<compile_context>
chip_gen: v6e
topology: v6e:2x2x1
jax: 0.10.0
libtpu: 0.0.40
codegen_flags: <defaults>
</compile_context>

<pallas_src>
import jax
import jax.numpy as jnp
from jax.experimental import pallas as pl
from jax.experimental.pallas import tpu as pltpu


_HIDDEN_DIMS = (2560, 1024, 512, 128, 64)
_LANE = 128
_SUBLANE = 8


def _round_up(x, m):
    return ((x + m - 1) // m) * m


def _mlp3_fused_kernel(x_ref,
                       w0, b0, w1, b1, w2, b2, w3, b3, w4, b4, w5, b5,
                       alpha_ref, o_ref):
    """Fused forward: 5x (Linear + PReLU) + final Linear, all in VMEM.

    x_ref            : (M_pad, K0) f32 activations (VMEM)
    wN / bN          : (Kn, Nn) bf16 weights / (1, Nn) f32 biases (VMEM)
    alpha_ref        : (5,) f32 PReLU alphas (SMEM)
    o_ref            : (M_pad, N_pad) f32 output (VMEM)
    """

    def linear(h, w_ref, b_ref):
        # bf16 x bf16 -> f32 accumulation on the MXU.
        y = jnp.dot(h.astype(w_ref.dtype), w_ref[...],
                    preferred_element_type=jnp.float32)
        return y + b_ref[...]

    def prelu(y, a):
        return jnp.where(y >= 0.0, y, a * y)

    h = x_ref[...].astype(jnp.float32)
    h = prelu(linear(h, w0, b0), alpha_ref[0])
    h = prelu(linear(h, w1, b1), alpha_ref[1])
    h = prelu(linear(h, w2, b2), alpha_ref[2])
    h = prelu(linear(h, w3, b3), alpha_ref[3])
    h = prelu(linear(h, w4, b4), alpha_ref[4])
    h = linear(h, w5, b5)            # final Linear, no PReLU
    o_ref[...] = h.astype(o_ref.dtype)


def init_mlp3_params(key, input_size, output_size):
    """Deterministic parameter init matching MLP3's layer shapes (f32)."""
    dims = [input_size, *_HIDDEN_DIMS, output_size]
    layers = []
    for i in range(len(dims) - 1):
        fan_in, fan_out = dims[i], dims[i + 1]
        key, wk, bk = jax.random.split(key, 3)
        scale = 1.0 / jnp.sqrt(jnp.float32(fan_in))
        w = jax.random.uniform(wk, (fan_in, fan_out), jnp.float32, -scale, scale)
        b = jax.random.uniform(bk, (fan_out,), jnp.float32, -scale, scale)
        has_prelu = i < len(dims) - 2          # last Linear has no PReLU
        alpha = jnp.float32(0.25) if has_prelu else None
        layers.append((w, b, alpha))
    return layers


def prepare_params(params):
    """Kernel-ready params: bf16 weights, last layer padded to 128 lanes,
    biases as (1, N) f32, PReLU alphas stacked into a (5,) f32 array."""
    weights, biases = [], []
    n_layers = len(params)
    for i, (w, b, _) in enumerate(params):
        if i == n_layers - 1:
            n_pad = _round_up(max(w.shape[1], _LANE), _LANE)
            w = jnp.pad(w, ((0, 0), (0, n_pad - w.shape[1])))
            b = jnp.pad(b, (0, n_pad - b.shape[0]))
        weights.append(w.astype(jnp.bfloat16))
        biases.append(b.reshape(1, -1).astype(jnp.float32))
    alphas = jnp.stack([a for (_, _, a) in params if a is not None])
    return weights, biases, alphas


def mlp3_forward(x, weights, biases, alphas, output_size):
    """MLP3 forward via one fused pallas_call; returns (batch, output_size)."""
    m, k = x.shape
    m_pad = _round_up(max(m, _SUBLANE), _SUBLANE)
    x_p = jnp.zeros((m_pad, k), jnp.float32).at[:m, :].set(x.astype(jnp.float32))
    n_pad = weights[-1].shape[1]

    wb = []
    for w, b in zip(weights, biases):
        wb += [w, b]

    in_specs = [pl.BlockSpec(memory_space=pltpu.MemorySpace.VMEM)]       # x
    in_specs += [pl.BlockSpec(memory_space=pltpu.MemorySpace.VMEM)
                 for _ in wb]                                            # W, b
    in_specs += [pl.BlockSpec(memory_space=pltpu.MemorySpace.SMEM)]      # alphas

    out = pl.pallas_call(
        _mlp3_fused_kernel,
        out_shape=jax.ShapeDtypeStruct((m_pad, n_pad), jnp.float32),
        in_specs=in_specs,
        out_specs=pl.BlockSpec(memory_space=pltpu.MemorySpace.VMEM),
        compiler_params=pltpu.CompilerParams(
            vmem_limit_bytes=32 * 1024 * 1024),
    )(x_p, *wb, alphas)

    return out[:m, :output_size]


def mlp3_reference(x, weights, biases, alphas, output_size):
    """Plain-JAX reference doing the identical (bf16-weight) math."""
    h = x.astype(jnp.float32)
    n_layers = len(weights)
    for i, (w, b) in enumerate(zip(weights, biases)):
        y = jnp.dot(h.astype(w.dtype), w,
                    preferred_element_type=jnp.float32) + b
        if i < n_layers - 1:
            y = jnp.where(y >= 0.0, y, alphas[i] * y)
        h = y
    return h[:, :output_size]


if __name__ == "__main__":
    batch = 2
    input_size = 64
    output_size = 10

    key = jax.random.PRNGKey(0)
    key, xk = jax.random.split(key)
    x = jax.random.normal(xk, (batch, input_size), jnp.float32)

    params = init_mlp3_params(key, input_size, output_size)
    weights, biases, alphas = prepare_params(params)

    out = mlp3_forward(x, weights, biases, alphas, output_size)
    out = jax.block_until_ready(out)

    ref = mlp3_reference(x, weights, biases, alphas, output_size)
    assert out.shape == (batch, output_size), out.shape
    max_err = float(jnp.max(jnp.abs(out - ref)))
    assert jnp.allclose(out, ref, atol=1e-3, rtol=1e-3), f"mismatch: {max_err}"

    print("KERNEL_OK")
</pallas_src>

<mosaic_0001>
module attributes {stable_mosaic.version = 11 : i64} {
  func.func @_mlp3_fused_kernel(%arg0: memref<8x64xf32, #tpu.memory_space<vmem>>, %arg1: memref<64x2560xbf16, #tpu.memory_space<vmem>>, %arg2: memref<1x2560xf32, #tpu.memory_space<vmem>>, %arg3: memref<2560x1024xbf16, #tpu.memory_space<vmem>>, %arg4: memref<1x1024xf32, #tpu.memory_space<vmem>>, %arg5: memref<1024x512xbf16, #tpu.memory_space<vmem>>, %arg6: memref<1x512xf32, #tpu.memory_space<vmem>>, %arg7: memref<512x128xbf16, #tpu.memory_space<vmem>>, %arg8: memref<1x128xf32, #tpu.memory_space<vmem>>, %arg9: memref<128x64xbf16, #tpu.memory_space<vmem>>, %arg10: memref<1x64xf32, #tpu.memory_space<vmem>>, %arg11: memref<64x128xbf16, #tpu.memory_space<vmem>>, %arg12: memref<1x128xf32, #tpu.memory_space<vmem>>, %arg13: memref<5xf32, #tpu.memory_space<smem>>, %arg14: memref<8x128xf32, #tpu.memory_space<vmem>>) attributes {dimension_semantics = [], scalar_prefetch = 0 : i64, scratch_operands = 0 : i64, tpu.core_type = #tpu.core_type<tc>} {
    %c0 = arith.constant 0 : index
    %c0_0 = arith.constant 0 : index
    %0 = vector.load %arg0[%c0, %c0_0] : memref<8x64xf32, #tpu.memory_space<vmem>>, vector<8x64xf32>
    %1 = arith.truncf %0 : vector<8x64xf32> to vector<8x64xbf16>
    %c0_1 = arith.constant 0 : index
    %c0_2 = arith.constant 0 : index
    %2 = vector.load %arg1[%c0_1, %c0_2] : memref<64x2560xbf16, #tpu.memory_space<vmem>>, vector<64x2560xbf16>
    %cst = arith.constant dense<0.000000e+00> : vector<8x2560xf32>
    %3 = tpu.matmul %1, %2, %cst {dimension_numbers = #tpu.dot_dimension_numbers<[1], [0], [0], [1], [0, 0, 1, 1], [], []>} : vector<8x64xbf16>, vector<64x2560xbf16>, vector<8x2560xf32> -> vector<8x2560xf32>
    %c0_3 = arith.constant 0 : index
    %c0_4 = arith.constant 0 : index
    %4 = vector.load %arg2[%c0_3, %c0_4] : memref<1x2560xf32, #tpu.memory_space<vmem>>, vector<1x2560xf32>
    %5 = vector.broadcast %4 : vector<1x2560xf32> to vector<8x2560xf32>
    %6 = arith.addf %3, %5 : vector<8x2560xf32>
    %c0_5 = arith.constant 0 : index
    %7 = memref.load %arg13[%c0_5] : memref<5xf32, #tpu.memory_space<smem>>
    %cst_6 = arith.constant 0.000000e+00 : f32
    %8 = vector.broadcast %cst_6 : f32 to vector<8x2560xf32>
    %9 = arith.cmpf oge, %6, %8 : vector<8x2560xf32>
    %10 = vector.broadcast %7 : f32 to vector<8x2560xf32>
    %11 = arith.mulf %10, %6 : vector<8x2560xf32>
    %12 = arith.select %9, %6, %11 : vector<8x2560xi1>, vector<8x2560xf32>
    %13 = arith.truncf %12 : vector<8x2560xf32> to vector<8x2560xbf16>
    %c0_7 = arith.constant 0 : index
    %c0_8 = arith.constant 0 : index
    %14 = vector.load %arg3[%c0_7, %c0_8] : memref<2560x1024xbf16, #tpu.memory_space<vmem>>, vector<2560x1024xbf16>
    %cst_9 = arith.constant dense<0.000000e+00> : vector<8x1024xf32>
    %15 = tpu.matmul %13, %14, %cst_9 {dimension_numbers = #tpu.dot_dimension_numbers<[1], [0], [0], [1], [0, 0, 1, 1], [], []>} : vector<8x2560xbf16>, vector<2560x1024xbf16>, vector<8x1024xf32> -> vector<8x1024xf32>
    %c0_10 = arith.constant 0 : index
    %c0_11 = arith.constant 0 : index
    %16 = vector.load %arg4[%c0_10, %c0_11] : memref<1x1024xf32, #tpu.memory_space<vmem>>, vector<1x1024xf32>
    %17 = vector.broadcast %16 : vector<1x1024xf32> to vector<8x1024xf32>
    %18 = arith.addf %15, %17 : vector<8x1024xf32>
    %c1 = arith.constant 1 : index
    %19 = memref.load %arg13[%c1] : memref<5xf32, #tpu.memory_space<smem>>
    %cst_12 = arith.constant 0.000000e+00 : f32
    %20 = vector.broadcast %cst_12 : f32 to vector<8x1024xf32>
    %21 = arith.cmpf oge, %18, %20 : vector<8x1024xf32>
    %22 = vector.broadcast %19 : f32 to vector<8x1024xf32>
    %23 = arith.mulf %22, %18 : vector<8x1024xf32>
    %24 = arith.select %21, %18, %23 : vector<8x1024xi1>, vector<8x1024xf32>
    %25 = arith.truncf %24 : vector<8x1024xf32> to vector<8x1024xbf16>
    %c0_13 = arith.constant 0 : index
    %c0_14 = arith.constant 0 : index
    %26 = vector.load %arg5[%c0_13, %c0_14] : memref<1024x512xbf16, #tpu.memory_space<vmem>>, vector<1024x512xbf16>
    %cst_15 = arith.constant dense<0.000000e+00> : vector<8x512xf32>
    %27 = tpu.matmul %25, %26, %cst_15 {dimension_numbers = #tpu.dot_dimension_numbers<[1], [0], [0], [1], [0, 0, 1, 1], [], []>} : vector<8x1024xbf16>, vector<1024x512xbf16>, vector<8x512xf32> -> vector<8x512xf32>
    %c0_16 = arith.constant 0 : index
    %c0_17 = arith.constant 0 : index
    %28 = vector.load %arg6[%c0_16, %c0_17] : memref<1x512xf32, #tpu.memory_space<vmem>>, vector<1x512xf32>
    %29 = vector.broadcast %28 : vector<1x512xf32> to vector<8x512xf32>
    %30 = arith.addf %27, %29 : vector<8x512xf32>
    %c2 = arith.constant 2 : index
    %31 = memref.load %arg13[%c2] : memref<5xf32, #tpu.memory_space<smem>>
    %cst_18 = arith.constant 0.000000e+00 : f32
    %32 = vector.broadcast %cst_18 : f32 to vector<8x512xf32>
    %33 = arith.cmpf oge, %30, %32 : vector<8x512xf32>
    %34 = vector.broadcast %31 : f32 to vector<8x512xf32>
    %35 = arith.mulf %34, %30 : vector<8x512xf32>
    %36 = arith.select %33, %30, %35 : vector<8x512xi1>, vector<8x512xf32>
    %37 = arith.truncf %36 : vector<8x512xf32> to vector<8x512xbf16>
    %c0_19 = arith.constant 0 : index
    %c0_20 = arith.constant 0 : index
    %38 = vector.load %arg7[%c0_19, %c0_20] : memref<512x128xbf16, #tpu.memory_space<vmem>>, vector<512x128xbf16>
    %cst_21 = arith.constant dense<0.000000e+00> : vector<8x128xf32>
    %39 = tpu.matmul %37, %38, %cst_21 {dimension_numbers = #tpu.dot_dimension_numbers<[1], [0], [0], [1], [0, 0, 1, 1], [], []>} : vector<8x512xbf16>, vector<512x128xbf16>, vector<8x128xf32> -> vector<8x128xf32>
    %c0_22 = arith.constant 0 : index
    %c0_23 = arith.constant 0 : index
    %40 = vector.load %arg8[%c0_22, %c0_23] : memref<1x128xf32, #tpu.memory_space<vmem>>, vector<1x128xf32>
    %41 = vector.broadcast %40 : vector<1x128xf32> to vector<8x128xf32>
    %42 = arith.addf %39, %41 : vector<8x128xf32>
    %c3 = arith.constant 3 : index
    %43 = memref.load %arg13[%c3] : memref<5xf32, #tpu.memory_space<smem>>
    %cst_24 = arith.constant 0.000000e+00 : f32
    %44 = vector.broadcast %cst_24 : f32 to vector<8x128xf32>
    %45 = arith.cmpf oge, %42, %44 : vector<8x128xf32>
    %46 = vector.broadcast %43 : f32 to vector<8x128xf32>
    %47 = arith.mulf %46, %42 : vector<8x128xf32>
    %48 = arith.select %45, %42, %47 : vector<8x128xi1>, vector<8x128xf32>
    %49 = arith.truncf %48 : vector<8x128xf32> to vector<8x128xbf16>
    %c0_25 = arith.constant 0 : index
    %c0_26 = arith.constant 0 : index
    %50 = vector.load %arg9[%c0_25, %c0_26] : memref<128x64xbf16, #tpu.memory_space<vmem>>, vector<128x64xbf16>
    %cst_27 = arith.constant dense<0.000000e+00> : vector<8x64xf32>
    %51 = tpu.matmul %49, %50, %cst_27 {dimension_numbers = #tpu.dot_dimension_numbers<[1], [0], [0], [1], [0, 0, 1, 1], [], []>} : vector<8x128xbf16>, vector<128x64xbf16>, vector<8x64xf32> -> vector<8x64xf32>
    %c0_28 = arith.constant 0 : index
    %c0_29 = arith.constant 0 : index
    %52 = vector.load %arg10[%c0_28, %c0_29] : memref<1x64xf32, #tpu.memory_space<vmem>>, vector<1x64xf32>
    %53 = vector.broadcast %52 : vector<1x64xf32> to vector<8x64xf32>
    %54 = arith.addf %51, %53 : vector<8x64xf32>
    %c4 = arith.constant 4 : index
    %55 = memref.load %arg13[%c4] : memref<5xf32, #tpu.memory_space<smem>>
    %cst_30 = arith.constant 0.000000e+00 : f32
    %56 = vector.broadcast %cst_30 : f32 to vector<8x64xf32>
    %57 = arith.cmpf oge, %54, %56 : vector<8x64xf32>
    %58 = vector.broadcast %55 : f32 to vector<8x64xf32>
    %59 = arith.mulf %58, %54 : vector<8x64xf32>
    %60 = arith.select %57, %54, %59 : vector<8x64xi1>, vector<8x64xf32>
    %61 = arith.truncf %60 : vector<8x64xf32> to vector<8x64xbf16>
    %c0_31 = arith.constant 0 : index
    %c0_32 = arith.constant 0 : index
    %62 = vector.load %arg11[%c0_31, %c0_32] : memref<64x128xbf16, #tpu.memory_space<vmem>>, vector<64x128xbf16>
    %cst_33 = arith.constant dense<0.000000e+00> : vector<8x128xf32>
    %63 = tpu.matmul %61, %62, %cst_33 {dimension_numbers = #tpu.dot_dimension_numbers<[1], [0], [0], [1], [0, 0, 1, 1], [], []>} : vector<8x64xbf16>, vector<64x128xbf16>, vector<8x128xf32> -> vector<8x128xf32>
    %c0_34 = arith.constant 0 : index
    %c0_35 = arith.constant 0 : index
    %64 = vector.load %arg12[%c0_34, %c0_35] : memref<1x128xf32, #tpu.memory_space<vmem>>, vector<1x128xf32>
    %65 = vector.broadcast %64 : vector<1x128xf32> to vector<8x128xf32>
    %66 = arith.addf %63, %65 : vector<8x128xf32>
    %c0_36 = arith.constant 0 : index
    %c0_37 = arith.constant 0 : index
    %67 = vector.load %arg14[%c0_36, %c0_37] : memref<8x128xf32, #tpu.memory_space<vmem>>, vector<8x128xf32>
    tpu.vector_store %arg14[%c0_36, %c0_37], %66 {strides = array<i32>} : memref<8x128xf32, #tpu.memory_space<vmem>>, vector<8x128xf32>,
    return
  }
}

</mosaic_0001>

<llo_original>
// kernel: tpu_custom_call.1
$region0: #{tpu_custom_call.1}
  #allocation0 [shape = 'u32[]', space=smem, size = 0x4, offset = 0x4, fixed_abs, tag = 'smem constant byte address 0x4 - core index']
  #allocation1 [shape = 'u32[144,128]{1,0:T(1,128)}', space=vmem, size = 0x12000, scoped, tag = 'internal scratch']
  %s0 = inlined_call_operand.hbm [shape: f32[8,64], index: 0, kind: input, shape index: {}]
  %s1 = inlined_call_operand.hbm [shape: bf16[64,2560], index: 1, kind: input, shape index: {}]
  %s2 = inlined_call_operand.hbm [shape: f32[1,2560], index: 2, kind: input, shape index: {}]
  %s3 = inlined_call_operand.hbm [shape: bf16[2560,1024], index: 3, kind: input, shape index: {}]
  %s4 = inlined_call_operand.hbm [shape: f32[1,1024], index: 4, kind: input, shape index: {}]
  %s5 = inlined_call_operand.hbm [shape: bf16[1024,512], index: 5, kind: input, shape index: {}]
  %s6 = inlined_call_operand.hbm [shape: f32[1,512], index: 6, kind: input, shape index: {}]
  %s7 = inlined_call_operand.hbm [shape: bf16[512,128], index: 7, kind: input, shape index: {}]
  %s8 = inlined_call_operand.hbm [shape: f32[1,128], index: 8, kind: input, shape index: {}]
  %s9 = inlined_call_operand.vmem [shape: bf16[128,64], index: 9, kind: input, shape index: {}]
  %s10 = inlined_call_operand.hbm [shape: f32[1,64], index: 10, kind: input, shape index: {}]
  %s11 = inlined_call_operand.hbm [shape: bf16[64,128], index: 11, kind: input, shape index: {}]
  %s12 = inlined_call_operand.hbm [shape: f32[1,128], index: 12, kind: input, shape index: {}]
  %s13 = inlined_call_operand.hbm [shape: f32[5], index: 13, kind: input, shape index: {}]
  %s14 = inlined_call_operand.hbm [shape: f32[8,128], index: 14, kind: output, shape index: {}]
  %s15 = sld [smem:[#allocation0]]
  $region118: #{tpu_custom_call.1} parent=0
    _
  %s17 = ssub.s32 1, %s15
  %s18 = scalar_select 0, %s17, %s15
  $region1: #{tpu_custom_call.1} parent=0
    #allocation2 [shape = 'u8[4096]{0}', space=vmem, size = 0x1000, scoped, tag = 'input window, operand 0, single buffered']
    #allocation3 [shape = 's32[1]{0}', space=sflag, size = 0x4, scoped, tag = 'scoped memory for tpu_custom_call.1']
    #allocation4 [shape = 's32[1]{0}', space=sflag, size = 0x4, scoped, tag = 'scoped memory for tpu_custom_call.1']
    #allocation5 [shape = 's32[1]{0}', space=sflag, size = 0x4, scoped, tag = 'scoped memory for tpu_custom_call.1']
    #allocation6 [shape = 'u8[327680]{0}', space=vmem, size = 0x50000, scoped, tag = 'input window, operand 1, single buffered']
    #allocation7 [shape = 's32[1]{0}', space=sflag, size = 0x4, scoped, tag = 'scoped memory for tpu_custom_call.1']
    #allocation8 [shape = 'u8[10240]{0}', space=vmem, size = 0x2800, scoped, tag = 'input window, operand 2, single buffered']
    #allocation9 [shape = 'u8[5242880]{0}', space=vmem, size = 0x500000, scoped, tag = 'input window, operand 3, single buffered']
    #allocation10 [shape = 's32[1]{0}', space=sflag, size = 0x4, scoped, tag = 'scoped memory for tpu_custom_call.1']
    #allocation11 [shape = 'u8[4096]{0}', space=vmem, size = 0x1000, scoped, tag = 'input window, operand 4, single buffered']
    #allocation12 [shape = 'u8[1048576]{0}', space=vmem, size = 0x100000, scoped, tag = 'input window, operand 5, single buffered']
    #allocation13 [shape = 's32[1]{0}', space=sflag, size = 0x4, scoped, tag = 'scoped memory for tpu_custom_call.1']
    #allocation14 [shape = 'u8[2048]{0}', space=vmem, size = 0x800, scoped, tag = 'input window, operand 6, single buffered']
    #allocation15 [shape = 'u8[131072]{0}', space=vmem, size = 0x20000, scoped, tag = 'input window, operand 7, single buffered']
    #allocation16 [shape = 's32[1]{0}', space=sflag, size = 0x4, scoped, tag = 'scoped memory for tpu_custom_call.1']
    #allocation17 [shape = 'u8[512]{0}', space=vmem, size = 0x400, scoped, tag = 'input window, operand 8, single buffered']
    #allocation18 [shape = 'u8[512]{0}', space=vmem, size = 0x400, scoped, tag = 'input window, operand 10, single buffered']
    #allocation19 [shape = 's32[1]{0}', space=sflag, size = 0x4, scoped, tag = 'scoped memory for tpu_custom_call.1']
    #allocation20 [shape = 'u8[16384]{0}', space=vmem, size = 0x4000, scoped, tag = 'input window, operand 11, single buffered']
    #allocation21 [shape = 'u8[512]{0}', space=vmem, size = 0x400, scoped, tag = 'input window, operand 12, single buffered']
    #allocation22 [shape = 's32[1]{0}', space=sflag, size = 0x4, scoped, tag = 'scoped memory for tpu_custom_call.1']
    #allocation23 [shape = 'u8[512]{0}', space=smem, size = 0x200, scoped, tag = 'input window, operand 13, single buffered']
    #allocation24 [shape = 'u8[4096]{0}', space=vmem, size = 0x1000, scoped, tag = 'output window, operand 0, single buffered']
    %19 = vsyncpa [#allocation3], 0
    %20 = vsyncpa [#allocation7], 0
    %21 = vsyncpa [#allocation10], 0
    %22 = vsyncpa [#allocation13], 0
    %23 = vsyncpa [#allocation16], 0
    %24 = vsyncpa [#allocation19], 0
    %25 = vsyncpa [#allocation22], 0
    %26 = vsyncpa [#allocation5], 0
    %27 = vsyncpa [#allocation4], 0
    // Predicated region
    $region2: #{tpu_custom_call.1} parent=1 // pred_check
      _
    $region3: #{tpu_custom_call.1} parent=1 // pred_check_branch
      %29 = sbr.rel (0) target = $region5
    $region4: #{tpu_custom_call.1} parent=1 // pred_region
      %s31 = ssub.s32 128, 128
      %32 = vsyncadd [#allocation3], %s31
      %s34 = sshll.u32 [#allocation2], 4
      %s35 = int_to_ptr.vmem [resolvable:$true] %s34
      %37 = dma.hbm_to_vmem [thread:$0]  %s0, 128, %s35, [#allocation3]
    $region5: #{tpu_custom_call.1} parent=1 // pred_fallthru
      _
    // Predicated region
    $region6: #{tpu_custom_call.1} parent=1 // pred_check
      _
    $region7: #{tpu_custom_call.1} parent=1 // pred_check_branch
      %39 = sbr.rel (0) target = $region9
    $region8: #{tpu_custom_call.1} parent=1 // pred_region
      %s41 = ssub.s32 10240, 10240
      %42 = vsyncadd [#allocation7], %s41
      %s43 = sshll.u32 [#allocation6], 4
      %s44 = int_to_ptr.vmem [resolvable:$true] %s43
      %49 = dma.hbm_to_vmem [thread:$0]  %s1, 10240, %s44, [#allocation7], 1280, 1280, 80
    $region9: #{tpu_custom_call.1} parent=1 // pred_fallthru
      _
    // Predicated region
    $region10: #{tpu_custom_call.1} parent=1 // pred_check
      _
    $region11: #{tpu_custom_call.1} parent=1 // pred_check_branch
      %51 = sbr.rel (0) target = $region13
    $region12: #{tpu_custom_call.1} parent=1 // pred_region
      %s53 = ssub.s32 320, 320
      %54 = vsyncadd [#allocation7], %s53
      %s56 = sshll.u32 [#allocation8], 4
      %s57 = int_to_ptr.vmem [resolvable:$true] %s56
      %59 = dma.hbm_to_vmem [thread:$0]  %s2, 320, %s57, [#allocation7]
    $region13: #{tpu_custom_call.1} parent=1 // pred_fallthru
      _
    // Predicated region
    $region14: #{tpu_custom_call.1} parent=1 // pred_check
      _
    $region15: #{tpu_custom_call.1} parent=1 // pred_check_branch
      %61 = sbr.rel (0) target = $region17
    $region16: #{tpu_custom_call.1} parent=1 // pred_region
      %s63 = ssub.s32 163840, 163840
      %64 = vsyncadd [#allocation10], %s63
      %s65 = sshll.u32 [#allocation9], 4
      %s66 = int_to_ptr.vmem [resolvable:$true] %s65
      %71 = dma.hbm_to_vmem [thread:$0]  %s3, 163840, %s66, [#allocation10], 512, 512, 32
    $region17: #{tpu_custom_call.1} parent=1 // pred_fallthru
      _
    // Predicated region
    $region18: #{tpu_custom_call.1} parent=1 // pred_check
      _
    $region19: #{tpu_custom_call.1} parent=1 // pred_check_branch
      %73 = sbr.rel (0) target = $region21
    $region20: #{tpu_custom_call.1} parent=1 // pred_region
      %s75 = ssub.s32 128, 128
      %76 = vsyncadd [#allocation10], %s75
      %s78 = sshll.u32 [#allocation11], 4
      %s79 = int_to_ptr.vmem [resolvable:$true] %s78
      %81 = dma.hbm_to_vmem [thread:$0]  %s4, 128, %s79, [#allocation10]
    $region21: #{tpu_custom_call.1} parent=1 // pred_fallthru
      _
    // Predicated region
    $region22: #{tpu_custom_call.1} parent=1 // pred_check
      _
    $region23: #{tpu_custom_call.1} parent=1 // pred_check_branch
      %83 = sbr.rel (0) target = $region25
    $region24: #{tpu_custom_call.1} parent=1 // pred_region
      %s85 = ssub.s32 32768, 32768
      %86 = vsyncadd [#allocation13], %s85
      %s87 = sshll.u32 [#allocation12], 4
      %s88 = int_to_ptr.vmem [resolvable:$true] %s87
      %93 = dma.hbm_to_vmem [thread:$0]  %s5, 32768, %s88, [#allocation13], 256, 256, 16
    $region25: #{tpu_custom_call.1} parent=1 // pred_fallthru
      _
    // Predicated region
    $region26: #{tpu_custom_call.1} parent=1 // pred_check
      _
    $region27: #{tpu_custom_call.1} parent=1 // pred_check_branch
      %95 = sbr.rel (0) target = $region29
    $region28: #{tpu_custom_call.1} parent=1 // pred_region
      %s97 = ssub.s32 64, 64
      %98 = vsyncadd [#allocation13], %s97
      %s100 = sshll.u32 [#allocation14], 4
      %s101 = int_to_ptr.vmem [resolvable:$true] %s100
      %103 = dma.hbm_to_vmem [thread:$0]  %s6, 64, %s101, [#allocation13]
    $region29: #{tpu_custom_call.1} parent=1 // pred_fallthru
      _
    // Predicated region
    $region30: #{tpu_custom_call.1} parent=1 // pred_check
      _
    $region31: #{tpu_custom_call.1} parent=1 // pred_check_branch
      %105 = sbr.rel (0) target = $region33
    $region32: #{tpu_custom_call.1} parent=1 // pred_region
      %s107 = ssub.s32 4096, 4096
      %108 = vsyncadd [#allocation16], %s107
      %s109 = sshll.u32 [#allocation15], 4
      %s110 = int_to_ptr.vmem [resolvable:$true] %s109
      %115 = dma.hbm_to_vmem [thread:$0]  %s7, 4096, %s110, [#allocation16], 64, 64, 4
    $region33: #{tpu_custom_call.1} parent=1 // pred_fallthru
      _
    // Predicated region
    $region34: #{tpu_custom_call.1} parent=1 // pred_check
      _
    $region35: #{tpu_custom_call.1} parent=1 // pred_check_branch
      %117 = sbr.rel (0) target = $region37
    $region36: #{tpu_custom_call.1} parent=1 // pred_region
      %s119 = ssub.s32 16, 16
      %120 = vsyncadd [#allocation16], %s119
      %s122 = sshll.u32 [#allocation17], 4
      %s123 = int_to_ptr.vmem [resolvable:$true] %s122
      %125 = dma.hbm_to_vmem [thread:$0]  %s8, 16, %s123, [#allocation16]
    $region37: #{tpu_custom_call.1} parent=1 // pred_fallthru
      _
    // Predicated region
    $region38: #{tpu_custom_call.1} parent=1 // pred_check
      _
    $region39: #{tpu_custom_call.1} parent=1 // pred_check_branch
      %127 = sbr.rel (0) target = $region41
    $region40: #{tpu_custom_call.1} parent=1 // pred_region
      _
    $region41: #{tpu_custom_call.1} parent=1 // pred_fallthru
      _
    // Predicated region
    $region42: #{tpu_custom_call.1} parent=1 // pred_check
      _
    $region43: #{tpu_custom_call.1} parent=1 // pred_check_branch
      %129 = sbr.rel (0) target = $region45
    $region44: #{tpu_custom_call.1} parent=1 // pred_region
      %s131 = ssub.s32 16, 16
      %132 = vsyncadd [#allocation19], %s131
      %s134 = sshll.u32 [#allocation18], 4
      %s135 = int_to_ptr.vmem [resolvable:$true] %s134
      %137 = dma.hbm_to_vmem [thread:$0]  %s10, 16, %s135, [#allocation19]
    $region45: #{tpu_custom_call.1} parent=1 // pred_fallthru
      _
    // Predicated region
    $region46: #{tpu_custom_call.1} parent=1 // pred_check
      _
    $region47: #{tpu_custom_call.1} parent=1 // pred_check_branch
      %139 = sbr.rel (0) target = $region49
    $region48: #{tpu_custom_call.1} parent=1 // pred_region
      %s141 = ssub.s32 512, 512
      %142 = vsyncadd [#allocation19], %s141
      %s143 = sshll.u32 [#allocation20], 4
      %s144 = int_to_ptr.vmem [resolvable:$true] %s143
      %149 = dma.hbm_to_vmem [thread:$0]  %s11, 512, %s144, [#allocation19], 64, 64, 4
    $region49: #{tpu_custom_call.1} parent=1 // pred_fallthru
      _
    // Predicated region
    $region50: #{tpu_custom_call.1} parent=1 // pred_check
      _
    $region51: #{tpu_custom_call.1} parent=1 // pred_check_branch
      %151 = sbr.rel (0) target = $region53
    $region52: #{tpu_custom_call.1} parent=1 // pred_region
      %s153 = ssub.s32 16, 16
      %154 = vsyncadd [#allocation22], %s153
      %s156 = sshll.u32 [#allocation21], 4
      %s157 = int_to_ptr.vmem [resolvable:$true] %s156
      %159 = dma.hbm_to_vmem [thread:$0]  %s12, 16, %s157, [#allocation22]
    $region53: #{tpu_custom_call.1} parent=1 // pred_fallthru
      _
    // Predicated region
    $region54: #{tpu_custom_call.1} parent=1 // pred_check
      _
    $region55: #{tpu_custom_call.1} parent=1 // pred_check_branch
      %161 = sbr.rel (0) target = $region57
    $region56: #{tpu_custom_call.1} parent=1 // pred_region
      %s163 = ssub.s32 16, 16
      %164 = vsyncadd [#allocation5], %s163
      %167 = dma.hbm_to_smem %s13, 16, [#allocation23], [#allocation5]
    $region57: #{tpu_custom_call.1} parent=1 // pred_fallthru
      _
    // Predicated region
    $region58: #{tpu_custom_call.1} parent=1 // pred_check
      _
    $region59: #{tpu_custom_call.1} parent=1 // pred_check_branch
      %169 = sbr.rel (0) target = $region61
    $region60: #{tpu_custom_call.1} parent=1 // pred_region
      %170 = dma.done [#allocation3], 128
    $region61: #{tpu_custom_call.1} parent=1 // pred_fallthru
      _
    // Predicated region
    $region62: #{tpu_custom_call.1} parent=1 // pred_check
      _
    $region63: #{tpu_custom_call.1} parent=1 // pred_check_branch
      %172 = sbr.rel (0) target = $region65
    $region64: #{tpu_custom_call.1} parent=1 // pred_region
      %173 = dma.done [#allocation7], 10240
    $region65: #{tpu_custom_call.1} parent=1 // pred_fallthru
      _
    // Predicated region
    $region66: #{tpu_custom_call.1} parent=1 // pred_check
      _
    $region67: #{tpu_custom_call.1} parent=1 // pred_check_branch
      %175 = sbr.rel (0) target = $region69
    $region68: #{tpu_custom_call.1} parent=1 // pred_region
      %176 = dma.done [#allocation7], 320
    $region69: #{tpu_custom_call.1} parent=1 // pred_fallthru
      _
    // Predicated region
    $region70: #{tpu_custom_call.1} parent=1 // pred_check
      _
    $region71: #{tpu_custom_call.1} parent=1 // pred_check_branch
      %178 = sbr.rel (0) target = $region73
    $region72: #{tpu_custom_call.1} parent=1 // pred_region
      %179 = dma.done [#allocation10], 163840
    $region73: #{tpu_custom_call.1} parent=1 // pred_fallthru
      _
    // Predicated region
    $region74: #{tpu_custom_call.1} parent=1 // pred_check
      _
    $region75: #{tpu_custom_call.1} parent=1 // pred_check_branch
      %181 = sbr.rel (0) target = $region77
    $region76: #{tpu_custom_call.1} parent=1 // pred_region
      %182 = dma.done [#allocation10], 128
    $region77: #{tpu_custom_call.1} parent=1 // pred_fallthru
      _
    // Predicated region
    $region78: #{tpu_custom_call.1} parent=1 // pred_check
      _
    $region79: #{tpu_custom_call.1} parent=1 // pred_check_branch
      %184 = sbr.rel (0) target = $region81
    $region80: #{tpu_custom_call.1} parent=1 // pred_region
      %185 = dma.done [#allocation13], 32768
    $region81: #{tpu_custom_call.1} parent=1 // pred_fallthru
      _
    // Predicated region
    $region82: #{tpu_custom_call.1} parent=1 // pred_check
      _
    $region83: #{tpu_custom_call.1} parent=1 // pred_check_branch
      %187 = sbr.rel (0) target = $region85
    $region84: #{tpu_custom_call.1} parent=1 // pred_region
      %188 = dma.done [#allocation13], 64
    $region85: #{tpu_custom_call.1} parent=1 // pred_fallthru
      _
    // Predicated region
    $region86: #{tpu_custom_call.1} parent=1 // pred_check
      _
    $region87: #{tpu_custom_call.1} parent=1 // pred_check_branch
      %190 = sbr.rel (0) target = $region89
    $region88: #{tpu_custom_call.1} parent=1 // pred_region
      %191 = dma.done [#allocation16], 4096
    $region89: #{tpu_custom_call.1} parent=1 // pred_fallthru
      _
    // Predicated region
    $region90: #{tpu_custom_call.1} parent=1 // pred_check
      _
    $region91: #{tpu_custom_call.1} parent=1 // pred_check_branch
      %193 = sbr.rel (0) target = $region93
    $region92: #{tpu_custom_call.1} parent=1 // pred_region
      %194 = dma.done [#allocation16], 16
    $region93: #{tpu_custom_call.1} parent=1 // pred_fallthru
      _
    // Predicated region
    $region94: #{tpu_custom_call.1} parent=1 // pred_check
      _
    $region95: #{tpu_custom_call.1} parent=1 // pred_check_branch
      %196 = sbr.rel (0) target = $region97
    $region96: #{tpu_custom_call.1} parent=1 // pred_region
      %197 = dma.done [#allocation19], 16
    $region97: #{tpu_custom_call.1} parent=1 // pred_fallthru
      _
    // Predicated region
    $region98: #{tpu_custom_call.1} parent=1 // pred_check
      _
    $region99: #{tpu_custom_call.1} parent=1 // pred_check_branch
      %199 = sbr.rel (0) target = $region101
    $region100: #{tpu_custom_call.1} parent=1 // pred_region
      %200 = dma.done [#allocation19], 512
    $region101: #{tpu_custom_call.1} parent=1 // pred_fallthru
      _
    // Predicated region
    $region102: #{tpu_custom_call.1} parent=1 // pred_check
      _
    $region103: #{tpu_custom_call.1} parent=1 // pred_check_branch
      %202 = sbr.rel (0) target = $region105
    $region104: #{tpu_custom_call.1} parent=1 // pred_region
      %203 = dma.done [#allocation22], 16
    $region105: #{tpu_custom_call.1} parent=1 // pred_fallthru
      _
    // Predicated region
    $region106: #{tpu_custom_call.1} parent=1 // pred_check
      _
    $region107: #{tpu_custom_call.1} parent=1 // pred_check_branch
      %205 = sbr.rel (0) target = $region109
    $region108: #{tpu_custom_call.1} parent=1 // pred_region
      %206 = dma.done [#allocation5], 16
    $region109: #{tpu_custom_call.1} parent=1 // pred_fallthru
      _
    %207 = sfence
    %v209 = vld [vmem:[#allocation2] sm:$0xff]
    %v210 = vpack.c.bf16 %v209, %v209
    %v211 = vld [vmem:[#allocation6] sm:$0xff]
    %v212 = vld [vmem:[#allocation6 + $0x8] sm:$0xff]
    %v213 = vld [vmem:[#allocation6 + $0x10] sm:$0xff]
    %v214 = vld [vmem:[#allocation6 + $0x18] sm:$0xff]
    %v215 = vld [vmem:[#allocation6 + $0x20] sm:$0xff]
    %v216 = vld [vmem:[#allocation6 + $0x28] sm:$0xff]
    %v217 = vld [vmem:[#allocation6 + $0x30] sm:$0xff]
    %v218 = vld [vmem:[#allocation6 + $0x38] sm:$0xff]
    %v219 = vld [vmem:[#allocation6 + $0x40] sm:$0xff]
    %v220 = vld [vmem:[#allocation6 + $0x48] sm:$0xff]
    %v221 = vld [vmem:[#allocation6 + $0x50] sm:$0xff]
    %v222 = vld [vmem:[#allocation6 + $0x58] sm:$0xff]
    %v223 = vld [vmem:[#allocation6 + $0x60] sm:$0xff]
    %v224 = vld [vmem:[#allocation6 + $0x68] sm:$0xff]
    %v225 = vld [vmem:[#allocation6 + $0x70] sm:$0xff]
    %v226 = vld [vmem:[#allocation6 + $0x78] sm:$0xff]
    %v227 = vld [vmem:[#allocation6 + $0x80] sm:$0xff]
    %v228 = vld [vmem:[#allocation6 + $0x88] sm:$0xff]
    %v229 = vld [vmem:[#allocation6 + $0x90] sm:$0xff]
    %v230 = vld [vmem:[#allocation6 + $0x98] sm:$0xff]
    %v231 = vld [vmem:[#allocation6 + $0xa0] sm:$0xff]
    %v232 = vld [vmem:[#allocation6 + $0xa8] sm:$0xff]
    %v233 = vld [vmem:[#allocation6 + $0xb0] sm:$0xff]
    %v234 = vld [vmem:[#allocation6 + $0xb8] sm:$0xff]
    %v235 = vld [vmem:[#allocation6 + $0xc0] sm:$0xff]
    %v236 = vld [vmem:[#allocation6 + $0xc8] sm:$0xff]
    %v237 = vld [vmem:[#allocation6 + $0xd0] sm:$0xff]
    %v238 = vld [vmem:[#allocation6 + $0xd8] sm:$0xff]
    %v239 = vld [vmem:[#allocation6 + $0xe0] sm:$0xff]
    %v240 = vld [vmem:[#allocation6 + $0xe8] sm:$0xff]
    %v241 = vld [vmem:[#allocation6 + $0xf0] sm:$0xff]
    %v242 = vld [vmem:[#allocation6 + $0xf8] sm:$0xff]
    %v243 = vld [vmem:[#allocation6 + $0x100] sm:$0xff]
    %v244 = vld [vmem:[#allocation6 + $0x108] sm:$0xff]
    %v245 = vld [vmem:[#allocation6 + $0x110] sm:$0xff]
    %v246 = vld [vmem:[#allocation6 + $0x118] sm:$0xff]
    %v247 = vld [vmem:[#allocation6 + $0x120] sm:$0xff]
    %v248 = vld [vmem:[#allocation6 + $0x128] sm:$0xff]
    %v249 = vld [vmem:[#allocation6 + $0x130] sm:$0xff]
    %v250 = vld [vmem:[#allocation6 + $0x138] sm:$0xff]
    %v251 = vld [vmem:[#allocation6 + $0x140] sm:$0xff]
    %v252 = vld [vmem:[#allocation6 + $0x148] sm:$0xff]
    %v253 = vld [vmem:[#allocation6 + $0x150] sm:$0xff]
    %v254 = vld [vmem:[#allocation6 + $0x158] sm:$0xff]
    %v255 = vld [vmem:[#allocation6 + $0x160] sm:$0xff]
    %v256 = vld [vmem:[#allocation6 + $0x168] sm:$0xff]
    %v257 = vld [vmem:[#allocation6 + $0x170] sm:$0xff]
    %v258 = vld [vmem:[#allocation6 + $0x178] sm:$0xff]
    %v259 = vld [vmem:[#allocation6 + $0x180] sm:$0xff]
    %v260 = vld [vmem:[#allocation6 + $0x188] sm:$0xff]
    %v261 = vld [vmem:[#allocation6 + $0x190] sm:$0xff]
    %v262 = vld [vmem:[#allocation6 + $0x198] sm:$0xff]
    %v263 = vld [vmem:[#allocation6 + $0x1a0] sm:$0xff]
    %v264 = vld [vmem:[#allocation6 + $0x1a8] sm:$0xff]
    %v265 = vld [vmem:[#allocation6 + $0x1b0] sm:$0xff]
    %v266 = vld [vmem:[#allocation6 + $0x1b8] sm:$0xff]
    %v267 = vld [vmem:[#allocation6 + $0x1c0] sm:$0xff]
    %v268 = vld [vmem:[#allocation6 + $0x1c8] sm:$0xff]
    %v269 = vld [vmem:[#allocation6 + $0x1d0] sm:$0xff]
    %v270 = vld [vmem:[#allocation6 + $0x1d8] sm:$0xff]
    %v271 = vld [vmem:[#allocation6 + $0x1e0] sm:$0xff]
    %v272 = vld [vmem:[#allocation6 + $0x1e8] sm:$0xff]
    %v273 = vld [vmem:[#allocation6 + $0x1f0] sm:$0xff]
    %v274 = vld [vmem:[#allocation6 + $0x1f8] sm:$0xff]
    %v275 = vld [vmem:[#allocation6 + $0x200] sm:$0xff]
    %v276 = vld [vmem:[#allocation6 + $0x208] sm:$0xff]
    %v277 = vld [vmem:[#allocation6 + $0x210] sm:$0xff]
    %v278 = vld [vmem:[#allocation6 + $0x218] sm:$0xff]
    %v279 = vld [vmem:[#allocation6 + $0x220] sm:$0xff]
    %v280 = vld [vmem:[#allocation6 + $0x228] sm:$0xff]
    %v281 = vld [vmem:[#allocation6 + $0x230] sm:$0xff]
    %v282 = vld [vmem:[#allocation6 + $0x238] sm:$0xff]
    %v283 = vld [vmem:[#allocation6 + $0x240] sm:$0xff]
    %v284 = vld [vmem:[#allocation6 + $0x248] sm:$0xff]
    %v285 = vld [vmem:[#allocation6 + $0x250] sm:$0xff]
    %v286 = vld [vmem:[#allocation6 + $0x258] sm:$0xff]
    %v287 = vld [vmem:[#allocation6 + $0x260] sm:$0xff]
    %v288 = vld [vmem:[#allocation6 + $0x268] sm:$0xff]
    %v289 = vld [vmem:[#allocation6 + $0x270] sm:$0xff]
    %v290 = vld [vmem:[#allocation6 + $0x278] sm:$0xff]
    %v291 = vld [vmem:[#allocation8] sm:$0xff]
    %v292 = vld [vmem:[#allocation8 + $0x8] sm:$0xff]
    %v293 = vld [vmem:[#allocation8 + $0x10] sm:$0xf]
    %v297 = vlaneseq
    %v298 = vshrl.u32 %v297, 7
    %v299 = vsub.s32 0, %v298
    %v300 = vrot.slane %v291, %v299
    %v301 = vlaneseq
    %v302 = vshrl.u32 %v301, 7
    %v303 = vsub.s32 1, %v302
    %v304 = vrot.slane %v291, %v303
    %v305 = vlaneseq
    %v306 = vshrl.u32 %v305, 7
    %v307 = vsub.s32 2, %v306
    %v308 = vrot.slane %v291, %v307
    %v309 = vlaneseq
    %v310 = vshrl.u32 %v309, 7
    %v311 = vsub.s32 3, %v310
    %v312 = vrot.slane %v291, %v311
    %v313 = vlaneseq
    %v314 = vshrl.u32 %v313, 7
    %v315 = vsub.s32 4, %v314
    %v316 = vrot.slane %v291, %v315
    %v317 = vlaneseq
    %v318 = vshrl.u32 %v317, 7
    %v319 = vsub.s32 5, %v318
    %v320 = vrot.slane %v291, %v319
    %v321 = vlaneseq
    %v322 = vshrl.u32 %v321, 7
    %v323 = vsub.s32 6, %v322
    %v324 = vrot.slane %v291, %v323
    %v325 = vlaneseq
    %v326 = vshrl.u32 %v325, 7
    %v327 = vsub.s32 7, %v326
    %v328 = vrot.slane %v291, %v327
    %v329 = vlaneseq
    %v330 = vshrl.u32 %v329, 7
    %v331 = vsub.s32 0, %v330
    %v332 = vrot.slane %v292, %v331
    %v333 = vlaneseq
    %v334 = vshrl.u32 %v333, 7
    %v335 = vsub.s32 1, %v334
    %v336 = vrot.slane %v292, %v335
    %v337 = vlaneseq
    %v338 = vshrl.u32 %v337, 7
    %v339 = vsub.s32 2, %v338
    %v340 = vrot.slane %v292, %v339
    %v341 = vlaneseq
    %v342 = vshrl.u32 %v341, 7
    %v343 = vsub.s32 3, %v342
    %v344 = vrot.slane %v292, %v343
    %v345 = vlaneseq
    %v346 = vshrl.u32 %v345, 7
    %v347 = vsub.s32 4, %v346
    %v348 = vrot.slane %v292, %v347
    %v349 = vlaneseq
    %v350 = vshrl.u32 %v349, 7
    %v351 = vsub.s32 5, %v350
    %v352 = vrot.slane %v292, %v351
    %v353 = vlaneseq
    %v354 = vshrl.u32 %v353, 7
    %v355 = vsub.s32 6, %v354
    %v356 = vrot.slane %v292, %v355
    %v357 = vlaneseq
    %v358 = vshrl.u32 %v357, 7
    %v359 = vsub.s32 7, %v358
    %v360 = vrot.slane %v292, %v359
    %v361 = vlaneseq
    %v362 = vshrl.u32 %v361, 7
    %v363 = vsub.s32 0, %v362
    %v364 = vrot.slane %v293, %v363
    %v365 = vlaneseq
    %v366 = vshrl.u32 %v365, 7
    %v367 = vsub.s32 1, %v366
    %v368 = vrot.slane %v293, %v367
    %v369 = vlaneseq
    %v370 = vshrl.u32 %v369, 7
    %v371 = vsub.s32 2, %v370
    %v372 = vrot.slane %v293, %v371
    %v373 = vlaneseq
    %v374 = vshrl.u32 %v373, 7
    %v375 = vsub.s32 3, %v374
    %v376 = vrot.slane %v293, %v375
    %v477 = vunpack.c.l.b16 %v211
    %v478 = vunpack.c.h.b16 %v211
    %v479 = vunpack.c.l.b16 %v212
    %v480 = vunpack.c.h.b16 %v212
    %v481 = vunpack.c.l.b16 %v213
    %v482 = vunpack.c.h.b16 %v213
    %v483 = vunpack.c.l.b16 %v214
    %v484 = vunpack.c.h.b16 %v214
    %v485 = vunpack.c.l.b16 %v215
    %v486 = vunpack.c.h.b16 %v215
    %v487 = vunpack.c.l.b16 %v216
    %v488 = vunpack.c.h.b16 %v216
    %v489 = vunpack.c.l.b16 %v217
    %v490 = vunpack.c.h.b16 %v217
    %v491 = vunpack.c.l.b16 %v218
    %v492 = vunpack.c.h.b16 %v218
    %v493 = vunpack.c.l.b16 %v219
    %v494 = vunpack.c.h.b16 %v219
    %v495 = vunpack.c.l.b16 %v220
    %v496 = vunpack.c.h.b16 %v220
    %v497 = vunpack.c.l.b16 %v221
    %v498 = vunpack.c.h.b16 %v221
    %v499 = vunpack.c.l.b16 %v222
    %v500 = vunpack.c.h.b16 %v222
    %v501 = vunpack.c.l.b16 %v223
    %v502 = vunpack.c.h.b16 %v223
    %v503 = vunpack.c.l.b16 %v224
    %v504 = vunpack.c.h.b16 %v224
    %v505 = vunpack.c.l.b16 %v225
    %v506 = vunpack.c.h.b16 %v225
    %v507 = vunpack.c.l.b16 %v226
    %v508 = vunpack.c.h.b16 %v226
    %v509 = vunpack.c.l.b16 %v227
    %v510 = vunpack.c.h.b16 %v227
    %v511 = vunpack.c.l.b16 %v228
    %v512 = vunpack.c.h.b16 %v228
    %v513 = vunpack.c.l.b16 %v229
    %v514 = vunpack.c.h.b16 %v229
    %v515 = vunpack.c.l.b16 %v230
    %v516 = vunpack.c.h.b16 %v230
    %v517 = vunpack.c.l.b16 %v231
    %v518 = vunpack.c.h.b16 %v231
    %v519 = vunpack.c.l.b16 %v232
    %v520 = vunpack.c.h.b16 %v232
    %v521 = vunpack.c.l.b16 %v233
    %v522 = vunpack.c.h.b16 %v233
    %v523 = vunpack.c.l.b16 %v234
    %v524 = vunpack.c.h.b16 %v234
    %v525 = vunpack.c.l.b16 %v235
    %v526 = vunpack.c.h.b16 %v235
    %v527 = vunpack.c.l.b16 %v236
    %v528 = vunpack.c.h.b16 %v236
    %v529 = vunpack.c.l.b16 %v237
    %v530 = vunpack.c.h.b16 %v237
    %v531 = vunpack.c.l.b16 %v238
    %v532 = vunpack.c.h.b16 %v238
    %v533 = vunpack.c.l.b16 %v239
    %v534 = vunpack.c.h.b16 %v239
    %v535 = vunpack.c.l.b16 %v240
    %v536 = vunpack.c.h.b16 %v240
    %v537 = vunpack.c.l.b16 %v241
    %v538 = vunpack.c.h.b16 %v241
    %v539 = vunpack.c.l.b16 %v242
    %v540 = vunpack.c.h.b16 %v242
    %v541 = vunpack.c.l.b16 %v243
    %v542 = vunpack.c.h.b16 %v243
    %v543 = vunpack.c.l.b16 %v244
    %v544 = vunpack.c.h.b16 %v244
    %v545 = vunpack.c.l.b16 %v245
    %v546 = vunpack.c.h.b16 %v245
    %v547 = vunpack.c.l.b16 %v246
    %v548 = vunpack.c.h.b16 %v246
    %v549 = vunpack.c.l.b16 %v247
    %v550 = vunpack.c.h.b16 %v247
    %v551 = vunpack.c.l.b16 %v248
    %v552 = vunpack.c.h.b16 %v248
    %v553 = vunpack.c.l.b16 %v249
    %v554 = vunpack.c.h.b16 %v249
    %v555 = vunpack.c.l.b16 %v250
    %v556 = vunpack.c.h.b16 %v250
    %v557 = vunpack.c.l.b16 %v251
    %v558 = vunpack.c.h.b16 %v251
    %v559 = vunpack.c.l.b16 %v252
    %v560 = vunpack.c.h.b16 %v252
    %v561 = vunpack.c.l.b16 %v253
    %v562 = vunpack.c.h.b16 %v253
    %v563 = vunpack.c.l.b16 %v254
    %v564 = vunpack.c.h.b16 %v254
    %v565 = vunpack.c.l.b16 %v255
    %v566 = vunpack.c.h.b16 %v255
    %v567 = vunpack.c.l.b16 %v256
    %v568 = vunpack.c.h.b16 %v256
    %v569 = vunpack.c.l.b16 %v257
    %v570 = vunpack.c.h.b16 %v257
    %v571 = vunpack.c.l.b16 %v258
    %v572 = vunpack.c.h.b16 %v258
    %v573 = vunpack.c.l.b16 %v259
    %v574 = vunpack.c.h.b16 %v259
    %v575 = vunpack.c.l.b16 %v260
    %v576 = vunpack.c.h.b16 %v260
    %v577 = vunpack.c.l.b16 %v261
    %v578 = vunpack.c.h.b16 %v261
    %v579 = vunpack.c.l.b16 %v262
    %v580 = vunpack.c.h.b16 %v262
    %v581 = vunpack.c.l.b16 %v263
    %v582 = vunpack.c.h.b16 %v263
    %v583 = vunpack.c.l.b16 %v264
    %v584 = vunpack.c.h.b16 %v264
    %v585 = vunpack.c.l.b16 %v265
    %v586 = vunpack.c.h.b16 %v265
    %v587 = vunpack.c.l.b16 %v266
    %v588 = vunpack.c.h.b16 %v266
    %v589 = vunpack.c.l.b16 %v267
    %v590 = vunpack.c.h.b16 %v267
    %v591 = vunpack.c.l.b16 %v268
    %v592 = vunpack.c.h.b16 %v268
    %v593 = vunpack.c.l.b16 %v269
    %v594 = vunpack.c.h.b16 %v269
    %v595 = vunpack.c.l.b16 %v270
    %v596 = vunpack.c.h.b16 %v270
    %v597 = vunpack.c.l.b16 %v271
    %v598 = vunpack.c.h.b16 %v271
    %v599 = vunpack.c.l.b16 %v272
    %v600 = vunpack.c.h.b16 %v272
    %v601 = vunpack.c.l.b16 %v273
    %v602 = vunpack.c.h.b16 %v273
    %v603 = vunpack.c.l.b16 %v274
    %v604 = vunpack.c.h.b16 %v274
    %v605 = vunpack.c.l.b16 %v275
    %v606 = vunpack.c.h.b16 %v275
    %v607 = vunpack.c.l.b16 %v276
    %v608 = vunpack.c.h.b16 %v276
    %v609 = vunpack.c.l.b16 %v277
    %v610 = vunpack.c.h.b16 %v277
    %v611 = vunpack.c.l.b16 %v278
    %v612 = vunpack.c.h.b16 %v278
    %v613 = vunpack.c.l.b16 %v279
    %v614 = vunpack.c.h.b16 %v279
    %v615 = vunpack.c.l.b16 %v280
    %v616 = vunpack.c.h.b16 %v280
    %v617 = vunpack.c.l.b16 %v281
    %v618 = vunpack.c.h.b16 %v281
    %v619 = vunpack.c.l.b16 %v282
    %v620 = vunpack.c.h.b16 %v282
    %v621 = vunpack.c.l.b16 %v283
    %v622 = vunpack.c.h.b16 %v283
    %v623 = vunpack.c.l.b16 %v284
    %v624 = vunpack.c.h.b16 %v284
    %v625 = vunpack.c.l.b16 %v285
    %v626 = vunpack.c.h.b16 %v285
    %v627 = vunpack.c.l.b16 %v286
    %v628 = vunpack.c.h.b16 %v286
    %v629 = vunpack.c.l.b16 %v287
    %v630 = vunpack.c.h.b16 %v287
    %v631 = vunpack.c.l.b16 %v288
    %v632 = vunpack.c.h.b16 %v288
    %v633 = vunpack.c.l.b16 %v289
    %v634 = vunpack.c.h.b16 %v289
    %v635 = vunpack.c.l.b16 %v290
    %v636 = vunpack.c.h.b16 %v290
    %v637 = vpack.c.b16 %v497, %v477
    %v638 = vpack.c.b16 %v498, %v478
    %v639 = vpack.c.b16 %v499, %v479
    %v640 = vpack.c.b16 %v500, %v480
    %v641 = vpack.c.b16 %v501, %v481
    %v642 = vpack.c.b16 %v502, %v482
    %v643 = vpack.c.b16 %v503, %v483
    %v644 = vpack.c.b16 %v504, %v484
    %v645 = vpack.c.b16 %v505, %v485
    %v646 = vpack.c.b16 %v506, %v486
    %v647 = vpack.c.b16 %v507, %v487
    %v648 = vpack.c.b16 %v508, %v488
    %v649 = vpack.c.b16 %v509, %v489
    %v650 = vpack.c.b16 %v510, %v490
    %v651 = vpack.c.b16 %v511, %v491
    %v652 = vpack.c.b16 %v512, %v492
    %v653 = vpack.c.b16 %v513, %v493
    %v654 = vpack.c.b16 %v514, %v494
    %v655 = vpack.c.b16 %v515, %v495
    %v656 = vpack.c.b16 %v516, %v496
    %v657 = vpack.c.b16 %v537, %v517
    %v658 = vpack.c.b16 %v538, %v518
    %v659 = vpack.c.b16 %v539, %v519
    %v660 = vpack.c.b16 %v540, %v520
    %v661 = vpack.c.b16 %v541, %v521
    %v662 = vpack.c.b16 %v542, %v522
    %v663 = vpack.c.b16 %v543, %v523
    %v664 = vpack.c.b16 %v544, %v524
    %v665 = vpack.c.b16 %v545, %v525
    %v666 = vpack.c.b16 %v546, %v526
    %v667 = vpack.c.b16 %v547, %v527
    %v668 = vpack.c.b16 %v548, %v528
    %v669 = vpack.c.b16 %v549, %v529
    %v670 = vpack.c.b16 %v550, %v530
    %v671 = vpack.c.b16 %v551, %v531
    %v672 = vpack.c.b16 %v552, %v532
    %v673 = vpack.c.b16 %v553, %v533
    %v674 = vpack.c.b16 %v554, %v534
    %v675 = vpack.c.b16 %v555, %v535
    %v676 = vpack.c.b16 %v556, %v536
    %v677 = vpack.c.b16 %v577, %v557
    %v678 = vpack.c.b16 %v578, %v558
    %v679 = vpack.c.b16 %v579, %v559
    %v680 = vpack.c.b16 %v580, %v560
    %v681 = vpack.c.b16 %v581, %v561
    %v682 = vpack.c.b16 %v582, %v562
    %v683 = vpack.c.b16 %v583, %v563
    %v684 = vpack.c.b16 %v584, %v564
    %v685 = vpack.c.b16 %v585, %v565
    %v686 = vpack.c.b16 %v586, %v566
    %v687 = vpack.c.b16 %v587, %v567
    %v688 = vpack.c.b16 %v588, %v568
    %v689 = vpack.c.b16 %v589, %v569
    %v690 = vpack.c.b16 %v590, %v570
    %v691 = vpack.c.b16 %v591, %v571
    %v692 = vpack.c.b16 %v592, %v572
    %v693 = vpack.c.b16 %v593, %v573
    %v694 = vpack.c.b16 %v594, %v574
    %v695 = vpack.c.b16 %v595, %v575
    %v696 = vpack.c.b16 %v596, %v576
    %v697 = vpack.c.b16 %v617, %v597
    %v698 = vpack.c.b16 %v618, %v598
    %v699 = vpack.c.b16 %v619, %v599
    %v700 = vpack.c.b16 %v620, %v600
    %v701 = vpack.c.b16 %v621, %v601
    %v702 = vpack.c.b16 %v622, %v602
    %v703 = vpack.c.b16 %v623, %v603
    %v704 = vpack.c.b16 %v624, %v604
    %v705 = vpack.c.b16 %v625, %v605
    %v706 = vpack.c.b16 %v626, %v606
    %v707 = vpack.c.b16 %v627, %v607
    %v708 = vpack.c.b16 %v628, %v608
    %v709 = vpack.c.b16 %v629, %v609
    %v710 = vpack.c.b16 %v630, %v610
    %v711 = vpack.c.b16 %v631, %v611
    %v712 = vpack.c.b16 %v632, %v612
    %v713 = vpack.c.b16 %v633, %v613
    %v714 = vpack.c.b16 %v634, %v614
    %v715 = vpack.c.b16 %v635, %v615
    %v716 = vpack.c.b16 %v636, %v616
    %vm797 = vcmask 523264
    %v799 = vsel %vm797, %v210, 0
    %801 = vmatprep.subr.bf16.mxu0 0
    %802 = vmatpush1.bf16.msra.mxu0 0
    %803 = vmatprep.subr.bf16.mxu0 0
    %804 = vmatpush1.bf16.msra.mxu0 0
    %805 = vmatprep.subr.bf16.mxu0 0
    %806 = vmatpush1.bf16.msra.mxu0 0
    %807 = vmatprep.subr.bf16.mxu0 0
    %808 = vmatpush1.bf16.msra.mxu0 0
    %809 = vmatprep.subr.bf16.mxu0 %v698
    %810 = vmatpush1.bf16.msra.mxu0 %v697
    %811 = vmatprep.subr.bf16.mxu0 %v678
    %812 = vmatpush1.bf16.msra.mxu0 %v677
    %813 = vmatprep.subr.bf16.mxu0 %v658
    %814 = vmatpush1.bf16.msra.mxu0 %v657
    %815 = vmatprep.subr.bf16.mxu0 %v638
    %816 = vmatpush1.bf16.msra.mxu0 %v637
    %817 = vmatprep.subr.bf16.mxu0 0
    %818 = vmatpush2.bf16.msra.mxu0 0
    %819 = vmatprep.subr.bf16.mxu0 0
    %820 = vmatpush2.bf16.msra.mxu0 0
    %821 = vmatprep.subr.bf16.mxu0 0
    %822 = vmatpush2.bf16.msra.mxu0 0
    %823 = vmatprep.subr.bf16.mxu0 0
    %824 = vmatpush2.bf16.msra.mxu0 0
    %825 = vmatprep.subr.bf16.mxu0 0
    %826 = vmatpush2.bf16.msra.mxu0 0
    %827 = vmatprep.subr.bf16.mxu0 0
    %828 = vmatpush2.bf16.msra.mxu0 0
    %829 = vmatprep.subr.bf16.mxu0 0
    %830 = vmatpush2.bf16.msra.mxu0 0
    %831 = vmatprep.subr.bf16.mxu0 0
    %832 = vmatpush2.bf16.msra.mxu0 0
    %833 = vmatprep.mubr.bf16.mxu0 0
    %834 = vmatmul.mubr.bf16.gmra.mxu0 %v799
    %v835 = vpop.f32.mrf.mxu0
    %v836 = vadd.f32 %v300, %v835
    %v837 = vpop.f32.mrf.mxu0
    %v838 = vadd.f32 %v304, %v837
    %v839 = vpop.f32.mrf.mxu0
    %v840 = vpop.f32.mrf.mxu0
    %841 = vdwg.mxu0
    %842 = vmatprep.subr.bf16.mxu0 0
    %843 = vmatpush1.bf16.msra.mxu0 0
    %844 = vmatprep.subr.bf16.mxu0 0
    %845 = vmatpush1.bf16.msra.mxu0 0
    %846 = vmatprep.subr.bf16.mxu0 0
    %847 = vmatpush1.bf16.msra.mxu0 0
    %848 = vmatprep.subr.bf16.mxu0 0
    %849 = vmatpush1.bf16.msra.mxu0 0
    %850 = vmatprep.subr.bf16.mxu0 %v700
    %851 = vmatpush1.bf16.msra.mxu0 %v699
    %852 = vmatprep.subr.bf16.mxu0 %v680
    %853 = vmatpush1.bf16.msra.mxu0 %v679
    %854 = vmatprep.subr.bf16.mxu0 %v660
    %855 = vmatpush1.bf16.msra.mxu0 %v659
    %856 = vmatprep.subr.bf16.mxu0 %v640
    %857 = vmatpush1.bf16.msra.mxu0 %v639
    %858 = vmatprep.subr.bf16.mxu0 0
    %859 = vmatpush2.bf16.msra.mxu0 0
    %860 = vmatprep.subr.bf16.mxu0 0
    %861 = vmatpush2.bf16.msra.mxu0 0
    %862 = vmatprep.subr.bf16.mxu0 0
    %863 = vmatpush2.bf16.msra.mxu0 0
    %864 = vmatprep.subr.bf16.mxu0 0
    %865 = vmatpush2.bf16.msra.mxu0 0
    %866 = vmatprep.subr.bf16.mxu0 0
    %867 = vmatpush2.bf16.msra.mxu0 0
    %868 = vmatprep.subr.bf16.mxu0 0
    %869 = vmatpush2.bf16.msra.mxu0 0
    %870 = vmatprep.subr.bf16.mxu0 0
    %871 = vmatpush2.bf16.msra.mxu0 0
    %872 = vmatprep.subr.bf16.mxu0 0
    %873 = vmatpush2.bf16.msra.mxu0 0
    %874 = vmatprep.mubr.bf16.mxu0 0
    %875 = vmatmul.mubr.bf16.gmra.mxu0 %v799
    %v876 = vpop.f32.mrf.mxu0
    %v877 = vadd.f32 %v308, %v876
    %v878 = vpop.f32.mrf.mxu0
    %v879 = vadd.f32 %v312, %v878
    %v880 = vpop.f32.mrf.mxu0
    %v881 = vpop.f32.mrf.mxu0
    %882 = vdwg.mxu0
    %883 = vmatprep.subr.bf16.mxu0 0
    %884 = vmatpush1.bf16.msra.mxu0 0
    %885 = vmatprep.subr.bf16.mxu0 0
    %886 = vmatpush1.bf16.msra.mxu0 0
    %887 = vmatprep.subr.bf16.mxu0 0
    %888 = vmatpush1.bf16.msra.mxu0 0
    %889 = vmatprep.subr.bf16.mxu0 0
    %890 = vmatpush1.bf16.msra.mxu0 0
    %891 = vmatprep.subr.bf16.mxu0 %v702
    %892 = vmatpush1.bf16.msra.mxu0 %v701
    %893 = vmatprep.subr.bf16.mxu0 %v682
    %894 = vmatpush1.bf16.msra.mxu0 %v681
    %895 = vmatprep.subr.bf16.mxu0 %v662
    %896 = vmatpush1.bf16.msra.mxu0 %v661
    %897 = vmatprep.subr.bf16.mxu0 %v642
    %898 = vmatpush1.bf16.msra.mxu0 %v641
    %899 = vmatprep.subr.bf16.mxu0 0
    %900 = vmatpush2.bf16.msra.mxu0 0
    %901 = vmatprep.subr.bf16.mxu0 0
    %902 = vmatpush2.bf16.msra.mxu0 0
    %903 = vmatprep.subr.bf16.mxu0 0
    %904 = vmatpush2.bf16.msra.mxu0 0
    %905 = vmatprep.subr.bf16.mxu0 0
    %906 = vmatpush2.bf16.msra.mxu0 0
    %907 = vmatprep.subr.bf16.mxu0 0
    %908 = vmatpush2.bf16.msra.mxu0 0
    %909 = vmatprep.subr.bf16.mxu0 0
    %910 = vmatpush2.bf16.msra.mxu0 0
    %911 = vmatprep.subr.bf16.mxu0 0
    %912 = vmatpush2.bf16.msra.mxu0 0
    %913 = vmatprep.subr.bf16.mxu0 0
    %914 = vmatpush2.bf16.msra.mxu0 0
    %915 = vmatprep.mubr.bf16.mxu0 0
    %916 = vmatmul.mubr.bf16.gmra.mxu0 %v799
    %v917 = vpop.f32.mrf.mxu0
    %v918 = vadd.f32 %v316, %v917
    %v919 = vpop.f32.mrf.mxu0
    %v920 = vadd.f32 %v320, %v919
    %v921 = vpop.f32.mrf.mxu0
    %v922 = vpop.f32.mrf.mxu0
    %923 = vdwg.mxu0
    %924 = vmatprep.subr.bf16.mxu0 0
    %925 = vmatpush1.bf16.msra.mxu0 0
    %926 = vmatprep.subr.bf16.mxu0 0
    %927 = vmatpush1.bf16.msra.mxu0 0
    %928 = vmatprep.subr.bf16.mxu0 0
    %929 = vmatpush1.bf16.msra.mxu0 0
    %930 = vmatprep.subr.bf16.mxu0 0
    %931 = vmatpush1.bf16.msra.mxu0 0
    %932 = vmatprep.subr.bf16.mxu0 %v704
    %933 = vmatpush1.bf16.msra.mxu0 %v703
    %934 = vmatprep.subr.bf16.mxu0 %v684
    %935 = vmatpush1.bf16.msra.mxu0 %v683
    %936 = vmatprep.subr.bf16.mxu0 %v664
    %937 = vmatpush1.bf16.msra.mxu0 %v663
    %938 = vmatprep.subr.bf16.mxu0 %v644
    %939 = vmatpush1.bf16.msra.mxu0 %v643
    %940 = vmatprep.subr.bf16.mxu0 0
    %941 = vmatpush2.bf16.msra.mxu0 0
    %942 = vmatprep.subr.bf16.mxu0 0
    %943 = vmatpush2.bf16.msra.mxu0 0
    %944 = vmatprep.subr.bf16.mxu0 0
    %945 = vmatpush2.bf16.msra.mxu0 0
    %946 = vmatprep.subr.bf16.mxu0 0
    %947 = vmatpush2.bf16.msra.mxu0 0
    %948 = vmatprep.subr.bf16.mxu0 0
    %949 = vmatpush2.bf16.msra.mxu0 0
    %950 = vmatprep.subr.bf16.mxu0 0
    %951 = vmatpush2.bf16.msra.mxu0 0
    %952 = vmatprep.subr.bf16.mxu0 0
    %953 = vmatpush2.bf16.msra.mxu0 0
    %954 = vmatprep.subr.bf16.mxu0 0
    %955 = vmatpush2.bf16.msra.mxu0 0
    %956 = vmatprep.mubr.bf16.mxu0 0
    %957 = vmatmul.mubr.bf16.gmra.mxu0 %v799
    %v958 = vpop.f32.mrf.mxu0
    %v959 = vadd.f32 %v324, %v958
    %v960 = vpop.f32.mrf.mxu0
    %v961 = vadd.f32 %v328, %v960
    %v962 = vpop.f32.mrf.mxu0
    %v963 = vpop.f32.mrf.mxu0
    %964 = vdwg.mxu0
    %965 = vmatprep.subr.bf16.mxu0 0
    %966 = vmatpush1.bf16.msra.mxu0 0
    %967 = vmatprep.subr.bf16.mxu0 0
    %968 = vmatpush1.bf16.msra.mxu0 0
    %969 = vmatprep.subr.bf16.mxu0 0
    %970 = vmatpush1.bf16.msra.mxu0 0
    %971 = vmatprep.subr.bf16.mxu0 0
    %972 = vmatpush1.bf16.msra.mxu0 0
    %973 = vmatprep.subr.bf16.mxu0 %v706
    %974 = vmatpush1.bf16.msra.mxu0 %v705
    %975 = vmatprep.subr.bf16.mxu0 %v686
    %976 = vmatpush1.bf16.msra.mxu0 %v685
    %977 = vmatprep.subr.bf16.mxu0 %v666
    %978 = vmatpush1.bf16.msra.mxu0 %v665
    %979 = vmatprep.subr.bf16.mxu0 %v646
    %980 = vmatpush1.bf16.msra.mxu0 %v645
    %981 = vmatprep.subr.bf16.mxu0 0
    %982 = vmatpush2.bf16.msra.mxu0 0
    %983 = vmatprep.subr.bf16.mxu0 0
    %984 = vmatpush2.bf16.msra.mxu0 0
    %985 = vmatprep.subr.bf16.mxu0 0
    %986 = vmatpush2.bf16.msra.mxu0 0
    %987 = vmatprep.subr.bf16.mxu0 0
    %988 = vmatpush2.bf16.msra.mxu0 0
    %989 = vmatprep.subr.bf16.mxu0 0
    %990 = vmatpush2.bf16.msra.mxu0 0
    %991 = vmatprep.subr.bf16.mxu0 0
    %992 = vmatpush2.bf16.msra.mxu0 0
    %993 = vmatprep.subr.bf16.mxu0 0
    %994 = vmatpush2.bf16.msra.mxu0 0
    %995 = vmatprep.subr.bf16.mxu0 0
    %996 = vmatpush2.bf16.msra.mxu0 0
    %997 = vmatprep.mubr.bf16.mxu0 0
    %998 = vmatmul.mubr.bf16.gmra.mxu0 %v799
    %v999 = vpop.f32.mrf.mxu0
    %v1000 = vadd.f32 %v332, %v999
    %v1001 = vpop.f32.mrf.mxu0
    %v1002 = vadd.f32 %v336, %v1001
    %v1003 = vpop.f32.mrf.mxu0
    %v1004 = vpop.f32.mrf.mxu0
    %1005 = vdwg.mxu0
    %1006 = vmatprep.subr.bf16.mxu0 0
    %1007 = vmatpush1.bf16.msra.mxu0 0
    %1008 = vmatprep.subr.bf16.mxu0 0
    %1009 = vmatpush1.bf16.msra.mxu0 0
    %1010 = vmatprep.subr.bf16.mxu0 0
    %1011 = vmatpush1.bf16.msra.mxu0 0
    %1012 = vmatprep.subr.bf16.mxu0 0
    %1013 = vmatpush1.bf16.msra.mxu0 0
    %1014 = vmatprep.subr.bf16.mxu0 %v708
    %1015 = vmatpush1.bf16.msra.mxu0 %v707
    %1016 = vmatprep.subr.bf16.mxu0 %v688
    %1017 = vmatpush1.bf16.msra.mxu0 %v687
    %1018 = vmatprep.subr.bf16.mxu0 %v668
    %1019 = vmatpush1.bf16.msra.mxu0 %v667
    %1020 = vmatprep.subr.bf16.mxu0 %v648
    %1021 = vmatpush1.bf16.msra.mxu0 %v647
    %1022 = vmatprep.subr.bf16.mxu0 0
    %1023 = vmatpush2.bf16.msra.mxu0 0
    %1024 = vmatprep.subr.bf16.mxu0 0
    %1025 = vmatpush2.bf16.msra.mxu0 0
    %1026 = vmatprep.subr.bf16.mxu0 0
    %1027 = vmatpush2.bf16.msra.mxu0 0
    %1028 = vmatprep.subr.bf16.mxu0 0
    %1029 = vmatpush2.bf16.msra.mxu0 0
    %1030 = vmatprep.subr.bf16.mxu0 0
    %1031 = vmatpush2.bf16.msra.mxu0 0
    %1032 = vmatprep.subr.bf16.mxu0 0
    %1033 = vmatpush2.bf16.msra.mxu0 0
    %1034 = vmatprep.subr.bf16.mxu0 0
    %1035 = vmatpush2.bf16.msra.mxu0 0
    %1036 = vmatprep.subr.bf16.mxu0 0
    %1037 = vmatpush2.bf16.msra.mxu0 0
    %1038 = vmatprep.mubr.bf16.mxu0 0
    %1039 = vmatmul.mubr.bf16.gmra.mxu0 %v799
    %v1040 = vpop.f32.mrf.mxu0
    %v1041 = vadd.f32 %v340, %v1040
    %v1042 = vpop.f32.mrf.mxu0
    %v1043 = vadd.f32 %v344, %v1042
    %v1044 = vpop.f32.mrf.mxu0
    %v1045 = vpop.f32.mrf.mxu0
    %1046 = vdwg.mxu0
    %1047 = vmatprep.subr.bf16.mxu0 0
    %1048 = vmatpush1.bf16.msra.mxu0 0
    %1049 = vmatprep.subr.bf16.mxu0 0
    %1050 = vmatpush1.bf16.msra.mxu0 0
    %1051 = vmatprep.subr.bf16.mxu0 0
    %1052 = vmatpush1.bf16.msra.mxu0 0
    %1053 = vmatprep.subr.bf16.mxu0 0
    %1054 = vmatpush1.bf16.msra.mxu0 0
    %1055 = vmatprep.subr.bf16.mxu0 %v710
    %1056 = vmatpush1.bf16.msra.mxu0 %v709
    %1057 = vmatprep.subr.bf16.mxu0 %v690
    %1058 = vmatpush1.bf16.msra.mxu0 %v689
    %1059 = vmatprep.subr.bf16.mxu0 %v670
    %1060 = vmatpush1.bf16.msra.mxu0 %v669
    %1061 = vmatprep.subr.bf16.mxu0 %v650
    %1062 = vmatpush1.bf16.msra.mxu0 %v649
    %1063 = vmatprep.subr.bf16.mxu0 0
    %1064 = vmatpush2.bf16.msra.mxu0 0
    %1065 = vmatprep.subr.bf16.mxu0 0
    %1066 = vmatpush2.bf16.msra.mxu0 0
    %1067 = vmatprep.subr.bf16.mxu0 0
    %1068 = vmatpush2.bf16.msra.mxu0 0
    %1069 = vmatprep.subr.bf16.mxu0 0
    %1070 = vmatpush2.bf16.msra.mxu0 0
    %1071 = vmatprep.subr.bf16.mxu0 0
    %1072 = vmatpush2.bf16.msra.mxu0 0
    %1073 = vmatprep.subr.bf16.mxu0 0
    %1074 = vmatpush2.bf16.msra.mxu0 0
    %1075 = vmatprep.subr.bf16.mxu0 0
    %1076 = vmatpush2.bf16.msra.mxu0 0
    %1077 = vmatprep.subr.bf16.mxu0 0
    %1078 = vmatpush2.bf16.msra.mxu0 0
    %1079 = vmatprep.mubr.bf16.mxu0 0
    %1080 = vmatmul.mubr.bf16.gmra.mxu0 %v799
    %v1081 = vpop.f32.mrf.mxu0
    %v1082 = vadd.f32 %v348, %v1081
    %v1083 = vpop.f32.mrf.mxu0
    %v1084 = vadd.f32 %v352, %v1083
    %v1085 = vpop.f32.mrf.mxu0
    %v1086 = vpop.f32.mrf.mxu0
    %1087 = vdwg.mxu0
    %1088 = vmatprep.subr.bf16.mxu0 0
    %1089 = vmatpush1.bf16.msra.mxu0 0
    %1090 = vmatprep.subr.bf16.mxu0 0
    %1091 = vmatpush1.bf16.msra.mxu0 0
    %1092 = vmatprep.subr.bf16.mxu0 0
    %1093 = vmatpush1.bf16.msra.mxu0 0
    %1094 = vmatprep.subr.bf16.mxu0 0
    %1095 = vmatpush1.bf16.msra.mxu0 0
    %1096 = vmatprep.subr.bf16.mxu0 %v712
    %1097 = vmatpush1.bf16.msra.mxu0 %v711
    %1098 = vmatprep.subr.bf16.mxu0 %v692
    %1099 = vmatpush1.bf16.msra.mxu0 %v691
    %1100 = vmatprep.subr.bf16.mxu0 %v672
    %1101 = vmatpush1.bf16.msra.mxu0 %v671
    %1102 = vmatprep.subr.bf16.mxu0 %v652
    %1103 = vmatpush1.bf16.msra.mxu0 %v651
    %1104 = vmatprep.subr.bf16.mxu0 0
    %1105 = vmatpush2.bf16.msra.mxu0 0
    %1106 = vmatprep.subr.bf16.mxu0 0
    %1107 = vmatpush2.bf16.msra.mxu0 0
    %1108 = vmatprep.subr.bf16.mxu0 0
    %1109 = vmatpush2.bf16.msra.mxu0 0
    %1110 = vmatprep.subr.bf16.mxu0 0
    %1111 = vmatpush2.bf16.msra.mxu0 0
    %1112 = vmatprep.subr.bf16.mxu0 0
    %1113 = vmatpush2.bf16.msra.mxu0 0
    %1114 = vmatprep.subr.bf16.mxu0 0
    %1115 = vmatpush2.bf16.msra.mxu0 0
    %1116 = vmatprep.subr.bf16.mxu0 0
    %1117 = vmatpush2.bf16.msra.mxu0 0
    %1118 = vmatprep.subr.bf16.mxu0 0
    %1119 = vmatpush2.bf16.msra.mxu0 0
    %1120 = vmatprep.mubr.bf16.mxu0 0
    %1121 = vmatmul.mubr.bf16.gmra.mxu0 %v799
    %v1122 = vpop.f32.mrf.mxu0
    %v1123 = vadd.f32 %v356, %v1122
    %v1124 = vpop.f32.mrf.mxu0
    %v1125 = vadd.f32 %v360, %v1124
    %v1126 = vpop.f32.mrf.mxu0
    %v1127 = vpop.f32.mrf.mxu0
    %1128 = vdwg.mxu0
    %1129 = vmatprep.subr.bf16.mxu0 0
    %1130 = vmatpush1.bf16.msra.mxu0 0
    %1131 = vmatprep.subr.bf16.mxu0 0
    %1132 = vmatpush1.bf16.msra.mxu0 0
    %1133 = vmatprep.subr.bf16.mxu0 0
    %1134 = vmatpush1.bf16.msra.mxu0 0
    %1135 = vmatprep.subr.bf16.mxu0 0
    %1136 = vmatpush1.bf16.msra.mxu0 0
    %1137 = vmatprep.subr.bf16.mxu0 %v714
    %1138 = vmatpush1.bf16.msra.mxu0 %v713
    %1139 = vmatprep.subr.bf16.mxu0 %v694
    %1140 = vmatpush1.bf16.msra.mxu0 %v693
    %1141 = vmatprep.subr.bf16.mxu0 %v674
    %1142 = vmatpush1.bf16.msra.mxu0 %v673
    %1143 = vmatprep.subr.bf16.mxu0 %v654
    %1144 = vmatpush1.bf16.msra.mxu0 %v653
    %1145 = vmatprep.subr.bf16.mxu0 0
    %1146 = vmatpush2.bf16.msra.mxu0 0
    %1147 = vmatprep.subr.bf16.mxu0 0
    %1148 = vmatpush2.bf16.msra.mxu0 0
    %1149 = vmatprep.subr.bf16.mxu0 0
    %1150 = vmatpush2.bf16.msra.mxu0 0
    %1151 = vmatprep.subr.bf16.mxu0 0
    %1152 = vmatpush2.bf16.msra.mxu0 0
    %1153 = vmatprep.subr.bf16.mxu0 0
    %1154 = vmatpush2.bf16.msra.mxu0 0
    %1155 = vmatprep.subr.bf16.mxu0 0
    %1156 = vmatpush2.bf16.msra.mxu0 0
    %1157 = vmatprep.subr.bf16.mxu0 0
    %1158 = vmatpush2.bf16.msra.mxu0 0
    %1159 = vmatprep.subr.bf16.mxu0 0
    %1160 = vmatpush2.bf16.msra.mxu0 0
    %1161 = vmatprep.mubr.bf16.mxu0 0
    %1162 = vmatmul.mubr.bf16.gmra.mxu0 %v799
    %v1163 = vpop.f32.mrf.mxu0
    %v1164 = vadd.f32 %v364, %v1163
    %v1165 = vpop.f32.mrf.mxu0
    %v1166 = vadd.f32 %v368, %v1165
    %v1167 = vpop.f32.mrf.mxu0
    %v1168 = vpop.f32.mrf.mxu0
    %1169 = vdwg.mxu0
    %1170 = vmatprep.subr.bf16.mxu0 0
    %1171 = vmatpush1.bf16.msra.mxu0 0
    %1172 = vmatprep.subr.bf16.mxu0 0
    %1173 = vmatpush1.bf16.msra.mxu0 0
    %1174 = vmatprep.subr.bf16.mxu0 0
    %1175 = vmatpush1.bf16.msra.mxu0 0
    %1176 = vmatprep.subr.bf16.mxu0 0
    %1177 = vmatpush1.bf16.msra.mxu0 0
    %1178 = vmatprep.subr.bf16.mxu0 %v716
    %1179 = vmatpush1.bf16.msra.mxu0 %v715
    %1180 = vmatprep.subr.bf16.mxu0 %v696
    %1181 = vmatpush1.bf16.msra.mxu0 %v695
    %1182 = vmatprep.subr.bf16.mxu0 %v676
    %1183 = vmatpush1.bf16.msra.mxu0 %v675
    %1184 = vmatprep.subr.bf16.mxu0 %v656
    %1185 = vmatpush1.bf16.msra.mxu0 %v655
    %1186 = vmatprep.subr.bf16.mxu0 0
    %1187 = vmatpush2.bf16.msra.mxu0 0
    %1188 = vmatprep.subr.bf16.mxu0 0
    %1189 = vmatpush2.bf16.msra.mxu0 0
    %1190 = vmatprep.subr.bf16.mxu0 0
    %1191 = vmatpush2.bf16.msra.mxu0 0
    %1192 = vmatprep.subr.bf16.mxu0 0
    %1193 = vmatpush2.bf16.msra.mxu0 0
    %1194 = vmatprep.subr.bf16.mxu0 0
    %1195 = vmatpush2.bf16.msra.mxu0 0
    %1196 = vmatprep.subr.bf16.mxu0 0
    %1197 = vmatpush2.bf16.msra.mxu0 0
    %1198 = vmatprep.subr.bf16.mxu0 0
    %1199 = vmatpush2.bf16.msra.mxu0 0
    %1200 = vmatprep.subr.bf16.mxu0 0
    %1201 = vmatpush2.bf16.msra.mxu0 0
    %1202 = vmatprep.mubr.bf16.mxu0 0
    %1203 = vmatmul.mubr.bf16.gmra.mxu0 %v799
    %v1204 = vpop.f32.mrf.mxu0
    %v1205 = vadd.f32 %v372, %v1204
    %v1206 = vpop.f32.mrf.mxu0
    %v1207 = vadd.f32 %v376, %v1206
    %v1208 = vpop.f32.mrf.mxu0
    %v1209 = vpop.f32.mrf.mxu0
    %1210 = vdwg.mxu0
    %s1211 = sld [smem:[#allocation23]]
    %vm1212 = vcmp.ge.f32.partialorder %v836, 0.0
    %vm1213 = vcmp.ge.f32.partialorder %v838, 0.0
    %vm1214 = vcmp.ge.f32.partialorder %v877, 0.0
    %vm1215 = vcmp.ge.f32.partialorder %v879, 0.0
    %vm1216 = vcmp.ge.f32.partialorder %v918, 0.0
    %vm1217 = vcmp.ge.f32.partialorder %v920, 0.0
    %vm1218 = vcmp.ge.f32.partialorder %v959, 0.0
    %vm1219 = vcmp.ge.f32.partialorder %v961, 0.0
    %vm1220 = vcmp.ge.f32.partialorder %v1000, 0.0
    %vm1221 = vcmp.ge.f32.partialorder %v1002, 0.0
    %vm1222 = vcmp.ge.f32.partialorder %v1041, 0.0
    %vm1223 = vcmp.ge.f32.partialorder %v1043, 0.0
    %vm1224 = vcmp.ge.f32.partialorder %v1082, 0.0
    %vm1225 = vcmp.ge.f32.partialorder %v1084, 0.0
    %vm1226 = vcmp.ge.f32.partialorder %v1123, 0.0
    %vm1227 = vcmp.ge.f32.partialorder %v1125, 0.0
    %vm1228 = vcmp.ge.f32.partialorder %v1164, 0.0
    %vm1229 = vcmp.ge.f32.partialorder %v1166, 0.0
    %vm1230 = vcmp.ge.f32.partialorder %v1205, 0.0
    %vm1231 = vcmp.ge.f32.partialorder %v1207, 0.0
    %v1232 = vstv %s1211
    %v1233 = vmul.f32 %v1232, %v836
    %v1234 = vmul.f32 %v1232, %v838
    %v1235 = vmul.f32 %v1232, %v877
    %v1236 = vmul.f32 %v1232, %v879
    %v1237 = vmul.f32 %v1232, %v918
    %v1238 = vmul.f32 %v1232, %v920
    %v1239 = vmul.f32 %v1232, %v959
    %v1240 = vmul.f32 %v1232, %v961
    %v1241 = vmul.f32 %v1232, %v1000
    %v1242 = vmul.f32 %v1232, %v1002
    %v1243 = vmul.f32 %v1232, %v1041
    %v1244 = vmul.f32 %v1232, %v1043
    %v1245 = vmul.f32 %v1232, %v1082
    %v1246 = vmul.f32 %v1232, %v1084
    %v1247 = vmul.f32 %v1232, %v1123
    %v1248 = vmul.f32 %v1232, %v1125
    %v1249 = vmul.f32 %v1232, %v1164
    %v1250 = vmul.f32 %v1232, %v1166
    %v1251 = vmul.f32 %v1232, %v1205
    %v1252 = vmul.f32 %v1232, %v1207
    %v1253 = vsel %vm1212, %v836, %v1233
    %v1254 = vsel %vm1213, %v838, %v1234
    %v1255 = vsel %vm1214, %v877, %v1235
    %v1256 = vsel %vm1215, %v879, %v1236
    %v1257 = vsel %vm1216, %v918, %v1237
    %v1258 = vsel %vm1217, %v920, %v1238
    %v1259 = vsel %vm1218, %v959, %v1239
    %v1260 = vsel %vm1219, %v961, %v1240
    %v1261 = vsel %vm1220, %v1000, %v1241
    %v1262 = vsel %vm1221, %v1002, %v1242
    %v1263 = vsel %vm1222, %v1041, %v1243
    %v1264 = vsel %vm1223, %v1043, %v1244
    %v1265 = vsel %vm1224, %v1082, %v1245
    %v1266 = vsel %vm1225, %v1084, %v1246
    %v1267 = vsel %vm1226, %v1123, %v1247
    %v1268 = vsel %vm1227, %v1125, %v1248
    %v1269 = vsel %vm1228, %v1164, %v1249
    %v1270 = vsel %vm1229, %v1166, %v1250
    %v1271 = vsel %vm1230, %v1205, %v1251
    %v1272 = vsel %vm1231, %v1207, %v1252
    %v1273 = vpack.c.bf16 %v1253, %v1253
    %v1274 = vpack.c.bf16 %v1254, %v1254
    %v1275 = vpack.c.bf16 %v1255, %v1255
    %v1276 = vpack.c.bf16 %v1256, %v1256
    %v1277 = vpack.c.bf16 %v1257, %v1257
    %v1278 = vpack.c.bf16 %v1258, %v1258
    %v1279 = vpack.c.bf16 %v1259, %v1259
    %v1280 = vpack.c.bf16 %v1260, %v1260
    %v1281 = vpack.c.bf16 %v1261, %v1261
    %v1282 = vpack.c.bf16 %v1262, %v1262
    %v1283 = vpack.c.bf16 %v1263, %v1263
    %v1284 = vpack.c.bf16 %v1264, %v1264
    %v1285 = vpack.c.bf16 %v1265, %v1265
    %v1286 = vpack.c.bf16 %v1266, %v1266
    %v1287 = vpack.c.bf16 %v1267, %v1267
    %v1288 = vpack.c.bf16 %v1268, %v1268
    %v1289 = vpack.c.bf16 %v1269, %v1269
    %v1290 = vpack.c.bf16 %v1270, %v1270
    %v1291 = vpack.c.bf16 %v1271, %v1271
    %v1292 = vpack.c.bf16 %v1272, %v1272
    %v1293 = vld [vmem:[#allocation9] sm:$0xff]
    %v1294 = vld [vmem:[#allocation9 + $0x8] sm:$0xff]
    %v1295 = vld [vmem:[#allocation9 + $0x10] sm:$0xff]
    %v1296 = vld [vmem:[#allocation9 + $0x18] sm:$0xff]
    %v1297 = vld [vmem:[#allocation9 + $0x20] sm:$0xff]
    %v1298 = vld [vmem:[#allocation9 + $0x28] sm:$0xff]
    %v1299 = vld [vmem:[#allocation9 + $0x30] sm:$0xff]
    %v1300 = vld [vmem:[#allocation9 + $0x38] sm:$0xff]
    %v1301 = vld [vmem:[#allocation9 + $0x40] sm:$0xff]
    %v1302 = vld [vmem:[#allocation9 + $0x48] sm:$0xff]
    %v1303 = vld [vmem:[#allocation9 + $0x50] sm:$0xff]
    %v1304 = vld [vmem:[#allocation9 + $0x58] sm:$0xff]
    %v1305 = vld [vmem:[#allocation9 + $0x60] sm:$0xff]
    %v1306 = vld [vmem:[#allocation9 + $0x68] sm:$0xff]
    %v1307 = vld [vmem:[#allocation9 + $0x70] sm:$0xff]
    %v1308 = vld [vmem:[#allocation9 + $0x78] sm:$0xff]
    %v1309 = vld [vmem:[#allocation9 + $0x80] sm:$0xff]
    %v1310 = vld [vmem:[#allocation9 + $0x88] sm:$0xff]
    %v1311 = vld [vmem:[#allocation9 + $0x90] sm:$0xff]
    %v1312 = vld [vmem:[#allocation9 + $0x98] sm:$0xff]
    %v1313 = vld [vmem:[#allocation9 + $0xa0] sm:$0xff]
    %v1314 = vld [vmem:[#allocation9 + $0xa8] sm:$0xff]
    %v1315 = vld [vmem:[#allocation9 + $0xb0] sm:$0xff]
    %v1316 = vld [vmem:[#allocation9 + $0xb8] sm:$0xff]
    %v1317 = vld [vmem:[#allocation9 + $0xc0] sm:$0xff]
    %v1318 = vld [vmem:[#allocation9 + $0xc8] sm:$0xff]
    %v1319 = vld [vmem:[#allocation9 + $0xd0] sm:$0xff]
    %v1320 = vld [vmem:[#allocation9 + $0xd8] sm:$0xff]
    %v1321 = vld [vmem:[#allocation9 + $0xe0] sm:$0xff]
    %v1322 = vld [vmem:[#allocation9 + $0xe8] sm:$0xff]
    %v1323 = vld [vmem:[#allocation9 + $0xf0] sm:$0xff]
    %v1324 = vld [vmem:[#allocation9 + $0xf8] sm:$0xff]
    %v1325 = vld [vmem:[#allocation9 + $0x100] sm:$0xff]
    %v1326 = vld [vmem:[#allocation9 + $0x108] sm:$0xff]
    %v1327 = vld [vmem:[#allocation9 + $0x110] sm:$0xff]
    %v1328 = vld [vmem:[#allocation9 + $0x118] sm:$0xff]
    %v1329 = vld [vmem:[#allocation9 + $0x120] sm:$0xff]
    %v1330 = vld [vmem:[#allocation9 + $0x128] sm:$0xff]
    %v1331 = vld [vmem:[#allocation9 + $0x130] sm:$0xff]
    %v1332 = vld [vmem:[#allocation9 + $0x138] sm:$0xff]
    %v1333 = vld [vmem:[#allocation9 + $0x140] sm:$0xff]
    %v1334 = vld [vmem:[#allocation9 + $0x148] sm:$0xff]
    %v1335 = vld [vmem:[#allocation9 + $0x150] sm:$0xff]
    %v1336 = vld [vmem:[#allocation9 + $0x158] sm:$0xff]
    %v1337 = vld [vmem:[#allocation9 + $0x160] sm:$0xff]
    %v1338 = vld [vmem:[#allocation9 + $0x168] sm:$0xff]
    %v1339 = vld [vmem:[#allocation9 + $0x170] sm:$0xff]
    %v1340 = vld [vmem:[#allocation9 + $0x178] sm:$0xff]
    %v1341 = vld [vmem:[#allocation9 + $0x180] sm:$0xff]
    %v1342 = vld [vmem:[#allocation9 + $0x188] sm:$0xff]
    %v1343 = vld [vmem:[#allocation9 + $0x190] sm:$0xff]
    %v1344 = vld [vmem:[#allocation9 + $0x198] sm:$0xff]
    %v1345 = vld [vmem:[#allocation9 + $0x1a0] sm:$0xff]
    %v1346 = vld [vmem:[#allocation9 + $0x1a8] sm:$0xff]
    %v1347 = vld [vmem:[#allocation9 + $0x1b0] sm:$0xff]
    %v1348 = vld [vmem:[#allocation9 + $0x1b8] sm:$0xff]
    %v1349 = vld [vmem:[#allocation9 + $0x1c0] sm:$0xff]
    %v1350 = vld [vmem:[#allocation9 + $0x1c8] sm:$0xff]
    %v1351 = vld [vmem:[#allocation9 + $0x1d0] sm:$0xff]
    %v1352 = vld [vmem:[#allocation9 + $0x1d8] sm:$0xff]
    %v1353 = vld [vmem:[#allocation9 + $0x1e0] sm:$0xff]
    %v1354 = vld [vmem:[#allocation9 + $0x1e8] sm:$0xff]
    %v1355 = vld [vmem:[#allocation9 + $0x1f0] sm:$0xff]
    %v1356 = vld [vmem:[#allocation9 + $0x1f8] sm:$0xff]
    %v1357 = vld [vmem:[#allocation9 + $0x200] sm:$0xff]
    %v1358 = vld [vmem:[#allocation9 + $0x208] sm:$0xff]
    %v1359 = vld [vmem:[#allocation9 + $0x210] sm:$0xff]
    %v1360 = vld [vmem:[#allocation9 + $0x218] sm:$0xff]
    %v1361 = vld [vmem:[#allocation9 + $0x220] sm:$0xff]
    %v1362 = vld [vmem:[#allocation9 + $0x228] sm:$0xff]
    %v1363 = vld [vmem:[#allocation9 + $0x230] sm:$0xff]
    %v1364 = vld [vmem:[#allocation9 + $0x238] sm:$0xff]
    %v1365 = vld [vmem:[#allocation9 + $0x240] sm:$0xff]
    %v1366 = vld [vmem:[#allocation9 + $0x248] sm:$0xff]
    %v1367 = vld [vmem:[#allocation9 + $0x250] sm:$0xff]
    %v1368 = vld [vmem:[#allocation9 + $0x258] sm:$0xff]
    %v1369 = vld [vmem:[#allocation9 + $0x260] sm:$0xff]
    %v1370 = vld [vmem:[#allocation9 + $0x268] sm:$0xff]
    %v1371 = vld [vmem:[#allocation9 + $0x270] sm:$0xff]
    %v1372 = vld [vmem:[#allocation9 + $0x278] sm:$0xff]
    %v1373 = vld [vmem:[#allocation9 + $0x280] sm:$0xff]
    %v1374 = vld [vmem:[#allocation9 + $0x288] sm:$0xff]
    %v1375 = vld [vmem:[#allocation9 + $0x290] sm:$0xff]
    %v1376 = vld [vmem:[#allocation9 + $0x298] sm:$0xff]
    %v1377 = vld [vmem:[#allocation9 + $0x2a0] sm:$0xff]
    %v1378 = vld [vmem:[#allocation9 + $0x2a8] sm:$0xff]
    %v1379 = vld [vmem:[#allocation9 + $0x2b0] sm:$0xff]
    %v1380 = vld [vmem:[#allocation9 + $0x2b8] sm:$0xff]
    %v1381 = vld [vmem:[#allocation9 + $0x2c0] sm:$0xff]
    %v1382 = vld [vmem:[#allocation9 + $0x2c8] sm:$0xff]
    %v1383 = vld [vmem:[#allocation9 + $0x2d0] sm:$0xff]
    %v1384 = vld [vmem:[#allocation9 + $0x2d8] sm:$0xff]
    %v1385 = vld [vmem:[#allocation9 + $0x2e0] sm:$0xff]
    %v1386 = vld [vmem:[#allocation9 + $0x2e8] sm:$0xff]
    %v1387 = vld [vmem:[#allocation9 + $0x2f0] sm:$0xff]
    %v1388 = vld [vmem:[#allocation9 + $0x2f8] sm:$0xff]
    %v1389 = vld [vmem:[#allocation9 + $0x300] sm:$0xff]
    %v1390 = vld [vmem:[#allocation9 + $0x308] sm:$0xff]
    %v1391 = vld [vmem:[#allocation9 + $0x310] sm:$0xff]
    %v1392 = vld [vmem:[#allocation9 + $0x318] sm:$0xff]
    %v1393 = vld [vmem:[#allocation9 + $0x320] sm:$0xff]
    %v1394 = vld [vmem:[#allocation9 + $0x328] sm:$0xff]
    %v1395 = vld [vmem:[#allocation9 + $0x330] sm:$0xff]
    %v1396 = vld [vmem:[#allocation9 + $0x338] sm:$0xff]
    %v1397 = vld [vmem:[#allocation9 + $0x340] sm:$0xff]
    %v1398 = vld [vmem:[#allocation9 + $0x348] sm:$0xff]
    %v1399 = vld [vmem:[#allocation9 + $0x350] sm:$0xff]
    %v1400 = vld [vmem:[#allocation9 + $0x358] sm:$0xff]
    %v1401 = vld [vmem:[#allocation9 + $0x360] sm:$0xff]
    %v1402 = vld [vmem:[#allocation9 + $0x368] sm:$0xff]
    %v1403 = vld [vmem:[#allocation9 + $0x370] sm:$0xff]
    %v1404 = vld [vmem:[#allocation9 + $0x378] sm:$0xff]
    %v1405 = vld [vmem:[#allocation9 + $0x380] sm:$0xff]
    %v1406 = vld [vmem:[#allocation9 + $0x388] sm:$0xff]
    %v1407 = vld [vmem:[#allocation9 + $0x390] sm:$0xff]
    %v1408 = vld [vmem:[#allocation9 + $0x398] sm:$0xff]
    %v1409 = vld [vmem:[#allocation9 + $0x3a0] sm:$0xff]
    %v1410 = vld [vmem:[#allocation9 + $0x3a8] sm:$0xff]
    %v1411 = vld [vmem:[#allocation9 + $0x3b0] sm:$0xff]
    %v1412 = vld [vmem:[#allocation9 + $0x3b8] sm:$0xff]
    %v1413 = vld [vmem:[#allocation9 + $0x3c0] sm:$0xff]
    %v1414 = vld [vmem:[#allocation9 + $0x3c8] sm:$0xff]
    %v1415 = vld [vmem:[#allocation9 + $0x3d0] sm:$0xff]
    %v1416 = vld [vmem:[#allocation9 + $0x3d8] sm:$0xff]
    %v1417 = vld [vmem:[#allocation9 + $0x3e0] sm:$0xff]
    %v1418 = vld [vmem:[#allocation9 + $0x3e8] sm:$0xff]
    %v1419 = vld [vmem:[#allocation9 + $0x3f0] sm:$0xff]
    %v1420 = vld [vmem:[#allocation9 + $0x3f8] sm:$0xff]
    %v1421 = vld [vmem:[#allocation9 + $0x400] sm:$0xff]
    %v1422 = vld [vmem:[#allocation9 + $0x408] sm:$0xff]
    %v1423 = vld [vmem:[#allocation9 + $0x410] sm:$0xff]
    %v1424 = vld [vmem:[#allocation9 + $0x418] sm:$0xff]
    %v1425 = vld [vmem:[#allocation9 + $0x420] sm:$0xff]
    %v1426 = vld [vmem:[#allocation9 + $0x428] sm:$0xff]
    %v1427 = vld [vmem:[#allocation9 + $0x430] sm:$0xff]
    %v1428 = vld [vmem:[#allocation9 + $0x438] sm:$0xff]
    %v1429 = vld [vmem:[#allocation9 + $0x440] sm:$0xff]
    %v1430 = vld [vmem:[#allocation9 + $0x448] sm:$0xff]
    %v1431 = vld [vmem:[#allocation9 + $0x450] sm:$0xff]
    %v1432 = vld [vmem:[#allocation9 + $0x458] sm:$0xff]
    %v1433 = vld [vmem:[#allocation9 + $0x460] sm:$0xff]
    %v1434 = vld [vmem:[#allocation9 + $0x468] sm:$0xff]
    %v1435 = vld [vmem:[#allocation9 + $0x470] sm:$0xff]
    %v1436 = vld [vmem:[#allocation9 + $0x478] sm:$0xff]
    %v1437 = vld [vmem:[#allocation9 + $0x480] sm:$0xff]
    %v1438 = vld [vmem:[#allocation9 + $0x488] sm:$0xff]
    %v1439 = vld [vmem:[#allocation9 + $0x490] sm:$0xff]
    %v1440 = vld [vmem:[#allocation9 + $0x498] sm:$0xff]
    %v1441 = vld [vmem:[#allocation9 + $0x4a0] sm:$0xff]
    %v1442 = vld [vmem:[#allocation9 + $0x4a8] sm:$0xff]
    %v1443 = vld [vmem:[#allocation9 + $0x4b0] sm:$0xff]
    %v1444 = vld [vmem:[#allocation9 + $0x4b8] sm:$0xff]
    %v1445 = vld [vmem:[#allocation9 + $0x4c0] sm:$0xff]
    %v1446 = vld [vmem:[#allocation9 + $0x4c8] sm:$0xff]
    %v1447 = vld [vmem:[#allocation9 + $0x4d0] sm:$0xff]
    %v1448 = vld [vmem:[#allocation9 + $0x4d8] sm:$0xff]
    %v1449 = vld [vmem:[#allocation9 + $0x4e0] sm:$0xff]
    %v1450 = vld [vmem:[#allocation9 + $0x4e8] sm:$0xff]
    %v1451 = vld [vmem:[#allocation9 + $0x4f0] sm:$0xff]
    %v1452 = vld [vmem:[#allocation9 + $0x4f8] sm:$0xff]
    %v1453 = vld [vmem:[#allocation9 + $0x500] sm:$0xff]
    %v1454 = vld [vmem:[#allocation9 + $0x508] sm:$0xff]
    %v1455 = vld [vmem:[#allocation9 + $0x510] sm:$0xff]
    %v1456 = vld [vmem:[#allocation9 + $0x518] sm:$0xff]
    %v1457 = vld [vmem:[#allocation9 + $0x520] sm:$0xff]
    %v1458 = vld [vmem:[#allocation9 + $0x528] sm:$0xff]
    %v1459 = vld [vmem:[#allocation9 + $0x530] sm:$0xff]
    %v1460 = vld [vmem:[#allocation9 + $0x538] sm:$0xff]
    %v1461 = vld [vmem:[#allocation9 + $0x540] sm:$0xff]
    %v1462 = vld [vmem:[#allocation9 + $0x548] sm:$0xff]
    %v1463 = vld [vmem:[#allocation9 + $0x550] sm:$0xff]
    %v1464 = vld [vmem:[#allocation9 + $0x558] sm:$0xff]
    %v1465 = vld [vmem:[#allocation9 + $0x560] sm:$0xff]
    %v1466 = vld [vmem:[#allocation9 + $0x568] sm:$0xff]
    %v1467 = vld [vmem:[#allocation9 + $0x570] sm:$0xff]
    %v1468 = vld [vmem:[#allocation9 + $0x578] sm:$0xff]
    %v1469 = vld [vmem:[#allocation9 + $0x580] sm:$0xff]
    %v1470 = vld [vmem:[#allocation9 + $0x588] sm:$0xff]
    %v1471 = vld [vmem:[#allocation9 + $0x590] sm:$0xff]
    %v1472 = vld [vmem:[#allocation9 + $0x598] sm:$0xff]
    %v1473 = vld [vmem:[#allocation9 + $0x5a0] sm:$0xff]
    %v1474 = vld [vmem:[#allocation9 + $0x5a8] sm:$0xff]
    %v1475 = vld [vmem:[#allocation9 + $0x5b0] sm:$0xff]
    %v1476 = vld [vmem:[#allocation9 + $0x5b8] sm:$0xff]
    %v1477 = vld [vmem:[#allocation9 + $0x5c0] sm:$0xff]
    %v1478 = vld [vmem:[#allocation9 + $0x5c8] sm:$0xff]
    %v1479 = vld [vmem:[#allocation9 + $0x5d0] sm:$0xff]
    %v1480 = vld [vmem:[#allocation9 + $0x5d8] sm:$0xff]
    %v1481 = vld [vmem:[#allocation9 + $0x5e0] sm:$0xff]
    %v1482 = vld [vmem:[#allocation9 + $0x5e8] sm:$0xff]
    %v1483 = vld [vmem:[#allocation9 + $0x5f0] sm:$0xff]
    %v1484 = vld [vmem:[#allocation9 + $0x5f8] sm:$0xff]
    %v1485 = vld [vmem:[#allocation9 + $0x600] sm:$0xff]
    %v1486 = vld [vmem:[#allocation9 + $0x608] sm:$0xff]
    %v1487 = vld [vmem:[#allocation9 + $0x610] sm:$0xff]
    %v1488 = vld [vmem:[#allocation9 + $0x618] sm:$0xff]
    %v1489 = vld [vmem:[#allocation9 + $0x620] sm:$0xff]
    %v1490 = vld [vmem:[#allocation9 + $0x628] sm:$0xff]
    %v1491 = vld [vmem:[#allocation9 + $0x630] sm:$0xff]
    %v1492 = vld [vmem:[#allocation9 + $0x638] sm:$0xff]
    %v1493 = vld [vmem:[#allocation9 + $0x640] sm:$0xff]
    %v1494 = vld [vmem:[#allocation9 + $0x648] sm:$0xff]
    %v1495 = vld [vmem:[#allocation9 + $0x650] sm:$0xff]
    %v1496 = vld [vmem:[#allocation9 + $0x658] sm:$0xff]
    %v1497 = vld [vmem:[#allocation9 + $0x660] sm:$0xff]
    %v1498 = vld [vmem:[#allocation9 + $0x668] sm:$0xff]
    %v1499 = vld [vmem:[#allocation9 + $0x670] sm:$0xff]
    %v1500 = vld [vmem:[#allocation9 + $0x678] sm:$0xff]
    %v1501 = vld [vmem:[#allocation9 + $0x680] sm:$0xff]
    %v1502 = vld [vmem:[#allocation9 + $0x688] sm:$0xff]
    %v1503 = vld [vmem:[#allocation9 + $0x690] sm:$0xff]
    %v1504 = vld [vmem:[#allocation9 + $0x698] sm:$0xff]
    %v1505 = vld [vmem:[#allocation9 + $0x6a0] sm:$0xff]
    %v1506 = vld [vmem:[#allocation9 + $0x6a8] sm:$0xff]
    %v1507 = vld [vmem:[#allocation9 + $0x6b0] sm:$0xff]
    %v1508 = vld [vmem:[#allocation9 + $0x6b8] sm:$0xff]
    %v1509 = vld [vmem:[#allocation9 + $0x6c0] sm:$0xff]
    %v1510 = vld [vmem:[#allocation9 + $0x6c8] sm:$0xff]
    %v1511 = vld [vmem:[#allocation9 + $0x6d0] sm:$0xff]
    %v1512 = vld [vmem:[#allocation9 + $0x6d8] sm:$0xff]
    %v1513 = vld [vmem:[#allocation9 + $0x6e0] sm:$0xff]
    %v1514 = vld [vmem:[#allocation9 + $0x6e8] sm:$0xff]
    %v1515 = vld [vmem:[#allocation9 + $0x6f0] sm:$0xff]
    %v1516 = vld [vmem:[#allocation9 + $0x6f8] sm:$0xff]
    %v1517 = vld [vmem:[#allocation9 + $0x700] sm:$0xff]
    %v1518 = vld [vmem:[#allocation9 + $0x708] sm:$0xff]
    %v1519 = vld [vmem:[#allocation9 + $0x710] sm:$0xff]
    %v1520 = vld [vmem:[#allocation9 + $0x718] sm:$0xff]
    %v1521 = vld [vmem:[#allocation9 + $0x720] sm:$0xff]
    %v1522 = vld [vmem:[#allocation9 + $0x728] sm:$0xff]
    %v1523 = vld [vmem:[#allocation9 + $0x730] sm:$0xff]
    %v1524 = vld [vmem:[#allocation9 + $0x738] sm:$0xff]
    %v1525 = vld [vmem:[#allocation9 + $0x740] sm:$0xff]
    %v1526 = vld [vmem:[#allocation9 + $0x748] sm:$0xff]
    %v1527 = vld [vmem:[#allocation9 + $0x750] sm:$0xff]
    %v1528 = vld [vmem:[#allocation9 + $0x758] sm:$0xff]
    %v1529 = vld [vmem:[#allocation9 + $0x760] sm:$0xff]
    %v1530 = vld [vmem:[#allocation9 + $0x768] sm:$0xff]
    %v1531 = vld [vmem:[#allocation9 + $0x770] sm:$0xff]
    %v1532 = vld [vmem:[#allocation9 + $0x778] sm:$0xff]
    %v1533 = vld [vmem:[#allocation9 + $0x780] sm:$0xff]
    %v1534 = vld [vmem:[#allocation9 + $0x788] sm:$0xff]
    %v1535 = vld [vmem:[#allocation9 + $0x790] sm:$0xff]
    %v1536 = vld [vmem:[#allocation9 + $0x798] sm:$0xff]
    %v1537 = vld [vmem:[#allocation9 + $0x7a0] sm:$0xff]
    %v1538 = vld [vmem:[#allocation9 + $0x7a8] sm:$0xff]
    %v1539 = vld [vmem:[#allocation9 + $0x7b0] sm:$0xff]
    %v1540 = vld [vmem:[#allocation9 + $0x7b8] sm:$0xff]
    %v1541 = vld [vmem:[#allocation9 + $0x7c0] sm:$0xff]
    %v1542 = vld [vmem:[#allocation9 + $0x7c8] sm:$0xff]
    %v1543 = vld [vmem:[#allocation9 + $0x7d0] sm:$0xff]
    %v1544 = vld [vmem:[#allocation9 + $0x7d8] sm:$0xff]
    %v1545 = vld [vmem:[#allocation9 + $0x7e0] sm:$0xff]
    %v1546 = vld [vmem:[#allocation9 + $0x7e8] sm:$0xff]
    %v1547 = vld [vmem:[#allocation9 + $0x7f0] sm:$0xff]
    %v1548 = vld [vmem:[#allocation9 + $0x7f8] sm:$0xff]
    %v1549 = vld [vmem:[#allocation9 + $0x800] sm:$0xff]
    %v1550 = vld [vmem:[#allocation9 + $0x808] sm:$0xff]
    %v1551 = vld [vmem:[#allocation9 + $0x810] sm:$0xff]
    %v1552 = vld [vmem:[#allocation9 + $0x818] sm:$0xff]
    %v1553 = vld [vmem:[#allocation9 + $0x820] sm:$0xff]
    %v1554 = vld [vmem:[#allocation9 + $0x828] sm:$0xff]
    %v1555 = vld [vmem:[#allocation9 + $0x830] sm:$0xff]
    %v1556 = vld [vmem:[#allocation9 + $0x838] sm:$0xff]
    %v1557 = vld [vmem:[#allocation9 + $0x840] sm:$0xff]
    %v1558 = vld [vmem:[#allocation9 + $0x848] sm:$0xff]
    %v1559 = vld [vmem:[#allocation9 + $0x850] sm:$0xff]
    %v1560 = vld [vmem:[#allocation9 + $0x858] sm:$0xff]
    %v1561 = vld [vmem:[#allocation9 + $0x860] sm:$0xff]
    %v1562 = vld [vmem:[#allocation9 + $0x868] sm:$0xff]
    %v1563 = vld [vmem:[#allocation9 + $0x870] sm:$0xff]
    %v1564 = vld [vmem:[#allocation9 + $0x878] sm:$0xff]
    %v1565 = vld [vmem:[#allocation9 + $0x880] sm:$0xff]
    %v1566 = vld [vmem:[#allocation9 + $0x888] sm:$0xff]
    %v1567 = vld [vmem:[#allocation9 + $0x890] sm:$0xff]
    %v1568 = vld [vmem:[#allocation9 + $0x898] sm:$0xff]
    %v1569 = vld [vmem:[#allocation9 + $0x8a0] sm:$0xff]
    %v1570 = vld [vmem:[#allocation9 + $0x8a8] sm:$0xff]
    %v1571 = vld [vmem:[#allocation9 + $0x8b0] sm:$0xff]
    %v1572 = vld [vmem:[#allocation9 + $0x8b8] sm:$0xff]
    %v1573 = vld [vmem:[#allocation9 + $0x8c0] sm:$0xff]
    %v1574 = vld [vmem:[#allocation9 + $0x8c8] sm:$0xff]
    %v1575 = vld [vmem:[#allocation9 + $0x8d0] sm:$0xff]
    %v1576 = vld [vmem:[#allocation9 + $0x8d8] sm:$0xff]
    %v1577 = vld [vmem:[#allocation9 + $0x8e0] sm:$0xff]
    %v1578 = vld [vmem:[#allocation9 + $0x8e8] sm:$0xff]
    %v1579 = vld [vmem:[#allocation9 + $0x8f0] sm:$0xff]
    %v1580 = vld [vmem:[#allocation9 + $0x8f8] sm:$0xff]
    %v1581 = vld [vmem:[#allocation9 + $0x900] sm:$0xff]
    %v1582 = vld [vmem:[#allocation9 + $0x908] sm:$0xff]
    %v1583 = vld [vmem:[#allocation9 + $0x910] sm:$0xff]
    %v1584 = vld [vmem:[#allocation9 + $0x918] sm:$0xff]
    %v1585 = vld [vmem:[#allocation9 + $0x920] sm:$0xff]
    %v1586 = vld [vmem:[#allocation9 + $0x928] sm:$0xff]
    %v1587 = vld [vmem:[#allocation9 + $0x930] sm:$0xff]
    %v1588 = vld [vmem:[#allocation9 + $0x938] sm:$0xff]
    %v1589 = vld [vmem:[#allocation9 + $0x940] sm:$0xff]
    %v1590 = vld [vmem:[#allocation9 + $0x948] sm:$0xff]
    %v1591 = vld [vmem:[#allocation9 + $0x950] sm:$0xff]
    %v1592 = vld [vmem:[#allocation9 + $0x958] sm:$0xff]
    %v1593 = vld [vmem:[#allocation9 + $0x960] sm:$0xff]
    %v1594 = vld [vmem:[#allocation9 + $0x968] sm:$0xff]
    %v1595 = vld [vmem:[#allocation9 + $0x970] sm:$0xff]
    %v1596 = vld [vmem:[#allocation9 + $0x978] sm:$0xff]
    %v1597 = vld [vmem:[#allocation9 + $0x980] sm:$0xff]
    %v1598 = vld [vmem:[#allocation9 + $0x988] sm:$0xff]
    %v1599 = vld [vmem:[#allocation9 + $0x990] sm:$0xff]
    %v1600 = vld [vmem:[#allocation9 + $0x998] sm:$0xff]
    %v1601 = vld [vmem:[#allocation9 + $0x9a0] sm:$0xff]
    %v1602 = vld [vmem:[#allocation9 + $0x9a8] sm:$0xff]
    %v1603 = vld [vmem:[#allocation9 + $0x9b0] sm:$0xff]
    %v1604 = vld [vmem:[#allocation9 + $0x9b8] sm:$0xff]
    %v1605 = vld [vmem:[#allocation9 + $0x9c0] sm:$0xff]
    %v1606 = vld [vmem:[#allocation9 + $0x9c8] sm:$0xff]
    %v1607 = vld [vmem:[#allocation9 + $0x9d0] sm:$0xff]
    %v1608 = vld [vmem:[#allocation9 + $0x9d8] sm:$0xff]
    %v1609 = vld [vmem:[#allocation9 + $0x9e0] sm:$0xff]
    %v1610 = vld [vmem:[#allocation9 + $0x9e8] sm:$0xff]
    %v1611 = vld [vmem:[#allocation9 + $0x9f0] sm:$0xff]
    %v1612 = vld [vmem:[#allocation9 + $0x9f8] sm:$0xff]
    %v1613 = vld [vmem:[#allocation9 + $0xa00] sm:$0xff]
    %v1614 = vld [vmem:[#allocation9 + $0xa08] sm:$0xff]
    %v1615 = vld [vmem:[#allocation9 + $0xa10] sm:$0xff]
    %v1616 = vld [vmem:[#allocation9 + $0xa18] sm:$0xff]
    %v1617 = vld [vmem:[#allocation9 + $0xa20] sm:$0xff]
    %v1618 = vld [vmem:[#allocation9 + $0xa28] sm:$0xff]
    %v1619 = vld [vmem:[#allocation9 + $0xa30] sm:$0xff]
    %v1620 = vld [vmem:[#allocation9 + $0xa38] sm:$0xff]
    %v1621 = vld [vmem:[#allocation9 + $0xa40] sm:$0xff]
    %v1622 = vld [vmem:[#allocation9 + $0xa48] sm:$0xff]
    %v1623 = vld [vmem:[#allocation9 + $0xa50] sm:$0xff]
    %v1624 = vld [vmem:[#allocation9 + $0xa58] sm:$0xff]
    %v1625 = vld [vmem:[#allocation9 + $0xa60] sm:$0xff]
    %v1626 = vld [vmem:[#allocation9 + $0xa68] sm:$0xff]
    %v1627 = vld [vmem:[#allocation9 + $0xa70] sm:$0xff]
    %v1628 = vld [vmem:[#allocation9 + $0xa78] sm:$0xff]
    %v1629 = vld [vmem:[#allocation9 + $0xa80] sm:$0xff]
    %v1630 = vld [vmem:[#allocation9 + $0xa88] sm:$0xff]
    %v1631 = vld [vmem:[#allocation9 + $0xa90] sm:$0xff]
    %v1632 = vld [vmem:[#allocation9 + $0xa98] sm:$0xff]
    %v1633 = vld [vmem:[#allocation9 + $0xaa0] sm:$0xff]
    %v1634 = vld [vmem:[#allocation9 + $0xaa8] sm:$0xff]
    %v1635 = vld [vmem:[#allocation9 + $0xab0] sm:$0xff]
    %v1636 = vld [vmem:[#allocation9 + $0xab8] sm:$0xff]
    %v1637 = vld [vmem:[#allocation9 + $0xac0] sm:$0xff]
    %v1638 = vld [vmem:[#allocation9 + $0xac8] sm:$0xff]
    %v1639 = vld [vmem:[#allocation9 + $0xad0] sm:$0xff]
    %v1640 = vld [vmem:[#allocation9 + $0xad8] sm:$0xff]
    %v1641 = vld [vmem:[#allocation9 + $0xae0] sm:$0xff]
    %v1642 = vld [vmem:[#allocation9 + $0xae8] sm:$0xff]
    %v1643 = vld [vmem:[#allocation9 + $0xaf0] sm:$0xff]
    %v1644 = vld [vmem:[#allocation9 + $0xaf8] sm:$0xff]
    %v1645 = vld [vmem:[#allocation9 + $0xb00] sm:$0xff]
    %v1646 = vld [vmem:[#allocation9 + $0xb08] sm:$0xff]
    %v1647 = vld [vmem:[#allocation9 + $0xb10] sm:$0xff]
    %v1648 = vld [vmem:[#allocation9 + $0xb18] sm:$0xff]
    %v1649 = vld [vmem:[#allocation9 + $0xb20] sm:$0xff]
    %v1650 = vld [vmem:[#allocation9 + $0xb28] sm:$0xff]
    %v1651 = vld [vmem:[#allocation9 + $0xb30] sm:$0xff]
    %v1652 = vld [vmem:[#allocation9 + $0xb38] sm:$0xff]
    %v1653 = vld [vmem:[#allocation9 + $0xb40] sm:$0xff]
    %v1654 = vld [vmem:[#allocation9 + $0xb48] sm:$0xff]
    %v1655 = vld [vmem:[#allocation9 + $0xb50] sm:$0xff]
    %v1656 = vld [vmem:[#allocation9 + $0xb58] sm:$0xff]
    %v1657 = vld [vmem:[#allocation9 + $0xb60] sm:$0xff]
    %v1658 = vld [vmem:[#allocation9 + $0xb68] sm:$0xff]
    %v1659 = vld [vmem:[#allocation9 + $0xb70] sm:$0xff]
    %v1660 = vld [vmem:[#allocation9 + $0xb78] sm:$0xff]
    %v1661 = vld [vmem:[#allocation9 + $0xb80] sm:$0xff]
    %v1662 = vld [vmem:[#allocation9 + $0xb88] sm:$0xff]
    %v1663 = vld [vmem:[#allocation9 + $0xb90] sm:$0xff]
    %v1664 = vld [vmem:[#allocation9 + $0xb98] sm:$0xff]
    %v1665 = vld [vmem:[#allocation9 + $0xba0] sm:$0xff]
    %v1666 = vld [vmem:[#allocation9 + $0xba8] sm:$0xff]
    %v1667 = vld [vmem:[#allocation9 + $0xbb0] sm:$0xff]
    %v1668 = vld [vmem:[#allocation9 + $0xbb8] sm:$0xff]
    %v1669 = vld [vmem:[#allocation9 + $0xbc0] sm:$0xff]
    %v1670 = vld [vmem:[#allocation9 + $0xbc8] sm:$0xff]
    %v1671 = vld [vmem:[#allocation9 + $0xbd0] sm:$0xff]
    %v1672 = vld [vmem:[#allocation9 + $0xbd8] sm:$0xff]
    %v1673 = vld [vmem:[#allocation9 + $0xbe0] sm:$0xff]
    %v1674 = vld [vmem:[#allocation9 + $0xbe8] sm:$0xff]
    %v1675 = vld [vmem:[#allocation9 + $0xbf0] sm:$0xff]
    %v1676 = vld [vmem:[#allocation9 + $0xbf8] sm:$0xff]
    %v1677 = vld [vmem:[#allocation9 + $0xc00] sm:$0xff]
    %v1678 = vld [vmem:[#allocation9 + $0xc08] sm:$0xff]
    %v1679 = vld [vmem:[#allocation9 + $0xc10] sm:$0xff]
    %v1680 = vld [vmem:[#allocation9 + $0xc18] sm:$0xff]
    %v1681 = vld [vmem:[#allocation9 + $0xc20] sm:$0xff]
    %v1682 = vld [vmem:[#allocation9 + $0xc28] sm:$0xff]
    %v1683 = vld [vmem:[#allocation9 + $0xc30] sm:$0xff]
    %v1684 = vld [vmem:[#allocation9 + $0xc38] sm:$0xff]
    %v1685 = vld [vmem:[#allocation9 + $0xc40] sm:$0xff]
    %v1686 = vld [vmem:[#allocation9 + $0xc48] sm:$0xff]
    %v1687 = vld [vmem:[#allocation9 + $0xc50] sm:$0xff]
    %v1688 = vld [vmem:[#allocation9 + $0xc58] sm:$0xff]
    %v1689 = vld [vmem:[#allocation9 + $0xc60] sm:$0xff]
    %v1690 = vld [vmem:[#allocation9 + $0xc68] sm:$0xff]
    %v1691 = vld [vmem:[#allocation9 + $0xc70] sm:$0xff]
    %v1692 = vld [vmem:[#allocation9 + $0xc78] sm:$0xff]
    %v1693 = vld [vmem:[#allocation9 + $0xc80] sm:$0xff]
    %v1694 = vld [vmem:[#allocation9 + $0xc88] sm:$0xff]
    %v1695 = vld [vmem:[#allocation9 + $0xc90] sm:$0xff]
    %v1696 = vld [vmem:[#allocation9 + $0xc98] sm:$0xff]
    %v1697 = vld [vmem:[#allocation9 + $0xca0] sm:$0xff]
    %v1698 = vld [vmem:[#allocation9 + $0xca8] sm:$0xff]
    %v1699 = vld [vmem:[#allocation9 + $0xcb0] sm:$0xff]
    %v1700 = vld [vmem:[#allocation9 + $0xcb8] sm:$0xff]
    %v1701 = vld [vmem:[#allocation9 + $0xcc0] sm:$0xff]
    %v1702 = vld [vmem:[#allocation9 + $0xcc8] sm:$0xff]
    %v1703 = vld [vmem:[#allocation9 + $0xcd0] sm:$0xff]
    %v1704 = vld [vmem:[#allocation9 + $0xcd8] sm:$0xff]
    %v1705 = vld [vmem:[#allocation9 + $0xce0] sm:$0xff]
    %v1706 = vld [vmem:[#allocation9 + $0xce8] sm:$0xff]
    %v1707 = vld [vmem:[#allocation9 + $0xcf0] sm:$0xff]
    %v1708 = vld [vmem:[#allocation9 + $0xcf8] sm:$0xff]
    %v1709 = vld [vmem:[#allocation9 + $0xd00] sm:$0xff]
    %v1710 = vld [vmem:[#allocation9 + $0xd08] sm:$0xff]
    %v1711 = vld [vmem:[#allocation9 + $0xd10] sm:$0xff]
    %v1712 = vld [vmem:[#allocation9 + $0xd18] sm:$0xff]
    %v1713 = vld [vmem:[#allocation9 + $0xd20] sm:$0xff]
    %v1714 = vld [vmem:[#allocation9 + $0xd28] sm:$0xff]
    %v1715 = vld [vmem:[#allocation9 + $0xd30] sm:$0xff]
    %v1716 = vld [vmem:[#allocation9 + $0xd38] sm:$0xff]
    %v1717 = vld [vmem:[#allocation9 + $0xd40] sm:$0xff]
    %v1718 = vld [vmem:[#allocation9 + $0xd48] sm:$0xff]
    %v1719 = vld [vmem:[#allocation9 + $0xd50] sm:$0xff]
    %v1720 = vld [vmem:[#allocation9 + $0xd58] sm:$0xff]
    %v1721 = vld [vmem:[#allocation9 + $0xd60] sm:$0xff]
    %v1722 = vld [vmem:[#allocation9 + $0xd68] sm:$0xff]
    %v1723 = vld [vmem:[#allocation9 + $0xd70] sm:$0xff]
    %v1724 = vld [vmem:[#allocation9 + $0xd78] sm:$0xff]
    %v1725 = vld [vmem:[#allocation9 + $0xd80] sm:$0xff]
    %v1726 = vld [vmem:[#allocation9 + $0xd88] sm:$0xff]
    %v1727 = vld [vmem:[#allocation9 + $0xd90] sm:$0xff]
    %v1728 = vld [vmem:[#allocation9 + $0xd98] sm:$0xff]
    %v1729 = vld [vmem:[#allocation9 + $0xda0] sm:$0xff]
    %v1730 = vld [vmem:[#allocation9 + $0xda8] sm:$0xff]
    %v1731 = vld [vmem:[#allocation9 + $0xdb0] sm:$0xff]
    %v1732 = vld [vmem:[#allocation9 + $0xdb8] sm:$0xff]
    %v1733 = vld [vmem:[#allocation9 + $0xdc0] sm:$0xff]
    %v1734 = vld [vmem:[#allocation9 + $0xdc8] sm:$0xff]
    %v1735 = vld [vmem:[#allocation9 + $0xdd0] sm:$0xff]
    %v1736 = vld [vmem:[#allocation9 + $0xdd8] sm:$0xff]
    %v1737 = vld [vmem:[#allocation9 + $0xde0] sm:$0xff]
    %v1738 = vld [vmem:[#allocation9 + $0xde8] sm:$0xff]
    %v1739 = vld [vmem:[#allocation9 + $0xdf0] sm:$0xff]
    %v1740 = vld [vmem:[#allocation9 + $0xdf8] sm:$0xff]
    %v1741 = vld [vmem:[#allocation9 + $0xe00] sm:$0xff]
    %v1742 = vld [vmem:[#allocation9 + $0xe08] sm:$0xff]
    %v1743 = vld [vmem:[#allocation9 + $0xe10] sm:$0xff]
    %v1744 = vld [vmem:[#allocation9 + $0xe18] sm:$0xff]
    %v1745 = vld [vmem:[#allocation9 + $0xe20] sm:$0xff]
    %v1746 = vld [vmem:[#allocation9 + $0xe28] sm:$0xff]
    %v1747 = vld [vmem:[#allocation9 + $0xe30] sm:$0xff]
    %v1748 = vld [vmem:[#allocation9 + $0xe38] sm:$0xff]
    %v1749 = vld [vmem:[#allocation9 + $0xe40] sm:$0xff]
    %v1750 = vld [vmem:[#allocation9 + $0xe48] sm:$0xff]
    %v1751 = vld [vmem:[#allocation9 + $0xe50] sm:$0xff]
    %v1752 = vld [vmem:[#allocation9 + $0xe58] sm:$0xff]
    %v1753 = vld [vmem:[#allocation9 + $0xe60] sm:$0xff]
    %v1754 = vld [vmem:[#allocation9 + $0xe68] sm:$0xff]
    %v1755 = vld [vmem:[#allocation9 + $0xe70] sm:$0xff]
    %v1756 = vld [vmem:[#allocation9 + $0xe78] sm:$0xff]
    %v1757 = vld [vmem:[#allocation9 + $0xe80] sm:$0xff]
    %v1758 = vld [vmem:[#allocation9 + $0xe88] sm:$0xff]
    %v1759 = vld [vmem:[#allocation9 + $0xe90] sm:$0xff]
    %v1760 = vld [vmem:[#allocation9 + $0xe98] sm:$0xff]
    %v1761 = vld [vmem:[#allocation9 + $0xea0] sm:$0xff]
    %v1762 = vld [vmem:[#allocation9 + $0xea8] sm:$0xff]
    %v1763 = vld [vmem:[#allocation9 + $0xeb0] sm:$0xff]
    %v1764 = vld [vmem:[#allocation9 + $0xeb8] sm:$0xff]
    %v1765 = vld [vmem:[#allocation9 + $0xec0] sm:$0xff]
    %v1766 = vld [vmem:[#allocation9 + $0xec8] sm:$0xff]
    %v1767 = vld [vmem:[#allocation9 + $0xed0] sm:$0xff]
    %v1768 = vld [vmem:[#allocation9 + $0xed8] sm:$0xff]
    %v1769 = vld [vmem:[#allocation9 + $0xee0] sm:$0xff]
    %v1770 = vld [vmem:[#allocation9 + $0xee8] sm:$0xff]
    %v1771 = vld [vmem:[#allocation9 + $0xef0] sm:$0xff]
    %v1772 = vld [vmem:[#allocation9 + $0xef8] sm:$0xff]
    %v1773 = vld [vmem:[#allocation9 + $0xf00] sm:$0xff]
    %v1774 = vld [vmem:[#allocation9 + $0xf08] sm:$0xff]
    %v1775 = vld [vmem:[#allocation9 + $0xf10] sm:$0xff]
    %v1776 = vld [vmem:[#allocation9 + $0xf18] sm:$0xff]
    %v1777 = vld [vmem:[#allocation9 + $0xf20] sm:$0xff]
    %v1778 = vld [vmem:[#allocation9 + $0xf28] sm:$0xff]
    %v1779 = vld [vmem:[#allocation9 + $0xf30] sm:$0xff]
    %v1780 = vld [vmem:[#allocation9 + $0xf38] sm:$0xff]
    %v1781 = vld [vmem:[#allocation9 + $0xf40] sm:$0xff]
    %v1782 = vld [vmem:[#allocation9 + $0xf48] sm:$0xff]
    %v1783 = vld [vmem:[#allocation9 + $0xf50] sm:$0xff]
    %v1784 = vld [vmem:[#allocation9 + $0xf58] sm:$0xff]
    %v1785 = vld [vmem:[#allocation9 + $0xf60] sm:$0xff]
    %v1786 = vld [vmem:[#allocation9 + $0xf68] sm:$0xff]
    %v1787 = vld [vmem:[#allocation9 + $0xf70] sm:$0xff]
    %v1788 = vld [vmem:[#allocation9 + $0xf78] sm:$0xff]
    %v1789 = vld [vmem:[#allocation9 + $0xf80] sm:$0xff]
    %v1790 = vld [vmem:[#allocation9 + $0xf88] sm:$0xff]
    %v1791 = vld [vmem:[#allocation9 + $0xf90] sm:$0xff]
    %v1792 = vld [vmem:[#allocation9 + $0xf98] sm:$0xff]
    %v1793 = vld [vmem:[#allocation9 + $0xfa0] sm:$0xff]
    %v1794 = vld [vmem:[#allocation9 + $0xfa8] sm:$0xff]
    %v1795 = vld [vmem:[#allocation9 + $0xfb0] sm:$0xff]
    %v1796 = vld [vmem:[#allocation9 + $0xfb8] sm:$0xff]
    %v1797 = vld [vmem:[#allocation9 + $0xfc0] sm:$0xff]
    %v1798 = vld [vmem:[#allocation9 + $0xfc8] sm:$0xff]
    %v1799 = vld [vmem:[#allocation9 + $0xfd0] sm:$0xff]
    %v1800 = vld [vmem:[#allocation9 + $0xfd8] sm:$0xff]
    %v1801 = vld [vmem:[#allocation9 + $0xfe0] sm:$0xff]
    %v1802 = vld [vmem:[#allocation9 + $0xfe8] sm:$0xff]
    %v1803 = vld [vmem:[#allocation9 + $0xff0] sm:$0xff]
    %v1804 = vld [vmem:[#allocation9 + $0xff8] sm:$0xff]
    %v1805 = vld [vmem:[#allocation9 + $0x1000] sm:$0xff]
    %v1806 = vld [vmem:[#allocation9 + $0x1008] sm:$0xff]
    %v1807 = vld [vmem:[#allocation9 + $0x1010] sm:$0xff]
    %v1808 = vld [vmem:[#allocation9 + $0x1018] sm:$0xff]
    %v1809 = vld [vmem:[#allocation9 + $0x1020] sm:$0xff]
    %v1810 = vld [vmem:[#allocation9 + $0x1028] sm:$0xff]
    %v1811 = vld [vmem:[#allocation9 + $0x1030] sm:$0xff]
    %v1812 = vld [vmem:[#allocation9 + $0x1038] sm:$0xff]
    %v1813 = vld [vmem:[#allocation9 + $0x1040] sm:$0xff]
    %v1814 = vld [vmem:[#allocation9 + $0x1048] sm:$0xff]
    %v1815 = vld [vmem:[#allocation9 + $0x1050] sm:$0xff]
    %v1816 = vld [vmem:[#allocation9 + $0x1058] sm:$0xff]
    %v1817 = vld [vmem:[#allocation9 + $0x1060] sm:$0xff]
    %v1818 = vld [vmem:[#allocation9 + $0x1068] sm:$0xff]
    %v1819 = vld [vmem:[#allocation9 + $0x1070] sm:$0xff]
    %v1820 = vld [vmem:[#allocation9 + $0x1078] sm:$0xff]
    %v1821 = vld [vmem:[#allocation9 + $0x1080] sm:$0xff]
    %v1822 = vld [vmem:[#allocation9 + $0x1088] sm:$0xff]
    %v1823 = vld [vmem:[#allocation9 + $0x1090] sm:$0xff]
    %v1824 = vld [vmem:[#allocation9 + $0x1098] sm:$0xff]
    %v1825 = vld [vmem:[#allocation9 + $0x10a0] sm:$0xff]
    %v1826 = vld [vmem:[#allocation9 + $0x10a8] sm:$0xff]
    %v1827 = vld [vmem:[#allocation9 + $0x10b0] sm:$0xff]
    %v1828 = vld [vmem:[#allocation9 + $0x10b8] sm:$0xff]
    %v1829 = vld [vmem:[#allocation9 + $0x10c0] sm:$0xff]
    %v1830 = vld [vmem:[#allocation9 + $0x10c8] sm:$0xff]
    %v1831 = vld [vmem:[#allocation9 + $0x10d0] sm:$0xff]
    %v1832 = vld [vmem:[#allocation9 + $0x10d8] sm:$0xff]
    %v1833 = vld [vmem:[#allocation9 + $0x10e0] sm:$0xff]
    %v1834 = vld [vmem:[#allocation9 + $0x10e8] sm:$0xff]
    %v1835 = vld [vmem:[#allocation9 + $0x10f0] sm:$0xff]
    %v1836 = vld [vmem:[#allocation9 + $0x10f8] sm:$0xff]
    %v1837 = vld [vmem:[#allocation9 + $0x1100] sm:$0xff]
    %v1838 = vld [vmem:[#allocation9 + $0x1108] sm:$0xff]
    %v1839 = vld [vmem:[#allocation9 + $0x1110] sm:$0xff]
    %v1840 = vld [vmem:[#allocation9 + $0x1118] sm:$0xff]
    %v1841 = vld [vmem:[#allocation9 + $0x1120] sm:$0xff]
    %v1842 = vld [vmem:[#allocation9 + $0x1128] sm:$0xff]
    %v1843 = vld [vmem:[#allocation9 + $0x1130] sm:$0xff]
    %v1844 = vld [vmem:[#allocation9 + $0x1138] sm:$0xff]
    %v1845 = vld [vmem:[#allocation9 + $0x1140] sm:$0xff]
    %v1846 = vld [vmem:[#allocation9 + $0x1148] sm:$0xff]
    %v1847 = vld [vmem:[#allocation9 + $0x1150] sm:$0xff]
    %v1848 = vld [vmem:[#allocation9 + $0x1158] sm:$0xff]
    %v1849 = vld [vmem:[#allocation9 + $0x1160] sm:$0xff]
    %v1850 = vld [vmem:[#allocation9 + $0x1168] sm:$0xff]
    %v1851 = vld [vmem:[#allocation9 + $0x1170] sm:$0xff]
    %v1852 = vld [vmem:[#allocation9 + $0x1178] sm:$0xff]
    %v1853 = vld [vmem:[#allocation9 + $0x1180] sm:$0xff]
    %v1854 = vld [vmem:[#allocation9 + $0x1188] sm:$0xff]
    %v1855 = vld [vmem:[#allocation9 + $0x1190] sm:$0xff]
    %v1856 = vld [vmem:[#allocation9 + $0x1198] sm:$0xff]
    %v1857 = vld [vmem:[#allocation9 + $0x11a0] sm:$0xff]
    %v1858 = vld [vmem:[#allocation9 + $0x11a8] sm:$0xff]
    %v1859 = vld [vmem:[#allocation9 + $0x11b0] sm:$0xff]
    %v1860 = vld [vmem:[#allocation9 + $0x11b8] sm:$0xff]
    %v1861 = vld [vmem:[#allocation9 + $0x11c0] sm:$0xff]
    %v1862 = vld [vmem:[#allocation9 + $0x11c8] sm:$0xff]
    %v1863 = vld [vmem:[#allocation9 + $0x11d0] sm:$0xff]
    %v1864 = vld [vmem:[#allocation9 + $0x11d8] sm:$0xff]
    %v1865 = vld [vmem:[#allocation9 + $0x11e0] sm:$0xff]
    %v1866 = vld [vmem:[#allocation9 + $0x11e8] sm:$0xff]
    %v1867 = vld [vmem:[#allocation9 + $0x11f0] sm:$0xff]
    %v1868 = vld [vmem:[#allocation9 + $0x11f8] sm:$0xff]
    %v1869 = vld [vmem:[#allocation9 + $0x1200] sm:$0xff]
    %v1870 = vld [vmem:[#allocation9 + $0x1208] sm:$0xff]
    %v1871 = vld [vmem:[#allocation9 + $0x1210] sm:$0xff]
    %v1872 = vld [vmem:[#allocation9 + $0x1218] sm:$0xff]
    %v1873 = vld [vmem:[#allocation9 + $0x1220] sm:$0xff]
    %v1874 = vld [vmem:[#allocation9 + $0x1228] sm:$0xff]
    %v1875 = vld [vmem:[#allocation9 + $0x1230] sm:$0xff]
    %v1876 = vld [vmem:[#allocation9 + $0x1238] sm:$0xff]
    %v1877 = vld [vmem:[#allocation9 + $0x1240] sm:$0xff]
    %v1878 = vld [vmem:[#allocation9 + $0x1248] sm:$0xff]
    %v1879 = vld [vmem:[#allocation9 + $0x1250] sm:$0xff]
    %v1880 = vld [vmem:[#allocation9 + $0x1258] sm:$0xff]
    %v1881 = vld [vmem:[#allocation9 + $0x1260] sm:$0xff]
    %v1882 = vld [vmem:[#allocation9 + $0x1268] sm:$0xff]
    %v1883 = vld [vmem:[#allocation9 + $0x1270] sm:$0xff]
    %v1884 = vld [vmem:[#allocation9 + $0x1278] sm:$0xff]
    %v1885 = vld [vmem:[#allocation9 + $0x1280] sm:$0xff]
    %v1886 = vld [vmem:[#allocation9 + $0x1288] sm:$0xff]
    %v1887 = vld [vmem:[#allocation9 + $0x1290] sm:$0xff]
    %v1888 = vld [vmem:[#allocation9 + $0x1298] sm:$0xff]
    %v1889 = vld [vmem:[#allocation9 + $0x12a0] sm:$0xff]
    %v1890 = vld [vmem:[#allocation9 + $0x12a8] sm:$0xff]
    %v1891 = vld [vmem:[#allocation9 + $0x12b0] sm:$0xff]
    %v1892 = vld [vmem:[#allocation9 + $0x12b8] sm:$0xff]
    %v1893 = vld [vmem:[#allocation9 + $0x12c0] sm:$0xff]
    %v1894 = vld [vmem:[#allocation9 + $0x12c8] sm:$0xff]
    %v1895 = vld [vmem:[#allocation9 + $0x12d0] sm:$0xff]
    %v1896 = vld [vmem:[#allocation9 + $0x12d8] sm:$0xff]
    %v1897 = vld [vmem:[#allocation9 + $0x12e0] sm:$0xff]
    %v1898 = vld [vmem:[#allocation9 + $0x12e8] sm:$0xff]
    %v1899 = vld [vmem:[#allocation9 + $0x12f0] sm:$0xff]
    %v1900 = vld [vmem:[#allocation9 + $0x12f8] sm:$0xff]
    %v1901 = vld [vmem:[#allocation9 + $0x1300] sm:$0xff]
    %v1902 = vld [vmem:[#allocation9 + $0x1308] sm:$0xff]
    %v1903 = vld [vmem:[#allocation9 + $0x1310] sm:$0xff]
    %v1904 = vld [vmem:[#allocation9 + $0x1318] sm:$0xff]
    %v1905 = vld [vmem:[#allocation9 + $0x1320] sm:$0xff]
    %v1906 = vld [vmem:[#allocation9 + $0x1328] sm:$0xff]
    %v1907 = vld [vmem:[#allocation9 + $0x1330] sm:$0xff]
    %v1908 = vld [vmem:[#allocation9 + $0x1338] sm:$0xff]
    %v1909 = vld [vmem:[#allocation9 + $0x1340] sm:$0xff]
    %v1910 = vld [vmem:[#allocation9 + $0x1348] sm:$0xff]
    %v1911 = vld [vmem:[#allocation9 + $0x1350] sm:$0xff]
    %v1912 = vld [vmem:[#allocation9 + $0x1358] sm:$0xff]
    %v1913 = vld [vmem:[#allocation9 + $0x1360] sm:$0xff]
    %v1914 = vld [vmem:[#allocation9 + $0x1368] sm:$0xff]
    %v1915 = vld [vmem:[#allocation9 + $0x1370] sm:$0xff]
    %v1916 = vld [vmem:[#allocation9 + $0x1378] sm:$0xff]
    %v1917 = vld [vmem:[#allocation9 + $0x1380] sm:$0xff]
    %v1918 = vld [vmem:[#allocation9 + $0x1388] sm:$0xff]
    %v1919 = vld [vmem:[#allocation9 + $0x1390] sm:$0xff]
    %v1920 = vld [vmem:[#allocation9 + $0x1398] sm:$0xff]
    %v1921 = vld [vmem:[#allocation9 + $0x13a0] sm:$0xff]
    %v1922 = vld [vmem:[#allocation9 + $0x13a8] sm:$0xff]
    %v1923 = vld [vmem:[#allocation9 + $0x13b0] sm:$0xff]
    %v1924 = vld [vmem:[#allocation9 + $0x13b8] sm:$0xff]
    %v1925 = vld [vmem:[#allocation9 + $0x13c0] sm:$0xff]
    %v1926 = vld [vmem:[#allocation9 + $0x13c8] sm:$0xff]
    %v1927 = vld [vmem:[#allocation9 + $0x13d0] sm:$0xff]
    %v1928 = vld [vmem:[#allocation9 + $0x13d8] sm:$0xff]
    %v1929 = vld [vmem:[#allocation9 + $0x13e0] sm:$0xff]
    %v1930 = vld [vmem:[#allocation9 + $0x13e8] sm:$0xff]
    %v1931 = vld [vmem:[#allocation9 + $0x13f0] sm:$0xff]
    %v1932 = vld [vmem:[#allocation9 + $0x13f8] sm:$0xff]
    %v1933 = vld [vmem:[#allocation9 + $0x1400] sm:$0xff]
    %v1934 = vld [vmem:[#allocation9 + $0x1408] sm:$0xff]
    %v1935 = vld [vmem:[#allocation9 + $0x1410] sm:$0xff]
    %v1936 = vld [vmem:[#allocation9 + $0x1418] sm:$0xff]
    %v1937 = vld [vmem:[#allocation9 + $0x1420] sm:$0xff]
    %v1938 = vld [vmem:[#allocation9 + $0x1428] sm:$0xff]
    %v1939 = vld [vmem:[#allocation9 + $0x1430] sm:$0xff]
    %v1940 = vld [vmem:[#allocation9 + $0x1438] sm:$0xff]
    %v1941 = vld [vmem:[#allocation9 + $0x1440] sm:$0xff]
    %v1942 = vld [vmem:[#allocation9 + $0x1448] sm:$0xff]
    %v1943 = vld [vmem:[#allocation9 + $0x1450] sm:$0xff]
    %v1944 = vld [vmem:[#allocation9 + $0x1458] sm:$0xff]
    %v1945 = vld [vmem:[#allocation9 + $0x1460] sm:$0xff]
    %v1946 = vld [vmem:[#allocation9 + $0x1468] sm:$0xff]
    %v1947 = vld [vmem:[#allocation9 + $0x1470] sm:$0xff]
    %v1948 = vld [vmem:[#allocation9 + $0x1478] sm:$0xff]
    %v1949 = vld [vmem:[#allocation9 + $0x1480] sm:$0xff]
    %v1950 = vld [vmem:[#allocation9 + $0x1488] sm:$0xff]
    %v1951 = vld [vmem:[#allocation9 + $0x1490] sm:$0xff]
    %v1952 = vld [vmem:[#allocation9 + $0x1498] sm:$0xff]
    %v1953 = vld [vmem:[#allocation9 + $0x14a0] sm:$0xff]
    %v1954 = vld [vmem:[#allocation9 + $0x14a8] sm:$0xff]
    %v1955 = vld [vmem:[#allocation9 + $0x14b0] sm:$0xff]
    %v1956 = vld [vmem:[#allocation9 + $0x14b8] sm:$0xff]
    %v1957 = vld [vmem:[#allocation9 + $0x14c0] sm:$0xff]
    %v1958 = vld [vmem:[#allocation9 + $0x14c8] sm:$0xff]
    %v1959 = vld [vmem:[#allocation9 + $0x14d0] sm:$0xff]
    %v1960 = vld [vmem:[#allocation9 + $0x14d8] sm:$0xff]
    %v1961 = vld [vmem:[#allocation9 + $0x14e0] sm:$0xff]
    %v1962 = vld [vmem:[#allocation9 + $0x14e8] sm:$0xff]
    %v1963 = vld [vmem:[#allocation9 + $0x14f0] sm:$0xff]
    %v1964 = vld [vmem:[#allocation9 + $0x14f8] sm:$0xff]
    %v1965 = vld [vmem:[#allocation9 + $0x1500] sm:$0xff]
    %v1966 = vld [vmem:[#allocation9 + $0x1508] sm:$0xff]
    %v1967 = vld [vmem:[#allocation9 + $0x1510] sm:$0xff]
    %v1968 = vld [vmem:[#allocation9 + $0x1518] sm:$0xff]
    %v1969 = vld [vmem:[#allocation9 + $0x1520] sm:$0xff]
    %v1970 = vld [vmem:[#allocation9 + $0x1528] sm:$0xff]
    %v1971 = vld [vmem:[#allocation9 + $0x1530] sm:$0xff]
    %v1972 = vld [vmem:[#allocation9 + $0x1538] sm:$0xff]
    %v1973 = vld [vmem:[#allocation9 + $0x1540] sm:$0xff]
    %v1974 = vld [vmem:[#allocation9 + $0x1548] sm:$0xff]
    %v1975 = vld [vmem:[#allocation9 + $0x1550] sm:$0xff]
    %v1976 = vld [vmem:[#allocation9 + $0x1558] sm:$0xff]
    %v1977 = vld [vmem:[#allocation9 + $0x1560] sm:$0xff]
    %v1978 = vld [vmem:[#allocation9 + $0x1568] sm:$0xff]
    %v1979 = vld [vmem:[#allocation9 + $0x1570] sm:$0xff]
    %v1980 = vld [vmem:[#allocation9 + $0x1578] sm:$0xff]
    %v1981 = vld [vmem:[#allocation9 + $0x1580] sm:$0xff]
    %v1982 = vld [vmem:[#allocation9 + $0x1588] sm:$0xff]
    %v1983 = vld [vmem:[#allocation9 + $0x1590] sm:$0xff]
    %v1984 = vld [vmem:[#allocation9 + $0x1598] sm:$0xff]
    %v1985 = vld [vmem:[#allocation9 + $0x15a0] sm:$0xff]
    %v1986 = vld [vmem:[#allocation9 + $0x15a8] sm:$0xff]
    %v1987 = vld [vmem:[#allocation9 + $0x15b0] sm:$0xff]
    %v1988 = vld [vmem:[#allocation9 + $0x15b8] sm:$0xff]
    %v1989 = vld [vmem:[#allocation9 + $0x15c0] sm:$0xff]
    %v1990 = vld [vmem:[#allocation9 + $0x15c8] sm:$0xff]
    %v1991 = vld [vmem:[#allocation9 + $0x15d0] sm:$0xff]
    %v1992 = vld [vmem:[#allocation9 + $0x15d8] sm:$0xff]
    %v1993 = vld [vmem:[#allocation9 + $0x15e0] sm:$0xff]
    %v1994 = vld [vmem:[#allocation9 + $0x15e8] sm:$0xff]
    %v1995 = vld [vmem:[#allocation9 + $0x15f0] sm:$0xff]
    %v1996 = vld [vmem:[#allocation9 + $0x15f8] sm:$0xff]
    %v1997 = vld [vmem:[#allocation9 + $0x1600] sm:$0xff]
    %v1998 = vld [vmem:[#allocation9 + $0x1608] sm:$0xff]
    %v1999 = vld [vmem:[#allocation9 + $0x1610] sm:$0xff]
    %v2000 = vld [vmem:[#allocation9 + $0x1618] sm:$0xff]
    %v2001 = vld [vmem:[#allocation9 + $0x1620] sm:$0xff]
    %v2002 = vld [vmem:[#allocation9 + $0x1628] sm:$0xff]
    %v2003 = vld [vmem:[#allocation9 + $0x1630] sm:$0xff]
    %v2004 = vld [vmem:[#allocation9 + $0x1638] sm:$0xff]
    %v2005 = vld [vmem:[#allocation9 + $0x1640] sm:$0xff]
    %v2006 = vld [vmem:[#allocation9 + $0x1648] sm:$0xff]
    %v2007 = vld [vmem:[#allocation9 + $0x1650] sm:$0xff]
    %v2008 = vld [vmem:[#allocation9 + $0x1658] sm:$0xff]
    %v2009 = vld [vmem:[#allocation9 + $0x1660] sm:$0xff]
    %v2010 = vld [vmem:[#allocation9 + $0x1668] sm:$0xff]
    %v2011 = vld [vmem:[#allocation9 + $0x1670] sm:$0xff]
    %v2012 = vld [vmem:[#allocation9 + $0x1678] sm:$0xff]
    %v2013 = vld [vmem:[#allocation9 + $0x1680] sm:$0xff]
    %v2014 = vld [vmem:[#allocation9 + $0x1688] sm:$0xff]
    %v2015 = vld [vmem:[#allocation9 + $0x1690] sm:$0xff]
    %v2016 = vld [vmem:[#allocation9 + $0x1698] sm:$0xff]
    %v2017 = vld [vmem:[#allocation9 + $0x16a0] sm:$0xff]
    %v2018 = vld [vmem:[#allocation9 + $0x16a8] sm:$0xff]
    %v2019 = vld [vmem:[#allocation9 + $0x16b0] sm:$0xff]
    %v2020 = vld [vmem:[#allocation9 + $0x16b8] sm:$0xff]
    %v2021 = vld [vmem:[#allocation9 + $0x16c0] sm:$0xff]
    %v2022 = vld [vmem:[#allocation9 + $0x16c8] sm:$0xff]
    %v2023 = vld [vmem:[#allocation9 + $0x16d0] sm:$0xff]
    %v2024 = vld [vmem:[#allocation9 + $0x16d8] sm:$0xff]
    %v2025 = vld [vmem:[#allocation9 + $0x16e0] sm:$0xff]
    %v2026 = vld [vmem:[#allocation9 + $0x16e8] sm:$0xff]
    %v2027 = vld [vmem:[#allocation9 + $0x16f0] sm:$0xff]
    %v2028 = vld [vmem:[#allocation9 + $0x16f8] sm:$0xff]
    %v2029 = vld [vmem:[#allocation9 + $0x1700] sm:$0xff]
    %v2030 = vld [vmem:[#allocation9 + $0x1708] sm:$0xff]
    %v2031 = vld [vmem:[#allocation9 + $0x1710] sm:$0xff]
    %v2032 = vld [vmem:[#allocation9 + $0x1718] sm:$0xff]
    %v2033 = vld [vmem:[#allocation9 + $0x1720] sm:$0xff]
    %v2034 = vld [vmem:[#allocation9 + $0x1728] sm:$0xff]
    %v2035 = vld [vmem:[#allocation9 + $0x1730] sm:$0xff]
    %v2036 = vld [vmem:[#allocation9 + $0x1738] sm:$0xff]
    %v2037 = vld [vmem:[#allocation9 + $0x1740] sm:$0xff]
    %v2038 = vld [vmem:[#allocation9 + $0x1748] sm:$0xff]
    %v2039 = vld [vmem:[#allocation9 + $0x1750] sm:$0xff]
    %v2040 = vld [vmem:[#allocation9 + $0x1758] sm:$0xff]
    %v2041 = vld [vmem:[#allocation9 + $0x1760] sm:$0xff]
    %v2042 = vld [vmem:[#allocation9 + $0x1768] sm:$0xff]
    %v2043 = vld [vmem:[#allocation9 + $0x1770] sm:$0xff]
    %v2044 = vld [vmem:[#allocation9 + $0x1778] sm:$0xff]
    %v2045 = vld [vmem:[#allocation9 + $0x1780] sm:$0xff]
    %v2046 = vld [vmem:[#allocation9 + $0x1788] sm:$0xff]
    %v2047 = vld [vmem:[#allocation9 + $0x1790] sm:$0xff]
    %v2048 = vld [vmem:[#allocation9 + $0x1798] sm:$0xff]
    %v2049 = vld [vmem:[#allocation9 + $0x17a0] sm:$0xff]
    %v2050 = vld [vmem:[#allocation9 + $0x17a8] sm:$0xff]
    %v2051 = vld [vmem:[#allocation9 + $0x17b0] sm:$0xff]
    %v2052 = vld [vmem:[#allocation9 + $0x17b8] sm:$0xff]
    %v2053 = vld [vmem:[#allocation9 + $0x17c0] sm:$0xff]
    %v2054 = vld [vmem:[#allocation9 + $0x17c8] sm:$0xff]
    %v2055 = vld [vmem:[#allocation9 + $0x17d0] sm:$0xff]
    %v2056 = vld [vmem:[#allocation9 + $0x17d8] sm:$0xff]
    %v2057 = vld [vmem:[#allocation9 + $0x17e0] sm:$0xff]
    %v2058 = vld [vmem:[#allocation9 + $0x17e8] sm:$0xff]
    %v2059 = vld [vmem:[#allocation9 + $0x17f0] sm:$0xff]
    %v2060 = vld [vmem:[#allocation9 + $0x17f8] sm:$0xff]
    %v2061 = vld [vmem:[#allocation9 + $0x1800] sm:$0xff]
    %v2062 = vld [vmem:[#allocation9 + $0x1808] sm:$0xff]
    %v2063 = vld [vmem:[#allocation9 + $0x1810] sm:$0xff]
    %v2064 = vld [vmem:[#allocation9 + $0x1818] sm:$0xff]
    %v2065 = vld [vmem:[#allocation9 + $0x1820] sm:$0xff]
    %v2066 = vld [vmem:[#allocation9 + $0x1828] sm:$0xff]
    %v2067 = vld [vmem:[#allocation9 + $0x1830] sm:$0xff]
    %v2068 = vld [vmem:[#allocation9 + $0x1838] sm:$0xff]
    %v2069 = vld [vmem:[#allocation9 + $0x1840] sm:$0xff]
    %v2070 = vld [vmem:[#allocation9 + $0x1848] sm:$0xff]
    %v2071 = vld [vmem:[#allocation9 + $0x1850] sm:$0xff]
    %v2072 = vld [vmem:[#allocation9 + $0x1858] sm:$0xff]
    %v2073 = vld [vmem:[#allocation9 + $0x1860] sm:$0xff]
    %v2074 = vld [vmem:[#allocation9 + $0x1868] sm:$0xff]
    %v2075 = vld [vmem:[#allocation9 + $0x1870] sm:$0xff]
    %v2076 = vld [vmem:[#allocation9 + $0x1878] sm:$0xff]
    %v2077 = vld [vmem:[#allocation9 + $0x1880] sm:$0xff]
    %v2078 = vld [vmem:[#allocation9 + $0x1888] sm:$0xff]
    %v2079 = vld [vmem:[#allocation9 + $0x1890] sm:$0xff]
    %v2080 = vld [vmem:[#allocation9 + $0x1898] sm:$0xff]
    %v2081 = vld [vmem:[#allocation9 + $0x18a0] sm:$0xff]
    %v2082 = vld [vmem:[#allocation9 + $0x18a8] sm:$0xff]
    %v2083 = vld [vmem:[#allocation9 + $0x18b0] sm:$0xff]
    %v2084 = vld [vmem:[#allocation9 + $0x18b8] sm:$0xff]
    %v2085 = vld [vmem:[#allocation9 + $0x18c0] sm:$0xff]
    %v2086 = vld [vmem:[#allocation9 + $0x18c8] sm:$0xff]
    %v2087 = vld [vmem:[#allocation9 + $0x18d0] sm:$0xff]
    %v2088 = vld [vmem:[#allocation9 + $0x18d8] sm:$0xff]
    %v2089 = vld [vmem:[#allocation9 + $0x18e0] sm:$0xff]
    %v2090 = vld [vmem:[#allocation9 + $0x18e8] sm:$0xff]
    %v2091 = vld [vmem:[#allocation9 + $0x18f0] sm:$0xff]
    %v2092 = vld [vmem:[#allocation9 + $0x18f8] sm:$0xff]
    %v2093 = vld [vmem:[#allocation9 + $0x1900] sm:$0xff]
    %v2094 = vld [vmem:[#allocation9 + $0x1908] sm:$0xff]
    %v2095 = vld [vmem:[#allocation9 + $0x1910] sm:$0xff]
    %v2096 = vld [vmem:[#allocation9 + $0x1918] sm:$0xff]
    %v2097 = vld [vmem:[#allocation9 + $0x1920] sm:$0xff]
    %v2098 = vld [vmem:[#allocation9 + $0x1928] sm:$0xff]
    %v2099 = vld [vmem:[#allocation9 + $0x1930] sm:$0xff]
    %v2100 = vld [vmem:[#allocation9 + $0x1938] sm:$0xff]
    %v2101 = vld [vmem:[#allocation9 + $0x1940] sm:$0xff]
    %v2102 = vld [vmem:[#allocation9 + $0x1948] sm:$0xff]
    %v2103 = vld [vmem:[#allocation9 + $0x1950] sm:$0xff]
    %v2104 = vld [vmem:[#allocation9 + $0x1958] sm:$0xff]
    %v2105 = vld [vmem:[#allocation9 + $0x1960] sm:$0xff]
    %v2106 = vld [vmem:[#allocation9 + $0x1968] sm:$0xff]
    %v2107 = vld [vmem:[#allocation9 + $0x1970] sm:$0xff]
    %v2108 = vld [vmem:[#allocation9 + $0x1978] sm:$0xff]
    %v2109 = vld [vmem:[#allocation9 + $0x1980] sm:$0xff]
    %v2110 = vld [vmem:[#allocation9 + $0x1988] sm:$0xff]
    %v2111 = vld [vmem:[#allocation9 + $0x1990] sm:$0xff]
    %v2112 = vld [vmem:[#allocation9 + $0x1998] sm:$0xff]
    %v2113 = vld [vmem:[#allocation9 + $0x19a0] sm:$0xff]
    %v2114 = vld [vmem:[#allocation9 + $0x19a8] sm:$0xff]
    %v2115 = vld [vmem:[#allocation9 + $0x19b0] sm:$0xff]
    %v2116 = vld [vmem:[#allocation9 + $0x19b8] sm:$0xff]
    %v2117 = vld [vmem:[#allocation9 + $0x19c0] sm:$0xff]
    %v2118 = vld [vmem:[#allocation9 + $0x19c8] sm:$0xff]
    %v2119 = vld [vmem:[#allocation9 + $0x19d0] sm:$0xff]
    %v2120 = vld [vmem:[#allocation9 + $0x19d8] sm:$0xff]
    %v2121 = vld [vmem:[#allocation9 + $0x19e0] sm:$0xff]
    %v2122 = vld [vmem:[#allocation9 + $0x19e8] sm:$0xff]
    %v2123 = vld [vmem:[#allocation9 + $0x19f0] sm:$0xff]
    %v2124 = vld [vmem:[#allocation9 + $0x19f8] sm:$0xff]
    %v2125 = vld [vmem:[#allocation9 + $0x1a00] sm:$0xff]
    %v2126 = vld [vmem:[#allocation9 + $0x1a08] sm:$0xff]
    %v2127 = vld [vmem:[#allocation9 + $0x1a10] sm:$0xff]
    %v2128 = vld [vmem:[#allocation9 + $0x1a18] sm:$0xff]
    %v2129 = vld [vmem:[#allocation9 + $0x1a20] sm:$0xff]
    %v2130 = vld [vmem:[#allocation9 + $0x1a28] sm:$0xff]
    %v2131 = vld [vmem:[#allocation9 + $0x1a30] sm:$0xff]
    %v2132 = vld [vmem:[#allocation9 + $0x1a38] sm:$0xff]
    %v2133 = vld [vmem:[#allocation9 + $0x1a40] sm:$0xff]
    %v2134 = vld [vmem:[#allocation9 + $0x1a48] sm:$0xff]
    %v2135 = vld [vmem:[#allocation9 + $0x1a50] sm:$0xff]
    %v2136 = vld [vmem:[#allocation9 + $0x1a58] sm:$0xff]
    %v2137 = vld [vmem:[#allocation9 + $0x1a60] sm:$0xff]
    %v2138 = vld [vmem:[#allocation9 + $0x1a68] sm:$0xff]
    %v2139 = vld [vmem:[#allocation9 + $0x1a70] sm:$0xff]
    %v2140 = vld [vmem:[#allocation9 + $0x1a78] sm:$0xff]
    %v2141 = vld [vmem:[#allocation9 + $0x1a80] sm:$0xff]
    %v2142 = vld [vmem:[#allocation9 + $0x1a88] sm:$0xff]
    %v2143 = vld [vmem:[#allocation9 + $0x1a90] sm:$0xff]
    %v2144 = vld [vmem:[#allocation9 + $0x1a98] sm:$0xff]
    %v2145 = vld [vmem:[#allocation9 + $0x1aa0] sm:$0xff]
    %v2146 = vld [vmem:[#allocation9 + $0x1aa8] sm:$0xff]
    %v2147 = vld [vmem:[#allocation9 + $0x1ab0] sm:$0xff]
    %v2148 = vld [vmem:[#allocation9 + $0x1ab8] sm:$0xff]
    %v2149 = vld [vmem:[#allocation9 + $0x1ac0] sm:$0xff]
    %v2150 = vld [vmem:[#allocation9 + $0x1ac8] sm:$0xff]
    %v2151 = vld [vmem:[#allocation9 + $0x1ad0] sm:$0xff]
    %v2152 = vld [vmem:[#allocation9 + $0x1ad8] sm:$0xff]
    %v2153 = vld [vmem:[#allocation9 + $0x1ae0] sm:$0xff]
    %v2154 = vld [vmem:[#allocation9 + $0x1ae8] sm:$0xff]
    %v2155 = vld [vmem:[#allocation9 + $0x1af0] sm:$0xff]
    %v2156 = vld [vmem:[#allocation9 + $0x1af8] sm:$0xff]
    %v2157 = vld [vmem:[#allocation9 + $0x1b00] sm:$0xff]
    %v2158 = vld [vmem:[#allocation9 + $0x1b08] sm:$0xff]
    %v2159 = vld [vmem:[#allocation9 + $0x1b10] sm:$0xff]
    %v2160 = vld [vmem:[#allocation9 + $0x1b18] sm:$0xff]
    %v2161 = vld [vmem:[#allocation9 + $0x1b20] sm:$0xff]
    %v2162 = vld [vmem:[#allocation9 + $0x1b28] sm:$0xff]
    %v2163 = vld [vmem:[#allocation9 + $0x1b30] sm:$0xff]
    %v2164 = vld [vmem:[#allocation9 + $0x1b38] sm:$0xff]
    %v2165 = vld [vmem:[#allocation9 + $0x1b40] sm:$0xff]
    %v2166 = vld [vmem:[#allocation9 + $0x1b48] sm:$0xff]
    %v2167 = vld [vmem:[#allocation9 + $0x1b50] sm:$0xff]
    %v2168 = vld [vmem:[#allocation9 + $0x1b58] sm:$0xff]
    %v2169 = vld [vmem:[#allocation9 + $0x1b60] sm:$0xff]
    %v2170 = vld [vmem:[#allocation9 + $0x1b68] sm:$0xff]
    %v2171 = vld [vmem:[#allocation9 + $0x1b70] sm:$0xff]
    %v2172 = vld [vmem:[#allocation9 + $0x1b78] sm:$0xff]
    %v2173 = vld [vmem:[#allocation9 + $0x1b80] sm:$0xff]
    %v2174 = vld [vmem:[#allocation9 + $0x1b88] sm:$0xff]
    %v2175 = vld [vmem:[#allocation9 + $0x1b90] sm:$0xff]
    %v2176 = vld [vmem:[#allocation9 + $0x1b98] sm:$0xff]
    %v2177 = vld [vmem:[#allocation9 + $0x1ba0] sm:$0xff]
    %v2178 = vld [vmem:[#allocation9 + $0x1ba8] sm:$0xff]
    %v2179 = vld [vmem:[#allocation9 + $0x1bb0] sm:$0xff]
    %v2180 = vld [vmem:[#allocation9 + $0x1bb8] sm:$0xff]
    %v2181 = vld [vmem:[#allocation9 + $0x1bc0] sm:$0xff]
    %v2182 = vld [vmem:[#allocation9 + $0x1bc8] sm:$0xff]
    %v2183 = vld [vmem:[#allocation9 + $0x1bd0] sm:$0xff]
    %v2184 = vld [vmem:[#allocation9 + $0x1bd8] sm:$0xff]
    %v2185 = vld [vmem:[#allocation9 + $0x1be0] sm:$0xff]
    %v2186 = vld [vmem:[#allocation9 + $0x1be8] sm:$0xff]
    %v2187 = vld [vmem:[#allocation9 + $0x1bf0] sm:$0xff]
    %v2188 = vld [vmem:[#allocation9 + $0x1bf8] sm:$0xff]
    %v2189 = vld [vmem:[#allocation9 + $0x1c00] sm:$0xff]
    %v2190 = vld [vmem:[#allocation9 + $0x1c08] sm:$0xff]
    %v2191 = vld [vmem:[#allocation9 + $0x1c10] sm:$0xff]
    %v2192 = vld [vmem:[#allocation9 + $0x1c18] sm:$0xff]
    %v2193 = vld [vmem:[#allocation9 + $0x1c20] sm:$0xff]
    %v2194 = vld [vmem:[#allocation9 + $0x1c28] sm:$0xff]
    %v2195 = vld [vmem:[#allocation9 + $0x1c30] sm:$0xff]
    %v2196 = vld [vmem:[#allocation9 + $0x1c38] sm:$0xff]
    %v2197 = vld [vmem:[#allocation9 + $0x1c40] sm:$0xff]
    %v2198 = vld [vmem:[#allocation9 + $0x1c48] sm:$0xff]
    %v2199 = vld [vmem:[#allocation9 + $0x1c50] sm:$0xff]
    %v2200 = vld [vmem:[#allocation9 + $0x1c58] sm:$0xff]
    %v2201 = vld [vmem:[#allocation9 + $0x1c60] sm:$0xff]
    %v2202 = vld [vmem:[#allocation9 + $0x1c68] sm:$0xff]
    %v2203 = vld [vmem:[#allocation9 + $0x1c70] sm:$0xff]
    %v2204 = vld [vmem:[#allocation9 + $0x1c78] sm:$0xff]
    %v2205 = vld [vmem:[#allocation9 + $0x1c80] sm:$0xff]
    %v2206 = vld [vmem:[#allocation9 + $0x1c88] sm:$0xff]
    %v2207 = vld [vmem:[#allocation9 + $0x1c90] sm:$0xff]
    %v2208 = vld [vmem:[#allocation9 + $0x1c98] sm:$0xff]
    %v2209 = vld [vmem:[#allocation9 + $0x1ca0] sm:$0xff]
    %v2210 = vld [vmem:[#allocation9 + $0x1ca8] sm:$0xff]
    %v2211 = vld [vmem:[#allocation9 + $0x1cb0] sm:$0xff]
    %v2212 = vld [vmem:[#allocation9 + $0x1cb8] sm:$0xff]
    %v2213 = vld [vmem:[#allocation9 + $0x1cc0] sm:$0xff]
    %v2214 = vld [vmem:[#allocation9 + $0x1cc8] sm:$0xff]
    %v2215 = vld [vmem:[#allocation9 + $0x1cd0] sm:$0xff]
    %v2216 = vld [vmem:[#allocation9 + $0x1cd8] sm:$0xff]
    %v2217 = vld [vmem:[#allocation9 + $0x1ce0] sm:$0xff]
    %v2218 = vld [vmem:[#allocation9 + $0x1ce8] sm:$0xff]
    %v2219 = vld [vmem:[#allocation9 + $0x1cf0] sm:$0xff]
    %v2220 = vld [vmem:[#allocation9 + $0x1cf8] sm:$0xff]
    %v2221 = vld [vmem:[#allocation9 + $0x1d00] sm:$0xff]
    %v2222 = vld [vmem:[#allocation9 + $0x1d08] sm:$0xff]
    %v2223 = vld [vmem:[#allocation9 + $0x1d10] sm:$0xff]
    %v2224 = vld [vmem:[#allocation9 + $0x1d18] sm:$0xff]
    %v2225 = vld [vmem:[#allocation9 + $0x1d20] sm:$0xff]
    %v2226 = vld [vmem:[#allocation9 + $0x1d28] sm:$0xff]
    %v2227 = vld [vmem:[#allocation9 + $0x1d30] sm:$0xff]
    %v2228 = vld [vmem:[#allocation9 + $0x1d38] sm:$0xff]
    %v2229 = vld [vmem:[#allocation9 + $0x1d40] sm:$0xff]
    %v2230 = vld [vmem:[#allocation9 + $0x1d48] sm:$0xff]
    %v2231 = vld [vmem:[#allocation9 + $0x1d50] sm:$0xff]
    %v2232 = vld [vmem:[#allocation9 + $0x1d58] sm:$0xff]
    %v2233 = vld [vmem:[#allocation9 + $0x1d60] sm:$0xff]
    %v2234 = vld [vmem:[#allocation9 + $0x1d68] sm:$0xff]
    %v2235 = vld [vmem:[#allocation9 + $0x1d70] sm:$0xff]
    %v2236 = vld [vmem:[#allocation9 + $0x1d78] sm:$0xff]
    %v2237 = vld [vmem:[#allocation9 + $0x1d80] sm:$0xff]
    %v2238 = vld [vmem:[#allocation9 + $0x1d88] sm:$0xff]
    %v2239 = vld [vmem:[#allocation9 + $0x1d90] sm:$0xff]
    %v2240 = vld [vmem:[#allocation9 + $0x1d98] sm:$0xff]
    %v2241 = vld [vmem:[#allocation9 + $0x1da0] sm:$0xff]
    %v2242 = vld [vmem:[#allocation9 + $0x1da8] sm:$0xff]
    %v2243 = vld [vmem:[#allocation9 + $0x1db0] sm:$0xff]
    %v2244 = vld [vmem:[#allocation9 + $0x1db8] sm:$0xff]
    %v2245 = vld [vmem:[#allocation9 + $0x1dc0] sm:$0xff]
    %v2246 = vld [vmem:[#allocation9 + $0x1dc8] sm:$0xff]
    %v2247 = vld [vmem:[#allocation9 + $0x1dd0] sm:$0xff]
    %v2248 = vld [vmem:[#allocation9 + $0x1dd8] sm:$0xff]
    %v2249 = vld [vmem:[#allocation9 + $0x1de0] sm:$0xff]
    %v2250 = vld [vmem:[#allocation9 + $0x1de8] sm:$0xff]
    %v2251 = vld [vmem:[#allocation9 + $0x1df0] sm:$0xff]
    %v2252 = vld [vmem:[#allocation9 + $0x1df8] sm:$0xff]
    %v2253 = vld [vmem:[#allocation9 + $0x1e00] sm:$0xff]
    %v2254 = vld [vmem:[#allocation9 + $0x1e08] sm:$0xff]
    %v2255 = vld [vmem:[#allocation9 + $0x1e10] sm:$0xff]
    %v2256 = vld [vmem:[#allocation9 + $0x1e18] sm:$0xff]
    %v2257 = vld [vmem:[#allocation9 + $0x1e20] sm:$0xff]
    %v2258 = vld [vmem:[#allocation9 + $0x1e28] sm:$0xff]
    %v2259 = vld [vmem:[#allocation9 + $0x1e30] sm:$0xff]
    %v2260 = vld [vmem:[#allocation9 + $0x1e38] sm:$0xff]
    %v2261 = vld [vmem:[#allocation9 + $0x1e40] sm:$0xff]
    %v2262 = vld [vmem:[#allocation9 + $0x1e48] sm:$0xff]
    %v2263 = vld [vmem:[#allocation9 + $0x1e50] sm:$0xff]
    %v2264 = vld [vmem:[#allocation9 + $0x1e58] sm:$0xff]
    %v2265 = vld [vmem:[#allocation9 + $0x1e60] sm:$0xff]
    %v2266 = vld [vmem:[#allocation9 + $0x1e68] sm:$0xff]
    %v2267 = vld [vmem:[#allocation9 + $0x1e70] sm:$0xff]
    %v2268 = vld [vmem:[#allocation9 + $0x1e78] sm:$0xff]
    %v2269 = vld [vmem:[#allocation9 + $0x1e80] sm:$0xff]
    %v2270 = vld [vmem:[#allocation9 + $0x1e88] sm:$0xff]
    %v2271 = vld [vmem:[#allocation9 + $0x1e90] sm:$0xff]
    %v2272 = vld [vmem:[#allocation9 + $0x1e98] sm:$0xff]
    %v2273 = vld [vmem:[#allocation9 + $0x1ea0] sm:$0xff]
    %v2274 = vld [vmem:[#allocation9 + $0x1ea8] sm:$0xff]
    %v2275 = vld [vmem:[#allocation9 + $0x1eb0] sm:$0xff]
    %v2276 = vld [vmem:[#allocation9 + $0x1eb8] sm:$0xff]
    %v2277 = vld [vmem:[#allocation9 + $0x1ec0] sm:$0xff]
    %v2278 = vld [vmem:[#allocation9 + $0x1ec8] sm:$0xff]
    %v2279 = vld [vmem:[#allocation9 + $0x1ed0] sm:$0xff]
    %v2280 = vld [vmem:[#allocation9 + $0x1ed8] sm:$0xff]
    %v2281 = vld [vmem:[#allocation9 + $0x1ee0] sm:$0xff]
    %v2282 = vld [vmem:[#allocation9 + $0x1ee8] sm:$0xff]
    %v2283 = vld [vmem:[#allocation9 + $0x1ef0] sm:$0xff]
    %v2284 = vld [vmem:[#allocation9 + $0x1ef8] sm:$0xff]
    %v2285 = vld [vmem:[#allocation9 + $0x1f00] sm:$0xff]
    %v2286 = vld [vmem:[#allocation9 + $0x1f08] sm:$0xff]
    %v2287 = vld [vmem:[#allocation9 + $0x1f10] sm:$0xff]
    %v2288 = vld [vmem:[#allocation9 + $0x1f18] sm:$0xff]
    %v2289 = vld [vmem:[#allocation9 + $0x1f20] sm:$0xff]
    %v2290 = vld [vmem:[#allocation9 + $0x1f28] sm:$0xff]
    %v2291 = vld [vmem:[#allocation9 + $0x1f30] sm:$0xff]
    %v2292 = vld [vmem:[#allocation9 + $0x1f38] sm:$0xff]
    %v2293 = vld [vmem:[#allocation9 + $0x1f40] sm:$0xff]
    %v2294 = vld [vmem:[#allocation9 + $0x1f48] sm:$0xff]
    %v2295 = vld [vmem:[#allocation9 + $0x1f50] sm:$0xff]
    %v2296 = vld [vmem:[#allocation9 + $0x1f58] sm:$0xff]
    %v2297 = vld [vmem:[#allocation9 + $0x1f60] sm:$0xff]
    %v2298 = vld [vmem:[#allocation9 + $0x1f68] sm:$0xff]
    %v2299 = vld [vmem:[#allocation9 + $0x1f70] sm:$0xff]
    %v2300 = vld [vmem:[#allocation9 + $0x1f78] sm:$0xff]
    %v2301 = vld [vmem:[#allocation9 + $0x1f80] sm:$0xff]
    %v2302 = vld [vmem:[#allocation9 + $0x1f88] sm:$0xff]
    %v2303 = vld [vmem:[#allocation9 + $0x1f90] sm:$0xff]
    %v2304 = vld [vmem:[#allocation9 + $0x1f98] sm:$0xff]
    %v2305 = vld [vmem:[#allocation9 + $0x1fa0] sm:$0xff]
    %v2306 = vld [vmem:[#allocation9 + $0x1fa8] sm:$0xff]
    %v2307 = vld [vmem:[#allocation9 + $0x1fb0] sm:$0xff]
    %v2308 = vld [vmem:[#allocation9 + $0x1fb8] sm:$0xff]
    %v2309 = vld [vmem:[#allocation9 + $0x1fc0] sm:$0xff]
    %v2310 = vld [vmem:[#allocation9 + $0x1fc8] sm:$0xff]
    %v2311 = vld [vmem:[#allocation9 + $0x1fd0] sm:$0xff]
    %v2312 = vld [vmem:[#allocation9 + $0x1fd8] sm:$0xff]
    %v2313 = vld [vmem:[#allocation9 + $0x1fe0] sm:$0xff]
    %v2314 = vld [vmem:[#allocation9 + $0x1fe8] sm:$0xff]
    %v2315 = vld [vmem:[#allocation9 + $0x1ff0] sm:$0xff]
    %v2316 = vld [vmem:[#allocation9 + $0x1ff8] sm:$0xff]
    %v2317 = vld [vmem:[#allocation9 + $0x2000] sm:$0xff]
    %v2318 = vld [vmem:[#allocation9 + $0x2008] sm:$0xff]
    %v2319 = vld [vmem:[#allocation9 + $0x2010] sm:$0xff]
    %v2320 = vld [vmem:[#allocation9 + $0x2018] sm:$0xff]
    %v2321 = vld [vmem:[#allocation9 + $0x2020] sm:$0xff]
    %v2322 = vld [vmem:[#allocation9 + $0x2028] sm:$0xff]
    %v2323 = vld [vmem:[#allocation9 + $0x2030] sm:$0xff]
    %v2324 = vld [vmem:[#allocation9 + $0x2038] sm:$0xff]
    %v2325 = vld [vmem:[#allocation9 + $0x2040] sm:$0xff]
    %v2326 = vld [vmem:[#allocation9 + $0x2048] sm:$0xff]
    %v2327 = vld [vmem:[#allocation9 + $0x2050] sm:$0xff]
    %v2328 = vld [vmem:[#allocation9 + $0x2058] sm:$0xff]
    %v2329 = vld [vmem:[#allocation9 + $0x2060] sm:$0xff]
    %v2330 = vld [vmem:[#allocation9 + $0x2068] sm:$0xff]
    %v2331 = vld [vmem:[#allocation9 + $0x2070] sm:$0xff]
    %v2332 = vld [vmem:[#allocation9 + $0x2078] sm:$0xff]
    %v2333 = vld [vmem:[#allocation9 + $0x2080] sm:$0xff]
    %v2334 = vld [vmem:[#allocation9 + $0x2088] sm:$0xff]
    %v2335 = vld [vmem:[#allocation9 + $0x2090] sm:$0xff]
    %v2336 = vld [vmem:[#allocation9 + $0x2098] sm:$0xff]
    %v2337 = vld [vmem:[#allocation9 + $0x20a0] sm:$0xff]
    %v2338 = vld [vmem:[#allocation9 + $0x20a8] sm:$0xff]
    %v2339 = vld [vmem:[#allocation9 + $0x20b0] sm:$0xff]
    %v2340 = vld [vmem:[#allocation9 + $0x20b8] sm:$0xff]
    %v2341 = vld [vmem:[#allocation9 + $0x20c0] sm:$0xff]
    %v2342 = vld [vmem:[#allocation9 + $0x20c8] sm:$0xff]
    %v2343 = vld [vmem:[#allocation9 + $0x20d0] sm:$0xff]
    %v2344 = vld [vmem:[#allocation9 + $0x20d8] sm:$0xff]
    %v2345 = vld [vmem:[#allocation9 + $0x20e0] sm:$0xff]
    %v2346 = vld [vmem:[#allocation9 + $0x20e8] sm:$0xff]
    %v2347 = vld [vmem:[#allocation9 + $0x20f0] sm:$0xff]
    %v2348 = vld [vmem:[#allocation9 + $0x20f8] sm:$0xff]
    %v2349 = vld [vmem:[#allocation9 + $0x2100] sm:$0xff]
    %v2350 = vld [vmem:[#allocation9 + $0x2108] sm:$0xff]
    %v2351 = vld [vmem:[#allocation9 + $0x2110] sm:$0xff]
    %v2352 = vld [vmem:[#allocation9 + $0x2118] sm:$0xff]
    %v2353 = vld [vmem:[#allocation9 + $0x2120] sm:$0xff]
    %v2354 = vld [vmem:[#allocation9 + $0x2128] sm:$0xff]
    %v2355 = vld [vmem:[#allocation9 + $0x2130] sm:$0xff]
    %v2356 = vld [vmem:[#allocation9 + $0x2138] sm:$0xff]
    %v2357 = vld [vmem:[#allocation9 + $0x2140] sm:$0xff]
    %v2358 = vld [vmem:[#allocation9 + $0x2148] sm:$0xff]
    %v2359 = vld [vmem:[#allocation9 + $0x2150] sm:$0xff]
    %v2360 = vld [vmem:[#allocation9 + $0x2158] sm:$0xff]
    %v2361 = vld [vmem:[#allocation9 + $0x2160] sm:$0xff]
    %v2362 = vld [vmem:[#allocation9 + $0x2168] sm:$0xff]
    %v2363 = vld [vmem:[#allocation9 + $0x2170] sm:$0xff]
    %v2364 = vld [vmem:[#allocation9 + $0x2178] sm:$0xff]
    %v2365 = vld [vmem:[#allocation9 + $0x2180] sm:$0xff]
    %v2366 = vld [vmem:[#allocation9 + $0x2188] sm:$0xff]
    %v2367 = vld [vmem:[#allocation9 + $0x2190] sm:$0xff]
    %v2368 = vld [vmem:[#allocation9 + $0x2198] sm:$0xff]
    %v2369 = vld [vmem:[#allocation9 + $0x21a0] sm:$0xff]
    %v2370 = vld [vmem:[#allocation9 + $0x21a8] sm:$0xff]
    %v2371 = vld [vmem:[#allocation9 + $0x21b0] sm:$0xff]
    %v2372 = vld [vmem:[#allocation9 + $0x21b8] sm:$0xff]
    %v2373 = vld [vmem:[#allocation9 + $0x21c0] sm:$0xff]
    %v2374 = vld [vmem:[#allocation9 + $0x21c8] sm:$0xff]
    %v2375 = vld [vmem:[#allocation9 + $0x21d0] sm:$0xff]
    %v2376 = vld [vmem:[#allocation9 + $0x21d8] sm:$0xff]
    %v2377 = vld [vmem:[#allocation9 + $0x21e0] sm:$0xff]
    %v2378 = vld [vmem:[#allocation9 + $0x21e8] sm:$0xff]
    %v2379 = vld [vmem:[#allocation9 + $0x21f0] sm:$0xff]
    %v2380 = vld [vmem:[#allocation9 + $0x21f8] sm:$0xff]
    %v2381 = vld [vmem:[#allocation9 + $0x2200] sm:$0xff]
    %v2382 = vld [vmem:[#allocation9 + $0x2208] sm:$0xff]
    %v2383 = vld [vmem:[#allocation9 + $0x2210] sm:$0xff]
    %v2384 = vld [vmem:[#allocation9 + $0x2218] sm:$0xff]
    %v2385 = vld [vmem:[#allocation9 + $0x2220] sm:$0xff]
    %v2386 = vld [vmem:[#allocation9 + $0x2228] sm:$0xff]
    %v2387 = vld [vmem:[#allocation9 + $0x2230] sm:$0xff]
    %v2388 = vld [vmem:[#allocation9 + $0x2238] sm:$0xff]
    %v2389 = vld [vmem:[#allocation9 + $0x2240] sm:$0xff]
    %v2390 = vld [vmem:[#allocation9 + $0x2248] sm:$0xff]
    %v2391 = vld [vmem:[#allocation9 + $0x2250] sm:$0xff]
    %v2392 = vld [vmem:[#allocation9 + $0x2258] sm:$0xff]
    %v2393 = vld [vmem:[#allocation9 + $0x2260] sm:$0xff]
    %v2394 = vld [vmem:[#allocation9 + $0x2268] sm:$0xff]
    %v2395 = vld [vmem:[#allocation9 + $0x2270] sm:$0xff]
    %v2396 = vld [vmem:[#allocation9 + $0x2278] sm:$0xff]
    %v2397 = vld [vmem:[#allocation9 + $0x2280] sm:$0xff]
    %v2398 = vld [vmem:[#allocation9 + $0x2288] sm:$0xff]
    %v2399 = vld [vmem:[#allocation9 + $0x2290] sm:$0xff]
    %v2400 = vld [vmem:[#allocation9 + $0x2298] sm:$0xff]
    %v2401 = vld [vmem:[#allocation9 + $0x22a0] sm:$0xff]
    %v2402 = vld [vmem:[#allocation9 + $0x22a8] sm:$0xff]
    %v2403 = vld [vmem:[#allocation9 + $0x22b0] sm:$0xff]
    %v2404 = vld [vmem:[#allocation9 + $0x22b8] sm:$0xff]
    %v2405 = vld [vmem:[#allocation9 + $0x22c0] sm:$0xff]
    %v2406 = vld [vmem:[#allocation9 + $0x22c8] sm:$0xff]
    %v2407 = vld [vmem:[#allocation9 + $0x22d0] sm:$0xff]
    %v2408 = vld [vmem:[#allocation9 + $0x22d8] sm:$0xff]
    %v2409 = vld [vmem:[#allocation9 + $0x22e0] sm:$0xff]
    %v2410 = vld [vmem:[#allocation9 + $0x22e8] sm:$0xff]
    %v2411 = vld [vmem:[#allocation9 + $0x22f0] sm:$0xff]
    %v2412 = vld [vmem:[#allocation9 + $0x22f8] sm:$0xff]
    %v2413 = vld [vmem:[#allocation9 + $0x2300] sm:$0xff]
    %v2414 = vld [vmem:[#allocation9 + $0x2308] sm:$0xff]
    %v2415 = vld [vmem:[#allocation9 + $0x2310] sm:$0xff]
    %v2416 = vld [vmem:[#allocation9 + $0x2318] sm:$0xff]
    %v2417 = vld [vmem:[#allocation9 + $0x2320] sm:$0xff]
    %v2418 = vld [vmem:[#allocation9 + $0x2328] sm:$0xff]
    %v2419 = vld [vmem:[#allocation9 + $0x2330] sm:$0xff]
    %v2420 = vld [vmem:[#allocation9 + $0x2338] sm:$0xff]
    %v2421 = vld [vmem:[#allocation9 + $0x2340] sm:$0xff]
    %v2422 = vld [vmem:[#allocation9 + $0x2348] sm:$0xff]
    %v2423 = vld [vmem:[#allocation9 + $0x2350] sm:$0xff]
    %v2424 = vld [vmem:[#allocation9 + $0x2358] sm:$0xff]
    %v2425 = vld [vmem:[#allocation9 + $0x2360] sm:$0xff]
    %v2426 = vld [vmem:[#allocation9 + $0x2368] sm:$0xff]
    %v2427 = vld [vmem:[#allocation9 + $0x2370] sm:$0xff]
    %v2428 = vld [vmem:[#allocation9 + $0x2378] sm:$0xff]
    %v2429 = vld [vmem:[#allocation9 + $0x2380] sm:$0xff]
    %v2430 = vld [vmem:[#allocation9 + $0x2388] sm:$0xff]
    %v2431 = vld [vmem:[#allocation9 + $0x2390] sm:$0xff]
    %v2432 = vld [vmem:[#allocation9 + $0x2398] sm:$0xff]
    %v2433 = vld [vmem:[#allocation9 + $0x23a0] sm:$0xff]
    %v2434 = vld [vmem:[#allocation9 + $0x23a8] sm:$0xff]
    %v2435 = vld [vmem:[#allocation9 + $0x23b0] sm:$0xff]
    %v2436 = vld [vmem:[#allocation9 + $0x23b8] sm:$0xff]
    %v2437 = vld [vmem:[#allocation9 + $0x23c0] sm:$0xff]
    %v2438 = vld [vmem:[#allocation9 + $0x23c8] sm:$0xff]
    %v2439 = vld [vmem:[#allocation9 + $0x23d0] sm:$0xff]
    %v2440 = vld [vmem:[#allocation9 + $0x23d8] sm:$0xff]
    %v2441 = vld [vmem:[#allocation9 + $0x23e0] sm:$0xff]
    %v2442 = vld [vmem:[#allocation9 + $0x23e8] sm:$0xff]
    %v2443 = vld [vmem:[#allocation9 + $0x23f0] sm:$0xff]
    %v2444 = vld [vmem:[#allocation9 + $0x23f8] sm:$0xff]
    %v2445 = vld [vmem:[#allocation9 + $0x2400] sm:$0xff]
    %v2446 = vld [vmem:[#allocation9 + $0x2408] sm:$0xff]
    %v2447 = vld [vmem:[#allocation9 + $0x2410] sm:$0xff]
    %v2448 = vld [vmem:[#allocation9 + $0x2418] sm:$0xff]
    %v2449 = vld [vmem:[#allocation9 + $0x2420] sm:$0xff]
    %v2450 = vld [vmem:[#allocation9 + $0x2428] sm:$0xff]
    %v2451 = vld [vmem:[#allocation9 + $0x2430] sm:$0xff]
    %v2452 = vld [vmem:[#allocation9 + $0x2438] sm:$0xff]
    %v2453 = vld [vmem:[#allocation9 + $0x2440] sm:$0xff]
    %v2454 = vld [vmem:[#allocation9 + $0x2448] sm:$0xff]
    %v2455 = vld [vmem:[#allocation9 + $0x2450] sm:$0xff]
    %v2456 = vld [vmem:[#allocation9 + $0x2458] sm:$0xff]
    %v2457 = vld [vmem:[#allocation9 + $0x2460] sm:$0xff]
    %v2458 = vld [vmem:[#allocation9 + $0x2468] sm:$0xff]
    %v2459 = vld [vmem:[#allocation9 + $0x2470] sm:$0xff]
    %v2460 = vld [vmem:[#allocation9 + $0x2478] sm:$0xff]
    %v2461 = vld [vmem:[#allocation9 + $0x2480] sm:$0xff]
    %v2462 = vld [vmem:[#allocation9 + $0x2488] sm:$0xff]
    %v2463 = vld [vmem:[#allocation9 + $0x2490] sm:$0xff]
    %v2464 = vld [vmem:[#allocation9 + $0x2498] sm:$0xff]
    %v2465 = vld [vmem:[#allocation9 + $0x24a0] sm:$0xff]
    %v2466 = vld [vmem:[#allocation9 + $0x24a8] sm:$0xff]
    %v2467 = vld [vmem:[#allocation9 + $0x24b0] sm:$0xff]
    %v2468 = vld [vmem:[#allocation9 + $0x24b8] sm:$0xff]
    %v2469 = vld [vmem:[#allocation9 + $0x24c0] sm:$0xff]
    %v2470 = vld [vmem:[#allocation9 + $0x24c8] sm:$0xff]
    %v2471 = vld [vmem:[#allocation9 + $0x24d0] sm:$0xff]
    %v2472 = vld [vmem:[#allocation9 + $0x24d8] sm:$0xff]
    %v2473 = vld [vmem:[#allocation9 + $0x24e0] sm:$0xff]
    %v2474 = vld [vmem:[#allocation9 + $0x24e8] sm:$0xff]
    %v2475 = vld [vmem:[#allocation9 + $0x24f0] sm:$0xff]
    %v2476 = vld [vmem:[#allocation9 + $0x24f8] sm:$0xff]
    %v2477 = vld [vmem:[#allocation9 + $0x2500] sm:$0xff]
    %v2478 = vld [vmem:[#allocation9 + $0x2508] sm:$0xff]
    %v2479 = vld [vmem:[#allocation9 + $0x2510] sm:$0xff]
    %v2480 = vld [vmem:[#allocation9 + $0x2518] sm:$0xff]
    %v2481 = vld [vmem:[#allocation9 + $0x2520] sm:$0xff]
    %v2482 = vld [vmem:[#allocation9 + $0x2528] sm:$0xff]
    %v2483 = vld [vmem:[#allocation9 + $0x2530] sm:$0xff]
    %v2484 = vld [vmem:[#allocation9 + $0x2538] sm:$0xff]
    %v2485 = vld [vmem:[#allocation9 + $0x2540] sm:$0xff]
    %v2486 = vld [vmem:[#allocation9 + $0x2548] sm:$0xff]
    %v2487 = vld [vmem:[#allocation9 + $0x2550] sm:$0xff]
    %v2488 = vld [vmem:[#allocation9 + $0x2558] sm:$0xff]
    %v2489 = vld [vmem:[#allocation9 + $0x2560] sm:$0xff]
    %v2490 = vld [vmem:[#allocation9 + $0x2568] sm:$0xff]
    %v2491 = vld [vmem:[#allocation9 + $0x2570] sm:$0xff]
    %v2492 = vld [vmem:[#allocation9 + $0x2578] sm:$0xff]
    %v2493 = vld [vmem:[#allocation9 + $0x2580] sm:$0xff]
    %v2494 = vld [vmem:[#allocation9 + $0x2588] sm:$0xff]
    %v2495 = vld [vmem:[#allocation9 + $0x2590] sm:$0xff]
    %v2496 = vld [vmem:[#allocation9 + $0x2598] sm:$0xff]
    %v2497 = vld [vmem:[#allocation9 + $0x25a0] sm:$0xff]
    %v2498 = vld [vmem:[#allocation9 + $0x25a8] sm:$0xff]
    %v2499 = vld [vmem:[#allocation9 + $0x25b0] sm:$0xff]
    %v2500 = vld [vmem:[#allocation9 + $0x25b8] sm:$0xff]
    %v2501 = vld [vmem:[#allocation9 + $0x25c0] sm:$0xff]
    %v2502 = vld [vmem:[#allocation9 + $0x25c8] sm:$0xff]
    %v2503 = vld [vmem:[#allocation9 + $0x25d0] sm:$0xff]
    %v2504 = vld [vmem:[#allocation9 + $0x25d8] sm:$0xff]
    %v2505 = vld [vmem:[#allocation9 + $0x25e0] sm:$0xff]
    %v2506 = vld [vmem:[#allocation9 + $0x25e8] sm:$0xff]
    %v2507 = vld [vmem:[#allocation9 + $0x25f0] sm:$0xff]
    %v2508 = vld [vmem:[#allocation9 + $0x25f8] sm:$0xff]
    %v2509 = vld [vmem:[#allocation9 + $0x2600] sm:$0xff]
    %v2510 = vld [vmem:[#allocation9 + $0x2608] sm:$0xff]
    %v2511 = vld [vmem:[#allocation9 + $0x2610] sm:$0xff]
    %v2512 = vld [vmem:[#allocation9 + $0x2618] sm:$0xff]
    %v2513 = vld [vmem:[#allocation9 + $0x2620] sm:$0xff]
    %v2514 = vld [vmem:[#allocation9 + $0x2628] sm:$0xff]
    %v2515 = vld [vmem:[#allocation9 + $0x2630] sm:$0xff]
    %v2516 = vld [vmem:[#allocation9 + $0x2638] sm:$0xff]
    %v2517 = vld [vmem:[#allocation9 + $0x2640] sm:$0xff]
    %v2518 = vld [vmem:[#allocation9 + $0x2648] sm:$0xff]
    %v2519 = vld [vmem:[#allocation9 + $0x2650] sm:$0xff]
    %v2520 = vld [vmem:[#allocation9 + $0x2658] sm:$0xff]
    %v2521 = vld [vmem:[#allocation9 + $0x2660] sm:$0xff]
    %v2522 = vld [vmem:[#allocation9 + $0x2668] sm:$0xff]
    %v2523 = vld [vmem:[#allocation9 + $0x2670] sm:$0xff]
    %v2524 = vld [vmem:[#allocation9 + $0x2678] sm:$0xff]
    %v2525 = vld [vmem:[#allocation9 + $0x2680] sm:$0xff]
    %v2526 = vld [vmem:[#allocation9 + $0x2688] sm:$0xff]
    %v2527 = vld [vmem:[#allocation9 + $0x2690] sm:$0xff]
    %v2528 = vld [vmem:[#allocation9 + $0x2698] sm:$0xff]
    %v2529 = vld [vmem:[#allocation9 + $0x26a0] sm:$0xff]
    %v2530 = vld [vmem:[#allocation9 + $0x26a8] sm:$0xff]
    %v2531 = vld [vmem:[#allocation9 + $0x26b0] sm:$0xff]
    %v2532 = vld [vmem:[#allocation9 + $0x26b8] sm:$0xff]
    %v2533 = vld [vmem:[#allocation9 + $0x26c0] sm:$0xff]
    %v2534 = vld [vmem:[#allocation9 + $0x26c8] sm:$0xff]
    %v2535 = vld [vmem:[#allocation9 + $0x26d0] sm:$0xff]
    %v2536 = vld [vmem:[#allocation9 + $0x26d8] sm:$0xff]
    %v2537 = vld [vmem:[#allocation9 + $0x26e0] sm:$0xff]
    %v2538 = vld [vmem:[#allocation9 + $0x26e8] sm:$0xff]
    %v2539 = vld [vmem:[#allocation9 + $0x26f0] sm:$0xff]
    %v2540 = vld [vmem:[#allocation9 + $0x26f8] sm:$0xff]
    %v2541 = vld [vmem:[#allocation9 + $0x2700] sm:$0xff]
    %v2542 = vld [vmem:[#allocation9 + $0x2708] sm:$0xff]
    %v2543 = vld [vmem:[#allocation9 + $0x2710] sm:$0xff]
    %v2544 = vld [vmem:[#allocation9 + $0x2718] sm:$0xff]
    %v2545 = vld [vmem:[#allocation9 + $0x2720] sm:$0xff]
    %v2546 = vld [vmem:[#allocation9 + $0x2728] sm:$0xff]
    %v2547 = vld [vmem:[#allocation9 + $0x2730] sm:$0xff]
    %v2548 = vld [vmem:[#allocation9 + $0x2738] sm:$0xff]
    %v2549 = vld [vmem:[#allocation9 + $0x2740] sm:$0xff]
    %v2550 = vld [vmem:[#allocation9 + $0x2748] sm:$0xff]
    %v2551 = vld [vmem:[#allocation9 + $0x2750] sm:$0xff]
    %v2552 = vld [vmem:[#allocation9 + $0x2758] sm:$0xff]
    %v2553 = vld [vmem:[#allocation9 + $0x2760] sm:$0xff]
    %v2554 = vld [vmem:[#allocation9 + $0x2768] sm:$0xff]
    %v2555 = vld [vmem:[#allocation9 + $0x2770] sm:$0xff]
    %v2556 = vld [vmem:[#allocation9 + $0x2778] sm:$0xff]
    %v2557 = vld [vmem:[#allocation9 + $0x2780] sm:$0xff]
    %v2558 = vld [vmem:[#allocation9 + $0x2788] sm:$0xff]
    %v2559 = vld [vmem:[#allocation9 + $0x2790] sm:$0xff]
    %v2560 = vld [vmem:[#allocation9 + $0x2798] sm:$0xff]
    %v2561 = vld [vmem:[#allocation9 + $0x27a0] sm:$0xff]
    %v2562 = vld [vmem:[#allocation9 + $0x27a8] sm:$0xff]
    %v2563 = vld [vmem:[#allocation9 + $0x27b0] sm:$0xff]
    %v2564 = vld [vmem:[#allocation9 + $0x27b8] sm:$0xff]
    %v2565 = vld [vmem:[#allocation9 + $0x27c0] sm:$0xff]
    %v2566 = vld [vmem:[#allocation9 + $0x27c8] sm:$0xff]
    %v2567 = vld [vmem:[#allocation9 + $0x27d0] sm:$0xff]
    %v2568 = vld [vmem:[#allocation9 + $0x27d8] sm:$0xff]
    %v2569 = vld [vmem:[#allocation9 + $0x27e0] sm:$0xff]
    %v2570 = vld [vmem:[#allocation9 + $0x27e8] sm:$0xff]
    %v2571 = vld [vmem:[#allocation9 + $0x27f0] sm:$0xff]
    %v2572 = vld [vmem:[#allocation9 + $0x27f8] sm:$0xff]
    %v2573 = vld [vmem:[#allocation11] sm:$0xff]
    %v2575 = vlaneseq
    %v2576 = vshrl.u32 %v2575, 7
    %v2577 = vsub.s32 0, %v2576
    %v2578 = vrot.slane %v2573, %v2577
    %v2579 = vlaneseq
    %v2580 = vshrl.u32 %v2579, 7
    %v2581 = vsub.s32 1, %v2580
    %v2582 = vrot.slane %v2573, %v2581
    %v2583 = vlaneseq
    %v2584 = vshrl.u32 %v2583, 7
    %v2585 = vsub.s32 2, %v2584
    %v2586 = vrot.slane %v2573, %v2585
    %v2587 = vlaneseq
    %v2588 = vshrl.u32 %v2587, 7
    %v2589 = vsub.s32 3, %v2588
    %v2590 = vrot.slane %v2573, %v2589
    %v2591 = vlaneseq
    %v2592 = vshrl.u32 %v2591, 7
    %v2593 = vsub.s32 4, %v2592
    %v2594 = vrot.slane %v2573, %v2593
    %v2595 = vlaneseq
    %v2596 = vshrl.u32 %v2595, 7
    %v2597 = vsub.s32 5, %v2596
    %v2598 = vrot.slane %v2573, %v2597
    %v2599 = vlaneseq
    %v2600 = vshrl.u32 %v2599, 7
    %v2601 = vsub.s32 6, %v2600
    %v2602 = vrot.slane %v2573, %v2601
    %v2603 = vlaneseq
    %v2604 = vshrl.u32 %v2603, 7
    %v2605 = vsub.s32 7, %v2604
    %v2606 = vrot.slane %v2573, %v2605
    %v3895 = vunpack.c.l.b16 %v1293
    %v3896 = vunpack.c.h.b16 %v1293
    %v3897 = vunpack.c.l.b16 %v1294
    %v3898 = vunpack.c.h.b16 %v1294
    %v3899 = vunpack.c.l.b16 %v1295
    %v3900 = vunpack.c.h.b16 %v1295
    %v3901 = vunpack.c.l.b16 %v1296
    %v3902 = vunpack.c.h.b16 %v1296
    %v3903 = vunpack.c.l.b16 %v1297
    %v3904 = vunpack.c.h.b16 %v1297
    %v3905 = vunpack.c.l.b16 %v1298
    %v3906 = vunpack.c.h.b16 %v1298
    %v3907 = vunpack.c.l.b16 %v1299
    %v3908 = vunpack.c.h.b16 %v1299
    %v3909 = vunpack.c.l.b16 %v1300
    %v3910 = vunpack.c.h.b16 %v1300
    %v3911 = vunpack.c.l.b16 %v1301
    %v3912 = vunpack.c.h.b16 %v1301
    %v3913 = vunpack.c.l.b16 %v1302
    %v3914 = vunpack.c.h.b16 %v1302
    %v3915 = vunpack.c.l.b16 %v1303
    %v3916 = vunpack.c.h.b16 %v1303
    %v3917 = vunpack.c.l.b16 %v1304
    %v3918 = vunpack.c.h.b16 %v1304
    %v3919 = vunpack.c.l.b16 %v1305
    %v3920 = vunpack.c.h.b16 %v1305
    %v3921 = vunpack.c.l.b16 %v1306
    %v3922 = vunpack.c.h.b16 %v1306
    %v3923 = vunpack.c.l.b16 %v1307
    %v3924 = vunpack.c.h.b16 %v1307
    %v3925 = vunpack.c.l.b16 %v1308
    %v3926 = vunpack.c.h.b16 %v1308
    %v3927 = vunpack.c.l.b16 %v1309
    %v3928 = vunpack.c.h.b16 %v1309
    %v3929 = vunpack.c.l.b16 %v1310
    %v3930 = vunpack.c.h.b16 %v1310
    %v3931 = vunpack.c.l.b16 %v1311
    %v3932 = vunpack.c.h.b16 %v1311
    %v3933 = vunpack.c.l.b16 %v1312
    %v3934 = vunpack.c.h.b16 %v1312
    %v3935 = vunpack.c.l.b16 %v1313
    %v3936 = vunpack.c.h.b16 %v1313
    %v3937 = vunpack.c.l.b16 %v1314
    %v3938 = vunpack.c.h.b16 %v1314
    %v3939 = vunpack.c.l.b16 %v1315
    %v3940 = vunpack.c.h.b16 %v1315
    %v3941 = vunpack.c.l.b16 %v1316
    %v3942 = vunpack.c.h.b16 %v1316
    %v3943 = vunpack.c.l.b16 %v1317
    %v3944 = vunpack.c.h.b16 %v1317
    %v3945 = vunpack.c.l.b16 %v1318
    %v3946 = vunpack.c.h.b16 %v1318
    %v3947 = vunpack.c.l.b16 %v1319
    %v3948 = vunpack.c.h.b16 %v1319
    %v3949 = vunpack.c.l.b16 %v1320
    %v3950 = vunpack.c.h.b16 %v1320
    %v3951 = vunpack.c.l.b16 %v1321
    %v3952 = vunpack.c.h.b16 %v1321
    %v3953 = vunpack.c.l.b16 %v1322
    %v3954 = vunpack.c.h.b16 %v1322
    %v3955 = vunpack.c.l.b16 %v1323
    %v3956 = vunpack.c.h.b16 %v1323
    %v3957 = vunpack.c.l.b16 %v1324
    %v3958 = vunpack.c.h.b16 %v1324
    %v3959 = vunpack.c.l.b16 %v1325
    %v3960 = vunpack.c.h.b16 %v1325
    %v3961 = vunpack.c.l.b16 %v1326
    %v3962 = vunpack.c.h.b16 %v1326
    %v3963 = vunpack.c.l.b16 %v1327
    %v3964 = vunpack.c.h.b16 %v1327
    %v3965 = vunpack.c.l.b16 %v1328
    %v3966 = vunpack.c.h.b16 %v1328
    %v3967 = vunpack.c.l.b16 %v1329
    %v3968 = vunpack.c.h.b16 %v1329
    %v3969 = vunpack.c.l.b16 %v1330
    %v3970 = vunpack.c.h.b16 %v1330
    %v3971 = vunpack.c.l.b16 %v1331
    %v3972 = vunpack.c.h.b16 %v1331
    %v3973 = vunpack.c.l.b16 %v1332
    %v3974 = vunpack.c.h.b16 %v1332
    %v3975 = vunpack.c.l.b16 %v1333
    %v3976 = vunpack.c.h.b16 %v1333
    %v3977 = vunpack.c.l.b16 %v1334
    %v3978 = vunpack.c.h.b16 %v1334
    %v3979 = vunpack.c.l.b16 %v1335
    %v3980 = vunpack.c.h.b16 %v1335
    %v3981 = vunpack.c.l.b16 %v1336
    %v3982 = vunpack.c.h.b16 %v1336
    %v3983 = vunpack.c.l.b16 %v1337
    %v3984 = vunpack.c.h.b16 %v1337
    %v3985 = vunpack.c.l.b16 %v1338
    %v3986 = vunpack.c.h.b16 %v1338
    %v3987 = vunpack.c.l.b16 %v1339
    %v3988 = vunpack.c.h.b16 %v1339
    %v3989 = vunpack.c.l.b16 %v1340
    %v3990 = vunpack.c.h.b16 %v1340
    %v3991 = vunpack.c.l.b16 %v1341
    %v3992 = vunpack.c.h.b16 %v1341
    %v3993 = vunpack.c.l.b16 %v1342
    %v3994 = vunpack.c.h.b16 %v1342
    %v3995 = vunpack.c.l.b16 %v1343
    %v3996 = vunpack.c.h.b16 %v1343
    %v3997 = vunpack.c.l.b16 %v1344
    %v3998 = vunpack.c.h.b16 %v1344
    %v3999 = vunpack.c.l.b16 %v1345
    %v4000 = vunpack.c.h.b16 %v1345
    %v4001 = vunpack.c.l.b16 %v1346
    %v4002 = vunpack.c.h.b16 %v1346
    %v4003 = vunpack.c.l.b16 %v1347
    %v4004 = vunpack.c.h.b16 %v1347
    %v4005 = vunpack.c.l.b16 %v1348
    %v4006 = vunpack.c.h.b16 %v1348
    %v4007 = vunpack.c.l.b16 %v1349
    %v4008 = vunpack.c.h.b16 %v1349
    %v4009 = vunpack.c.l.b16 %v1350
    %v4010 = vunpack.c.h.b16 %v1350
    %v4011 = vunpack.c.l.b16 %v1351
    %v4012 = vunpack.c.h.b16 %v1351
    %v4013 = vunpack.c.l.b16 %v1352
    %v4014 = vunpack.c.h.b16 %v1352
    %v4015 = vunpack.c.l.b16 %v1353
    %v4016 = vunpack.c.h.b16 %v1353
    %v4017 = vunpack.c.l.b16 %v1354
    %v4018 = vunpack.c.h.b16 %v1354
    %v4019 = vunpack.c.l.b16 %v1355
    %v4020 = vunpack.c.h.b16 %v1355
    %v4021 = vunpack.c.l.b16 %v1356
    %v4022 = vunpack.c.h.b16 %v1356
    %v4023 = vunpack.c.l.b16 %v1357
    %v4024 = vunpack.c.h.b16 %v1357
    %v4025 = vunpack.c.l.b16 %v1358
    %v4026 = vunpack.c.h.b16 %v1358
    %v4027 = vunpack.c.l.b16 %v1359
    %v4028 = vunpack.c.h.b16 %v1359
    %v4029 = vunpack.c.l.b16 %v1360
    %v4030 = vunpack.c.h.b16 %v1360
    %v4031 = vunpack.c.l.b16 %v1361
    %v4032 = vunpack.c.h.b16 %v1361
    %v4033 = vunpack.c.l.b16 %v1362
    %v4034 = vunpack.c.h.b16 %v1362
    %v4035 = vunpack.c.l.b16 %v1363
    %v4036 = vunpack.c.h.b16 %v1363
    %v4037 = vunpack.c.l.b16 %v1364
    %v4038 = vunpack.c.h.b16 %v1364
    %v4039 = vunpack.c.l.b16 %v1365
    %v4040 = vunpack.c.h.b16 %v1365
    %v4041 = vunpack.c.l.b16 %v1366
    %v4042 = vunpack.c.h.b16 %v1366
    %v4043 = vunpack.c.l.b16 %v1367
    %v4044 = vunpack.c.h.b16 %v1367
    %v4045 = vunpack.c.l.b16 %v1368
    %v4046 = vunpack.c.h.b16 %v1368
    %v4047 = vunpack.c.l.b16 %v1369
    %v4048 = vunpack.c.h.b16 %v1369
    %v4049 = vunpack.c.l.b16 %v1370
    %v4050 = vunpack.c.h.b16 %v1370
    %v4051 = vunpack.c.l.b16 %v1371
    %v4052 = vunpack.c.h.b16 %v1371
    %v4053 = vunpack.c.l.b16 %v1372
    %v4054 = vunpack.c.h.b16 %v1372
    %v4055 = vunpack.c.l.b16 %v1373
    %v4056 = vunpack.c.h.b16 %v1373
    %v4057 = vunpack.c.l.b16 %v1374
    %v4058 = vunpack.c.h.b16 %v1374
    %v4059 = vunpack.c.l.b16 %v1375
    %v4060 = vunpack.c.h.b16 %v1375
    %v4061 = vunpack.c.l.b16 %v1376
    %v4062 = vunpack.c.h.b16 %v1376
    %v4063 = vunpack.c.l.b16 %v1377
    %v4064 = vunpack.c.h.b16 %v1377
    %v4065 = vunpack.c.l.b16 %v1378
    %v4066 = vunpack.c.h.b16 %v1378
    %v4067 = vunpack.c.l.b16 %v1379
    %v4068 = vunpack.c.h.b16 %v1379
    %v4069 = vunpack.c.l.b16 %v1380
    %v4070 = vunpack.c.h.b16 %v1380
    %v4071 = vunpack.c.l.b16 %v1381
    %v4072 = vunpack.c.h.b16 %v1381
    %v4073 = vunpack.c.l.b16 %v1382
    %v4074 = vunpack.c.h.b16 %v1382
    %v4075 = vunpack.c.l.b16 %v1383
    %v4076 = vunpack.c.h.b16 %v1383
    %v4077 = vunpack.c.l.b16 %v1384
    %v4078 = vunpack.c.h.b16 %v1384
    %v4079 = vunpack.c.l.b16 %v1385
    %v4080 = vunpack.c.h.b16 %v1385
    %v4081 = vunpack.c.l.b16 %v1386
    %v4082 = vunpack.c.h.b16 %v1386
    %v4083 = vunpack.c.l.b16 %v1387
    %v4084 = vunpack.c.h.b16 %v1387
    %v4085 = vunpack.c.l.b16 %v1388
    %v4086 = vunpack.c.h.b16 %v1388
    %v4087 = vunpack.c.l.b16 %v1389
    %v4088 = vunpack.c.h.b16 %v1389
    %v4089 = vunpack.c.l.b16 %v1390
    %v4090 = vunpack.c.h.b16 %v1390
    %v4091 = vunpack.c.l.b16 %v1391
    %v4092 = vunpack.c.h.b16 %v1391
    %v4093 = vunpack.c.l.b16 %v1392
    %v4094 = vunpack.c.h.b16 %v1392
    %v4095 = vunpack.c.l.b16 %v1393
    %v4096 = vunpack.c.h.b16 %v1393
    %v4097 = vunpack.c.l.b16 %v1394
    %v4098 = vunpack.c.h.b16 %v1394
    %v4099 = vunpack.c.l.b16 %v1395
    %v4100 = vunpack.c.h.b16 %v1395
    %v4101 = vunpack.c.l.b16 %v1396
    %v4102 = vunpack.c.h.b16 %v1396
    %v4103 = vunpack.c.l.b16 %v1397
    %v4104 = vunpack.c.h.b16 %v1397
    %v4105 = vunpack.c.l.b16 %v1398
    %v4106 = vunpack.c.h.b16 %v1398
    %v4107 = vunpack.c.l.b16 %v1399
    %v4108 = vunpack.c.h.b16 %v1399
    %v4109 = vunpack.c.l.b16 %v1400
    %v4110 = vunpack.c.h.b16 %v1400
    %v4111 = vunpack.c.l.b16 %v1401
    %v4112 = vunpack.c.h.b16 %v1401
    %v4113 = vunpack.c.l.b16 %v1402
    %v4114 = vunpack.c.h.b16 %v1402
    %v4115 = vunpack.c.l.b16 %v1403
    %v4116 = vunpack.c.h.b16 %v1403
    %v4117 = vunpack.c.l.b16 %v1404
    %v4118 = vunpack.c.h.b16 %v1404
    %v4119 = vunpack.c.l.b16 %v1405
    %v4120 = vunpack.c.h.b16 %v1405
    %v4121 = vunpack.c.l.b16 %v1406
    %v4122 = vunpack.c.h.b16 %v1406
    %v4123 = vunpack.c.l.b16 %v1407
    %v4124 = vunpack.c.h.b16 %v1407
    %v4125 = vunpack.c.l.b16 %v1408
    %v4126 = vunpack.c.h.b16 %v1408
    %v4127 = vunpack.c.l.b16 %v1409
    %v4128 = vunpack.c.h.b16 %v1409
    %v4129 = vunpack.c.l.b16 %v1410
    %v4130 = vunpack.c.h.b16 %v1410
    %v4131 = vunpack.c.l.b16 %v1411
    %v4132 = vunpack.c.h.b16 %v1411
    %v4133 = vunpack.c.l.b16 %v1412
    %v4134 = vunpack.c.h.b16 %v1412
    %v4135 = vunpack.c.l.b16 %v1413
    %v4136 = vunpack.c.h.b16 %v1413
    %v4137 = vunpack.c.l.b16 %v1414
    %v4138 = vunpack.c.h.b16 %v1414
    %v4139 = vunpack.c.l.b16 %v1415
    %v4140 = vunpack.c.h.b16 %v1415
    %v4141 = vunpack.c.l.b16 %v1416
    %v4142 = vunpack.c.h.b16 %v1416
    %v4143 = vunpack.c.l.b16 %v1417
    %v4144 = vunpack.c.h.b16 %v1417
    %v4145 = vunpack.c.l.b16 %v1418
    %v4146 = vunpack.c.h.b16 %v1418
    %v4147 = vunpack.c.l.b16 %v1419
    %v4148 = vunpack.c.h.b16 %v1419
    %v4149 = vunpack.c.l.b16 %v1420
    %v4150 = vunpack.c.h.b16 %v1420
    %v4151 = vunpack.c.l.b16 %v1421
    %v4152 = vunpack.c.h.b16 %v1421
    %v4153 = vunpack.c.l.b16 %v1422
    %v4154 = vunpack.c.h.b16 %v1422
    %v4155 = vunpack.c.l.b16 %v1423
    %v4156 = vunpack.c.h.b16 %v1423
    %v4157 = vunpack.c.l.b16 %v1424
    %v4158 = vunpack.c.h.b16 %v1424
    %v4159 = vunpack.c.l.b16 %v1425
    %v4160 = vunpack.c.h.b16 %v1425
    %v4161 = vunpack.c.l.b16 %v1426
    %v4162 = vunpack.c.h.b16 %v1426
    %v4163 = vunpack.c.l.b16 %v1427
    %v4164 = vunpack.c.h.b16 %v1427
    %v4165 = vunpack.c.l.b16 %v1428
    %v4166 = vunpack.c.h.b16 %v1428
    %v4167 = vunpack.c.l.b16 %v1429
    %v4168 = vunpack.c.h.b16 %v1429
    %v4169 = vunpack.c.l.b16 %v1430
    %v4170 = vunpack.c.h.b16 %v1430
    %v4171 = vunpack.c.l.b16 %v1431
    %v4172 = vunpack.c.h.b16 %v1431
    %v4173 = vunpack.c.l.b16 %v1432
    %v4174 = vunpack.c.h.b16 %v1432
    %v4175 = vunpack.c.l.b16 %v1433
    %v4176 = vunpack.c.h.b16 %v1433
    %v4177 = vunpack.c.l.b16 %v1434
    %v4178 = vunpack.c.h.b16 %v1434
    %v4179 = vunpack.c.l.b16 %v1435
    %v4180 = vunpack.c.h.b16 %v1435
    %v4181 = vunpack.c.l.b16 %v1436
    %v4182 = vunpack.c.h.b16 %v1436
    %v4183 = vunpack.c.l.b16 %v1437
    %v4184 = vunpack.c.h.b16 %v1437
    %v4185 = vunpack.c.l.b16 %v1438
    %v4186 = vunpack.c.h.b16 %v1438
    %v4187 = vunpack.c.l.b16 %v1439
    %v4188 = vunpack.c.h.b16 %v1439
    %v4189 = vunpack.c.l.b16 %v1440
    %v4190 = vunpack.c.h.b16 %v1440
    %v4191 = vunpack.c.l.b16 %v1441
    %v4192 = vunpack.c.h.b16 %v1441
    %v4193 = vunpack.c.l.b16 %v1442
    %v4194 = vunpack.c.h.b16 %v1442
    %v4195 = vunpack.c.l.b16 %v1443
    %v4196 = vunpack.c.h.b16 %v1443
    %v4197 = vunpack.c.l.b16 %v1444
    %v4198 = vunpack.c.h.b16 %v1444
    %v4199 = vunpack.c.l.b16 %v1445
    %v4200 = vunpack.c.h.b16 %v1445
    %v4201 = vunpack.c.l.b16 %v1446
    %v4202 = vunpack.c.h.b16 %v1446
    %v4203 = vunpack.c.l.b16 %v1447
    %v4204 = vunpack.c.h.b16 %v1447
    %v4205 = vunpack.c.l.b16 %v1448
    %v4206 = vunpack.c.h.b16 %v1448
    %v4207 = vunpack.c.l.b16 %v1449
    %v4208 = vunpack.c.h.b16 %v1449
    %v4209 = vunpack.c.l.b16 %v1450
    %v4210 = vunpack.c.h.b16 %v1450
    %v4211 = vunpack.c.l.b16 %v1451
    %v4212 = vunpack.c.h.b16 %v1451
    %v4213 = vunpack.c.l.b16 %v1452
    %v4214 = vunpack.c.h.b16 %v1452
    %v4215 = vunpack.c.l.b16 %v1453
    %v4216 = vunpack.c.h.b16 %v1453
    %v4217 = vunpack.c.l.b16 %v1454
    %v4218 = vunpack.c.h.b16 %v1454
    %v4219 = vunpack.c.l.b16 %v1455
    %v4220 = vunpack.c.h.b16 %v1455
    %v4221 = vunpack.c.l.b16 %v1456
    %v4222 = vunpack.c.h.b16 %v1456
    %v4223 = vunpack.c.l.b16 %v1457
    %v4224 = vunpack.c.h.b16 %v1457
    %v4225 = vunpack.c.l.b16 %v1458
    %v4226 = vunpack.c.h.b16 %v1458
    %v4227 = vunpack.c.l.b16 %v1459
    %v4228 = vunpack.c.h.b16 %v1459
    %v4229 = vunpack.c.l.b16 %v1460
    %v4230 = vunpack.c.h.b16 %v1460
    %v4231 = vunpack.c.l.b16 %v1461
    %v4232 = vunpack.c.h.b16 %v1461
    %v4233 = vunpack.c.l.b16 %v1462
    %v4234 = vunpack.c.h.b16 %v1462
    %v4235 = vunpack.c.l.b16 %v1463
    %v4236 = vunpack.c.h.b16 %v1463
    %v4237 = vunpack.c.l.b16 %v1464
    %v4238 = vunpack.c.h.b16 %v1464
    %v4239 = vunpack.c.l.b16 %v1465
    %v4240 = vunpack.c.h.b16 %v1465
    %v4241 = vunpack.c.l.b16 %v1466
    %v4242 = vunpack.c.h.b16 %v1466
    %v4243 = vunpack.c.l.b16 %v1467
    %v4244 = vunpack.c.h.b16 %v1467
    %v4245 = vunpack.c.l.b16 %v1468
    %v4246 = vunpack.c.h.b16 %v1468
    %v4247 = vunpack.c.l.b16 %v1469
    %v4248 = vunpack.c.h.b16 %v1469
    %v4249 = vunpack.c.l.b16 %v1470
    %v4250 = vunpack.c.h.b16 %v1470
    %v4251 = vunpack.c.l.b16 %v1471
    %v4252 = vunpack.c.h.b16 %v1471
    %v4253 = vunpack.c.l.b16 %v1472
    %v4254 = vunpack.c.h.b16 %v1472
    %v4255 = vunpack.c.l.b16 %v1473
    %v4256 = vunpack.c.h.b16 %v1473
    %v4257 = vunpack.c.l.b16 %v1474
    %v4258 = vunpack.c.h.b16 %v1474
    %v4259 = vunpack.c.l.b16 %v1475
    %v4260 = vunpack.c.h.b16 %v1475
    %v4261 = vunpack.c.l.b16 %v1476
    %v4262 = vunpack.c.h.b16 %v1476
    %v4263 = vunpack.c.l.b16 %v1477
    %v4264 = vunpack.c.h.b16 %v1477
    %v4265 = vunpack.c.l.b16 %v1478
    %v4266 = vunpack.c.h.b16 %v1478
    %v4267 = vunpack.c.l.b16 %v1479
    %v4268 = vunpack.c.h.b16 %v1479
    %v4269 = vunpack.c.l.b16 %v1480
    %v4270 = vunpack.c.h.b16 %v1480
    %v4271 = vunpack.c.l.b16 %v1481
    %v4272 = vunpack.c.h.b16 %v1481
    %v4273 = vunpack.c.l.b16 %v1482
    %v4274 = vunpack.c.h.b16 %v1482
    %v4275 = vunpack.c.l.b16 %v1483
    %v4276 = vunpack.c.h.b16 %v1483
    %v4277 = vunpack.c.l.b16 %v1484
    %v4278 = vunpack.c.h.b16 %v1484
    %v4279 = vunpack.c.l.b16 %v1485
    %v4280 = vunpack.c.h.b16 %v1485
    %v4281 = vunpack.c.l.b16 %v1486
    %v4282 = vunpack.c.h.b16 %v1486
    %v4283 = vunpack.c.l.b16 %v1487
    %v4284 = vunpack.c.h.b16 %v1487
    %v4285 = vunpack.c.l.b16 %v1488
    %v4286 = vunpack.c.h.b16 %v1488
    %v4287 = vunpack.c.l.b16 %v1489
    %v4288 = vunpack.c.h.b16 %v1489
    %v4289 = vunpack.c.l.b16 %v1490
    %v4290 = vunpack.c.h.b16 %v1490
    %v4291 = vunpack.c.l.b16 %v1491
    %v4292 = vunpack.c.h.b16 %v1491
    %v4293 = vunpack.c.l.b16 %v1492
    %v4294 = vunpack.c.h.b16 %v1492
    %v4295 = vunpack.c.l.b16 %v1493
    %v4296 = vunpack.c.h.b16 %v1493
    %v4297 = vunpack.c.l.b16 %v1494
    %v4298 = vunpack.c.h.b16 %v1494
    %v4299 = vunpack.c.l.b16 %v1495
    %v4300 = vunpack.c.h.b16 %v1495
    %v4301 = vunpack.c.l.b16 %v1496
    %v4302 = vunpack.c.h.b16 %v1496
    %v4303 = vunpack.c.l.b16 %v1497
    %v4304 = vunpack.c.h.b16 %v1497
    %v4305 = vunpack.c.l.b16 %v1498
    %v4306 = vunpack.c.h.b16 %v1498
    %v4307 = vunpack.c.l.b16 %v1499
    %v4308 = vunpack.c.h.b16 %v1499
    %v4309 = vunpack.c.l.b16 %v1500
    %v4310 = vunpack.c.h.b16 %v1500
    %v4311 = vunpack.c.l.b16 %v1501
    %v4312 = vunpack.c.h.b16 %v1501
    %v4313 = vunpack.c.l.b16 %v1502
    %v4314 = vunpack.c.h.b16 %v1502
    %v4315 = vunpack.c.l.b16 %v1503
    %v4316 = vunpack.c.h.b16 %v1503
    %v4317 = vunpack.c.l.b16 %v1504
    %v4318 = vunpack.c.h.b16 %v1504
    %v4319 = vunpack.c.l.b16 %v1505
    %v4320 = vunpack.c.h.b16 %v1505
    %v4321 = vunpack.c.l.b16 %v1506
    %v4322 = vunpack.c.h.b16 %v1506
    %v4323 = vunpack.c.l.b16 %v1507
    %v4324 = vunpack.c.h.b16 %v1507
    %v4325 = vunpack.c.l.b16 %v1508
    %v4326 = vunpack.c.h.b16 %v1508
    %v4327 = vunpack.c.l.b16 %v1509
    %v4328 = vunpack.c.h.b16 %v1509
    %v4329 = vunpack.c.l.b16 %v1510
    %v4330 = vunpack.c.h.b16 %v1510
    %v4331 = vunpack.c.l.b16 %v1511
    %v4332 = vunpack.c.h.b16 %v1511
    %v4333 = vunpack.c.l.b16 %v1512
    %v4334 = vunpack.c.h.b16 %v1512
    %v4335 = vunpack.c.l.b16 %v1513
    %v4336 = vunpack.c.h.b16 %v1513
    %v4337 = vunpack.c.l.b16 %v1514
    %v4338 = vunpack.c.h.b16 %v1514
    %v4339 = vunpack.c.l.b16 %v1515
    %v4340 = vunpack.c.h.b16 %v1515
    %v4341 = vunpack.c.l.b16 %v1516
    %v4342 = vunpack.c.h.b16 %v1516
    %v4343 = vunpack.c.l.b16 %v1517
    %v4344 = vunpack.c.h.b16 %v1517
    %v4345 = vunpack.c.l.b16 %v1518
    %v4346 = vunpack.c.h.b16 %v1518
    %v4347 = vunpack.c.l.b16 %v1519
    %v4348 = vunpack.c.h.b16 %v1519
    %v4349 = vunpack.c.l.b16 %v1520
    %v4350 = vunpack.c.h.b16 %v1520
    %v4351 = vunpack.c.l.b16 %v1521
    %v4352 = vunpack.c.h.b16 %v1521
    %v4353 = vunpack.c.l.b16 %v1522
    %v4354 = vunpack.c.h.b16 %v1522
    %v4355 = vunpack.c.l.b16 %v1523
    %v4356 = vunpack.c.h.b16 %v1523
    %v4357 = vunpack.c.l.b16 %v1524
    %v4358 = vunpack.c.h.b16 %v1524
    %v4359 = vunpack.c.l.b16 %v1525
    %v4360 = vunpack.c.h.b16 %v1525
    %v4361 = vunpack.c.l.b16 %v1526
    %v4362 = vunpack.c.h.b16 %v1526
    %v4363 = vunpack.c.l.b16 %v1527
    %v4364 = vunpack.c.h.b16 %v1527
    %v4365 = vunpack.c.l.b16 %v1528
    %v4366 = vunpack.c.h.b16 %v1528
    %v4367 = vunpack.c.l.b16 %v1529
    %v4368 = vunpack.c.h.b16 %v1529
    %v4369 = vunpack.c.l.b16 %v1530
    %v4370 = vunpack.c.h.b16 %v1530
    %v4371 = vunpack.c.l.b16 %v1531
    %v4372 = vunpack.c.h.b16 %v1531
    %v4373 = vunpack.c.l.b16 %v1532
    %v4374 = vunpack.c.h.b16 %v1532
    %v4375 = vunpack.c.l.b16 %v1533
    %v4376 = vunpack.c.h.b16 %v1533
    %v4377 = vunpack.c.l.b16 %v1534
    %v4378 = vunpack.c.h.b16 %v1534
    %v4379 = vunpack.c.l.b16 %v1535
    %v4380 = vunpack.c.h.b16 %v1535
    %v4381 = vunpack.c.l.b16 %v1536
    %v4382 = vunpack.c.h.b16 %v1536
    %v4383 = vunpack.c.l.b16 %v1537
    %v4384 = vunpack.c.h.b16 %v1537
    %v4385 = vunpack.c.l.b16 %v1538
    %v4386 = vunpack.c.h.b16 %v1538
    %v4387 = vunpack.c.l.b16 %v1539
    %v4388 = vunpack.c.h.b16 %v1539
    %v4389 = vunpack.c.l.b16 %v1540
    %v4390 = vunpack.c.h.b16 %v1540
    %v4391 = vunpack.c.l.b16 %v1541
    %v4392 = vunpack.c.h.b16 %v1541
    %v4393 = vunpack.c.l.b16 %v1542
    %v4394 = vunpack.c.h.b16 %v1542
    %v4395 = vunpack.c.l.b16 %v1543
    %v4396 = vunpack.c.h.b16 %v1543
    %v4397 = vunpack.c.l.b16 %v1544
    %v4398 = vunpack.c.h.b16 %v1544
    %v4399 = vunpack.c.l.b16 %v1545
    %v4400 = vunpack.c.h.b16 %v1545
    %v4401 = vunpack.c.l.b16 %v1546
    %v4402 = vunpack.c.h.b16 %v1546
    %v4403 = vunpack.c.l.b16 %v1547
    %v4404 = vunpack.c.h.b16 %v1547
    %v4405 = vunpack.c.l.b16 %v1548
    %v4406 = vunpack.c.h.b16 %v1548
    %v4407 = vunpack.c.l.b16 %v1549
    %v4408 = vunpack.c.h.b16 %v1549
    %v4409 = vunpack.c.l.b16 %v1550
    %v4410 = vunpack.c.h.b16 %v1550
    %v4411 = vunpack.c.l.b16 %v1551
    %v4412 = vunpack.c.h.b16 %v1551
    %v4413 = vunpack.c.l.b16 %v1552
    %v4414 = vunpack.c.h.b16 %v1552
    %v4415 = vunpack.c.l.b16 %v1553
    %v4416 = vunpack.c.h.b16 %v1553
    %v4417 = vunpack.c.l.b16 %v1554
    %v4418 = vunpack.c.h.b16 %v1554
    %v4419 = vunpack.c.l.b16 %v1555
    %v4420 = vunpack.c.h.b16 %v1555
    %v4421 = vunpack.c.l.b16 %v1556
    %v4422 = vunpack.c.h.b16 %v1556
    %v4423 = vunpack.c.l.b16 %v1557
    %v4424 = vunpack.c.h.b16 %v1557
    %v4425 = vunpack.c.l.b16 %v1558
    %v4426 = vunpack.c.h.b16 %v1558
    %v4427 = vunpack.c.l.b16 %v1559
    %v4428 = vunpack.c.h.b16 %v1559
    %v4429 = vunpack.c.l.b16 %v1560
    %v4430 = vunpack.c.h.b16 %v1560
    %v4431 = vunpack.c.l.b16 %v1561
    %v4432 = vunpack.c.h.b16 %v1561
    %v4433 = vunpack.c.l.b16 %v1562
    %v4434 = vunpack.c.h.b16 %v1562
    %v4435 = vunpack.c.l.b16 %v1563
    %v4436 = vunpack.c.h.b16 %v1563
    %v4437 = vunpack.c.l.b16 %v1564
    %v4438 = vunpack.c.h.b16 %v1564
    %v4439 = vunpack.c.l.b16 %v1565
    %v4440 = vunpack.c.h.b16 %v1565
    %v4441 = vunpack.c.l.b16 %v1566
    %v4442 = vunpack.c.h.b16 %v1566
    %v4443 = vunpack.c.l.b16 %v1567
    %v4444 = vunpack.c.h.b16 %v1567
    %v4445 = vunpack.c.l.b16 %v1568
    %v4446 = vunpack.c.h.b16 %v1568
    %v4447 = vunpack.c.l.b16 %v1569
    %v4448 = vunpack.c.h.b16 %v1569
    %v4449 = vunpack.c.l.b16 %v1570
    %v4450 = vunpack.c.h.b16 %v1570
    %v4451 = vunpack.c.l.b16 %v1571
    %v4452 = vunpack.c.h.b16 %v1571
    %v4453 = vunpack.c.l.b16 %v1572
    %v4454 = vunpack.c.h.b16 %v1572
    %v4455 = vunpack.c.l.b16 %v1573
    %v4456 = vunpack.c.h.b16 %v1573
    %v4457 = vunpack.c.l.b16 %v1574
    %v4458 = vunpack.c.h.b16 %v1574
    %v4459 = vunpack.c.l.b16 %v1575
    %v4460 = vunpack.c.h.b16 %v1575
    %v4461 = vunpack.c.l.b16 %v1576
    %v4462 = vunpack.c.h.b16 %v1576
    %v4463 = vunpack.c.l.b16 %v1577
    %v4464 = vunpack.c.h.b16 %v1577
    %v4465 = vunpack.c.l.b16 %v1578
    %v4466 = vunpack.c.h.b16 %v1578
    %v4467 = vunpack.c.l.b16 %v1579
    %v4468 = vunpack.c.h.b16 %v1579
    %v4469 = vunpack.c.l.b16 %v1580
    %v4470 = vunpack.c.h.b16 %v1580
    %v4471 = vunpack.c.l.b16 %v1581
    %v4472 = vunpack.c.h.b16 %v1581
    %v4473 = vunpack.c.l.b16 %v1582
    %v4474 = vunpack.c.h.b16 %v1582
    %v4475 = vunpack.c.l.b16 %v1583
    %v4476 = vunpack.c.h.b16 %v1583
    %v4477 = vunpack.c.l.b16 %v1584
    %v4478 = vunpack.c.h.b16 %v1584
    %v4479 = vunpack.c.l.b16 %v1585
    %v4480 = vunpack.c.h.b16 %v1585
    %v4481 = vunpack.c.l.b16 %v1586
    %v4482 = vunpack.c.h.b16 %v1586
    %v4483 = vunpack.c.l.b16 %v1587
    %v4484 = vunpack.c.h.b16 %v1587
    %v4485 = vunpack.c.l.b16 %v1588
    %v4486 = vunpack.c.h.b16 %v1588
    %v4487 = vunpack.c.l.b16 %v1589
    %v4488 = vunpack.c.h.b16 %v1589
    %v4489 = vunpack.c.l.b16 %v1590
    %v4490 = vunpack.c.h.b16 %v1590
    %v4491 = vunpack.c.l.b16 %v1591
    %v4492 = vunpack.c.h.b16 %v1591
    %v4493 = vunpack.c.l.b16 %v1592
    %v4494 = vunpack.c.h.b16 %v1592
    %v4495 = vunpack.c.l.b16 %v1593
    %v4496 = vunpack.c.h.b16 %v1593
    %v4497 = vunpack.c.l.b16 %v1594
    %v4498 = vunpack.c.h.b16 %v1594
    %v4499 = vunpack.c.l.b16 %v1595
    %v4500 = vunpack.c.h.b16 %v1595
    %v4501 = vunpack.c.l.b16 %v1596
    %v4502 = vunpack.c.h.b16 %v1596
    %v4503 = vunpack.c.l.b16 %v1597
    %v4504 = vunpack.c.h.b16 %v1597
    %v4505 = vunpack.c.l.b16 %v1598
    %v4506 = vunpack.c.h.b16 %v1598
    %v4507 = vunpack.c.l.b16 %v1599
    %v4508 = vunpack.c.h.b16 %v1599
    %v4509 = vunpack.c.l.b16 %v1600
    %v4510 = vunpack.c.h.b16 %v1600
    %v4511 = vunpack.c.l.b16 %v1601
    %v4512 = vunpack.c.h.b16 %v1601
    %v4513 = vunpack.c.l.b16 %v1602
    %v4514 = vunpack.c.h.b16 %v1602
    %v4515 = vunpack.c.l.b16 %v1603
    %v4516 = vunpack.c.h.b16 %v1603
    %v4517 = vunpack.c.l.b16 %v1604
    %v4518 = vunpack.c.h.b16 %v1604
    %v4519 = vunpack.c.l.b16 %v1605
    %v4520 = vunpack.c.h.b16 %v1605
    %v4521 = vunpack.c.l.b16 %v1606
    %v4522 = vunpack.c.h.b16 %v1606
    %v4523 = vunpack.c.l.b16 %v1607
    %v4524 = vunpack.c.h.b16 %v1607
    %v4525 = vunpack.c.l.b16 %v1608
    %v4526 = vunpack.c.h.b16 %v1608
    %v4527 = vunpack.c.l.b16 %v1609
    %v4528 = vunpack.c.h.b16 %v1609
    %v4529 = vunpack.c.l.b16 %v1610
    %v4530 = vunpack.c.h.b16 %v1610
    %v4531 = vunpack.c.l.b16 %v1611
    %v4532 = vunpack.c.h.b16 %v1611
    %v4533 = vunpack.c.l.b16 %v1612
    %v4534 = vunpack.c.h.b16 %v1612
    %v4535 = vunpack.c.l.b16 %v1613
    %v4536 = vunpack.c.h.b16 %v1613
    %v4537 = vunpack.c.l.b16 %v1614
    %v4538 = vunpack.c.h.b16 %v1614
    %v4539 = vunpack.c.l.b16 %v1615
    %v4540 = vunpack.c.h.b16 %v1615
    %v4541 = vunpack.c.l.b16 %v1616
    %v4542 = vunpack.c.h.b16 %v1616
    %v4543 = vunpack.c.l.b16 %v1617
    %v4544 = vunpack.c.h.b16 %v1617
    %v4545 = vunpack.c.l.b16 %v1618
    %v4546 = vunpack.c.h.b16 %v1618
    %v4547 = vunpack.c.l.b16 %v1619
    %v4548 = vunpack.c.h.b16 %v1619
    %v4549 = vunpack.c.l.b16 %v1620
    %v4550 = vunpack.c.h.b16 %v1620
    %v4551 = vunpack.c.l.b16 %v1621
    %v4552 = vunpack.c.h.b16 %v1621
    %v4553 = vunpack.c.l.b16 %v1622
    %v4554 = vunpack.c.h.b16 %v1622
    %v4555 = vunpack.c.l.b16 %v1623
    %v4556 = vunpack.c.h.b16 %v1623
    %v4557 = vunpack.c.l.b16 %v1624
    %v4558 = vunpack.c.h.b16 %v1624
    %v4559 = vunpack.c.l.b16 %v1625
    %v4560 = vunpack.c.h.b16 %v1625
    %v4561 = vunpack.c.l.b16 %v1626
    %v4562 = vunpack.c.h.b16 %v1626
    %v4563 = vunpack.c.l.b16 %v1627
    %v4564 = vunpack.c.h.b16 %v1627
    %v4565 = vunpack.c.l.b16 %v1628
    %v4566 = vunpack.c.h.b16 %v1628
    %v4567 = vunpack.c.l.b16 %v1629
    %v4568 = vunpack.c.h.b16 %v1629
    %v4569 = vunpack.c.l.b16 %v1630
    %v4570 = vunpack.c.h.b16 %v1630
    %v4571 = vunpack.c.l.b16 %v1631
    %v4572 = vunpack.c.h.b16 %v1631
    %v4573 = vunpack.c.l.b16 %v1632
    %v4574 = vunpack.c.h.b16 %v1632
    %v4575 = vunpack.c.l.b16 %v1633
    %v4576 = vunpack.c.h.b16 %v1633
    %v4577 = vunpack.c.l.b16 %v1634
    %v4578 = vunpack.c.h.b16 %v1634
    %v4579 = vunpack.c.l.b16 %v1635
    %v4580 = vunpack.c.h.b16 %v1635
    %v4581 = vunpack.c.l.b16 %v1636
    %v4582 = vunpack.c.h.b16 %v1636
    %v4583 = vunpack.c.l.b16 %v1637
    %v4584 = vunpack.c.h.b16 %v1637
    %v4585 = vunpack.c.l.b16 %v1638
    %v4586 = vunpack.c.h.b16 %v1638
    %v4587 = vunpack.c.l.b16 %v1639
    %v4588 = vunpack.c.h.b16 %v1639
    %v4589 = vunpack.c.l.b16 %v1640
    %v4590 = vunpack.c.h.b16 %v1640
    %v4591 = vunpack.c.l.b16 %v1641
    %v4592 = vunpack.c.h.b16 %v1641
    %v4593 = vunpack.c.l.b16 %v1642
    %v4594 = vunpack.c.h.b16 %v1642
    %v4595 = vunpack.c.l.b16 %v1643
    %v4596 = vunpack.c.h.b16 %v1643
    %v4597 = vunpack.c.l.b16 %v1644
    %v4598 = vunpack.c.h.b16 %v1644
    %v4599 = vunpack.c.l.b16 %v1645
    %v4600 = vunpack.c.h.b16 %v1645
    %v4601 = vunpack.c.l.b16 %v1646
    %v4602 = vunpack.c.h.b16 %v1646
    %v4603 = vunpack.c.l.b16 %v1647
    %v4604 = vunpack.c.h.b16 %v1647
    %v4605 = vunpack.c.l.b16 %v1648
    %v4606 = vunpack.c.h.b16 %v1648
    %v4607 = vunpack.c.l.b16 %v1649
    %v4608 = vunpack.c.h.b16 %v1649
    %v4609 = vunpack.c.l.b16 %v1650
    %v4610 = vunpack.c.h.b16 %v1650
    %v4611 = vunpack.c.l.b16 %v1651
    %v4612 = vunpack.c.h.b16 %v1651
    %v4613 = vunpack.c.l.b16 %v1652
    %v4614 = vunpack.c.h.b16 %v1652
    %v4615 = vunpack.c.l.b16 %v1653
    %v4616 = vunpack.c.h.b16 %v1653
    %v4617 = vunpack.c.l.b16 %v1654
    %v4618 = vunpack.c.h.b16 %v1654
    %v4619 = vunpack.c.l.b16 %v1655
    %v4620 = vunpack.c.h.b16 %v1655
    %v4621 = vunpack.c.l.b16 %v1656
    %v4622 = vunpack.c.h.b16 %v1656
    %v4623 = vunpack.c.l.b16 %v1657
    %v4624 = vunpack.c.h.b16 %v1657
    %v4625 = vunpack.c.l.b16 %v1658
    %v4626 = vunpack.c.h.b16 %v1658
    %v4627 = vunpack.c.l.b16 %v1659
    %v4628 = vunpack.c.h.b16 %v1659
    %v4629 = vunpack.c.l.b16 %v1660
    %v4630 = vunpack.c.h.b16 %v1660
    %v4631 = vunpack.c.l.b16 %v1661
    %v4632 = vunpack.c.h.b16 %v1661
    %v4633 = vunpack.c.l.b16 %v1662
    %v4634 = vunpack.c.h.b16 %v1662
    %v4635 = vunpack.c.l.b16 %v1663
    %v4636 = vunpack.c.h.b16 %v1663
    %v4637 = vunpack.c.l.b16 %v1664
    %v4638 = vunpack.c.h.b16 %v1664
    %v4639 = vunpack.c.l.b16 %v1665
    %v4640 = vunpack.c.h.b16 %v1665
    %v4641 = vunpack.c.l.b16 %v1666
    %v4642 = vunpack.c.h.b16 %v1666
    %v4643 = vunpack.c.l.b16 %v1667
    %v4644 = vunpack.c.h.b16 %v1667
    %v4645 = vunpack.c.l.b16 %v1668
    %v4646 = vunpack.c.h.b16 %v1668
    %v4647 = vunpack.c.l.b16 %v1669
    %v4648 = vunpack.c.h.b16 %v1669
    %v4649 = vunpack.c.l.b16 %v1670
    %v4650 = vunpack.c.h.b16 %v1670
    %v4651 = vunpack.c.l.b16 %v1671
    %v4652 = vunpack.c.h.b16 %v1671
    %v4653 = vunpack.c.l.b16 %v1672
    %v4654 = vunpack.c.h.b16 %v1672
    %v4655 = vunpack.c.l.b16 %v1673
    %v4656 = vunpack.c.h.b16 %v1673
    %v4657 = vunpack.c.l.b16 %v1674
    %v4658 = vunpack.c.h.b16 %v1674
    %v4659 = vunpack.c.l.b16 %v1675
    %v4660 = vunpack.c.h.b16 %v1675
    %v4661 = vunpack.c.l.b16 %v1676
    %v4662 = vunpack.c.h.b16 %v1676
    %v4663 = vunpack.c.l.b16 %v1677
    %v4664 = vunpack.c.h.b16 %v1677
    %v4665 = vunpack.c.l.b16 %v1678
    %v4666 = vunpack.c.h.b16 %v1678
    %v4667 = vunpack.c.l.b16 %v1679
    %v4668 = vunpack.c.h.b16 %v1679
    %v4669 = vunpack.c.l.b16 %v1680
    %v4670 = vunpack.c.h.b16 %v1680
    %v4671 = vunpack.c.l.b16 %v1681
    %v4672 = vunpack.c.h.b16 %v1681
    %v4673 = vunpack.c.l.b16 %v1682
    %v4674 = vunpack.c.h.b16 %v1682
    %v4675 = vunpack.c.l.b16 %v1683
    %v4676 = vunpack.c.h.b16 %v1683
    %v4677 = vunpack.c.l.b16 %v1684
    %v4678 = vunpack.c.h.b16 %v1684
    %v4679 = vunpack.c.l.b16 %v1685
    %v4680 = vunpack.c.h.b16 %v1685
    %v4681 = vunpack.c.l.b16 %v1686
    %v4682 = vunpack.c.h.b16 %v1686
    %v4683 = vunpack.c.l.b16 %v1687
    %v4684 = vunpack.c.h.b16 %v1687
    %v4685 = vunpack.c.l.b16 %v1688
    %v4686 = vunpack.c.h.b16 %v1688
    %v4687 = vunpack.c.l.b16 %v1689
    %v4688 = vunpack.c.h.b16 %v1689
    %v4689 = vunpack.c.l.b16 %v1690
    %v4690 = vunpack.c.h.b16 %v1690
    %v4691 = vunpack.c.l.b16 %v1691
    %v4692 = vunpack.c.h.b16 %v1691
    %v4693 = vunpack.c.l.b16 %v1692
    %v4694 = vunpack.c.h.b16 %v1692
    %v4695 = vunpack.c.l.b16 %v1693
    %v4696 = vunpack.c.h.b16 %v1693
    %v4697 = vunpack.c.l.b16 %v1694
    %v4698 = vunpack.c.h.b16 %v1694
    %v4699 = vunpack.c.l.b16 %v1695
    %v4700 = vunpack.c.h.b16 %v1695
    %v4701 = vunpack.c.l.b16 %v1696
    %v4702 = vunpack.c.h.b16 %v1696
    %v4703 = vunpack.c.l.b16 %v1697
    %v4704 = vunpack.c.h.b16 %v1697
    %v4705 = vunpack.c.l.b16 %v1698
    %v4706 = vunpack.c.h.b16 %v1698
    %v4707 = vunpack.c.l.b16 %v1699
    %v4708 = vunpack.c.h.b16 %v1699
    %v4709 = vunpack.c.l.b16 %v1700
    %v4710 = vunpack.c.h.b16 %v1700
    %v4711 = vunpack.c.l.b16 %v1701
    %v4712 = vunpack.c.h.b16 %v1701
    %v4713 = vunpack.c.l.b16 %v1702
    %v4714 = vunpack.c.h.b16 %v1702
    %v4715 = vunpack.c.l.b16 %v1703
    %v4716 = vunpack.c.h.b16 %v1703
    %v4717 = vunpack.c.l.b16 %v1704
    %v4718 = vunpack.c.h.b16 %v1704
    %v4719 = vunpack.c.l.b16 %v1705
    %v4720 = vunpack.c.h.b16 %v1705
    %v4721 = vunpack.c.l.b16 %v1706
    %v4722 = vunpack.c.h.b16 %v1706
    %v4723 = vunpack.c.l.b16 %v1707
    %v4724 = vunpack.c.h.b16 %v1707
    %v4725 = vunpack.c.l.b16 %v1708
    %v4726 = vunpack.c.h.b16 %v1708
    %v4727 = vunpack.c.l.b16 %v1709
    %v4728 = vunpack.c.h.b16 %v1709
    %v4729 = vunpack.c.l.b16 %v1710
    %v4730 = vunpack.c.h.b16 %v1710
    %v4731 = vunpack.c.l.b16 %v1711
    %v4732 = vunpack.c.h.b16 %v1711
    %v4733 = vunpack.c.l.b16 %v1712
    %v4734 = vunpack.c.h.b16 %v1712
    %v4735 = vunpack.c.l.b16 %v1713
    %v4736 = vunpack.c.h.b16 %v1713
    %v4737 = vunpack.c.l.b16 %v1714
    %v4738 = vunpack.c.h.b16 %v1714
    %v4739 = vunpack.c.l.b16 %v1715
    %v4740 = vunpack.c.h.b16 %v1715
    %v4741 = vunpack.c.l.b16 %v1716
    %v4742 = vunpack.c.h.b16 %v1716
    %v4743 = vunpack.c.l.b16 %v1717
    %v4744 = vunpack.c.h.b16 %v1717
    %v4745 = vunpack.c.l.b16 %v1718
    %v4746 = vunpack.c.h.b16 %v1718
    %v4747 = vunpack.c.l.b16 %v1719
    %v4748 = vunpack.c.h.b16 %v1719
    %v4749 = vunpack.c.l.b16 %v1720
    %v4750 = vunpack.c.h.b16 %v1720
    %v4751 = vunpack.c.l.b16 %v1721
    %v4752 = vunpack.c.h.b16 %v1721
    %v4753 = vunpack.c.l.b16 %v1722
    %v4754 = vunpack.c.h.b16 %v1722
    %v4755 = vunpack.c.l.b16 %v1723
    %v4756 = vunpack.c.h.b16 %v1723
    %v4757 = vunpack.c.l.b16 %v1724
    %v4758 = vunpack.c.h.b16 %v1724
    %v4759 = vunpack.c.l.b16 %v1725
    %v4760 = vunpack.c.h.b16 %v1725
    %v4761 = vunpack.c.l.b16 %v1726
    %v4762 = vunpack.c.h.b16 %v1726
    %v4763 = vunpack.c.l.b16 %v1727
    %v4764 = vunpack.c.h.b16 %v1727
    %v4765 = vunpack.c.l.b16 %v1728
    %v4766 = vunpack.c.h.b16 %v1728
    %v4767 = vunpack.c.l.b16 %v1729
    %v4768 = vunpack.c.h.b16 %v1729
    %v4769 = vunpack.c.l.b16 %v1730
    %v4770 = vunpack.c.h.b16 %v1730
    %v4771 = vunpack.c.l.b16 %v1731
    %v4772 = vunpack.c.h.b16 %v1731
    %v4773 = vunpack.c.l.b16 %v1732
    %v4774 = vunpack.c.h.b16 %v1732
    %v4775 = vunpack.c.l.b16 %v1733
    %v4776 = vunpack.c.h.b16 %v1733
    %v4777 = vunpack.c.l.b16 %v1734
    %v4778 = vunpack.c.h.b16 %v1734
    %v4779 = vunpack.c.l.b16 %v1735
    %v4780 = vunpack.c.h.b16 %v1735
    %v4781 = vunpack.c.l.b16 %v1736
    %v4782 = vunpack.c.h.b16 %v1736
    %v4783 = vunpack.c.l.b16 %v1737
    %v4784 = vunpack.c.h.b16 %v1737
    %v4785 = vunpack.c.l.b16 %v1738
    %v4786 = vunpack.c.h.b16 %v1738
    %v4787 = vunpack.c.l.b16 %v1739
    %v4788 = vunpack.c.h.b16 %v1739
    %v4789 = vunpack.c.l.b16 %v1740
    %v4790 = vunpack.c.h.b16 %v1740
    %v4791 = vunpack.c.l.b16 %v1741
    %v4792 = vunpack.c.h.b16 %v1741
    %v4793 = vunpack.c.l.b16 %v1742
    %v4794 = vunpack.c.h.b16 %v1742
    %v4795 = vunpack.c.l.b16 %v1743
    %v4796 = vunpack.c.h.b16 %v1743
    %v4797 = vunpack.c.l.b16 %v1744
    %v4798 = vunpack.c.h.b16 %v1744
    %v4799 = vunpack.c.l.b16 %v1745
    %v4800 = vunpack.c.h.b16 %v1745
    %v4801 = vunpack.c.l.b16 %v1746
    %v4802 = vunpack.c.h.b16 %v1746
    %v4803 = vunpack.c.l.b16 %v1747
    %v4804 = vunpack.c.h.b16 %v1747
    %v4805 = vunpack.c.l.b16 %v1748
    %v4806 = vunpack.c.h.b16 %v1748
    %v4807 = vunpack.c.l.b16 %v1749
    %v4808 = vunpack.c.h.b16 %v1749
    %v4809 = vunpack.c.l.b16 %v1750
    %v4810 = vunpack.c.h.b16 %v1750
    %v4811 = vunpack.c.l.b16 %v1751
    %v4812 = vunpack.c.h.b16 %v1751
    %v4813 = vunpack.c.l.b16 %v1752
    %v4814 = vunpack.c.h.b16 %v1752
    %v4815 = vunpack.c.l.b16 %v1753
    %v4816 = vunpack.c.h.b16 %v1753
    %v4817 = vunpack.c.l.b16 %v1754
    %v4818 = vunpack.c.h.b16 %v1754
    %v4819 = vunpack.c.l.b16 %v1755
    %v4820 = vunpack.c.h.b16 %v1755
    %v4821 = vunpack.c.l.b16 %v1756
    %v4822 = vunpack.c.h.b16 %v1756
    %v4823 = vunpack.c.l.b16 %v1757
    %v4824 = vunpack.c.h.b16 %v1757
    %v4825 = vunpack.c.l.b16 %v1758
    %v4826 = vunpack.c.h.b16 %v1758
    %v4827 = vunpack.c.l.b16 %v1759
    %v4828 = vunpack.c.h.b16 %v1759
    %v4829 = vunpack.c.l.b16 %v1760
    %v4830 = vunpack.c.h.b16 %v1760
    %v4831 = vunpack.c.l.b16 %v1761
    %v4832 = vunpack.c.h.b16 %v1761
    %v4833 = vunpack.c.l.b16 %v1762
    %v4834 = vunpack.c.h.b16 %v1762
    %v4835 = vunpack.c.l.b16 %v1763
    %v4836 = vunpack.c.h.b16 %v1763
    %v4837 = vunpack.c.l.b16 %v1764
    %v4838 = vunpack.c.h.b16 %v1764
    %v4839 = vunpack.c.l.b16 %v1765
    %v4840 = vunpack.c.h.b16 %v1765
    %v4841 = vunpack.c.l.b16 %v1766
    %v4842 = vunpack.c.h.b16 %v1766
    %v4843 = vunpack.c.l.b16 %v1767
    %v4844 = vunpack.c.h.b16 %v1767
    %v4845 = vunpack.c.l.b16 %v1768
    %v4846 = vunpack.c.h.b16 %v1768
    %v4847 = vunpack.c.l.b16 %v1769
    %v4848 = vunpack.c.h.b16 %v1769
    %v4849 = vunpack.c.l.b16 %v1770
    %v4850 = vunpack.c.h.b16 %v1770
    %v4851 = vunpack.c.l.b16 %v1771
    %v4852 = vunpack.c.h.b16 %v1771
    %v4853 = vunpack.c.l.b16 %v1772
    %v4854 = vunpack.c.h.b16 %v1772
    %v4855 = vunpack.c.l.b16 %v1773
    %v4856 = vunpack.c.h.b16 %v1773
    %v4857 = vunpack.c.l.b16 %v1774
    %v4858 = vunpack.c.h.b16 %v1774
    %v4859 = vunpack.c.l.b16 %v1775
    %v4860 = vunpack.c.h.b16 %v1775
    %v4861 = vunpack.c.l.b16 %v1776
    %v4862 = vunpack.c.h.b16 %v1776
    %v4863 = vunpack.c.l.b16 %v1777
    %v4864 = vunpack.c.h.b16 %v1777
    %v4865 = vunpack.c.l.b16 %v1778
    %v4866 = vunpack.c.h.b16 %v1778
    %v4867 = vunpack.c.l.b16 %v1779
    %v4868 = vunpack.c.h.b16 %v1779
    %v4869 = vunpack.c.l.b16 %v1780
    %v4870 = vunpack.c.h.b16 %v1780
    %v4871 = vunpack.c.l.b16 %v1781
    %v4872 = vunpack.c.h.b16 %v1781
    %v4873 = vunpack.c.l.b16 %v1782
    %v4874 = vunpack.c.h.b16 %v1782
    %v4875 = vunpack.c.l.b16 %v1783
    %v4876 = vunpack.c.h.b16 %v1783
    %v4877 = vunpack.c.l.b16 %v1784
    %v4878 = vunpack.c.h.b16 %v1784
    %v4879 = vunpack.c.l.b16 %v1785
    %v4880 = vunpack.c.h.b16 %v1785
    %v4881 = vunpack.c.l.b16 %v1786
    %v4882 = vunpack.c.h.b16 %v1786
    %v4883 = vunpack.c.l.b16 %v1787
    %v4884 = vunpack.c.h.b16 %v1787
    %v4885 = vunpack.c.l.b16 %v1788
    %v4886 = vunpack.c.h.b16 %v1788
    %v4887 = vunpack.c.l.b16 %v1789
    %v4888 = vunpack.c.h.b16 %v1789
    %v4889 = vunpack.c.l.b16 %v1790
    %v4890 = vunpack.c.h.b16 %v1790
    %v4891 = vunpack.c.l.b16 %v1791
    %v4892 = vunpack.c.h.b16 %v1791
    %v4893 = vunpack.c.l.b16 %v1792
    %v4894 = vunpack.c.h.b16 %v1792
    %v4895 = vunpack.c.l.b16 %v1793
    %v4896 = vunpack.c.h.b16 %v1793
    %v4897 = vunpack.c.l.b16 %v1794
    %v4898 = vunpack.c.h.b16 %v1794
    %v4899 = vunpack.c.l.b16 %v1795
    %v4900 = vunpack.c.h.b16 %v1795
    %v4901 = vunpack.c.l.b16 %v1796
    %v4902 = vunpack.c.h.b16 %v1796
    %v4903 = vunpack.c.l.b16 %v1797
    %v4904 = vunpack.c.h.b16 %v1797
    %v4905 = vunpack.c.l.b16 %v1798
    %v4906 = vunpack.c.h.b16 %v1798
    %v4907 = vunpack.c.l.b16 %v1799
    %v4908 = vunpack.c.h.b16 %v1799
    %v4909 = vunpack.c.l.b16 %v1800
    %v4910 = vunpack.c.h.b16 %v1800
    %v4911 = vunpack.c.l.b16 %v1801
    %v4912 = vunpack.c.h.b16 %v1801
    %v4913 = vunpack.c.l.b16 %v1802
    %v4914 = vunpack.c.h.b16 %v1802
    %v4915 = vunpack.c.l.b16 %v1803
    %v4916 = vunpack.c.h.b16 %v1803
    %v4917 = vunpack.c.l.b16 %v1804
    %v4918 = vunpack.c.h.b16 %v1804
    %v4919 = vunpack.c.l.b16 %v1805
    %v4920 = vunpack.c.h.b16 %v1805
    %v4921 = vunpack.c.l.b16 %v1806
    %v4922 = vunpack.c.h.b16 %v1806
    %v4923 = vunpack.c.l.b16 %v1807
    %v4924 = vunpack.c.h.b16 %v1807
    %v4925 = vunpack.c.l.b16 %v1808
    %v4926 = vunpack.c.h.b16 %v1808
    %v4927 = vunpack.c.l.b16 %v1809
    %v4928 = vunpack.c.h.b16 %v1809
    %v4929 = vunpack.c.l.b16 %v1810
    %v4930 = vunpack.c.h.b16 %v1810
    %v4931 = vunpack.c.l.b16 %v1811
    %v4932 = vunpack.c.h.b16 %v1811
    %v4933 = vunpack.c.l.b16 %v1812
    %v4934 = vunpack.c.h.b16 %v1812
    %v4935 = vunpack.c.l.b16 %v1813
    %v4936 = vunpack.c.h.b16 %v1813
    %v4937 = vunpack.c.l.b16 %v1814
    %v4938 = vunpack.c.h.b16 %v1814
    %v4939 = vunpack.c.l.b16 %v1815
    %v4940 = vunpack.c.h.b16 %v1815
    %v4941 = vunpack.c.l.b16 %v1816
    %v4942 = vunpack.c.h.b16 %v1816
    %v4943 = vunpack.c.l.b16 %v1817
    %v4944 = vunpack.c.h.b16 %v1817
    %v4945 = vunpack.c.l.b16 %v1818
    %v4946 = vunpack.c.h.b16 %v1818
    %v4947 = vunpack.c.l.b16 %v1819
    %v4948 = vunpack.c.h.b16 %v1819
    %v4949 = vunpack.c.l.b16 %v1820
    %v4950 = vunpack.c.h.b16 %v1820
    %v4951 = vunpack.c.l.b16 %v1821
    %v4952 = vunpack.c.h.b16 %v1821
    %v4953 = vunpack.c.l.b16 %v1822
    %v4954 = vunpack.c.h.b16 %v1822
    %v4955 = vunpack.c.l.b16 %v1823
    %v4956 = vunpack.c.h.b16 %v1823
    %v4957 = vunpack.c.l.b16 %v1824
    %v4958 = vunpack.c.h.b16 %v1824
    %v4959 = vunpack.c.l.b16 %v1825
    %v4960 = vunpack.c.h.b16 %v1825
    %v4961 = vunpack.c.l.b16 %v1826
    %v4962 = vunpack.c.h.b16 %v1826
    %v4963 = vunpack.c.l.b16 %v1827
    %v4964 = vunpack.c.h.b16 %v1827
    %v4965 = vunpack.c.l.b16 %v1828
    %v4966 = vunpack.c.h.b16 %v1828
    %v4967 = vunpack.c.l.b16 %v1829
    %v4968 = vunpack.c.h.b16 %v1829
    %v4969 = vunpack.c.l.b16 %v1830
    %v4970 = vunpack.c.h.b16 %v1830
    %v4971 = vunpack.c.l.b16 %v1831
    %v4972 = vunpack.c.h.b16 %v1831
    %v4973 = vunpack.c.l.b16 %v1832
    %v4974 = vunpack.c.h.b16 %v1832
    %v4975 = vunpack.c.l.b16 %v1833
    %v4976 = vunpack.c.h.b16 %v1833
    %v4977 = vunpack.c.l.b16 %v1834
    %v4978 = vunpack.c.h.b16 %v1834
    %v4979 = vunpack.c.l.b16 %v1835
    %v4980 = vunpack.c.h.b16 %v1835
    %v4981 = vunpack.c.l.b16 %v1836
    %v4982 = vunpack.c.h.b16 %v1836
    %v4983 = vunpack.c.l.b16 %v1837
    %v4984 = vunpack.c.h.b16 %v1837
    %v4985 = vunpack.c.l.b16 %v1838
    %v4986 = vunpack.c.h.b16 %v1838
    %v4987 = vunpack.c.l.b16 %v1839
    %v4988 = vunpack.c.h.b16 %v1839
    %v4989 = vunpack.c.l.b16 %v1840
    %v4990 = vunpack.c.h.b16 %v1840
    %v4991 = vunpack.c.l.b16 %v1841
    %v4992 = vunpack.c.h.b16 %v1841
    %v4993 = vunpack.c.l.b16 %v1842
    %v4994 = vunpack.c.h.b16 %v1842
    %v4995 = vunpack.c.l.b16 %v1843
    %v4996 = vunpack.c.h.b16 %v1843
    %v4997 = vunpack.c.l.b16 %v1844
    %v4998 = vunpack.c.h.b16 %v1844
    %v4999 = vunpack.c.l.b16 %v1845
    %v5000 = vunpack.c.h.b16 %v1845
    %v5001 = vunpack.c.l.b16 %v1846
    %v5002 = vunpack.c.h.b16 %v1846
    %v5003 = vunpack.c.l.b16 %v1847
    %v5004 = vunpack.c.h.b16 %v1847
    %v5005 = vunpack.c.l.b16 %v1848
    %v5006 = vunpack.c.h.b16 %v1848
    %v5007 = vunpack.c.l.b16 %v1849
    %v5008 = vunpack.c.h.b16 %v1849
    %v5009 = vunpack.c.l.b16 %v1850
    %v5010 = vunpack.c.h.b16 %v1850
    %v5011 = vunpack.c.l.b16 %v1851
    %v5012 = vunpack.c.h.b16 %v1851
    %v5013 = vunpack.c.l.b16 %v1852
    %v5014 = vunpack.c.h.b16 %v1852
    %v5015 = vunpack.c.l.b16 %v1853
    %v5016 = vunpack.c.h.b16 %v1853
    %v5017 = vunpack.c.l.b16 %v1854
    %v5018 = vunpack.c.h.b16 %v1854
    %v5019 = vunpack.c.l.b16 %v1855
    %v5020 = vunpack.c.h.b16 %v1855
    %v5021 = vunpack.c.l.b16 %v1856
    %v5022 = vunpack.c.h.b16 %v1856
    %v5023 = vunpack.c.l.b16 %v1857
    %v5024 = vunpack.c.h.b16 %v1857
    %v5025 = vunpack.c.l.b16 %v1858
    %v5026 = vunpack.c.h.b16 %v1858
    %v5027 = vunpack.c.l.b16 %v1859
    %v5028 = vunpack.c.h.b16 %v1859
    %v5029 = vunpack.c.l.b16 %v1860
    %v5030 = vunpack.c.h.b16 %v1860
    %v5031 = vunpack.c.l.b16 %v1861
    %v5032 = vunpack.c.h.b16 %v1861
    %v5033 = vunpack.c.l.b16 %v1862
    %v5034 = vunpack.c.h.b16 %v1862
    %v5035 = vunpack.c.l.b16 %v1863
    %v5036 = vunpack.c.h.b16 %v1863
    %v5037 = vunpack.c.l.b16 %v1864
    %v5038 = vunpack.c.h.b16 %v1864
    %v5039 = vunpack.c.l.b16 %v1865
    %v5040 = vunpack.c.h.b16 %v1865
    %v5041 = vunpack.c.l.b16 %v1866
    %v5042 = vunpack.c.h.b16 %v1866
    %v5043 = vunpack.c.l.b16 %v1867
    %v5044 = vunpack.c.h.b16 %v1867
    %v5045 = vunpack.c.l.b16 %v1868
    %v5046 = vunpack.c.h.b16 %v1868
    %v5047 = vunpack.c.l.b16 %v1869
    %v5048 = vunpack.c.h.b16 %v1869
    %v5049 = vunpack.c.l.b16 %v1870
    %v5050 = vunpack.c.h.b16 %v1870
    %v5051 = vunpack.c.l.b16 %v1871
    %v5052 = vunpack.c.h.b16 %v1871
    %v5053 = vunpack.c.l.b16 %v1872
    %v5054 = vunpack.c.h.b16 %v1872
    %v5055 = vunpack.c.l.b16 %v1873
    %v5056 = vunpack.c.h.b16 %v1873
    %v5057 = vunpack.c.l.b16 %v1874
    %v5058 = vunpack.c.h.b16 %v1874
    %v5059 = vunpack.c.l.b16 %v1875
    %v5060 = vunpack.c.h.b16 %v1875
    %v5061 = vunpack.c.l.b16 %v1876
    %v5062 = vunpack.c.h.b16 %v1876
    %v5063 = vunpack.c.l.b16 %v1877
    %v5064 = vunpack.c.h.b16 %v1877
    %v5065 = vunpack.c.l.b16 %v1878
    %v5066 = vunpack.c.h.b16 %v1878
    %v5067 = vunpack.c.l.b16 %v1879
    %v5068 = vunpack.c.h.b16 %v1879
    %v5069 = vunpack.c.l.b16 %v1880
    %v5070 = vunpack.c.h.b16 %v1880
    %v5071 = vunpack.c.l.b16 %v1881
    %v5072 = vunpack.c.h.b16 %v1881
    %v5073 = vunpack.c.l.b16 %v1882
    %v5074 = vunpack.c.h.b16 %v1882
    %v5075 = vunpack.c.l.b16 %v1883
    %v5076 = vunpack.c.h.b16 %v1883
    %v5077 = vunpack.c.l.b16 %v1884
    %v5078 = vunpack.c.h.b16 %v1884
    %v5079 = vunpack.c.l.b16 %v1885
    %v5080 = vunpack.c.h.b16 %v1885
    %v5081 = vunpack.c.l.b16 %v1886
    %v5082 = vunpack.c.h.b16 %v1886
    %v5083 = vunpack.c.l.b16 %v1887
    %v5084 = vunpack.c.h.b16 %v1887
    %v5085 = vunpack.c.l.b16 %v1888
    %v5086 = vunpack.c.h.b16 %v1888
    %v5087 = vunpack.c.l.b16 %v1889
    %v5088 = vunpack.c.h.b16 %v1889
    %v5089 = vunpack.c.l.b16 %v1890
    %v5090 = vunpack.c.h.b16 %v1890
    %v5091 = vunpack.c.l.b16 %v1891
    %v5092 = vunpack.c.h.b16 %v1891
    %v5093 = vunpack.c.l.b16 %v1892
    %v5094 = vunpack.c.h.b16 %v1892
    %v5095 = vunpack.c.l.b16 %v1893
    %v5096 = vunpack.c.h.b16 %v1893
    %v5097 = vunpack.c.l.b16 %v1894
    %v5098 = vunpack.c.h.b16 %v1894
    %v5099 = vunpack.c.l.b16 %v1895
    %v5100 = vunpack.c.h.b16 %v1895
    %v5101 = vunpack.c.l.b16 %v1896
    %v5102 = vunpack.c.h.b16 %v1896
    %v5103 = vunpack.c.l.b16 %v1897
    %v5104 = vunpack.c.h.b16 %v1897
    %v5105 = vunpack.c.l.b16 %v1898
    %v5106 = vunpack.c.h.b16 %v1898
    %v5107 = vunpack.c.l.b16 %v1899
    %v5108 = vunpack.c.h.b16 %v1899
    %v5109 = vunpack.c.l.b16 %v1900
    %v5110 = vunpack.c.h.b16 %v1900
    %v5111 = vunpack.c.l.b16 %v1901
    %v5112 = vunpack.c.h.b16 %v1901
    %v5113 = vunpack.c.l.b16 %v1902
    %v5114 = vunpack.c.h.b16 %v1902
    %v5115 = vunpack.c.l.b16 %v1903
    %v5116 = vunpack.c.h.b16 %v1903
    %v5117 = vunpack.c.l.b16 %v1904
    %v5118 = vunpack.c.h.b16 %v1904
    %v5119 = vunpack.c.l.b16 %v1905
    %v5120 = vunpack.c.h.b16 %v1905
    %v5121 = vunpack.c.l.b16 %v1906
    %v5122 = vunpack.c.h.b16 %v1906
    %v5123 = vunpack.c.l.b16 %v1907
    %v5124 = vunpack.c.h.b16 %v1907
    %v5125 = vunpack.c.l.b16 %v1908
    %v5126 = vunpack.c.h.b16 %v1908
    %v5127 = vunpack.c.l.b16 %v1909
    %v5128 = vunpack.c.h.b16 %v1909
    %v5129 = vunpack.c.l.b16 %v1910
    %v5130 = vunpack.c.h.b16 %v1910
    %v5131 = vunpack.c.l.b16 %v1911
    %v5132 = vunpack.c.h.b16 %v1911
    %v5133 = vunpack.c.l.b16 %v1912
    %v5134 = vunpack.c.h.b16 %v1912
    %v5135 = vunpack.c.l.b16 %v1913
    %v5136 = vunpack.c.h.b16 %v1913
    %v5137 = vunpack.c.l.b16 %v1914
    %v5138 = vunpack.c.h.b16 %v1914
    %v5139 = vunpack.c.l.b16 %v1915
    %v5140 = vunpack.c.h.b16 %v1915
    %v5141 = vunpack.c.l.b16 %v1916
    %v5142 = vunpack.c.h.b16 %v1916
    %v5143 = vunpack.c.l.b16 %v1917
    %v5144 = vunpack.c.h.b16 %v1917
    %v5145 = vunpack.c.l.b16 %v1918
    %v5146 = vunpack.c.h.b16 %v1918
    %v5147 = vunpack.c.l.b16 %v1919
    %v5148 = vunpack.c.h.b16 %v1919
    %v5149 = vunpack.c.l.b16 %v1920
    %v5150 = vunpack.c.h.b16 %v1920
    %v5151 = vunpack.c.l.b16 %v1921
    %v5152 = vunpack.c.h.b16 %v1921
    %v5153 = vunpack.c.l.b16 %v1922
    %v5154 = vunpack.c.h.b16 %v1922
    %v5155 = vunpack.c.l.b16 %v1923
    %v5156 = vunpack.c.h.b16 %v1923
    %v5157 = vunpack.c.l.b16 %v1924
    %v5158 = vunpack.c.h.b16 %v1924
    %v5159 = vunpack.c.l.b16 %v1925
    %v5160 = vunpack.c.h.b16 %v1925
    %v5161 = vunpack.c.l.b16 %v1926
    %v5162 = vunpack.c.h.b16 %v1926
    %v5163 = vunpack.c.l.b16 %v1927
    %v5164 = vunpack.c.h.b16 %v1927
    %v5165 = vunpack.c.l.b16 %v1928
    %v5166 = vunpack.c.h.b16 %v1928
    %v5167 = vunpack.c.l.b16 %v1929
    %v5168 = vunpack.c.h.b16 %v1929
    %v5169 = vunpack.c.l.b16 %v1930
    %v5170 = vunpack.c.h.b16 %v1930
    %v5171 = vunpack.c.l.b16 %v1931
    %v5172 = vunpack.c.h.b16 %v1931
    %v5173 = vunpack.c.l.b16 %v1932
    %v5174 = vunpack.c.h.b16 %v1932
    %v5175 = vunpack.c.l.b16 %v1933
    %v5176 = vunpack.c.h.b16 %v1933
    %v5177 = vunpack.c.l.b16 %v1934
    %v5178 = vunpack.c.h.b16 %v1934
    %v5179 = vunpack.c.l.b16 %v1935
    %v5180 = vunpack.c.h.b16 %v1935
    %v5181 = vunpack.c.l.b16 %v1936
    %v5182 = vunpack.c.h.b16 %v1936
    %v5183 = vunpack.c.l.b16 %v1937
    %v5184 = vunpack.c.h.b16 %v1937
    %v5185 = vunpack.c.l.b16 %v1938
    %v5186 = vunpack.c.h.b16 %v1938
    %v5187 = vunpack.c.l.b16 %v1939
    %v5188 = vunpack.c.h.b16 %v1939
    %v5189 = vunpack.c.l.b16 %v1940
    %v5190 = vunpack.c.h.b16 %v1940
    %v5191 = vunpack.c.l.b16 %v1941
    %v5192 = vunpack.c.h.b16 %v1941
    %v5193 = vunpack.c.l.b16 %v1942
    %v5194 = vunpack.c.h.b16 %v1942
    %v5195 = vunpack.c.l.b16 %v1943
    %v5196 = vunpack.c.h.b16 %v1943
    %v5197 = vunpack.c.l.b16 %v1944
    %v5198 = vunpack.c.h.b16 %v1944
    %v5199 = vunpack.c.l.b16 %v1945
    %v5200 = vunpack.c.h.b16 %v1945
    %v5201 = vunpack.c.l.b16 %v1946
    %v5202 = vunpack.c.h.b16 %v1946
    %v5203 = vunpack.c.l.b16 %v1947
    %v5204 = vunpack.c.h.b16 %v1947
    %v5205 = vunpack.c.l.b16 %v1948
    %v5206 = vunpack.c.h.b16 %v1948
    %v5207 = vunpack.c.l.b16 %v1949
    %v5208 = vunpack.c.h.b16 %v1949
    %v5209 = vunpack.c.l.b16 %v1950
    %v5210 = vunpack.c.h.b16 %v1950
    %v5211 = vunpack.c.l.b16 %v1951
    %v5212 = vunpack.c.h.b16 %v1951
    %v5213 = vunpack.c.l.b16 %v1952
    %v5214 = vunpack.c.h.b16 %v1952
    %v5215 = vunpack.c.l.b16 %v1953
    %v5216 = vunpack.c.h.b16 %v1953
    %v5217 = vunpack.c.l.b16 %v1954
    %v5218 = vunpack.c.h.b16 %v1954
    %v5219 = vunpack.c.l.b16 %v1955
    %v5220 = vunpack.c.h.b16 %v1955
    %v5221 = vunpack.c.l.b16 %v1956
    %v5222 = vunpack.c.h.b16 %v1956
    %v5223 = vunpack.c.l.b16 %v1957
    %v5224 = vunpack.c.h.b16 %v1957
    %v5225 = vunpack.c.l.b16 %v1958
    %v5226 = vunpack.c.h.b16 %v1958
    %v5227 = vunpack.c.l.b16 %v1959
    %v5228 = vunpack.c.h.b16 %v1959
    %v5229 = vunpack.c.l.b16 %v1960
    %v5230 = vunpack.c.h.b16 %v1960
    %v5231 = vunpack.c.l.b16 %v1961
    %v5232 = vunpack.c.h.b16 %v1961
    %v5233 = vunpack.c.l.b16 %v1962
    %v5234 = vunpack.c.h.b16 %v1962
    %v5235 = vunpack.c.l.b16 %v1963
    %v5236 = vunpack.c.h.b16 %v1963
    %v5237 = vunpack.c.l.b16 %v1964
    %v5238 = vunpack.c.h.b16 %v1964
    %v5239 = vunpack.c.l.b16 %v1965
    %v5240 = vunpack.c.h.b16 %v1965
    %v5241 = vunpack.c.l.b16 %v1966
    %v5242 = vunpack.c.h.b16 %v1966
    %v5243 = vunpack.c.l.b16 %v1967
    %v5244 = vunpack.c.h.b16 %v1967
    %v5245 = vunpack.c.l.b16 %v1968
    %v5246 = vunpack.c.h.b16 %v1968
    %v5247 = vunpack.c.l.b16 %v1969
    %v5248 = vunpack.c.h.b16 %v1969
    %v5249 = vunpack.c.l.b16 %v1970
    %v5250 = vunpack.c.h.b16 %v1970
    %v5251 = vunpack.c.l.b16 %v1971
    %v5252 = vunpack.c.h.b16 %v1971
    %v5253 = vunpack.c.l.b16 %v1972
    %v5254 = vunpack.c.h.b16 %v1972
    %v5255 = vunpack.c.l.b16 %v1973
    %v5256 = vunpack.c.h.b16 %v1973
    %v5257 = vunpack.c.l.b16 %v1974
    %v5258 = vunpack.c.h.b16 %v1974
    %v5259 = vunpack.c.l.b16 %v1975
    %v5260 = vunpack.c.h.b16 %v1975
    %v5261 = vunpack.c.l.b16 %v1976
    %v5262 = vunpack.c.h.b16 %v1976
    %v5263 = vunpack.c.l.b16 %v1977
    %v5264 = vunpack.c.h.b16 %v1977
    %v5265 = vunpack.c.l.b16 %v1978
    %v5266 = vunpack.c.h.b16 %v1978
    %v5267 = vunpack.c.l.b16 %v1979
    %v5268 = vunpack.c.h.b16 %v1979
    %v5269 = vunpack.c.l.b16 %v1980
    %v5270 = vunpack.c.h.b16 %v1980
    %v5271 = vunpack.c.l.b16 %v1981
    %v5272 = vunpack.c.h.b16 %v1981
    %v5273 = vunpack.c.l.b16 %v1982
    %v5274 = vunpack.c.h.b16 %v1982
    %v5275 = vunpack.c.l.b16 %v1983
    %v5276 = vunpack.c.h.b16 %v1983
    %v5277 = vunpack.c.l.b16 %v1984
    %v5278 = vunpack.c.h.b16 %v1984
    %v5279 = vunpack.c.l.b16 %v1985
    %v5280 = vunpack.c.h.b16 %v1985
    %v5281 = vunpack.c.l.b16 %v1986
    %v5282 = vunpack.c.h.b16 %v1986
    %v5283 = vunpack.c.l.b16 %v1987
    %v5284 = vunpack.c.h.b16 %v1987
    %v5285 = vunpack.c.l.b16 %v1988
    %v5286 = vunpack.c.h.b16 %v1988
    %v5287 = vunpack.c.l.b16 %v1989
    %v5288 = vunpack.c.h.b16 %v1989
    %v5289 = vunpack.c.l.b16 %v1990
    %v5290 = vunpack.c.h.b16 %v1990
    %v5291 = vunpack.c.l.b16 %v1991
    %v5292 = vunpack.c.h.b16 %v1991
    %v5293 = vunpack.c.l.b16 %v1992
    %v5294 = vunpack.c.h.b16 %v1992
    %v5295 = vunpack.c.l.b16 %v1993
    %v5296 = vunpack.c.h.b16 %v1993
    %v5297 = vunpack.c.l.b16 %v1994
    %v5298 = vunpack.c.h.b16 %v1994
    %v5299 = vunpack.c.l.b16 %v1995
    %v5300 = vunpack.c.h.b16 %v1995
    %v5301 = vunpack.c.l.b16 %v1996
    %v5302 = vunpack.c.h.b16 %v1996
    %v5303 = vunpack.c.l.b16 %v1997
    %v5304 = vunpack.c.h.b16 %v1997
    %v5305 = vunpack.c.l.b16 %v1998
    %v5306 = vunpack.c.h.b16 %v1998
    %v5307 = vunpack.c.l.b16 %v1999
    %v5308 = vunpack.c.h.b16 %v1999
    %v5309 = vunpack.c.l.b16 %v2000
    %v5310 = vunpack.c.h.b16 %v2000
    %v5311 = vunpack.c.l.b16 %v2001
    %v5312 = vunpack.c.h.b16 %v2001
    %v5313 = vunpack.c.l.b16 %v2002
    %v5314 = vunpack.c.h.b16 %v2002
    %v5315 = vunpack.c.l.b16 %v2003
    %v5316 = vunpack.c.h.b16 %v2003
    %v5317 = vunpack.c.l.b16 %v2004
    %v5318 = vunpack.c.h.b16 %v2004
    %v5319 = vunpack.c.l.b16 %v2005
    %v5320 = vunpack.c.h.b16 %v2005
    %v5321 = vunpack.c.l.b16 %v2006
    %v5322 = vunpack.c.h.b16 %v2006
    %v5323 = vunpack.c.l.b16 %v2007
    %v5324 = vunpack.c.h.b16 %v2007
    %v5325 = vunpack.c.l.b16 %v2008
    %v5326 = vunpack.c.h.b16 %v2008
    %v5327 = vunpack.c.l.b16 %v2009
    %v5328 = vunpack.c.h.b16 %v2009
    %v5329 = vunpack.c.l.b16 %v2010
    %v5330 = vunpack.c.h.b16 %v2010
    %v5331 = vunpack.c.l.b16 %v2011
    %v5332 = vunpack.c.h.b16 %v2011
    %v5333 = vunpack.c.l.b16 %v2012
    %v5334 = vunpack.c.h.b16 %v2012
    %v5335 = vunpack.c.l.b16 %v2013
    %v5336 = vunpack.c.h.b16 %v2013
    %v5337 = vunpack.c.l.b16 %v2014
    %v5338 = vunpack.c.h.b16 %v2014
    %v5339 = vunpack.c.l.b16 %v2015
    %v5340 = vunpack.c.h.b16 %v2015
    %v5341 = vunpack.c.l.b16 %v2016
    %v5342 = vunpack.c.h.b16 %v2016
    %v5343 = vunpack.c.l.b16 %v2017
    %v5344 = vunpack.c.h.b16 %v2017
    %v5345 = vunpack.c.l.b16 %v2018
    %v5346 = vunpack.c.h.b16 %v2018
    %v5347 = vunpack.c.l.b16 %v2019
    %v5348 = vunpack.c.h.b16 %v2019
    %v5349 = vunpack.c.l.b16 %v2020
    %v5350 = vunpack.c.h.b16 %v2020
    %v5351 = vunpack.c.l.b16 %v2021
    %v5352 = vunpack.c.h.b16 %v2021
    %v5353 = vunpack.c.l.b16 %v2022
    %v5354 = vunpack.c.h.b16 %v2022
    %v5355 = vunpack.c.l.b16 %v2023
    %v5356 = vunpack.c.h.b16 %v2023
    %v5357 = vunpack.c.l.b16 %v2024
    %v5358 = vunpack.c.h.b16 %v2024
    %v5359 = vunpack.c.l.b16 %v2025
    %v5360 = vunpack.c.h.b16 %v2025
    %v5361 = vunpack.c.l.b16 %v2026
    %v5362 = vunpack.c.h.b16 %v2026
    %v5363 = vunpack.c.l.b16 %v2027
    %v5364 = vunpack.c.h.b16 %v2027
    %v5365 = vunpack.c.l.b16 %v2028
    %v5366 = vunpack.c.h.b16 %v2028
    %v5367 = vunpack.c.l.b16 %v2029
    %v5368 = vunpack.c.h.b16 %v2029
    %v5369 = vunpack.c.l.b16 %v2030
    %v5370 = vunpack.c.h.b16 %v2030
    %v5371 = vunpack.c.l.b16 %v2031
    %v5372 = vunpack.c.h.b16 %v2031
    %v5373 = vunpack.c.l.b16 %v2032
    %v5374 = vunpack.c.h.b16 %v2032
    %v5375 = vunpack.c.l.b16 %v2033
    %v5376 = vunpack.c.h.b16 %v2033
    %v5377 = vunpack.c.l.b16 %v2034
    %v5378 = vunpack.c.h.b16 %v2034
    %v5379 = vunpack.c.l.b16 %v2035
    %v5380 = vunpack.c.h.b16 %v2035
    %v5381 = vunpack.c.l.b16 %v2036
    %v5382 = vunpack.c.h.b16 %v2036
    %v5383 = vunpack.c.l.b16 %v2037
    %v5384 = vunpack.c.h.b16 %v2037
    %v5385 = vunpack.c.l.b16 %v2038
    %v5386 = vunpack.c.h.b16 %v2038
    %v5387 = vunpack.c.l.b16 %v2039
    %v5388 = vunpack.c.h.b16 %v2039
    %v5389 = vunpack.c.l.b16 %v2040
    %v5390 = vunpack.c.h.b16 %v2040
    %v5391 = vunpack.c.l.b16 %v2041
    %v5392 = vunpack.c.h.b16 %v2041
    %v5393 = vunpack.c.l.b16 %v2042
    %v5394 = vunpack.c.h.b16 %v2042
    %v5395 = vunpack.c.l.b16 %v2043
    %v5396 = vunpack.c.h.b16 %v2043
    %v5397 = vunpack.c.l.b16 %v2044
    %v5398 = vunpack.c.h.b16 %v2044
    %v5399 = vunpack.c.l.b16 %v2045
    %v5400 = vunpack.c.h.b16 %v2045
    %v5401 = vunpack.c.l.b16 %v2046
    %v5402 = vunpack.c.h.b16 %v2046
    %v5403 = vunpack.c.l.b16 %v2047
    %v5404 = vunpack.c.h.b16 %v2047
    %v5405 = vunpack.c.l.b16 %v2048
    %v5406 = vunpack.c.h.b16 %v2048
    %v5407 = vunpack.c.l.b16 %v2049
    %v5408 = vunpack.c.h.b16 %v2049
    %v5409 = vunpack.c.l.b16 %v2050
    %v5410 = vunpack.c.h.b16 %v2050
    %v5411 = vunpack.c.l.b16 %v2051
    %v5412 = vunpack.c.h.b16 %v2051
    %v5413 = vunpack.c.l.b16 %v2052
    %v5414 = vunpack.c.h.b16 %v2052
    %v5415 = vunpack.c.l.b16 %v2053
    %v5416 = vunpack.c.h.b16 %v2053
    %v5417 = vunpack.c.l.b16 %v2054
    %v5418 = vunpack.c.h.b16 %v2054
    %v5419 = vunpack.c.l.b16 %v2055
    %v5420 = vunpack.c.h.b16 %v2055
    %v5421 = vunpack.c.l.b16 %v2056
    %v5422 = vunpack.c.h.b16 %v2056
    %v5423 = vunpack.c.l.b16 %v2057
    %v5424 = vunpack.c.h.b16 %v2057
    %v5425 = vunpack.c.l.b16 %v2058
    %v5426 = vunpack.c.h.b16 %v2058
    %v5427 = vunpack.c.l.b16 %v2059
    %v5428 = vunpack.c.h.b16 %v2059
    %v5429 = vunpack.c.l.b16 %v2060
    %v5430 = vunpack.c.h.b16 %v2060
    %v5431 = vunpack.c.l.b16 %v2061
    %v5432 = vunpack.c.h.b16 %v2061
    %v5433 = vunpack.c.l.b16 %v2062
    %v5434 = vunpack.c.h.b16 %v2062
    %v5435 = vunpack.c.l.b16 %v2063
    %v5436 = vunpack.c.h.b16 %v2063
    %v5437 = vunpack.c.l.b16 %v2064
    %v5438 = vunpack.c.h.b16 %v2064
    %v5439 = vunpack.c.l.b16 %v2065
    %v5440 = vunpack.c.h.b16 %v2065
    %v5441 = vunpack.c.l.b16 %v2066
    %v5442 = vunpack.c.h.b16 %v2066
    %v5443 = vunpack.c.l.b16 %v2067
    %v5444 = vunpack.c.h.b16 %v2067
    %v5445 = vunpack.c.l.b16 %v2068
    %v5446 = vunpack.c.h.b16 %v2068
    %v5447 = vunpack.c.l.b16 %v2069
    %v5448 = vunpack.c.h.b16 %v2069
    %v5449 = vunpack.c.l.b16 %v2070
    %v5450 = vunpack.c.h.b16 %v2070
    %v5451 = vunpack.c.l.b16 %v2071
    %v5452 = vunpack.c.h.b16 %v2071
    %v5453 = vunpack.c.l.b16 %v2072
    %v5454 = vunpack.c.h.b16 %v2072
    %v5455 = vunpack.c.l.b16 %v2073
    %v5456 = vunpack.c.h.b16 %v2073
    %v5457 = vunpack.c.l.b16 %v2074
    %v5458 = vunpack.c.h.b16 %v2074
    %v5459 = vunpack.c.l.b16 %v2075
    %v5460 = vunpack.c.h.b16 %v2075
    %v5461 = vunpack.c.l.b16 %v2076
    %v5462 = vunpack.c.h.b16 %v2076
    %v5463 = vunpack.c.l.b16 %v2077
    %v5464 = vunpack.c.h.b16 %v2077
    %v5465 = vunpack.c.l.b16 %v2078
    %v5466 = vunpack.c.h.b16 %v2078
    %v5467 = vunpack.c.l.b16 %v2079
    %v5468 = vunpack.c.h.b16 %v2079
    %v5469 = vunpack.c.l.b16 %v2080
    %v5470 = vunpack.c.h.b16 %v2080
    %v5471 = vunpack.c.l.b16 %v2081
    %v5472 = vunpack.c.h.b16 %v2081
    %v5473 = vunpack.c.l.b16 %v2082
    %v5474 = vunpack.c.h.b16 %v2082
    %v5475 = vunpack.c.l.b16 %v2083
    %v5476 = vunpack.c.h.b16 %v2083
    %v5477 = vunpack.c.l.b16 %v2084
    %v5478 = vunpack.c.h.b16 %v2084
    %v5479 = vunpack.c.l.b16 %v2085
    %v5480 = vunpack.c.h.b16 %v2085
    %v5481 = vunpack.c.l.b16 %v2086
    %v5482 = vunpack.c.h.b16 %v2086
    %v5483 = vunpack.c.l.b16 %v2087
    %v5484 = vunpack.c.h.b16 %v2087
    %v5485 = vunpack.c.l.b16 %v2088
    %v5486 = vunpack.c.h.b16 %v2088
    %v5487 = vunpack.c.l.b16 %v2089
    %v5488 = vunpack.c.h.b16 %v2089
    %v5489 = vunpack.c.l.b16 %v2090
    %v5490 = vunpack.c.h.b16 %v2090
    %v5491 = vunpack.c.l.b16 %v2091
    %v5492 = vunpack.c.h.b16 %v2091
    %v5493 = vunpack.c.l.b16 %v2092
    %v5494 = vunpack.c.h.b16 %v2092
    %v5495 = vunpack.c.l.b16 %v2093
    %v5496 = vunpack.c.h.b16 %v2093
    %v5497 = vunpack.c.l.b16 %v2094
    %v5498 = vunpack.c.h.b16 %v2094
    %v5499 = vunpack.c.l.b16 %v2095
    %v5500 = vunpack.c.h.b16 %v2095
    %v5501 = vunpack.c.l.b16 %v2096
    %v5502 = vunpack.c.h.b16 %v2096
    %v5503 = vunpack.c.l.b16 %v2097
    %v5504 = vunpack.c.h.b16 %v2097
    %v5505 = vunpack.c.l.b16 %v2098
    %v5506 = vunpack.c.h.b16 %v2098
    %v5507 = vunpack.c.l.b16 %v2099
    %v5508 = vunpack.c.h.b16 %v2099
    %v5509 = vunpack.c.l.b16 %v2100
    %v5510 = vunpack.c.h.b16 %v2100
    %v5511 = vunpack.c.l.b16 %v2101
    %v5512 = vunpack.c.h.b16 %v2101
    %v5513 = vunpack.c.l.b16 %v2102
    %v5514 = vunpack.c.h.b16 %v2102
    %v5515 = vunpack.c.l.b16 %v2103
    %v5516 = vunpack.c.h.b16 %v2103
    %v5517 = vunpack.c.l.b16 %v2104
    %v5518 = vunpack.c.h.b16 %v2104
    %v5519 = vunpack.c.l.b16 %v2105
    %v5520 = vunpack.c.h.b16 %v2105
    %v5521 = vunpack.c.l.b16 %v2106
    %v5522 = vunpack.c.h.b16 %v2106
    %v5523 = vunpack.c.l.b16 %v2107
    %v5524 = vunpack.c.h.b16 %v2107
    %v5525 = vunpack.c.l.b16 %v2108
    %v5526 = vunpack.c.h.b16 %v2108
    %v5527 = vunpack.c.l.b16 %v2109
    %v5528 = vunpack.c.h.b16 %v2109
    %v5529 = vunpack.c.l.b16 %v2110
    %v5530 = vunpack.c.h.b16 %v2110
    %v5531 = vunpack.c.l.b16 %v2111
    %v5532 = vunpack.c.h.b16 %v2111
    %v5533 = vunpack.c.l.b16 %v2112
    %v5534 = vunpack.c.h.b16 %v2112
    %v5535 = vunpack.c.l.b16 %v2113
    %v5536 = vunpack.c.h.b16 %v2113
    %v5537 = vunpack.c.l.b16 %v2114
    %v5538 = vunpack.c.h.b16 %v2114
    %v5539 = vunpack.c.l.b16 %v2115
    %v5540 = vunpack.c.h.b16 %v2115
    %v5541 = vunpack.c.l.b16 %v2116
    %v5542 = vunpack.c.h.b16 %v2116
    %v5543 = vunpack.c.l.b16 %v2117
    %v5544 = vunpack.c.h.b16 %v2117
    %v5545 = vunpack.c.l.b16 %v2118
    %v5546 = vunpack.c.h.b16 %v2118
    %v5547 = vunpack.c.l.b16 %v2119
    %v5548 = vunpack.c.h.b16 %v2119
    %v5549 = vunpack.c.l.b16 %v2120
    %v5550 = vunpack.c.h.b16 %v2120
    %v5551 = vunpack.c.l.b16 %v2121
    %v5552 = vunpack.c.h.b16 %v2121
    %v5553 = vunpack.c.l.b16 %v2122
    %v5554 = vunpack.c.h.b16 %v2122
    %v5555 = vunpack.c.l.b16 %v2123
    %v5556 = vunpack.c.h.b16 %v2123
    %v5557 = vunpack.c.l.b16 %v2124
    %v5558 = vunpack.c.h.b16 %v2124
    %v5559 = vunpack.c.l.b16 %v2125
    %v5560 = vunpack.c.h.b16 %v2125
    %v5561 = vunpack.c.l.b16 %v2126
    %v5562 = vunpack.c.h.b16 %v2126
    %v5563 = vunpack.c.l.b16 %v2127
    %v5564 = vunpack.c.h.b16 %v2127
    %v5565 = vunpack.c.l.b16 %v2128
    %v5566 = vunpack.c.h.b16 %v2128
    %v5567 = vunpack.c.l.b16 %v2129
    %v5568 = vunpack.c.h.b16 %v2129
    %v5569 = vunpack.c.l.b16 %v2130
    %v5570 = vunpack.c.h.b16 %v2130
    %v5571 = vunpack.c.l.b16 %v2131
    %v5572 = vunpack.c.h.b16 %v2131
    %v5573 = vunpack.c.l.b16 %v2132
    %v5574 = vunpack.c.h.b16 %v2132
    %v5575 = vunpack.c.l.b16 %v2133
    %v5576 = vunpack.c.h.b16 %v2133
    %v5577 = vunpack.c.l.b16 %v2134
    %v5578 = vunpack.c.h.b16 %v2134
    %v5579 = vunpack.c.l.b16 %v2135
    %v5580 = vunpack.c.h.b16 %v2135
    %v5581 = vunpack.c.l.b16 %v2136
    %v5582 = vunpack.c.h.b16 %v2136
    %v5583 = vunpack.c.l.b16 %v2137
    %v5584 = vunpack.c.h.b16 %v2137
    %v5585 = vunpack.c.l.b16 %v2138
    %v5586 = vunpack.c.h.b16 %v2138
    %v5587 = vunpack.c.l.b16 %v2139
    %v5588 = vunpack.c.h.b16 %v2139
    %v5589 = vunpack.c.l.b16 %v2140
    %v5590 = vunpack.c.h.b16 %v2140
    %v5591 = vunpack.c.l.b16 %v2141
    %v5592 = vunpack.c.h.b16 %v2141
    %v5593 = vunpack.c.l.b16 %v2142
    %v5594 = vunpack.c.h.b16 %v2142
    %v5595 = vunpack.c.l.b16 %v2143
    %v5596 = vunpack.c.h.b16 %v2143
    %v5597 = vunpack.c.l.b16 %v2144
    %v5598 = vunpack.c.h.b16 %v2144
    %v5599 = vunpack.c.l.b16 %v2145
    %v5600 = vunpack.c.h.b16 %v2145
    %v5601 = vunpack.c.l.b16 %v2146
    %v5602 = vunpack.c.h.b16 %v2146
    %v5603 = vunpack.c.l.b16 %v2147
    %v5604 = vunpack.c.h.b16 %v2147
    %v5605 = vunpack.c.l.b16 %v2148
    %v5606 = vunpack.c.h.b16 %v2148
    %v5607 = vunpack.c.l.b16 %v2149
    %v5608 = vunpack.c.h.b16 %v2149
    %v5609 = vunpack.c.l.b16 %v2150
    %v5610 = vunpack.c.h.b16 %v2150
    %v5611 = vunpack.c.l.b16 %v2151
    %v5612 = vunpack.c.h.b16 %v2151
    %v5613 = vunpack.c.l.b16 %v2152
    %v5614 = vunpack.c.h.b16 %v2152
    %v5615 = vunpack.c.l.b16 %v2153
    %v5616 = vunpack.c.h.b16 %v2153
    %v5617 = vunpack.c.l.b16 %v2154
    %v5618 = vunpack.c.h.b16 %v2154
    %v5619 = vunpack.c.l.b16 %v2155
    %v5620 = vunpack.c.h.b16 %v2155
    %v5621 = vunpack.c.l.b16 %v2156
    %v5622 = vunpack.c.h.b16 %v2156
    %v5623 = vunpack.c.l.b16 %v2157
    %v5624 = vunpack.c.h.b16 %v2157
    %v5625 = vunpack.c.l.b16 %v2158
    %v5626 = vunpack.c.h.b16 %v2158
    %v5627 = vunpack.c.l.b16 %v2159
    %v5628 = vunpack.c.h.b16 %v2159
    %v5629 = vunpack.c.l.b16 %v2160
    %v5630 = vunpack.c.h.b16 %v2160
    %v5631 = vunpack.c.l.b16 %v2161
    %v5632 = vunpack.c.h.b16 %v2161
    %v5633 = vunpack.c.l.b16 %v2162
    %v5634 = vunpack.c.h.b16 %v2162
    %v5635 = vunpack.c.l.b16 %v2163
    %v5636 = vunpack.c.h.b16 %v2163
    %v5637 = vunpack.c.l.b16 %v2164
    %v5638 = vunpack.c.h.b16 %v2164
    %v5639 = vunpack.c.l.b16 %v2165
    %v5640 = vunpack.c.h.b16 %v2165
    %v5641 = vunpack.c.l.b16 %v2166
    %v5642 = vunpack.c.h.b16 %v2166
    %v5643 = vunpack.c.l.b16 %v2167
    %v5644 = vunpack.c.h.b16 %v2167
    %v5645 = vunpack.c.l.b16 %v2168
    %v5646 = vunpack.c.h.b16 %v2168
    %v5647 = vunpack.c.l.b16 %v2169
    %v5648 = vunpack.c.h.b16 %v2169
    %v5649 = vunpack.c.l.b16 %v2170
    %v5650 = vunpack.c.h.b16 %v2170
    %v5651 = vunpack.c.l.b16 %v2171
    %v5652 = vunpack.c.h.b16 %v2171
    %v5653 = vunpack.c.l.b16 %v2172
    %v5654 = vunpack.c.h.b16 %v2172
    %v5655 = vunpack.c.l.b16 %v2173
    %v5656 = vunpack.c.h.b16 %v2173
    %v5657 = vunpack.c.l.b16 %v2174
    %v5658 = vunpack.c.h.b16 %v2174
    %v5659 = vunpack.c.l.b16 %v2175
    %v5660 = vunpack.c.h.b16 %v2175
    %v5661 = vunpack.c.l.b16 %v2176
    %v5662 = vunpack.c.h.b16 %v2176
    %v5663 = vunpack.c.l.b16 %v2177
    %v5664 = vunpack.c.h.b16 %v2177
    %v5665 = vunpack.c.l.b16 %v2178
    %v5666 = vunpack.c.h.b16 %v2178
    %v5667 = vunpack.c.l.b16 %v2179
    %v5668 = vunpack.c.h.b16 %v2179
    %v5669 = vunpack.c.l.b16 %v2180
    %v5670 = vunpack.c.h.b16 %v2180
    %v5671 = vunpack.c.l.b16 %v2181
    %v5672 = vunpack.c.h.b16 %v2181
    %v5673 = vunpack.c.l.b16 %v2182
    %v5674 = vunpack.c.h.b16 %v2182
    %v5675 = vunpack.c.l.b16 %v2183
    %v5676 = vunpack.c.h.b16 %v2183
    %v5677 = vunpack.c.l.b16 %v2184
    %v5678 = vunpack.c.h.b16 %v2184
    %v5679 = vunpack.c.l.b16 %v2185
    %v5680 = vunpack.c.h.b16 %v2185
    %v5681 = vunpack.c.l.b16 %v2186
    %v5682 = vunpack.c.h.b16 %v2186
    %v5683 = vunpack.c.l.b16 %v2187
    %v5684 = vunpack.c.h.b16 %v2187
    %v5685 = vunpack.c.l.b16 %v2188
    %v5686 = vunpack.c.h.b16 %v2188
    %v5687 = vunpack.c.l.b16 %v2189
    %v5688 = vunpack.c.h.b16 %v2189
    %v5689 = vunpack.c.l.b16 %v2190
    %v5690 = vunpack.c.h.b16 %v2190
    %v5691 = vunpack.c.l.b16 %v2191
    %v5692 = vunpack.c.h.b16 %v2191
    %v5693 = vunpack.c.l.b16 %v2192
    %v5694 = vunpack.c.h.b16 %v2192
    %v5695 = vunpack.c.l.b16 %v2193
    %v5696 = vunpack.c.h.b16 %v2193
    %v5697 = vunpack.c.l.b16 %v2194
    %v5698 = vunpack.c.h.b16 %v2194
    %v5699 = vunpack.c.l.b16 %v2195
    %v5700 = vunpack.c.h.b16 %v2195
    %v5701 = vunpack.c.l.b16 %v2196
    %v5702 = vunpack.c.h.b16 %v2196
    %v5703 = vunpack.c.l.b16 %v2197
    %v5704 = vunpack.c.h.b16 %v2197
    %v5705 = vunpack.c.l.b16 %v2198
    %v5706 = vunpack.c.h.b16 %v2198
    %v5707 = vunpack.c.l.b16 %v2199
    %v5708 = vunpack.c.h.b16 %v2199
    %v5709 = vunpack.c.l.b16 %v2200
    %v5710 = vunpack.c.h.b16 %v2200
    %v5711 = vunpack.c.l.b16 %v2201
    %v5712 = vunpack.c.h.b16 %v2201
    %v5713 = vunpack.c.l.b16 %v2202
    %v5714 = vunpack.c.h.b16 %v2202
    %v5715 = vunpack.c.l.b16 %v2203
    %v5716 = vunpack.c.h.b16 %v2203
    %v5717 = vunpack.c.l.b16 %v2204
    %v5718 = vunpack.c.h.b16 %v2204
    %v5719 = vunpack.c.l.b16 %v2205
    %v5720 = vunpack.c.h.b16 %v2205
    %v5721 = vunpack.c.l.b16 %v2206
    %v5722 = vunpack.c.h.b16 %v2206
    %v5723 = vunpack.c.l.b16 %v2207
    %v5724 = vunpack.c.h.b16 %v2207
    %v5725 = vunpack.c.l.b16 %v2208
    %v5726 = vunpack.c.h.b16 %v2208
    %v5727 = vunpack.c.l.b16 %v2209
    %v5728 = vunpack.c.h.b16 %v2209
    %v5729 = vunpack.c.l.b16 %v2210
    %v5730 = vunpack.c.h.b16 %v2210
    %v5731 = vunpack.c.l.b16 %v2211
    %v5732 = vunpack.c.h.b16 %v2211
    %v5733 = vunpack.c.l.b16 %v2212
    %v5734 = vunpack.c.h.b16 %v2212
    %v5735 = vunpack.c.l.b16 %v2213
    %v5736 = vunpack.c.h.b16 %v2213
    %v5737 = vunpack.c.l.b16 %v2214
    %v5738 = vunpack.c.h.b16 %v2214
    %v5739 = vunpack.c.l.b16 %v2215
    %v5740 = vunpack.c.h.b16 %v2215
    %v5741 = vunpack.c.l.b16 %v2216
    %v5742 = vunpack.c.h.b16 %v2216
    %v5743 = vunpack.c.l.b16 %v2217
    %v5744 = vunpack.c.h.b16 %v2217
    %v5745 = vunpack.c.l.b16 %v2218
    %v5746 = vunpack.c.h.b16 %v2218
    %v5747 = vunpack.c.l.b16 %v2219
    %v5748 = vunpack.c.h.b16 %v2219
    %v5749 = vunpack.c.l.b16 %v2220
    %v5750 = vunpack.c.h.b16 %v2220
    %v5751 = vunpack.c.l.b16 %v2221
    %v5752 = vunpack.c.h.b16 %v2221
    %v5753 = vunpack.c.l.b16 %v2222
    %v5754 = vunpack.c.h.b16 %v2222
    %v5755 = vunpack.c.l.b16 %v2223
    %v5756 = vunpack.c.h.b16 %v2223
    %v5757 = vunpack.c.l.b16 %v2224
    %v5758 = vunpack.c.h.b16 %v2224
    %v5759 = vunpack.c.l.b16 %v2225
    %v5760 = vunpack.c.h.b16 %v2225
    %v5761 = vunpack.c.l.b16 %v2226
    %v5762 = vunpack.c.h.b16 %v2226
    %v5763 = vunpack.c.l.b16 %v2227
    %v5764 = vunpack.c.h.b16 %v2227
    %v5765 = vunpack.c.l.b16 %v2228
    %v5766 = vunpack.c.h.b16 %v2228
    %v5767 = vunpack.c.l.b16 %v2229
    %v5768 = vunpack.c.h.b16 %v2229
    %v5769 = vunpack.c.l.b16 %v2230
    %v5770 = vunpack.c.h.b16 %v2230
    %v5771 = vunpack.c.l.b16 %v2231
    %v5772 = vunpack.c.h.b16 %v2231
    %v5773 = vunpack.c.l.b16 %v2232
    %v5774 = vunpack.c.h.b16 %v2232
    %v5775 = vunpack.c.l.b16 %v2233
    %v5776 = vunpack.c.h.b16 %v2233
    %v5777 = vunpack.c.l.b16 %v2234
    %v5778 = vunpack.c.h.b16 %v2234
    %v5779 = vunpack.c.l.b16 %v2235
    %v5780 = vunpack.c.h.b16 %v2235
    %v5781 = vunpack.c.l.b16 %v2236
    %v5782 = vunpack.c.h.b16 %v2236
    %v5783 = vunpack.c.l.b16 %v2237
    %v5784 = vunpack.c.h.b16 %v2237
    %v5785 = vunpack.c.l.b16 %v2238
    %v5786 = vunpack.c.h.b16 %v2238
    %v5787 = vunpack.c.l.b16 %v2239
    %v5788 = vunpack.c.h.b16 %v2239
    %v5789 = vunpack.c.l.b16 %v2240
    %v5790 = vunpack.c.h.b16 %v2240
    %v5791 = vunpack.c.l.b16 %v2241
    %v5792 = vunpack.c.h.b16 %v2241
    %v5793 = vunpack.c.l.b16 %v2242
    %v5794 = vunpack.c.h.b16 %v2242
    %v5795 = vunpack.c.l.b16 %v2243
    %v5796 = vunpack.c.h.b16 %v2243
    %v5797 = vunpack.c.l.b16 %v2244
    %v5798 = vunpack.c.h.b16 %v2244
    %v5799 = vunpack.c.l.b16 %v2245
    %v5800 = vunpack.c.h.b16 %v2245
    %v5801 = vunpack.c.l.b16 %v2246
    %v5802 = vunpack.c.h.b16 %v2246
    %v5803 = vunpack.c.l.b16 %v2247
    %v5804 = vunpack.c.h.b16 %v2247
    %v5805 = vunpack.c.l.b16 %v2248
    %v5806 = vunpack.c.h.b16 %v2248
    %v5807 = vunpack.c.l.b16 %v2249
    %v5808 = vunpack.c.h.b16 %v2249
    %v5809 = vunpack.c.l.b16 %v2250
    %v5810 = vunpack.c.h.b16 %v2250
    %v5811 = vunpack.c.l.b16 %v2251
    %v5812 = vunpack.c.h.b16 %v2251
    %v5813 = vunpack.c.l.b16 %v2252
    %v5814 = vunpack.c.h.b16 %v2252
    %v5815 = vunpack.c.l.b16 %v2253
    %v5816 = vunpack.c.h.b16 %v2253
    %v5817 = vunpack.c.l.b16 %v2254
    %v5818 = vunpack.c.h.b16 %v2254
    %v5819 = vunpack.c.l.b16 %v2255
    %v5820 = vunpack.c.h.b16 %v2255
    %v5821 = vunpack.c.l.b16 %v2256
    %v5822 = vunpack.c.h.b16 %v2256
    %v5823 = vunpack.c.l.b16 %v2257
    %v5824 = vunpack.c.h.b16 %v2257
    %v5825 = vunpack.c.l.b16 %v2258
    %v5826 = vunpack.c.h.b16 %v2258
    %v5827 = vunpack.c.l.b16 %v2259
    %v5828 = vunpack.c.h.b16 %v2259
    %v5829 = vunpack.c.l.b16 %v2260
    %v5830 = vunpack.c.h.b16 %v2260
    %v5831 = vunpack.c.l.b16 %v2261
    %v5832 = vunpack.c.h.b16 %v2261
    %v5833 = vunpack.c.l.b16 %v2262
    %v5834 = vunpack.c.h.b16 %v2262
    %v5835 = vunpack.c.l.b16 %v2263
    %v5836 = vunpack.c.h.b16 %v2263
    %v5837 = vunpack.c.l.b16 %v2264
    %v5838 = vunpack.c.h.b16 %v2264
    %v5839 = vunpack.c.l.b16 %v2265
    %v5840 = vunpack.c.h.b16 %v2265
    %v5841 = vunpack.c.l.b16 %v2266
    %v5842 = vunpack.c.h.b16 %v2266
    %v5843 = vunpack.c.l.b16 %v2267
    %v5844 = vunpack.c.h.b16 %v2267
    %v5845 = vunpack.c.l.b16 %v2268
    %v5846 = vunpack.c.h.b16 %v2268
    %v5847 = vunpack.c.l.b16 %v2269
    %v5848 = vunpack.c.h.b16 %v2269
    %v5849 = vunpack.c.l.b16 %v2270
    %v5850 = vunpack.c.h.b16 %v2270
    %v5851 = vunpack.c.l.b16 %v2271
    %v5852 = vunpack.c.h.b16 %v2271
    %v5853 = vunpack.c.l.b16 %v2272
    %v5854 = vunpack.c.h.b16 %v2272
    %v5855 = vunpack.c.l.b16 %v2273
    %v5856 = vunpack.c.h.b16 %v2273
    %v5857 = vunpack.c.l.b16 %v2274
    %v5858 = vunpack.c.h.b16 %v2274
    %v5859 = vunpack.c.l.b16 %v2275
    %v5860 = vunpack.c.h.b16 %v2275
    %v5861 = vunpack.c.l.b16 %v2276
    %v5862 = vunpack.c.h.b16 %v2276
    %v5863 = vunpack.c.l.b16 %v2277
    %v5864 = vunpack.c.h.b16 %v2277
    %v5865 = vunpack.c.l.b16 %v2278
    %v5866 = vunpack.c.h.b16 %v2278
    %v5867 = vunpack.c.l.b16 %v2279
    %v5868 = vunpack.c.h.b16 %v2279
    %v5869 = vunpack.c.l.b16 %v2280
    %v5870 = vunpack.c.h.b16 %v2280
    %v5871 = vunpack.c.l.b16 %v2281
    %v5872 = vunpack.c.h.b16 %v2281
    %v5873 = vunpack.c.l.b16 %v2282
    %v5874 = vunpack.c.h.b16 %v2282
    %v5875 = vunpack.c.l.b16 %v2283
    %v5876 = vunpack.c.h.b16 %v2283
    %v5877 = vunpack.c.l.b16 %v2284
    %v5878 = vunpack.c.h.b16 %v2284
    %v5879 = vunpack.c.l.b16 %v2285
    %v5880 = vunpack.c.h.b16 %v2285
    %v5881 = vunpack.c.l.b16 %v2286
    %v5882 = vunpack.c.h.b16 %v2286
    %v5883 = vunpack.c.l.b16 %v2287
    %v5884 = vunpack.c.h.b16 %v2287
    %v5885 = vunpack.c.l.b16 %v2288
    %v5886 = vunpack.c.h.b16 %v2288
    %v5887 = vunpack.c.l.b16 %v2289
    %v5888 = vunpack.c.h.b16 %v2289
    %v5889 = vunpack.c.l.b16 %v2290
    %v5890 = vunpack.c.h.b16 %v2290
    %v5891 = vunpack.c.l.b16 %v2291
    %v5892 = vunpack.c.h.b16 %v2291
    %v5893 = vunpack.c.l.b16 %v2292
    %v5894 = vunpack.c.h.b16 %v2292
    %v5895 = vunpack.c.l.b16 %v2293
    %v5896 = vunpack.c.h.b16 %v2293
    %v5897 = vunpack.c.l.b16 %v2294
    %v5898 = vunpack.c.h.b16 %v2294
    %v5899 = vunpack.c.l.b16 %v2295
    %v5900 = vunpack.c.h.b16 %v2295
    %v5901 = vunpack.c.l.b16 %v2296
    %v5902 = vunpack.c.h.b16 %v2296
    %v5903 = vunpack.c.l.b16 %v2297
    %v5904 = vunpack.c.h.b16 %v2297
    %v5905 = vunpack.c.l.b16 %v2298
    %v5906 = vunpack.c.h.b16 %v2298
    %v5907 = vunpack.c.l.b16 %v2299
    %v5908 = vunpack.c.h.b16 %v2299
    %v5909 = vunpack.c.l.b16 %v2300
    %v5910 = vunpack.c.h.b16 %v2300
    %v5911 = vunpack.c.l.b16 %v2301
    %v5912 = vunpack.c.h.b16 %v2301
    %v5913 = vunpack.c.l.b16 %v2302
    %v5914 = vunpack.c.h.b16 %v2302
    %v5915 = vunpack.c.l.b16 %v2303
    %v5916 = vunpack.c.h.b16 %v2303
    %v5917 = vunpack.c.l.b16 %v2304
    %v5918 = vunpack.c.h.b16 %v2304
    %v5919 = vunpack.c.l.b16 %v2305
    %v5920 = vunpack.c.h.b16 %v2305
    %v5921 = vunpack.c.l.b16 %v2306
    %v5922 = vunpack.c.h.b16 %v2306
    %v5923 = vunpack.c.l.b16 %v2307
    %v5924 = vunpack.c.h.b16 %v2307
    %v5925 = vunpack.c.l.b16 %v2308
    %v5926 = vunpack.c.h.b16 %v2308
    %v5927 = vunpack.c.l.b16 %v2309
    %v5928 = vunpack.c.h.b16 %v2309
    %v5929 = vunpack.c.l.b16 %v2310
    %v5930 = vunpack.c.h.b16 %v2310
    %v5931 = vunpack.c.l.b16 %v2311
    %v5932 = vunpack.c.h.b16 %v2311
    %v5933 = vunpack.c.l.b16 %v2312
    %v5934 = vunpack.c.h.b16 %v2312
    %v5935 = vunpack.c.l.b16 %v2313
    %v5936 = vunpack.c.h.b16 %v2313
    %v5937 = vunpack.c.l.b16 %v2314
    %v5938 = vunpack.c.h.b16 %v2314
    %v5939 = vunpack.c.l.b16 %v2315
    %v5940 = vunpack.c.h.b16 %v2315
    %v5941 = vunpack.c.l.b16 %v2316
    %v5942 = vunpack.c.h.b16 %v2316
    %v5943 = vunpack.c.l.b16 %v2317
    %v5944 = vunpack.c.h.b16 %v2317
    %v5945 = vunpack.c.l.b16 %v2318
    %v5946 = vunpack.c.h.b16 %v2318
    %v5947 = vunpack.c.l.b16 %v2319
    %v5948 = vunpack.c.h.b16 %v2319
    %v5949 = vunpack.c.l.b16 %v2320
    %v5950 = vunpack.c.h.b16 %v2320
    %v5951 = vunpack.c.l.b16 %v2321
    %v5952 = vunpack.c.h.b16 %v2321
    %v5953 = vunpack.c.l.b16 %v2322
    %v5954 = vunpack.c.h.b16 %v2322
    %v5955 = vunpack.c.l.b16 %v2323
    %v5956 = vunpack.c.h.b16 %v2323
    %v5957 = vunpack.c.l.b16 %v2324
    %v5958 = vunpack.c.h.b16 %v2324
    %v5959 = vunpack.c.l.b16 %v2325
    %v5960 = vunpack.c.h.b16 %v2325
    %v5961 = vunpack.c.l.b16 %v2326
    %v5962 = vunpack.c.h.b16 %v2326
    %v5963 = vunpack.c.l.b16 %v2327
    %v5964 = vunpack.c.h.b16 %v2327
    %v5965 = vunpack.c.l.b16 %v2328
    %v5966 = vunpack.c.h.b16 %v2328
    %v5967 = vunpack.c.l.b16 %v2329
    %v5968 = vunpack.c.h.b16 %v2329
    %v5969 = vunpack.c.l.b16 %v2330
    %v5970 = vunpack.c.h.b16 %v2330
    %v5971 = vunpack.c.l.b16 %v2331
    %v5972 = vunpack.c.h.b16 %v2331
    %v5973 = vunpack.c.l.b16 %v2332
    %v5974 = vunpack.c.h.b16 %v2332
    %v5975 = vunpack.c.l.b16 %v2333
    %v5976 = vunpack.c.h.b16 %v2333
    %v5977 = vunpack.c.l.b16 %v2334
    %v5978 = vunpack.c.h.b16 %v2334
    %v5979 = vunpack.c.l.b16 %v2335
    %v5980 = vunpack.c.h.b16 %v2335
    %v5981 = vunpack.c.l.b16 %v2336
    %v5982 = vunpack.c.h.b16 %v2336
    %v5983 = vunpack.c.l.b16 %v2337
    %v5984 = vunpack.c.h.b16 %v2337
    %v5985 = vunpack.c.l.b16 %v2338
    %v5986 = vunpack.c.h.b16 %v2338
    %v5987 = vunpack.c.l.b16 %v2339
    %v5988 = vunpack.c.h.b16 %v2339
    %v5989 = vunpack.c.l.b16 %v2340
    %v5990 = vunpack.c.h.b16 %v2340
    %v5991 = vunpack.c.l.b16 %v2341
    %v5992 = vunpack.c.h.b16 %v2341
    %v5993 = vunpack.c.l.b16 %v2342
    %v5994 = vunpack.c.h.b16 %v2342
    %v5995 = vunpack.c.l.b16 %v2343
    %v5996 = vunpack.c.h.b16 %v2343
    %v5997 = vunpack.c.l.b16 %v2344
    %v5998 = vunpack.c.h.b16 %v2344
    %v5999 = vunpack.c.l.b16 %v2345
    %v6000 = vunpack.c.h.b16 %v2345
    %v6001 = vunpack.c.l.b16 %v2346
    %v6002 = vunpack.c.h.b16 %v2346
    %v6003 = vunpack.c.l.b16 %v2347
    %v6004 = vunpack.c.h.b16 %v2347
    %v6005 = vunpack.c.l.b16 %v2348
    %v6006 = vunpack.c.h.b16 %v2348
    %v6007 = vunpack.c.l.b16 %v2349
    %v6008 = vunpack.c.h.b16 %v2349
    %v6009 = vunpack.c.l.b16 %v2350
    %v6010 = vunpack.c.h.b16 %v2350
    %v6011 = vunpack.c.l.b16 %v2351
    %v6012 = vunpack.c.h.b16 %v2351
    %v6013 = vunpack.c.l.b16 %v2352
    %v6014 = vunpack.c.h.b16 %v2352
    %v6015 = vunpack.c.l.b16 %v2353
    %v6016 = vunpack.c.h.b16 %v2353
    %v6017 = vunpack.c.l.b16 %v2354
    %v6018 = vunpack.c.h.b16 %v2354
    %v6019 = vunpack.c.l.b16 %v2355
    %v6020 = vunpack.c.h.b16 %v2355
    %v6021 = vunpack.c.l.b16 %v2356
    %v6022 = vunpack.c.h.b16 %v2356
    %v6023 = vunpack.c.l.b16 %v2357
    %v6024 = vunpack.c.h.b16 %v2357
    %v6025 = vunpack.c.l.b16 %v2358
    %v6026 = vunpack.c.h.b16 %v2358
    %v6027 = vunpack.c.l.b16 %v2359
    %v6028 = vunpack.c.h.b16 %v2359
    %v6029 = vunpack.c.l.b16 %v2360
    %v6030 = vunpack.c.h.b16 %v2360
    %v6031 = vunpack.c.l.b16 %v2361
    %v6032 = vunpack.c.h.b16 %v2361
    %v6033 = vunpack.c.l.b16 %v2362
    %v6034 = vunpack.c.h.b16 %v2362
    %v6035 = vunpack.c.l.b16 %v2363
    %v6036 = vunpack.c.h.b16 %v2363
    %v6037 = vunpack.c.l.b16 %v2364
    %v6038 = vunpack.c.h.b16 %v2364
    %v6039 = vunpack.c.l.b16 %v2365
    %v6040 = vunpack.c.h.b16 %v2365
    %v6041 = vunpack.c.l.b16 %v2366
    %v6042 = vunpack.c.h.b16 %v2366
    %v6043 = vunpack.c.l.b16 %v2367
    %v6044 = vunpack.c.h.b16 %v2367
    %v6045 = vunpack.c.l.b16 %v2368
    %v6046 = vunpack.c.h.b16 %v2368
    %v6047 = vunpack.c.l.b16 %v2369
    %v6048 = vunpack.c.h.b16 %v2369
    %v6049 = vunpack.c.l.b16 %v2370
    %v6050 = vunpack.c.h.b16 %v2370
    %v6051 = vunpack.c.l.b16 %v2371
    %v6052 = vunpack.c.h.b16 %v2371
    %v6053 = vunpack.c.l.b16 %v2372
    %v6054 = vunpack.c.h.b16 %v2372
    %v6055 = vunpack.c.l.b16 %v2373
    %v6056 = vunpack.c.h.b16 %v2373
    %v6057 = vunpack.c.l.b16 %v2374
    %v6058 = vunpack.c.h.b16 %v2374
    %v6059 = vunpack.c.l.b16 %v2375
    %v6060 = vunpack.c.h.b16 %v2375
    %v6061 = vunpack.c.l.b16 %v2376
    %v6062 = vunpack.c.h.b16 %v2376
    %v6063 = vunpack.c.l.b16 %v2377
    %v6064 = vunpack.c.h.b16 %v2377
    %v6065 = vunpack.c.l.b16 %v2378
    %v6066 = vunpack.c.h.b16 %v2378
    %v6067 = vunpack.c.l.b16 %v2379
    %v6068 = vunpack.c.h.b16 %v2379
    %v6069 = vunpack.c.l.b16 %v2380
    %v6070 = vunpack.c.h.b16 %v2380
    %v6071 = vunpack.c.l.b16 %v2381
    %v6072 = vunpack.c.h.b16 %v2381
    %v6073 = vunpack.c.l.b16 %v2382
    %v6074 = vunpack.c.h.b16 %v2382
    %v6075 = vunpack.c.l.b16 %v2383
    %v6076 = vunpack.c.h.b16 %v2383
    %v6077 = vunpack.c.l.b16 %v2384
    %v6078 = vunpack.c.h.b16 %v2384
    %v6079 = vunpack.c.l.b16 %v2385
    %v6080 = vunpack.c.h.b16 %v2385
    %v6081 = vunpack.c.l.b16 %v2386
    %v6082 = vunpack.c.h.b16 %v2386
    %v6083 = vunpack.c.l.b16 %v2387
    %v6084 = vunpack.c.h.b16 %v2387
    %v6085 = vunpack.c.l.b16 %v2388
    %v6086 = vunpack.c.h.b16 %v2388
    %v6087 = vunpack.c.l.b16 %v2389
    %v6088 = vunpack.c.h.b16 %v2389
    %v6089 = vunpack.c.l.b16 %v2390
    %v6090 = vunpack.c.h.b16 %v2390
    %v6091 = vunpack.c.l.b16 %v2391
    %v6092 = vunpack.c.h.b16 %v2391
    %v6093 = vunpack.c.l.b16 %v2392
    %v6094 = vunpack.c.h.b16 %v2392
    %v6095 = vunpack.c.l.b16 %v2393
    %v6096 = vunpack.c.h.b16 %v2393
    %v6097 = vunpack.c.l.b16 %v2394
    %v6098 = vunpack.c.h.b16 %v2394
    %v6099 = vunpack.c.l.b16 %v2395
    %v6100 = vunpack.c.h.b16 %v2395
    %v6101 = vunpack.c.l.b16 %v2396
    %v6102 = vunpack.c.h.b16 %v2396
    %v6103 = vunpack.c.l.b16 %v2397
    %v6104 = vunpack.c.h.b16 %v2397
    %v6105 = vunpack.c.l.b16 %v2398
    %v6106 = vunpack.c.h.b16 %v2398
    %v6107 = vunpack.c.l.b16 %v2399
    %v6108 = vunpack.c.h.b16 %v2399
    %v6109 = vunpack.c.l.b16 %v2400
    %v6110 = vunpack.c.h.b16 %v2400
    %v6111 = vunpack.c.l.b16 %v2401
    %v6112 = vunpack.c.h.b16 %v2401
    %v6113 = vunpack.c.l.b16 %v2402
    %v6114 = vunpack.c.h.b16 %v2402
    %v6115 = vunpack.c.l.b16 %v2403
    %v6116 = vunpack.c.h.b16 %v2403
    %v6117 = vunpack.c.l.b16 %v2404
    %v6118 = vunpack.c.h.b16 %v2404
    %v6119 = vunpack.c.l.b16 %v2405
    %v6120 = vunpack.c.h.b16 %v2405
    %v6121 = vunpack.c.l.b16 %v2406
    %v6122 = vunpack.c.h.b16 %v2406
    %v6123 = vunpack.c.l.b16 %v2407
    %v6124 = vunpack.c.h.b16 %v2407
    %v6125 = vunpack.c.l.b16 %v2408
    %v6126 = vunpack.c.h.b16 %v2408
    %v6127 = vunpack.c.l.b16 %v2409
    %v6128 = vunpack.c.h.b16 %v2409
    %v6129 = vunpack.c.l.b16 %v2410
    %v6130 = vunpack.c.h.b16 %v2410
    %v6131 = vunpack.c.l.b16 %v2411
    %v6132 = vunpack.c.h.b16 %v2411
    %v6133 = vunpack.c.l.b16 %v2412
    %v6134 = vunpack.c.h.b16 %v2412
    %v6135 = vunpack.c.l.b16 %v2413
    %v6136 = vunpack.c.h.b16 %v2413
    %v6137 = vunpack.c.l.b16 %v2414
    %v6138 = vunpack.c.h.b16 %v2414
    %v6139 = vunpack.c.l.b16 %v2415
    %v6140 = vunpack.c.h.b16 %v2415
    %v6141 = vunpack.c.l.b16 %v2416
    %v6142 = vunpack.c.h.b16 %v2416
    %v6143 = vunpack.c.l.b16 %v2417
    %v6144 = vunpack.c.h.b16 %v2417
    %v6145 = vunpack.c.l.b16 %v2418
    %v6146 = vunpack.c.h.b16 %v2418
    %v6147 = vunpack.c.l.b16 %v2419
    %v6148 = vunpack.c.h.b16 %v2419
    %v6149 = vunpack.c.l.b16 %v2420
    %v6150 = vunpack.c.h.b16 %v2420
    %v6151 = vunpack.c.l.b16 %v2421
    %v6152 = vunpack.c.h.b16 %v2421
    %v6153 = vunpack.c.l.b16 %v2422
    %v6154 = vunpack.c.h.b16 %v2422
    %v6155 = vunpack.c.l.b16 %v2423
    %v6156 = vunpack.c.h.b16 %v2423
    %v6157 = vunpack.c.l.b16 %v2424
    %v6158 = vunpack.c.h.b16 %v2424
    %v6159 = vunpack.c.l.b16 %v2425
    %v6160 = vunpack.c.h.b16 %v2425
    %v6161 = vunpack.c.l.b16 %v2426
    %v6162 = vunpack.c.h.b16 %v2426
    %v6163 = vunpack.c.l.b16 %v2427
    %v6164 = vunpack.c.h.b16 %v2427
    %v6165 = vunpack.c.l.b16 %v2428
    %v6166 = vunpack.c.h.b16 %v2428
    %v6167 = vunpack.c.l.b16 %v2429
    %v6168 = vunpack.c.h.b16 %v2429
    %v6169 = vunpack.c.l.b16 %v2430
    %v6170 = vunpack.c.h.b16 %v2430
    %v6171 = vunpack.c.l.b16 %v2431
    %v6172 = vunpack.c.h.b16 %v2431
    %v6173 = vunpack.c.l.b16 %v2432
    %v6174 = vunpack.c.h.b16 %v2432
    %v6175 = vunpack.c.l.b16 %v2433
    %v6176 = vunpack.c.h.b16 %v2433
    %v6177 = vunpack.c.l.b16 %v2434
    %v6178 = vunpack.c.h.b16 %v2434
    %v6179 = vunpack.c.l.b16 %v2435
    %v6180 = vunpack.c.h.b16 %v2435
    %v6181 = vunpack.c.l.b16 %v2436
    %v6182 = vunpack.c.h.b16 %v2436
    %v6183 = vunpack.c.l.b16 %v2437
    %v6184 = vunpack.c.h.b16 %v2437
    %v6185 = vunpack.c.l.b16 %v2438
    %v6186 = vunpack.c.h.b16 %v2438
    %v6187 = vunpack.c.l.b16 %v2439
    %v6188 = vunpack.c.h.b16 %v2439
    %v6189 = vunpack.c.l.b16 %v2440
    %v6190 = vunpack.c.h.b16 %v2440
    %v6191 = vunpack.c.l.b16 %v2441
    %v6192 = vunpack.c.h.b16 %v2441
    %v6193 = vunpack.c.l.b16 %v2442
    %v6194 = vunpack.c.h.b16 %v2442
    %v6195 = vunpack.c.l.b16 %v2443
    %v6196 = vunpack.c.h.b16 %v2443
    %v6197 = vunpack.c.l.b16 %v2444
    %v6198 = vunpack.c.h.b16 %v2444
    %v6199 = vunpack.c.l.b16 %v2445
    %v6200 = vunpack.c.h.b16 %v2445
    %v6201 = vunpack.c.l.b16 %v2446
    %v6202 = vunpack.c.h.b16 %v2446
    %v6203 = vunpack.c.l.b16 %v2447
    %v6204 = vunpack.c.h.b16 %v2447
    %v6205 = vunpack.c.l.b16 %v2448
    %v6206 = vunpack.c.h.b16 %v2448
    %v6207 = vunpack.c.l.b16 %v2449
    %v6208 = vunpack.c.h.b16 %v2449
    %v6209 = vunpack.c.l.b16 %v2450
    %v6210 = vunpack.c.h.b16 %v2450
    %v6211 = vunpack.c.l.b16 %v2451
    %v6212 = vunpack.c.h.b16 %v2451
    %v6213 = vunpack.c.l.b16 %v2452
    %v6214 = vunpack.c.h.b16 %v2452
    %v6215 = vunpack.c.l.b16 %v2453
    %v6216 = vunpack.c.h.b16 %v2453
    %v6217 = vunpack.c.l.b16 %v2454
    %v6218 = vunpack.c.h.b16 %v2454
    %v6219 = vunpack.c.l.b16 %v2455
    %v6220 = vunpack.c.h.b16 %v2455
    %v6221 = vunpack.c.l.b16 %v2456
    %v6222 = vunpack.c.h.b16 %v2456
    %v6223 = vunpack.c.l.b16 %v2457
    %v6224 = vunpack.c.h.b16 %v2457
    %v6225 = vunpack.c.l.b16 %v2458
    %v6226 = vunpack.c.h.b16 %v2458
    %v6227 = vunpack.c.l.b16 %v2459
    %v6228 = vunpack.c.h.b16 %v2459
    %v6229 = vunpack.c.l.b16 %v2460
    %v6230 = vunpack.c.h.b16 %v2460
    %v6231 = vunpack.c.l.b16 %v2461
    %v6232 = vunpack.c.h.b16 %v2461
    %v6233 = vunpack.c.l.b16 %v2462
    %v6234 = vunpack.c.h.b16 %v2462
    %v6235 = vunpack.c.l.b16 %v2463
    %v6236 = vunpack.c.h.b16 %v2463
    %v6237 = vunpack.c.l.b16 %v2464
    %v6238 = vunpack.c.h.b16 %v2464
    %v6239 = vunpack.c.l.b16 %v2465
    %v6240 = vunpack.c.h.b16 %v2465
    %v6241 = vunpack.c.l.b16 %v2466
    %v6242 = vunpack.c.h.b16 %v2466
    %v6243 = vunpack.c.l.b16 %v2467
    %v6244 = vunpack.c.h.b16 %v2467
    %v6245 = vunpack.c.l.b16 %v2468
    %v6246 = vunpack.c.h.b16 %v2468
    %v6247 = vunpack.c.l.b16 %v2469
    %v6248 = vunpack.c.h.b16 %v2469
    %v6249 = vunpack.c.l.b16 %v2470
    %v6250 = vunpack.c.h.b16 %v2470
    %v6251 = vunpack.c.l.b16 %v2471
    %v6252 = vunpack.c.h.b16 %v2471
    %v6253 = vunpack.c.l.b16 %v2472
    %v6254 = vunpack.c.h.b16 %v2472
    %v6255 = vunpack.c.l.b16 %v2473
    %v6256 = vunpack.c.h.b16 %v2473
    %v6257 = vunpack.c.l.b16 %v2474
    %v6258 = vunpack.c.h.b16 %v2474
    %v6259 = vunpack.c.l.b16 %v2475
    %v6260 = vunpack.c.h.b16 %v2475
    %v6261 = vunpack.c.l.b16 %v2476
    %v6262 = vunpack.c.h.b16 %v2476
    %v6263 = vunpack.c.l.b16 %v2477
    %v6264 = vunpack.c.h.b16 %v2477
    %v6265 = vunpack.c.l.b16 %v2478
    %v6266 = vunpack.c.h.b16 %v2478
    %v6267 = vunpack.c.l.b16 %v2479
    %v6268 = vunpack.c.h.b16 %v2479
    %v6269 = vunpack.c.l.b16 %v2480
    %v6270 = vunpack.c.h.b16 %v2480
    %v6271 = vunpack.c.l.b16 %v2481
    %v6272 = vunpack.c.h.b16 %v2481
    %v6273 = vunpack.c.l.b16 %v2482
    %v6274 = vunpack.c.h.b16 %v2482
    %v6275 = vunpack.c.l.b16 %v2483
    %v6276 = vunpack.c.h.b16 %v2483
    %v6277 = vunpack.c.l.b16 %v2484
    %v6278 = vunpack.c.h.b16 %v2484
    %v6279 = vunpack.c.l.b16 %v2485
    %v6280 = vunpack.c.h.b16 %v2485
    %v6281 = vunpack.c.l.b16 %v2486
    %v6282 = vunpack.c.h.b16 %v2486
    %v6283 = vunpack.c.l.b16 %v2487
    %v6284 = vunpack.c.h.b16 %v2487
    %v6285 = vunpack.c.l.b16 %v2488
    %v6286 = vunpack.c.h.b16 %v2488
    %v6287 = vunpack.c.l.b16 %v2489
    %v6288 = vunpack.c.h.b16 %v2489
    %v6289 = vunpack.c.l.b16 %v2490
    %v6290 = vunpack.c.h.b16 %v2490
    %v6291 = vunpack.c.l.b16 %v2491
    %v6292 = vunpack.c.h.b16 %v2491
    %v6293 = vunpack.c.l.b16 %v2492
    %v6294 = vunpack.c.h.b16 %v2492
    %v6295 = vunpack.c.l.b16 %v2493
    %v6296 = vunpack.c.h.b16 %v2493
    %v6297 = vunpack.c.l.b16 %v2494
    %v6298 = vunpack.c.h.b16 %v2494
    %v6299 = vunpack.c.l.b16 %v2495
    %v6300 = vunpack.c.h.b16 %v2495
    %v6301 = vunpack.c.l.b16 %v2496
    %v6302 = vunpack.c.h.b16 %v2496
    %v6303 = vunpack.c.l.b16 %v2497
    %v6304 = vunpack.c.h.b16 %v2497
    %v6305 = vunpack.c.l.b16 %v2498
    %v6306 = vunpack.c.h.b16 %v2498
    %v6307 = vunpack.c.l.b16 %v2499
    %v6308 = vunpack.c.h.b16 %v2499
    %v6309 = vunpack.c.l.b16 %v2500
    %v6310 = vunpack.c.h.b16 %v2500
    %v6311 = vunpack.c.l.b16 %v2501
    %v6312 = vunpack.c.h.b16 %v2501
    %v6313 = vunpack.c.l.b16 %v2502
    %v6314 = vunpack.c.h.b16 %v2502
    %v6315 = vunpack.c.l.b16 %v2503
    %v6316 = vunpack.c.h.b16 %v2503
    %v6317 = vunpack.c.l.b16 %v2504
    %v6318 = vunpack.c.h.b16 %v2504
    %v6319 = vunpack.c.l.b16 %v2505
    %v6320 = vunpack.c.h.b16 %v2505
    %v6321 = vunpack.c.l.b16 %v2506
    %v6322 = vunpack.c.h.b16 %v2506
    %v6323 = vunpack.c.l.b16 %v2507
    %v6324 = vunpack.c.h.b16 %v2507
    %v6325 = vunpack.c.l.b16 %v2508
    %v6326 = vunpack.c.h.b16 %v2508
    %v6327 = vunpack.c.l.b16 %v2509
    %v6328 = vunpack.c.h.b16 %v2509
    %v6329 = vunpack.c.l.b16 %v2510
    %v6330 = vunpack.c.h.b16 %v2510
    %v6331 = vunpack.c.l.b16 %v2511
    %v6332 = vunpack.c.h.b16 %v2511
    %v6333 = vunpack.c.l.b16 %v2512
    %v6334 = vunpack.c.h.b16 %v2512
    %v6335 = vunpack.c.l.b16 %v2513
    %v6336 = vunpack.c.h.b16 %v2513
    %v6337 = vunpack.c.l.b16 %v2514
    %v6338 = vunpack.c.h.b16 %v2514
    %v6339 = vunpack.c.l.b16 %v2515
    %v6340 = vunpack.c.h.b16 %v2515
    %v6341 = vunpack.c.l.b16 %v2516
    %v6342 = vunpack.c.h.b16 %v2516
    %v6343 = vunpack.c.l.b16 %v2517
    %v6344 = vunpack.c.h.b16 %v2517
    %v6345 = vunpack.c.l.b16 %v2518
    %v6346 = vunpack.c.h.b16 %v2518
    %v6347 = vunpack.c.l.b16 %v2519
    %v6348 = vunpack.c.h.b16 %v2519
    %v6349 = vunpack.c.l.b16 %v2520
    %v6350 = vunpack.c.h.b16 %v2520
    %v6351 = vunpack.c.l.b16 %v2521
    %v6352 = vunpack.c.h.b16 %v2521
    %v6353 = vunpack.c.l.b16 %v2522
    %v6354 = vunpack.c.h.b16 %v2522
    %v6355 = vunpack.c.l.b16 %v2523
    %v6356 = vunpack.c.h.b16 %v2523
    %v6357 = vunpack.c.l.b16 %v2524
    %v6358 = vunpack.c.h.b16 %v2524
    %v6359 = vunpack.c.l.b16 %v2525
    %v6360 = vunpack.c.h.b16 %v2525
    %v6361 = vunpack.c.l.b16 %v2526
    %v6362 = vunpack.c.h.b16 %v2526
    %v6363 = vunpack.c.l.b16 %v2527
    %v6364 = vunpack.c.h.b16 %v2527
    %v6365 = vunpack.c.l.b16 %v2528
    %v6366 = vunpack.c.h.b16 %v2528
    %v6367 = vunpack.c.l.b16 %v2529
    %v6368 = vunpack.c.h.b16 %v2529
    %v6369 = vunpack.c.l.b16 %v2530
    %v6370 = vunpack.c.h.b16 %v2530
    %v6371 = vunpack.c.l.b16 %v2531
    %v6372 = vunpack.c.h.b16 %v2531
    %v6373 = vunpack.c.l.b16 %v2532
    %v6374 = vunpack.c.h.b16 %v2532
    %v6375 = vunpack.c.l.b16 %v2533
    %v6376 = vunpack.c.h.b16 %v2533
    %v6377 = vunpack.c.l.b16 %v2534
    %v6378 = vunpack.c.h.b16 %v2534
    %v6379 = vunpack.c.l.b16 %v2535
    %v6380 = vunpack.c.h.b16 %v2535
    %v6381 = vunpack.c.l.b16 %v2536
    %v6382 = vunpack.c.h.b16 %v2536
    %v6383 = vunpack.c.l.b16 %v2537
    %v6384 = vunpack.c.h.b16 %v2537
    %v6385 = vunpack.c.l.b16 %v2538
    %v6386 = vunpack.c.h.b16 %v2538
    %v6387 = vunpack.c.l.b16 %v2539
    %v6388 = vunpack.c.h.b16 %v2539
    %v6389 = vunpack.c.l.b16 %v2540
    %v6390 = vunpack.c.h.b16 %v2540
    %v6391 = vunpack.c.l.b16 %v2541
    %v6392 = vunpack.c.h.b16 %v2541
    %v6393 = vunpack.c.l.b16 %v2542
    %v6394 = vunpack.c.h.b16 %v2542
    %v6395 = vunpack.c.l.b16 %v2543
    %v6396 = vunpack.c.h.b16 %v2543
    %v6397 = vunpack.c.l.b16 %v2544
    %v6398 = vunpack.c.h.b16 %v2544
    %v6399 = vunpack.c.l.b16 %v2545
    %v6400 = vunpack.c.h.b16 %v2545
    %v6401 = vunpack.c.l.b16 %v2546
    %v6402 = vunpack.c.h.b16 %v2546
    %v6403 = vunpack.c.l.b16 %v2547
    %v6404 = vunpack.c.h.b16 %v2547
    %v6405 = vunpack.c.l.b16 %v2548
    %v6406 = vunpack.c.h.b16 %v2548
    %v6407 = vunpack.c.l.b16 %v2549
    %v6408 = vunpack.c.h.b16 %v2549
    %v6409 = vunpack.c.l.b16 %v2550
    %v6410 = vunpack.c.h.b16 %v2550
    %v6411 = vunpack.c.l.b16 %v2551
    %v6412 = vunpack.c.h.b16 %v2551
    %v6413 = vunpack.c.l.b16 %v2552
    %v6414 = vunpack.c.h.b16 %v2552
    %v6415 = vunpack.c.l.b16 %v2553
    %v6416 = vunpack.c.h.b16 %v2553
    %v6417 = vunpack.c.l.b16 %v2554
    %v6418 = vunpack.c.h.b16 %v2554
    %v6419 = vunpack.c.l.b16 %v2555
    %v6420 = vunpack.c.h.b16 %v2555
    %v6421 = vunpack.c.l.b16 %v2556
    %v6422 = vunpack.c.h.b16 %v2556
    %v6423 = vunpack.c.l.b16 %v2557
    %v6424 = vunpack.c.h.b16 %v2557
    %v6425 = vunpack.c.l.b16 %v2558
    %v6426 = vunpack.c.h.b16 %v2558
    %v6427 = vunpack.c.l.b16 %v2559
    %v6428 = vunpack.c.h.b16 %v2559
    %v6429 = vunpack.c.l.b16 %v2560
    %v6430 = vunpack.c.h.b16 %v2560
    %v6431 = vunpack.c.l.b16 %v2561
    %v6432 = vunpack.c.h.b16 %v2561
    %v6433 = vunpack.c.l.b16 %v2562
    %v6434 = vunpack.c.h.b16 %v2562
    %v6435 = vunpack.c.l.b16 %v2563
    %v6436 = vunpack.c.h.b16 %v2563
    %v6437 = vunpack.c.l.b16 %v2564
    %v6438 = vunpack.c.h.b16 %v2564
    %v6439 = vunpack.c.l.b16 %v2565
    %v6440 = vunpack.c.h.b16 %v2565
    %v6441 = vunpack.c.l.b16 %v2566
    %v6442 = vunpack.c.h.b16 %v2566
    %v6443 = vunpack.c.l.b16 %v2567
    %v6444 = vunpack.c.h.b16 %v2567
    %v6445 = vunpack.c.l.b16 %v2568
    %v6446 = vunpack.c.h.b16 %v2568
    %v6447 = vunpack.c.l.b16 %v2569
    %v6448 = vunpack.c.h.b16 %v2569
    %v6449 = vunpack.c.l.b16 %v2570
    %v6450 = vunpack.c.h.b16 %v2570
    %v6451 = vunpack.c.l.b16 %v2571
    %v6452 = vunpack.c.h.b16 %v2571
    %v6453 = vunpack.c.l.b16 %v2572
    %v6454 = vunpack.c.h.b16 %v2572
    %v6455 = vpack.c.b16 %v3903, %v3895
    %v6456 = vpack.c.b16 %v3904, %v3896
    %v6457 = vpack.c.b16 %v3905, %v3897
    %v6458 = vpack.c.b16 %v3906, %v3898
    %v6459 = vpack.c.b16 %v3907, %v3899
    %v6460 = vpack.c.b16 %v3908, %v3900
    %v6461 = vpack.c.b16 %v3909, %v3901
    %v6462 = vpack.c.b16 %v3910, %v3902
    %v6463 = vpack.c.b16 %v3919, %v3911
    %v6464 = vpack.c.b16 %v3920, %v3912
    %v6465 = vpack.c.b16 %v3921, %v3913
    %v6466 = vpack.c.b16 %v3922, %v3914
    %v6467 = vpack.c.b16 %v3923, %v3915
    %v6468 = vpack.c.b16 %v3924, %v3916
    %v6469 = vpack.c.b16 %v3925, %v3917
    %v6470 = vpack.c.b16 %v3926, %v3918
    %v6471 = vpack.c.b16 %v3935, %v3927
    %v6472 = vpack.c.b16 %v3936, %v3928
    %v6473 = vpack.c.b16 %v3937, %v3929
    %v6474 = vpack.c.b16 %v3938, %v3930
    %v6475 = vpack.c.b16 %v3939, %v3931
    %v6476 = vpack.c.b16 %v3940, %v3932
    %v6477 = vpack.c.b16 %v3941, %v3933
    %v6478 = vpack.c.b16 %v3942, %v3934
    %v6479 = vpack.c.b16 %v3951, %v3943
    %v6480 = vpack.c.b16 %v3952, %v3944
    %v6481 = vpack.c.b16 %v3953, %v3945
    %v6482 = vpack.c.b16 %v3954, %v3946
    %v6483 = vpack.c.b16 %v3955, %v3947
    %v6484 = vpack.c.b16 %v3956, %v3948
    %v6485 = vpack.c.b16 %v3957, %v3949
    %v6486 = vpack.c.b16 %v3958, %v3950
    %v6487 = vpack.c.b16 %v3967, %v3959
    %v6488 = vpack.c.b16 %v3968, %v3960
    %v6489 = vpack.c.b16 %v3969, %v3961
    %v6490 = vpack.c.b16 %v3970, %v3962
    %v6491 = vpack.c.b16 %v3971, %v3963
    %v6492 = vpack.c.b16 %v3972, %v3964
    %v6493 = vpack.c.b16 %v3973, %v3965
    %v6494 = vpack.c.b16 %v3974, %v3966
    %v6495 = vpack.c.b16 %v3983, %v3975
    %v6496 = vpack.c.b16 %v3984, %v3976
    %v6497 = vpack.c.b16 %v3985, %v3977
    %v6498 = vpack.c.b16 %v3986, %v3978
    %v6499 = vpack.c.b16 %v3987, %v3979
    %v6500 = vpack.c.b16 %v3988, %v3980
    %v6501 = vpack.c.b16 %v3989, %v3981
    %v6502 = vpack.c.b16 %v3990, %v3982
    %v6503 = vpack.c.b16 %v3999, %v3991
    %v6504 = vpack.c.b16 %v4000, %v3992
    %v6505 = vpack.c.b16 %v4001, %v3993
    %v6506 = vpack.c.b16 %v4002, %v3994
    %v6507 = vpack.c.b16 %v4003, %v3995
    %v6508 = vpack.c.b16 %v4004, %v3996
    %v6509 = vpack.c.b16 %v4005, %v3997
    %v6510 = vpack.c.b16 %v4006, %v3998
    %v6511 = vpack.c.b16 %v4015, %v4007
    %v6512 = vpack.c.b16 %v4016, %v4008
    %v6513 = vpack.c.b16 %v4017, %v4009
    %v6514 = vpack.c.b16 %v4018, %v4010
    %v6515 = vpack.c.b16 %v4019, %v4011
    %v6516 = vpack.c.b16 %v4020, %v4012
    %v6517 = vpack.c.b16 %v4021, %v4013
    %v6518 = vpack.c.b16 %v4022, %v4014
    %v6519 = vpack.c.b16 %v4031, %v4023
    %v6520 = vpack.c.b16 %v4032, %v4024
    %v6521 = vpack.c.b16 %v4033, %v4025
    %v6522 = vpack.c.b16 %v4034, %v4026
    %v6523 = vpack.c.b16 %v4035, %v4027
    %v6524 = vpack.c.b16 %v4036, %v4028
    %v6525 = vpack.c.b16 %v4037, %v4029
    %v6526 = vpack.c.b16 %v4038, %v4030
    %v6527 = vpack.c.b16 %v4047, %v4039
    %v6528 = vpack.c.b16 %v4048, %v4040
    %v6529 = vpack.c.b16 %v4049, %v4041
    %v6530 = vpack.c.b16 %v4050, %v4042
    %v6531 = vpack.c.b16 %v4051, %v4043
    %v6532 = vpack.c.b16 %v4052, %v4044
    %v6533 = vpack.c.b16 %v4053, %v4045
    %v6534 = vpack.c.b16 %v4054, %v4046
    %v6535 = vpack.c.b16 %v4063, %v4055
    %v6536 = vpack.c.b16 %v4064, %v4056
    %v6537 = vpack.c.b16 %v4065, %v4057
    %v6538 = vpack.c.b16 %v4066, %v4058
    %v6539 = vpack.c.b16 %v4067, %v4059
    %v6540 = vpack.c.b16 %v4068, %v4060
    %v6541 = vpack.c.b16 %v4069, %v4061
    %v6542 = vpack.c.b16 %v4070, %v4062
    %v6543 = vpack.c.b16 %v4079, %v4071
    %v6544 = vpack.c.b16 %v4080, %v4072
    %v6545 = vpack.c.b16 %v4081, %v4073
    %v6546 = vpack.c.b16 %v4082, %v4074
    %v6547 = vpack.c.b16 %v4083, %v4075
    %v6548 = vpack.c.b16 %v4084, %v4076
    %v6549 = vpack.c.b16 %v4085, %v4077
    %v6550 = vpack.c.b16 %v4086, %v4078
    %v6551 = vpack.c.b16 %v4095, %v4087
    %v6552 = vpack.c.b16 %v4096, %v4088
    %v6553 = vpack.c.b16 %v4097, %v4089
    %v6554 = vpack.c.b16 %v4098, %v4090
    %v6555 = vpack.c.b16 %v4099, %v4091
    %v6556 = vpack.c.b16 %v4100, %v4092
    %v6557 = vpack.c.b16 %v4101, %v4093
    %v6558 = vpack.c.b16 %v4102, %v4094
    %v6559 = vpack.c.b16 %v4111, %v4103
    %v6560 = vpack.c.b16 %v4112, %v4104
    %v6561 = vpack.c.b16 %v4113, %v4105
    %v6562 = vpack.c.b16 %v4114, %v4106
    %v6563 = vpack.c.b16 %v4115, %v4107
    %v6564 = vpack.c.b16 %v4116, %v4108
    %v6565 = vpack.c.b16 %v4117, %v4109
    %v6566 = vpack.c.b16 %v4118, %v4110
    %v6567 = vpack.c.b16 %v4127, %v4119
    %v6568 = vpack.c.b16 %v4128, %v4120
    %v6569 = vpack.c.b16 %v4129, %v4121
    %v6570 = vpack.c.b16 %v4130, %v4122
    %v6571 = vpack.c.b16 %v4131, %v4123
    %v6572 = vpack.c.b16 %v4132, %v4124
    %v6573 = vpack.c.b16 %v4133, %v4125
    %v6574 = vpack.c.b16 %v4134, %v4126
    %v6575 = vpack.c.b16 %v4143, %v4135
    %v6576 = vpack.c.b16 %v4144, %v4136
    %v6577 = vpack.c.b16 %v4145, %v4137
    %v6578 = vpack.c.b16 %v4146, %v4138
    %v6579 = vpack.c.b16 %v4147, %v4139
    %v6580 = vpack.c.b16 %v4148, %v4140
    %v6581 = vpack.c.b16 %v4149, %v4141
    %v6582 = vpack.c.b16 %v4150, %v4142
    %v6583 = vpack.c.b16 %v4159, %v4151
    %v6584 = vpack.c.b16 %v4160, %v4152
    %v6585 = vpack.c.b16 %v4161, %v4153
    %v6586 = vpack.c.b16 %v4162, %v4154
    %v6587 = vpack.c.b16 %v4163, %v4155
    %v6588 = vpack.c.b16 %v4164, %v4156
    %v6589 = vpack.c.b16 %v4165, %v4157
    %v6590 = vpack.c.b16 %v4166, %v4158
    %v6591 = vpack.c.b16 %v4175, %v4167
    %v6592 = vpack.c.b16 %v4176, %v4168
    %v6593 = vpack.c.b16 %v4177, %v4169
    %v6594 = vpack.c.b16 %v4178, %v4170
    %v6595 = vpack.c.b16 %v4179, %v4171
    %v6596 = vpack.c.b16 %v4180, %v4172
    %v6597 = vpack.c.b16 %v4181, %v4173
    %v6598 = vpack.c.b16 %v4182, %v4174
    %v6599 = vpack.c.b16 %v4191, %v4183
    %v6600 = vpack.c.b16 %v4192, %v4184
    %v6601 = vpack.c.b16 %v4193, %v4185
    %v6602 = vpack.c.b16 %v4194, %v4186
    %v6603 = vpack.c.b16 %v4195, %v4187
    %v6604 = vpack.c.b16 %v4196, %v4188
    %v6605 = vpack.c.b16 %v4197, %v4189
    %v6606 = vpack.c.b16 %v4198, %v4190
    %v6607 = vpack.c.b16 %v4207, %v4199
    %v6608 = vpack.c.b16 %v4208, %v4200
    %v6609 = vpack.c.b16 %v4209, %v4201
    %v6610 = vpack.c.b16 %v4210, %v4202
    %v6611 = vpack.c.b16 %v4211, %v4203
    %v6612 = vpack.c.b16 %v4212, %v4204
    %v6613 = vpack.c.b16 %v4213, %v4205
    %v6614 = vpack.c.b16 %v4214, %v4206
    %v6615 = vpack.c.b16 %v4223, %v4215
    %v6616 = vpack.c.b16 %v4224, %v4216
    %v6617 = vpack.c.b16 %v4225, %v4217
    %v6618 = vpack.c.b16 %v4226, %v4218
    %v6619 = vpack.c.b16 %v4227, %v4219
    %v6620 = vpack.c.b16 %v4228, %v4220
    %v6621 = vpack.c.b16 %v4229, %v4221
    %v6622 = vpack.c.b16 %v4230, %v4222
    %v6623 = vpack.c.b16 %v4239, %v4231
    %v6624 = vpack.c.b16 %v4240, %v4232
    %v6625 = vpack.c.b16 %v4241, %v4233
    %v6626 = vpack.c.b16 %v4242, %v4234
    %v6627 = vpack.c.b16 %v4243, %v4235
    %v6628 = vpack.c.b16 %v4244, %v4236
    %v6629 = vpack.c.b16 %v4245, %v4237
    %v6630 = vpack.c.b16 %v4246, %v4238
    %v6631 = vpack.c.b16 %v4255, %v4247
    %v6632 = vpack.c.b16 %v4256, %v4248
    %v6633 = vpack.c.b16 %v4257, %v4249
    %v6634 = vpack.c.b16 %v4258, %v4250
    %v6635 = vpack.c.b16 %v4259, %v4251
    %v6636 = vpack.c.b16 %v4260, %v4252
    %v6637 = vpack.c.b16 %v4261, %v4253
    %v6638 = vpack.c.b16 %v4262, %v4254
    %v6639 = vpack.c.b16 %v4271, %v4263
    %v6640 = vpack.c.b16 %v4272, %v4264
    %v6641 = vpack.c.b16 %v4273, %v4265
    %v6642 = vpack.c.b16 %v4274, %v4266
    %v6643 = vpack.c.b16 %v4275, %v4267
    %v6644 = vpack.c.b16 %v4276, %v4268
    %v6645 = vpack.c.b16 %v4277, %v4269
    %v6646 = vpack.c.b16 %v4278, %v4270
    %v6647 = vpack.c.b16 %v4287, %v4279
    %v6648 = vpack.c.b16 %v4288, %v4280
    %v6649 = vpack.c.b16 %v4289, %v4281
    %v6650 = vpack.c.b16 %v4290, %v4282
    %v6651 = vpack.c.b16 %v4291, %v4283
    %v6652 = vpack.c.b16 %v4292, %v4284
    %v6653 = vpack.c.b16 %v4293, %v4285
    %v6654 = vpack.c.b16 %v4294, %v4286
    %v6655 = vpack.c.b16 %v4303, %v4295
    %v6656 = vpack.c.b16 %v4304, %v4296
    %v6657 = vpack.c.b16 %v4305, %v4297
    %v6658 = vpack.c.b16 %v4306, %v4298
    %v6659 = vpack.c.b16 %v4307, %v4299
    %v6660 = vpack.c.b16 %v4308, %v4300
    %v6661 = vpack.c.b16 %v4309, %v4301
    %v6662 = vpack.c.b16 %v4310, %v4302
    %v6663 = vpack.c.b16 %v4319, %v4311
    %v6664 = vpack.c.b16 %v4320, %v4312
    %v6665 = vpack.c.b16 %v4321, %v4313
    %v6666 = vpack.c.b16 %v4322, %v4314
    %v6667 = vpack.c.b16 %v4323, %v4315
    %v6668 = vpack.c.b16 %v4324, %v4316
    %v6669 = vpack.c.b16 %v4325, %v4317
    %v6670 = vpack.c.b16 %v4326, %v4318
    %v6671 = vpack.c.b16 %v4335, %v4327
    %v6672 = vpack.c.b16 %v4336, %v4328
    %v6673 = vpack.c.b16 %v4337, %v4329
    %v6674 = vpack.c.b16 %v4338, %v4330
    %v6675 = vpack.c.b16 %v4339, %v4331
    %v6676 = vpack.c.b16 %v4340, %v4332
    %v6677 = vpack.c.b16 %v4341, %v4333
    %v6678 = vpack.c.b16 %v4342, %v4334
    %v6679 = vpack.c.b16 %v4351, %v4343
    %v6680 = vpack.c.b16 %v4352, %v4344
    %v6681 = vpack.c.b16 %v4353, %v4345
    %v6682 = vpack.c.b16 %v4354, %v4346
    %v6683 = vpack.c.b16 %v4355, %v4347
    %v6684 = vpack.c.b16 %v4356, %v4348
    %v6685 = vpack.c.b16 %v4357, %v4349
    %v6686 = vpack.c.b16 %v4358, %v4350
    %v6687 = vpack.c.b16 %v4367, %v4359
    %v6688 = vpack.c.b16 %v4368, %v4360
    %v6689 = vpack.c.b16 %v4369, %v4361
    %v6690 = vpack.c.b16 %v4370, %v4362
    %v6691 = vpack.c.b16 %v4371, %v4363
    %v6692 = vpack.c.b16 %v4372, %v4364
    %v6693 = vpack.c.b16 %v4373, %v4365
    %v6694 = vpack.c.b16 %v4374, %v4366
    %v6695 = vpack.c.b16 %v4383, %v4375
    %v6696 = vpack.c.b16 %v4384, %v4376
    %v6697 = vpack.c.b16 %v4385, %v4377
    %v6698 = vpack.c.b16 %v4386, %v4378
    %v6699 = vpack.c.b16 %v4387, %v4379
    %v6700 = vpack.c.b16 %v4388, %v4380
    %v6701 = vpack.c.b16 %v4389, %v4381
    %v6702 = vpack.c.b16 %v4390, %v4382
    %v6703 = vpack.c.b16 %v4399, %v4391
    %v6704 = vpack.c.b16 %v4400, %v4392
    %v6705 = vpack.c.b16 %v4401, %v4393
    %v6706 = vpack.c.b16 %v4402, %v4394
    %v6707 = vpack.c.b16 %v4403, %v4395
    %v6708 = vpack.c.b16 %v4404, %v4396
    %v6709 = vpack.c.b16 %v4405, %v4397
    %v6710 = vpack.c.b16 %v4406, %v4398
    %v6711 = vpack.c.b16 %v4415, %v4407
    %v6712 = vpack.c.b16 %v4416, %v4408
    %v6713 = vpack.c.b16 %v4417, %v4409
    %v6714 = vpack.c.b16 %v4418, %v4410
    %v6715 = vpack.c.b16 %v4419, %v4411
    %v6716 = vpack.c.b16 %v4420, %v4412
    %v6717 = vpack.c.b16 %v4421, %v4413
    %v6718 = vpack.c.b16 %v4422, %v4414
    %v6719 = vpack.c.b16 %v4431, %v4423
    %v6720 = vpack.c.b16 %v4432, %v4424
    %v6721 = vpack.c.b16 %v4433, %v4425
    %v6722 = vpack.c.b16 %v4434, %v4426
    %v6723 = vpack.c.b16 %v4435, %v4427
    %v6724 = vpack.c.b16 %v4436, %v4428
    %v6725 = vpack.c.b16 %v4437, %v4429
    %v6726 = vpack.c.b16 %v4438, %v4430
    %v6727 = vpack.c.b16 %v4447, %v4439
    %v6728 = vpack.c.b16 %v4448, %v4440
    %v6729 = vpack.c.b16 %v4449, %v4441
    %v6730 = vpack.c.b16 %v4450, %v4442
    %v6731 = vpack.c.b16 %v4451, %v4443
    %v6732 = vpack.c.b16 %v4452, %v4444
    %v6733 = vpack.c.b16 %v4453, %v4445
    %v6734 = vpack.c.b16 %v4454, %v4446
    %v6735 = vpack.c.b16 %v4463, %v4455
    %v6736 = vpack.c.b16 %v4464, %v4456
    %v6737 = vpack.c.b16 %v4465, %v4457
    %v6738 = vpack.c.b16 %v4466, %v4458
    %v6739 = vpack.c.b16 %v4467, %v4459
    %v6740 = vpack.c.b16 %v4468, %v4460
    %v6741 = vpack.c.b16 %v4469, %v4461
    %v6742 = vpack.c.b16 %v4470, %v4462
    %v6743 = vpack.c.b16 %v4479, %v4471
    %v6744 = vpack.c.b16 %v4480, %v4472
    %v6745 = vpack.c.b16 %v4481, %v4473
    %v6746 = vpack.c.b16 %v4482, %v4474
    %v6747 = vpack.c.b16 %v4483, %v4475
    %v6748 = vpack.c.b16 %v4484, %v4476
    %v6749 = vpack.c.b16 %v4485, %v4477
    %v6750 = vpack.c.b16 %v4486, %v4478
    %v6751 = vpack.c.b16 %v4495, %v4487
    %v6752 = vpack.c.b16 %v4496, %v4488
    %v6753 = vpack.c.b16 %v4497, %v4489
    %v6754 = vpack.c.b16 %v4498, %v4490
    %v6755 = vpack.c.b16 %v4499, %v4491
    %v6756 = vpack.c.b16 %v4500, %v4492
    %v6757 = vpack.c.b16 %v4501, %v4493
    %v6758 = vpack.c.b16 %v4502, %v4494
    %v6759 = vpack.c.b16 %v4511, %v4503
    %v6760 = vpack.c.b16 %v4512, %v4504
    %v6761 = vpack.c.b16 %v4513, %v4505
    %v6762 = vpack.c.b16 %v4514, %v4506
    %v6763 = vpack.c.b16 %v4515, %v4507
    %v6764 = vpack.c.b16 %v4516, %v4508
    %v6765 = vpack.c.b16 %v4517, %v4509
    %v6766 = vpack.c.b16 %v4518, %v4510
    %v6767 = vpack.c.b16 %v4527, %v4519
    %v6768 = vpack.c.b16 %v4528, %v4520
    %v6769 = vpack.c.b16 %v4529, %v4521
    %v6770 = vpack.c.b16 %v4530, %v4522
    %v6771 = vpack.c.b16 %v4531, %v4523
    %v6772 = vpack.c.b16 %v4532, %v4524
    %v6773 = vpack.c.b16 %v4533, %v4525
    %v6774 = vpack.c.b16 %v4534, %v4526
    %v6775 = vpack.c.b16 %v4543, %v4535
    %v6776 = vpack.c.b16 %v4544, %v4536
    %v6777 = vpack.c.b16 %v4545, %v4537
    %v6778 = vpack.c.b16 %v4546, %v4538
    %v6779 = vpack.c.b16 %v4547, %v4539
    %v6780 = vpack.c.b16 %v4548, %v4540
    %v6781 = vpack.c.b16 %v4549, %v4541
    %v6782 = vpack.c.b16 %v4550, %v4542
    %v6783 = vpack.c.b16 %v4559, %v4551
    %v6784 = vpack.c.b16 %v4560, %v4552
    %v6785 = vpack.c.b16 %v4561, %v4553
    %v6786 = vpack.c.b16 %v4562, %v4554
    %v6787 = vpack.c.b16 %v4563, %v4555
    %v6788 = vpack.c.b16 %v4564, %v4556
    %v6789 = vpack.c.b16 %v4565, %v4557
    %v6790 = vpack.c.b16 %v4566, %v4558
    %v6791 = vpack.c.b16 %v4575, %v4567
    %v6792 = vpack.c.b16 %v4576, %v4568
    %v6793 = vpack.c.b16 %v4577, %v4569
    %v6794 = vpack.c.b16 %v4578, %v4570
    %v6795 = vpack.c.b16 %v4579, %v4571
    %v6796 = vpack.c.b16 %v4580, %v4572
    %v6797 = vpack.c.b16 %v4581, %v4573
    %v6798 = vpack.c.b16 %v4582, %v4574
    %v6799 = vpack.c.b16 %v4591, %v4583
    %v6800 = vpack.c.b16 %v4592, %v4584
    %v6801 = vpack.c.b16 %v4593, %v4585
    %v6802 = vpack.c.b16 %v4594, %v4586
    %v6803 = vpack.c.b16 %v4595, %v4587
    %v6804 = vpack.c.b16 %v4596, %v4588
    %v6805 = vpack.c.b16 %v4597, %v4589
    %v6806 = vpack.c.b16 %v4598, %v4590
    %v6807 = vpack.c.b16 %v4607, %v4599
    %v6808 = vpack.c.b16 %v4608, %v4600
    %v6809 = vpack.c.b16 %v4609, %v4601
    %v6810 = vpack.c.b16 %v4610, %v4602
    %v6811 = vpack.c.b16 %v4611, %v4603
    %v6812 = vpack.c.b16 %v4612, %v4604
    %v6813 = vpack.c.b16 %v4613, %v4605
    %v6814 = vpack.c.b16 %v4614, %v4606
    %v6815 = vpack.c.b16 %v4623, %v4615
    %v6816 = vpack.c.b16 %v4624, %v4616
    %v6817 = vpack.c.b16 %v4625, %v4617
    %v6818 = vpack.c.b16 %v4626, %v4618
    %v6819 = vpack.c.b16 %v4627, %v4619
    %v6820 = vpack.c.b16 %v4628, %v4620
    %v6821 = vpack.c.b16 %v4629, %v4621
    %v6822 = vpack.c.b16 %v4630, %v4622
    %v6823 = vpack.c.b16 %v4639, %v4631
    %v6824 = vpack.c.b16 %v4640, %v4632
    %v6825 = vpack.c.b16 %v4641, %v4633
    %v6826 = vpack.c.b16 %v4642, %v4634
    %v6827 = vpack.c.b16 %v4643, %v4635
    %v6828 = vpack.c.b16 %v4644, %v4636
    %v6829 = vpack.c.b16 %v4645, %v4637
    %v6830 = vpack.c.b16 %v4646, %v4638
    %v6831 = vpack.c.b16 %v4655, %v4647
    %v6832 = vpack.c.b16 %v4656, %v4648
    %v6833 = vpack.c.b16 %v4657, %v4649
    %v6834 = vpack.c.b16 %v4658, %v4650
    %v6835 = vpack.c.b16 %v4659, %v4651
    %v6836 = vpack.c.b16 %v4660, %v4652
    %v6837 = vpack.c.b16 %v4661, %v4653
    %v6838 = vpack.c.b16 %v4662, %v4654
    %v6839 = vpack.c.b16 %v4671, %v4663
    %v6840 = vpack.c.b16 %v4672, %v4664
    %v6841 = vpack.c.b16 %v4673, %v4665
    %v6842 = vpack.c.b16 %v4674, %v4666
    %v6843 = vpack.c.b16 %v4675, %v4667
    %v6844 = vpack.c.b16 %v4676, %v4668
    %v6845 = vpack.c.b16 %v4677, %v4669
    %v6846 = vpack.c.b16 %v4678, %v4670
    %v6847 = vpack.c.b16 %v4687, %v4679
    %v6848 = vpack.c.b16 %v4688, %v4680
    %v6849 = vpack.c.b16 %v4689, %v4681
    %v6850 = vpack.c.b16 %v4690, %v4682
    %v6851 = vpack.c.b16 %v4691, %v4683
    %v6852 = vpack.c.b16 %v4692, %v4684
    %v6853 = vpack.c.b16 %v4693, %v4685
    %v6854 = vpack.c.b16 %v4694, %v4686
    %v6855 = vpack.c.b16 %v4703, %v4695
    %v6856 = vpack.c.b16 %v4704, %v4696
    %v6857 = vpack.c.b16 %v4705, %v4697
    %v6858 = vpack.c.b16 %v4706, %v4698
    %v6859 = vpack.c.b16 %v4707, %v4699
    %v6860 = vpack.c.b16 %v4708, %v4700
    %v6861 = vpack.c.b16 %v4709, %v4701
    %v6862 = vpack.c.b16 %v4710, %v4702
    %v6863 = vpack.c.b16 %v4719, %v4711
    %v6864 = vpack.c.b16 %v4720, %v4712
    %v6865 = vpack.c.b16 %v4721, %v4713
    %v6866 = vpack.c.b16 %v4722, %v4714
    %v6867 = vpack.c.b16 %v4723, %v4715
    %v6868 = vpack.c.b16 %v4724, %v4716
    %v6869 = vpack.c.b16 %v4725, %v4717
    %v6870 = vpack.c.b16 %v4726, %v4718
    %v6871 = vpack.c.b16 %v4735, %v4727
    %v6872 = vpack.c.b16 %v4736, %v4728
    %v6873 = vpack.c.b16 %v4737, %v4729
    %v6874 = vpack.c.b16 %v4738, %v4730
    %v6875 = vpack.c.b16 %v4739, %v4731
    %v6876 = vpack.c.b16 %v4740, %v4732
    %v6877 = vpack.c.b16 %v4741, %v4733
    %v6878 = vpack.c.b16 %v4742, %v4734
    %v6879 = vpack.c.b16 %v4751, %v4743
    %v6880 = vpack.c.b16 %v4752, %v4744
    %v6881 = vpack.c.b16 %v4753, %v4745
    %v6882 = vpack.c.b16 %v4754, %v4746
    %v6883 = vpack.c.b16 %v4755, %v4747
    %v6884 = vpack.c.b16 %v4756, %v4748
    %v6885 = vpack.c.b16 %v4757, %v4749
    %v6886 = vpack.c.b16 %v4758, %v4750
    %v6887 = vpack.c.b16 %v4767, %v4759
    %v6888 = vpack.c.b16 %v4768, %v4760
    %v6889 = vpack.c.b16 %v4769, %v4761
    %v6890 = vpack.c.b16 %v4770, %v4762
    %v6891 = vpack.c.b16 %v4771, %v4763
    %v6892 = vpack.c.b16 %v4772, %v4764
    %v6893 = vpack.c.b16 %v4773, %v4765
    %v6894 = vpack.c.b16 %v4774, %v4766
    %v6895 = vpack.c.b16 %v4783, %v4775
    %v6896 = vpack.c.b16 %v4784, %v4776
    %v6897 = vpack.c.b16 %v4785, %v4777
    %v6898 = vpack.c.b16 %v4786, %v4778
    %v6899 = vpack.c.b16 %v4787, %v4779
    %v6900 = vpack.c.b16 %v4788, %v4780
    %v6901 = vpack.c.b16 %v4789, %v4781
    %v6902 = vpack.c.b16 %v4790, %v4782
    %v6903 = vpack.c.b16 %v4799, %v4791
    %v6904 = vpack.c.b16 %v4800, %v4792
    %v6905 = vpack.c.b16 %v4801, %v4793
    %v6906 = vpack.c.b16 %v4802, %v4794
    %v6907 = vpack.c.b16 %v4803, %v4795
    %v6908 = vpack.c.b16 %v4804, %v4796
    %v6909 = vpack.c.b16 %v4805, %v4797
    %v6910 = vpack.c.b16 %v4806, %v4798
    %v6911 = vpack.c.b16 %v4815, %v4807
    %v6912 = vpack.c.b16 %v4816, %v4808
    %v6913 = vpack.c.b16 %v4817, %v4809
    %v6914 = vpack.c.b16 %v4818, %v4810
    %v6915 = vpack.c.b16 %v4819, %v4811
    %v6916 = vpack.c.b16 %v4820, %v4812
    %v6917 = vpack.c.b16 %v4821, %v4813
    %v6918 = vpack.c.b16 %v4822, %v4814
    %v6919 = vpack.c.b16 %v4831, %v4823
    %v6920 = vpack.c.b16 %v4832, %v4824
    %v6921 = vpack.c.b16 %v4833, %v4825
    %v6922 = vpack.c.b16 %v4834, %v4826
    %v6923 = vpack.c.b16 %v4835, %v4827
    %v6924 = vpack.c.b16 %v4836, %v4828
    %v6925 = vpack.c.b16 %v4837, %v4829
    %v6926 = vpack.c.b16 %v4838, %v4830
    %v6927 = vpack.c.b16 %v4847, %v4839
    %v6928 = vpack.c.b16 %v4848, %v4840
    %v6929 = vpack.c.b16 %v4849, %v4841
    %v6930 = vpack.c.b16 %v4850, %v4842
    %v6931 = vpack.c.b16 %v4851, %v4843
    %v6932 = vpack.c.b16 %v4852, %v4844
    %v6933 = vpack.c.b16 %v4853, %v4845
    %v6934 = vpack.c.b16 %v4854, %v4846
    %v6935 = vpack.c.b16 %v4863, %v4855
    %v6936 = vpack.c.b16 %v4864, %v4856
    %v6937 = vpack.c.b16 %v4865, %v4857
    %v6938 = vpack.c.b16 %v4866, %v4858
    %v6939 = vpack.c.b16 %v4867, %v4859
    %v6940 = vpack.c.b16 %v4868, %v4860
    %v6941 = vpack.c.b16 %v4869, %v4861
    %v6942 = vpack.c.b16 %v4870, %v4862
    %v6943 = vpack.c.b16 %v4879, %v4871
    %v6944 = vpack.c.b16 %v4880, %v4872
    %v6945 = vpack.c.b16 %v4881, %v4873
    %v6946 = vpack.c.b16 %v4882, %v4874
    %v6947 = vpack.c.b16 %v4883, %v4875
    %v6948 = vpack.c.b16 %v4884, %v4876
    %v6949 = vpack.c.b16 %v4885, %v4877
    %v6950 = vpack.c.b16 %v4886, %v4878
    %v6951 = vpack.c.b16 %v4895, %v4887
    %v6952 = vpack.c.b16 %v4896, %v4888
    %v6953 = vpack.c.b16 %v4897, %v4889
    %v6954 = vpack.c.b16 %v4898, %v4890
    %v6955 = vpack.c.b16 %v4899, %v4891
    %v6956 = vpack.c.b16 %v4900, %v4892
    %v6957 = vpack.c.b16 %v4901, %v4893
    %v6958 = vpack.c.b16 %v4902, %v4894
    %v6959 = vpack.c.b16 %v4911, %v4903
    %v6960 = vpack.c.b16 %v4912, %v4904
    %v6961 = vpack.c.b16 %v4913, %v4905
    %v6962 = vpack.c.b16 %v4914, %v4906
    %v6963 = vpack.c.b16 %v4915, %v4907
    %v6964 = vpack.c.b16 %v4916, %v4908
    %v6965 = vpack.c.b16 %v4917, %v4909
    %v6966 = vpack.c.b16 %v4918, %v4910
    %v6967 = vpack.c.b16 %v4927, %v4919
    %v6968 = vpack.c.b16 %v4928, %v4920
    %v6969 = vpack.c.b16 %v4929, %v4921
    %v6970 = vpack.c.b16 %v4930, %v4922
    %v6971 = vpack.c.b16 %v4931, %v4923
    %v6972 = vpack.c.b16 %v4932, %v4924
    %v6973 = vpack.c.b16 %v4933, %v4925
    %v6974 = vpack.c.b16 %v4934, %v4926
    %v6975 = vpack.c.b16 %v4943, %v4935
    %v6976 = vpack.c.b16 %v4944, %v4936
    %v6977 = vpack.c.b16 %v4945, %v4937
    %v6978 = vpack.c.b16 %v4946, %v4938
    %v6979 = vpack.c.b16 %v4947, %v4939
    %v6980 = vpack.c.b16 %v4948, %v4940
    %v6981 = vpack.c.b16 %v4949, %v4941
    %v6982 = vpack.c.b16 %v4950, %v4942
    %v6983 = vpack.c.b16 %v4959, %v4951
    %v6984 = vpack.c.b16 %v4960, %v4952
    %v6985 = vpack.c.b16 %v4961, %v4953
    %v6986 = vpack.c.b16 %v4962, %v4954
    %v6987 = vpack.c.b16 %v4963, %v4955
    %v6988 = vpack.c.b16 %v4964, %v4956
    %v6989 = vpack.c.b16 %v4965, %v4957
    %v6990 = vpack.c.b16 %v4966, %v4958
    %v6991 = vpack.c.b16 %v4975, %v4967
    %v6992 = vpack.c.b16 %v4976, %v4968
    %v6993 = vpack.c.b16 %v4977, %v4969
    %v6994 = vpack.c.b16 %v4978, %v4970
    %v6995 = vpack.c.b16 %v4979, %v4971
    %v6996 = vpack.c.b16 %v4980, %v4972
    %v6997 = vpack.c.b16 %v4981, %v4973
    %v6998 = vpack.c.b16 %v4982, %v4974
    %v6999 = vpack.c.b16 %v4991, %v4983
    %v7000 = vpack.c.b16 %v4992, %v4984
    %v7001 = vpack.c.b16 %v4993, %v4985
    %v7002 = vpack.c.b16 %v4994, %v4986
    %v7003 = vpack.c.b16 %v4995, %v4987
    %v7004 = vpack.c.b16 %v4996, %v4988
    %v7005 = vpack.c.b16 %v4997, %v4989
    %v7006 = vpack.c.b16 %v4998, %v4990
    %v7007 = vpack.c.b16 %v5007, %v4999
    %v7008 = vpack.c.b16 %v5008, %v5000
    %v7009 = vpack.c.b16 %v5009, %v5001
    %v7010 = vpack.c.b16 %v5010, %v5002
    %v7011 = vpack.c.b16 %v5011, %v5003
    %v7012 = vpack.c.b16 %v5012, %v5004
    %v7013 = vpack.c.b16 %v5013, %v5005
    %v7014 = vpack.c.b16 %v5014, %v5006
    %v7015 = vpack.c.b16 %v5023, %v5015
    %v7016 = vpack.c.b16 %v5024, %v5016
    %v7017 = vpack.c.b16 %v5025, %v5017
    %v7018 = vpack.c.b16 %v5026, %v5018
    %v7019 = vpack.c.b16 %v5027, %v5019
    %v7020 = vpack.c.b16 %v5028, %v5020
    %v7021 = vpack.c.b16 %v5029, %v5021
    %v7022 = vpack.c.b16 %v5030, %v5022
    %v7023 = vpack.c.b16 %v5039, %v5031
    %v7024 = vpack.c.b16 %v5040, %v5032
    %v7025 = vpack.c.b16 %v5041, %v5033
    %v7026 = vpack.c.b16 %v5042, %v5034
    %v7027 = vpack.c.b16 %v5043, %v5035
    %v7028 = vpack.c.b16 %v5044, %v5036
    %v7029 = vpack.c.b16 %v5045, %v5037
    %v7030 = vpack.c.b16 %v5046, %v5038
    %v7031 = vpack.c.b16 %v5055, %v5047
    %v7032 = vpack.c.b16 %v5056, %v5048
    %v7033 = vpack.c.b16 %v5057, %v5049
    %v7034 = vpack.c.b16 %v5058, %v5050
    %v7035 = vpack.c.b16 %v5059, %v5051
    %v7036 = vpack.c.b16 %v5060, %v5052
    %v7037 = vpack.c.b16 %v5061, %v5053
    %v7038 = vpack.c.b16 %v5062, %v5054
    %v7039 = vpack.c.b16 %v5071, %v5063
    %v7040 = vpack.c.b16 %v5072, %v5064
    %v7041 = vpack.c.b16 %v5073, %v5065
    %v7042 = vpack.c.b16 %v5074, %v5066
    %v7043 = vpack.c.b16 %v5075, %v5067
    %v7044 = vpack.c.b16 %v5076, %v5068
    %v7045 = vpack.c.b16 %v5077, %v5069
    %v7046 = vpack.c.b16 %v5078, %v5070
    %v7047 = vpack.c.b16 %v5087, %v5079
    %v7048 = vpack.c.b16 %v5088, %v5080
    %v7049 = vpack.c.b16 %v5089, %v5081
    %v7050 = vpack.c.b16 %v5090, %v5082
    %v7051 = vpack.c.b16 %v5091, %v5083
    %v7052 = vpack.c.b16 %v5092, %v5084
    %v7053 = vpack.c.b16 %v5093, %v5085
    %v7054 = vpack.c.b16 %v5094, %v5086
    %v7055 = vpack.c.b16 %v5103, %v5095
    %v7056 = vpack.c.b16 %v5104, %v5096
    %v7057 = vpack.c.b16 %v5105, %v5097
    %v7058 = vpack.c.b16 %v5106, %v5098
    %v7059 = vpack.c.b16 %v5107, %v5099
    %v7060 = vpack.c.b16 %v5108, %v5100
    %v7061 = vpack.c.b16 %v5109, %v5101
    %v7062 = vpack.c.b16 %v5110, %v5102
    %v7063 = vpack.c.b16 %v5119, %v5111
    %v7064 = vpack.c.b16 %v5120, %v5112
    %v7065 = vpack.c.b16 %v5121, %v5113
    %v7066 = vpack.c.b16 %v5122, %v5114
    %v7067 = vpack.c.b16 %v5123, %v5115
    %v7068 = vpack.c.b16 %v5124, %v5116
    %v7069 = vpack.c.b16 %v5125, %v5117
    %v7070 = vpack.c.b16 %v5126, %v5118
    %v7071 = vpack.c.b16 %v5135, %v5127
    %v7072 = vpack.c.b16 %v5136, %v5128
    %v7073 = vpack.c.b16 %v5137, %v5129
    %v7074 = vpack.c.b16 %v5138, %v5130
    %v7075 = vpack.c.b16 %v5139, %v5131
    %v7076 = vpack.c.b16 %v5140, %v5132
    %v7077 = vpack.c.b16 %v5141, %v5133
    %v7078 = vpack.c.b16 %v5142, %v5134
    %v7079 = vpack.c.b16 %v5151, %v5143
    %v7080 = vpack.c.b16 %v5152, %v5144
    %v7081 = vpack.c.b16 %v5153, %v5145
    %v7082 = vpack.c.b16 %v5154, %v5146
    %v7083 = vpack.c.b16 %v5155, %v5147
    %v7084 = vpack.c.b16 %v5156, %v5148
    %v7085 = vpack.c.b16 %v5157, %v5149
    %v7086 = vpack.c.b16 %v5158, %v5150
    %v7087 = vpack.c.b16 %v5167, %v5159
    %v7088 = vpack.c.b16 %v5168, %v5160
    %v7089 = vpack.c.b16 %v5169, %v5161
    %v7090 = vpack.c.b16 %v5170, %v5162
    %v7091 = vpack.c.b16 %v5171, %v5163
    %v7092 = vpack.c.b16 %v5172, %v5164
    %v7093 = vpack.c.b16 %v5173, %v5165
    %v7094 = vpack.c.b16 %v5174, %v5166
    %v7095 = vpack.c.b16 %v5183, %v5175
    %v7096 = vpack.c.b16 %v5184, %v5176
    %v7097 = vpack.c.b16 %v5185, %v5177
    %v7098 = vpack.c.b16 %v5186, %v5178
    %v7099 = vpack.c.b16 %v5187, %v5179
    %v7100 = vpack.c.b16 %v5188, %v5180
    %v7101 = vpack.c.b16 %v5189, %v5181
    %v7102 = vpack.c.b16 %v5190, %v5182
    %v7103 = vpack.c.b16 %v5199, %v5191
    %v7104 = vpack.c.b16 %v5200, %v5192
    %v7105 = vpack.c.b16 %v5201, %v5193
    %v7106 = vpack.c.b16 %v5202, %v5194
    %v7107 = vpack.c.b16 %v5203, %v5195
    %v7108 = vpack.c.b16 %v5204, %v5196
    %v7109 = vpack.c.b16 %v5205, %v5197
    %v7110 = vpack.c.b16 %v5206, %v5198
    %v7111 = vpack.c.b16 %v5215, %v5207
    %v7112 = vpack.c.b16 %v5216, %v5208
    %v7113 = vpack.c.b16 %v5217, %v5209
    %v7114 = vpack.c.b16 %v5218, %v5210
    %v7115 = vpack.c.b16 %v5219, %v5211
    %v7116 = vpack.c.b16 %v5220, %v5212
    %v7117 = vpack.c.b16 %v5221, %v5213
    %v7118 = vpack.c.b16 %v5222, %v5214
    %v7119 = vpack.c.b16 %v5231, %v5223
    %v7120 = vpack.c.b16 %v5232, %v5224
    %v7121 = vpack.c.b16 %v5233, %v5225
    %v7122 = vpack.c.b16 %v5234, %v5226
    %v7123 = vpack.c.b16 %v5235, %v5227
    %v7124 = vpack.c.b16 %v5236, %v5228
    %v7125 = vpack.c.b16 %v5237, %v5229
    %v7126 = vpack.c.b16 %v5238, %v5230
    %v7127 = vpack.c.b16 %v5247, %v5239
    %v7128 = vpack.c.b16 %v5248, %v5240
    %v7129 = vpack.c.b16 %v5249, %v5241
    %v7130 = vpack.c.b16 %v5250, %v5242
    %v7131 = vpack.c.b16 %v5251, %v5243
    %v7132 = vpack.c.b16 %v5252, %v5244
    %v7133 = vpack.c.b16 %v5253, %v5245
    %v7134 = vpack.c.b16 %v5254, %v5246
    %v7135 = vpack.c.b16 %v5263, %v5255
    %v7136 = vpack.c.b16 %v5264, %v5256
    %v7137 = vpack.c.b16 %v5265, %v5257
    %v7138 = vpack.c.b16 %v5266, %v5258
    %v7139 = vpack.c.b16 %v5267, %v5259
    %v7140 = vpack.c.b16 %v5268, %v5260
    %v7141 = vpack.c.b16 %v5269, %v5261
    %v7142 = vpack.c.b16 %v5270, %v5262
    %v7143 = vpack.c.b16 %v5279, %v5271
    %v7144 = vpack.c.b16 %v5280, %v5272
    %v7145 = vpack.c.b16 %v5281, %v5273
    %v7146 = vpack.c.b16 %v5282, %v5274
    %v7147 = vpack.c.b16 %v5283, %v5275
    %v7148 = vpack.c.b16 %v5284, %v5276
    %v7149 = vpack.c.b16 %v5285, %v5277
    %v7150 = vpack.c.b16 %v5286, %v5278
    %v7151 = vpack.c.b16 %v5295, %v5287
    %v7152 = vpack.c.b16 %v5296, %v5288
    %v7153 = vpack.c.b16 %v5297, %v5289
    %v7154 = vpack.c.b16 %v5298, %v5290
    %v7155 = vpack.c.b16 %v5299, %v5291
    %v7156 = vpack.c.b16 %v5300, %v5292
    %v7157 = vpack.c.b16 %v5301, %v5293
    %v7158 = vpack.c.b16 %v5302, %v5294
    %v7159 = vpack.c.b16 %v5311, %v5303
    %v7160 = vpack.c.b16 %v5312, %v5304
    %v7161 = vpack.c.b16 %v5313, %v5305
    %v7162 = vpack.c.b16 %v5314, %v5306
    %v7163 = vpack.c.b16 %v5315, %v5307
    %v7164 = vpack.c.b16 %v5316, %v5308
    %v7165 = vpack.c.b16 %v5317, %v5309
    %v7166 = vpack.c.b16 %v5318, %v5310
    %v7167 = vpack.c.b16 %v5327, %v5319
    %v7168 = vpack.c.b16 %v5328, %v5320
    %v7169 = vpack.c.b16 %v5329, %v5321
    %v7170 = vpack.c.b16 %v5330, %v5322
    %v7171 = vpack.c.b16 %v5331, %v5323
    %v7172 = vpack.c.b16 %v5332, %v5324
    %v7173 = vpack.c.b16 %v5333, %v5325
    %v7174 = vpack.c.b16 %v5334, %v5326
    %v7175 = vpack.c.b16 %v5343, %v5335
    %v7176 = vpack.c.b16 %v5344, %v5336
    %v7177 = vpack.c.b16 %v5345, %v5337
    %v7178 = vpack.c.b16 %v5346, %v5338
    %v7179 = vpack.c.b16 %v5347, %v5339
    %v7180 = vpack.c.b16 %v5348, %v5340
    %v7181 = vpack.c.b16 %v5349, %v5341
    %v7182 = vpack.c.b16 %v5350, %v5342
    %v7183 = vpack.c.b16 %v5359, %v5351
    %v7184 = vpack.c.b16 %v5360, %v5352
    %v7185 = vpack.c.b16 %v5361, %v5353
    %v7186 = vpack.c.b16 %v5362, %v5354
    %v7187 = vpack.c.b16 %v5363, %v5355
    %v7188 = vpack.c.b16 %v5364, %v5356
    %v7189 = vpack.c.b16 %v5365, %v5357
    %v7190 = vpack.c.b16 %v5366, %v5358
    %v7191 = vpack.c.b16 %v5375, %v5367
    %v7192 = vpack.c.b16 %v5376, %v5368
    %v7193 = vpack.c.b16 %v5377, %v5369
    %v7194 = vpack.c.b16 %v5378, %v5370
    %v7195 = vpack.c.b16 %v5379, %v5371
    %v7196 = vpack.c.b16 %v5380, %v5372
    %v7197 = vpack.c.b16 %v5381, %v5373
    %v7198 = vpack.c.b16 %v5382, %v5374
    %v7199 = vpack.c.b16 %v5391, %v5383
    %v7200 = vpack.c.b16 %v5392, %v5384
    %v7201 = vpack.c.b16 %v5393, %v5385
    %v7202 = vpack.c.b16 %v5394, %v5386
    %v7203 = vpack.c.b16 %v5395, %v5387
    %v7204 = vpack.c.b16 %v5396, %v5388
    %v7205 = vpack.c.b16 %v5397, %v5389
    %v7206 = vpack.c.b16 %v5398, %v5390
    %v7207 = vpack.c.b16 %v5407, %v5399
    %v7208 = vpack.c.b16 %v5408, %v5400
    %v7209 = vpack.c.b16 %v5409, %v5401
    %v7210 = vpack.c.b16 %v5410, %v5402
    %v7211 = vpack.c.b16 %v5411, %v5403
    %v7212 = vpack.c.b16 %v5412, %v5404
    %v7213 = vpack.c.b16 %v5413, %v5405
    %v7214 = vpack.c.b16 %v5414, %v5406
    %v7215 = vpack.c.b16 %v5423, %v5415
    %v7216 = vpack.c.b16 %v5424, %v5416
    %v7217 = vpack.c.b16 %v5425, %v5417
    %v7218 = vpack.c.b16 %v5426, %v5418
    %v7219 = vpack.c.b16 %v5427, %v5419
    %v7220 = vpack.c.b16 %v5428, %v5420
    %v7221 = vpack.c.b16 %v5429, %v5421
    %v7222 = vpack.c.b16 %v5430, %v5422
    %v7223 = vpack.c.b16 %v5439, %v5431
    %v7224 = vpack.c.b16 %v5440, %v5432
    %v7225 = vpack.c.b16 %v5441, %v5433
    %v7226 = vpack.c.b16 %v5442, %v5434
    %v7227 = vpack.c.b16 %v5443, %v5435
    %v7228 = vpack.c.b16 %v5444, %v5436
    %v7229 = vpack.c.b16 %v5445, %v5437
    %v7230 = vpack.c.b16 %v5446, %v5438
    %v7231 = vpack.c.b16 %v5455, %v5447
    %v7232 = vpack.c.b16 %v5456, %v5448
    %v7233 = vpack.c.b16 %v5457, %v5449
    %v7234 = vpack.c.b16 %v5458, %v5450
    %v7235 = vpack.c.b16 %v5459, %v5451
    %v7236 = vpack.c.b16 %v5460, %v5452
    %v7237 = vpack.c.b16 %v5461, %v5453
    %v7238 = vpack.c.b16 %v5462, %v5454
    %v7239 = vpack.c.b16 %v5471, %v5463
    %v7240 = vpack.c.b16 %v5472, %v5464
    %v7241 = vpack.c.b16 %v5473, %v5465
    %v7242 = vpack.c.b16 %v5474, %v5466
    %v7243 = vpack.c.b16 %v5475, %v5467
    %v7244 = vpack.c.b16 %v5476, %v5468
    %v7245 = vpack.c.b16 %v5477, %v5469
    %v7246 = vpack.c.b16 %v5478, %v5470
    %v7247 = vpack.c.b16 %v5487, %v5479
    %v7248 = vpack.c.b16 %v5488, %v5480
    %v7249 = vpack.c.b16 %v5489, %v5481
    %v7250 = vpack.c.b16 %v5490, %v5482
    %v7251 = vpack.c.b16 %v5491, %v5483
    %v7252 = vpack.c.b16 %v5492, %v5484
    %v7253 = vpack.c.b16 %v5493, %v5485
    %v7254 = vpack.c.b16 %v5494, %v5486
    %v7255 = vpack.c.b16 %v5503, %v5495
    %v7256 = vpack.c.b16 %v5504, %v5496
    %v7257 = vpack.c.b16 %v5505, %v5497
    %v7258 = vpack.c.b16 %v5506, %v5498
    %v7259 = vpack.c.b16 %v5507, %v5499
    %v7260 = vpack.c.b16 %v5508, %v5500
    %v7261 = vpack.c.b16 %v5509, %v5501
    %v7262 = vpack.c.b16 %v5510, %v5502
    %v7263 = vpack.c.b16 %v5519, %v5511
    %v7264 = vpack.c.b16 %v5520, %v5512
    %v7265 = vpack.c.b16 %v5521, %v5513
    %v7266 = vpack.c.b16 %v5522, %v5514
    %v7267 = vpack.c.b16 %v5523, %v5515
    %v7268 = vpack.c.b16 %v5524, %v5516
    %v7269 = vpack.c.b16 %v5525, %v5517
    %v7270 = vpack.c.b16 %v5526, %v5518
    %v7271 = vpack.c.b16 %v5535, %v5527
    %v7272 = vpack.c.b16 %v5536, %v5528
    %v7273 = vpack.c.b16 %v5537, %v5529
    %v7274 = vpack.c.b16 %v5538, %v5530
    %v7275 = vpack.c.b16 %v5539, %v5531
    %v7276 = vpack.c.b16 %v5540, %v5532
    %v7277 = vpack.c.b16 %v5541, %v5533
    %v7278 = vpack.c.b16 %v5542, %v5534
    %v7279 = vpack.c.b16 %v5551, %v5543
    %v7280 = vpack.c.b16 %v5552, %v5544
    %v7281 = vpack.c.b16 %v5553, %v5545
    %v7282 = vpack.c.b16 %v5554, %v5546
    %v7283 = vpack.c.b16 %v5555, %v5547
    %v7284 = vpack.c.b16 %v5556, %v5548
    %v7285 = vpack.c.b16 %v5557, %v5549
    %v7286 = vpack.c.b16 %v5558, %v5550
    %v7287 = vpack.c.b16 %v5567, %v5559
    %v7288 = vpack.c.b16 %v5568, %v5560
    %v7289 = vpack.c.b16 %v5569, %v5561
    %v7290 = vpack.c.b16 %v5570, %v5562
    %v7291 = vpack.c.b16 %v5571, %v5563
    %v7292 = vpack.c.b16 %v5572, %v5564
    %v7293 = vpack.c.b16 %v5573, %v5565
    %v7294 = vpack.c.b16 %v5574, %v5566
    %v7295 = vpack.c.b16 %v5583, %v5575
    %v7296 = vpack.c.b16 %v5584, %v5576
    %v7297 = vpack.c.b16 %v5585, %v5577
    %v7298 = vpack.c.b16 %v5586, %v5578
    %v7299 = vpack.c.b16 %v5587, %v5579
    %v7300 = vpack.c.b16 %v5588, %v5580
    %v7301 = vpack.c.b16 %v5589, %v5581
    %v7302 = vpack.c.b16 %v5590, %v5582
    %v7303 = vpack.c.b16 %v5599, %v5591
    %v7304 = vpack.c.b16 %v5600, %v5592
    %v7305 = vpack.c.b16 %v5601, %v5593
    %v7306 = vpack.c.b16 %v5602, %v5594
    %v7307 = vpack.c.b16 %v5603, %v5595
    %v7308 = vpack.c.b16 %v5604, %v5596
    %v7309 = vpack.c.b16 %v5605, %v5597
    %v7310 = vpack.c.b16 %v5606, %v5598
    %v7311 = vpack.c.b16 %v5615, %v5607
    %v7312 = vpack.c.b16 %v5616, %v5608
    %v7313 = vpack.c.b16 %v5617, %v5609
    %v7314 = vpack.c.b16 %v5618, %v5610
    %v7315 = vpack.c.b16 %v5619, %v5611
    %v7316 = vpack.c.b16 %v5620, %v5612
    %v7317 = vpack.c.b16 %v5621, %v5613
    %v7318 = vpack.c.b16 %v5622, %v5614
    %v7319 = vpack.c.b16 %v5631, %v5623
    %v7320 = vpack.c.b16 %v5632, %v5624
    %v7321 = vpack.c.b16 %v5633, %v5625
    %v7322 = vpack.c.b16 %v5634, %v5626
    %v7323 = vpack.c.b16 %v5635, %v5627
    %v7324 = vpack.c.b16 %v5636, %v5628
    %v7325 = vpack.c.b16 %v5637, %v5629
    %v7326 = vpack.c.b16 %v5638, %v5630
    %v7327 = vpack.c.b16 %v5647, %v5639
    %v7328 = vpack.c.b16 %v5648, %v5640
    %v7329 = vpack.c.b16 %v5649, %v5641
    %v7330 = vpack.c.b16 %v5650, %v5642
    %v7331 = vpack.c.b16 %v5651, %v5643
    %v7332 = vpack.c.b16 %v5652, %v5644
    %v7333 = vpack.c.b16 %v5653, %v5645
    %v7334 = vpack.c.b16 %v5654, %v5646
    %v7335 = vpack.c.b16 %v5663, %v5655
    %v7336 = vpack.c.b16 %v5664, %v5656
    %v7337 = vpack.c.b16 %v5665, %v5657
    %v7338 = vpack.c.b16 %v5666, %v5658
    %v7339 = vpack.c.b16 %v5667, %v5659
    %v7340 = vpack.c.b16 %v5668, %v5660
    %v7341 = vpack.c.b16 %v5669, %v5661
    %v7342 = vpack.c.b16 %v5670, %v5662
    %v7343 = vpack.c.b16 %v5679, %v5671
    %v7344 = vpack.c.b16 %v5680, %v5672
    %v7345 = vpack.c.b16 %v5681, %v5673
    %v7346 = vpack.c.b16 %v5682, %v5674
    %v7347 = vpack.c.b16 %v5683, %v5675
    %v7348 = vpack.c.b16 %v5684, %v5676
    %v7349 = vpack.c.b16 %v5685, %v5677
    %v7350 = vpack.c.b16 %v5686, %v5678
    %v7351 = vpack.c.b16 %v5695, %v5687
    %v7352 = vpack.c.b16 %v5696, %v5688
    %v7353 = vpack.c.b16 %v5697, %v5689
    %v7354 = vpack.c.b16 %v5698, %v5690
    %v7355 = vpack.c.b16 %v5699, %v5691
    %v7356 = vpack.c.b16 %v5700, %v5692
    %v7357 = vpack.c.b16 %v5701, %v5693
    %v7358 = vpack.c.b16 %v5702, %v5694
    %v7359 = vpack.c.b16 %v5711, %v5703
    %v7360 = vpack.c.b16 %v5712, %v5704
    %v7361 = vpack.c.b16 %v5713, %v5705
    %v7362 = vpack.c.b16 %v5714, %v5706
    %v7363 = vpack.c.b16 %v5715, %v5707
    %v7364 = vpack.c.b16 %v5716, %v5708
    %v7365 = vpack.c.b16 %v5717, %v5709
    %v7366 = vpack.c.b16 %v5718, %v5710
    %v7367 = vpack.c.b16 %v5727, %v5719
    %v7368 = vpack.c.b16 %v5728, %v5720
    %v7369 = vpack.c.b16 %v5729, %v5721
    %v7370 = vpack.c.b16 %v5730, %v5722
    %v7371 = vpack.c.b16 %v5731, %v5723
    %v7372 = vpack.c.b16 %v5732, %v5724
    %v7373 = vpack.c.b16 %v5733, %v5725
    %v7374 = vpack.c.b16 %v5734, %v5726
    %v7375 = vpack.c.b16 %v5743, %v5735
    %v7376 = vpack.c.b16 %v5744, %v5736
    %v7377 = vpack.c.b16 %v5745, %v5737
    %v7378 = vpack.c.b16 %v5746, %v5738
    %v7379 = vpack.c.b16 %v5747, %v5739
    %v7380 = vpack.c.b16 %v5748, %v5740
    %v7381 = vpack.c.b16 %v5749, %v5741
    %v7382 = vpack.c.b16 %v5750, %v5742
    %v7383 = vpack.c.b16 %v5759, %v5751
    %v7384 = vpack.c.b16 %v5760, %v5752
    %v7385 = vpack.c.b16 %v5761, %v5753
    %v7386 = vpack.c.b16 %v5762, %v5754
    %v7387 = vpack.c.b16 %v5763, %v5755
    %v7388 = vpack.c.b16 %v5764, %v5756
    %v7389 = vpack.c.b16 %v5765, %v5757
    %v7390 = vpack.c.b16 %v5766, %v5758
    %v7391 = vpack.c.b16 %v5775, %v5767
    %v7392 = vpack.c.b16 %v5776, %v5768
    %v7393 = vpack.c.b16 %v5777, %v5769
    %v7394 = vpack.c.b16 %v5778, %v5770
    %v7395 = vpack.c.b16 %v5779, %v5771
    %v7396 = vpack.c.b16 %v5780, %v5772
    %v7397 = vpack.c.b16 %v5781, %v5773
    %v7398 = vpack.c.b16 %v5782, %v5774
    %v7399 = vpack.c.b16 %v5791, %v5783
    %v7400 = vpack.c.b16 %v5792, %v5784
    %v7401 = vpack.c.b16 %v5793, %v5785
    %v7402 = vpack.c.b16 %v5794, %v5786
    %v7403 = vpack.c.b16 %v5795, %v5787
    %v7404 = vpack.c.b16 %v5796, %v5788
    %v7405 = vpack.c.b16 %v5797, %v5789
    %v7406 = vpack.c.b16 %v5798, %v5790
    %v7407 = vpack.c.b16 %v5807, %v5799
    %v7408 = vpack.c.b16 %v5808, %v5800
    %v7409 = vpack.c.b16 %v5809, %v5801
    %v7410 = vpack.c.b16 %v5810, %v5802
    %v7411 = vpack.c.b16 %v5811, %v5803
    %v7412 = vpack.c.b16 %v5812, %v5804
    %v7413 = vpack.c.b16 %v5813, %v5805
    %v7414 = vpack.c.b16 %v5814, %v5806
    %v7415 = vpack.c.b16 %v5823, %v5815
    %v7416 = vpack.c.b16 %v5824, %v5816
    %v7417 = vpack.c.b16 %v5825, %v5817
    %v7418 = vpack.c.b16 %v5826, %v5818
    %v7419 = vpack.c.b16 %v5827, %v5819
    %v7420 = vpack.c.b16 %v5828, %v5820
    %v7421 = vpack.c.b16 %v5829, %v5821
    %v7422 = vpack.c.b16 %v5830, %v5822
    %v7423 = vpack.c.b16 %v5839, %v5831
    %v7424 = vpack.c.b16 %v5840, %v5832
    %v7425 = vpack.c.b16 %v5841, %v5833
    %v7426 = vpack.c.b16 %v5842, %v5834
    %v7427 = vpack.c.b16 %v5843, %v5835
    %v7428 = vpack.c.b16 %v5844, %v5836
    %v7429 = vpack.c.b16 %v5845, %v5837
    %v7430 = vpack.c.b16 %v5846, %v5838
    %v7431 = vpack.c.b16 %v5855, %v5847
    %v7432 = vpack.c.b16 %v5856, %v5848
    %v7433 = vpack.c.b16 %v5857, %v5849
    %v7434 = vpack.c.b16 %v5858, %v5850
    %v7435 = vpack.c.b16 %v5859, %v5851
    %v7436 = vpack.c.b16 %v5860, %v5852
    %v7437 = vpack.c.b16 %v5861, %v5853
    %v7438 = vpack.c.b16 %v5862, %v5854
    %v7439 = vpack.c.b16 %v5871, %v5863
    %v7440 = vpack.c.b16 %v5872, %v5864
    %v7441 = vpack.c.b16 %v5873, %v5865
    %v7442 = vpack.c.b16 %v5874, %v5866
    %v7443 = vpack.c.b16 %v5875, %v5867
    %v7444 = vpack.c.b16 %v5876, %v5868
    %v7445 = vpack.c.b16 %v5877, %v5869
    %v7446 = vpack.c.b16 %v5878, %v5870
    %v7447 = vpack.c.b16 %v5887, %v5879
    %v7448 = vpack.c.b16 %v5888, %v5880
    %v7449 = vpack.c.b16 %v5889, %v5881
    %v7450 = vpack.c.b16 %v5890, %v5882
    %v7451 = vpack.c.b16 %v5891, %v5883
    %v7452 = vpack.c.b16 %v5892, %v5884
    %v7453 = vpack.c.b16 %v5893, %v5885
    %v7454 = vpack.c.b16 %v5894, %v5886
    %v7455 = vpack.c.b16 %v5903, %v5895
    %v7456 = vpack.c.b16 %v5904, %v5896
    %v7457 = vpack.c.b16 %v5905, %v5897
    %v7458 = vpack.c.b16 %v5906, %v5898
    %v7459 = vpack.c.b16 %v5907, %v5899
    %v7460 = vpack.c.b16 %v5908, %v5900
    %v7461 = vpack.c.b16 %v5909, %v5901
    %v7462 = vpack.c.b16 %v5910, %v5902
    %v7463 = vpack.c.b16 %v5919, %v5911
    %v7464 = vpack.c.b16 %v5920, %v5912
    %v7465 = vpack.c.b16 %v5921, %v5913
    %v7466 = vpack.c.b16 %v5922, %v5914
    %v7467 = vpack.c.b16 %v5923, %v5915
    %v7468 = vpack.c.b16 %v5924, %v5916
    %v7469 = vpack.c.b16 %v5925, %v5917
    %v7470 = vpack.c.b16 %v5926, %v5918
    %v7471 = vpack.c.b16 %v5935, %v5927
    %v7472 = vpack.c.b16 %v5936, %v5928
    %v7473 = vpack.c.b16 %v5937, %v5929
    %v7474 = vpack.c.b16 %v5938, %v5930
    %v7475 = vpack.c.b16 %v5939, %v5931
    %v7476 = vpack.c.b16 %v5940, %v5932
    %v7477 = vpack.c.b16 %v5941, %v5933
    %v7478 = vpack.c.b16 %v5942, %v5934
    %v7479 = vpack.c.b16 %v5951, %v5943
    %v7480 = vpack.c.b16 %v5952, %v5944
    %v7481 = vpack.c.b16 %v5953, %v5945
    %v7482 = vpack.c.b16 %v5954, %v5946
    %v7483 = vpack.c.b16 %v5955, %v5947
    %v7484 = vpack.c.b16 %v5956, %v5948
    %v7485 = vpack.c.b16 %v5957, %v5949
    %v7486 = vpack.c.b16 %v5958, %v5950
    %v7487 = vpack.c.b16 %v5967, %v5959
    %v7488 = vpack.c.b16 %v5968, %v5960
    %v7489 = vpack.c.b16 %v5969, %v5961
    %v7490 = vpack.c.b16 %v5970, %v5962
    %v7491 = vpack.c.b16 %v5971, %v5963
    %v7492 = vpack.c.b16 %v5972, %v5964
    %v7493 = vpack.c.b16 %v5973, %v5965
    %v7494 = vpack.c.b16 %v5974, %v5966
    %v7495 = vpack.c.b16 %v5983, %v5975
    %v7496 = vpack.c.b16 %v5984, %v5976
    %v7497 = vpack.c.b16 %v5985, %v5977
    %v7498 = vpack.c.b16 %v5986, %v5978
    %v7499 = vpack.c.b16 %v5987, %v5979
    %v7500 = vpack.c.b16 %v5988, %v5980
    %v7501 = vpack.c.b16 %v5989, %v5981
    %v7502 = vpack.c.b16 %v5990, %v5982
    %v7503 = vpack.c.b16 %v5999, %v5991
    %v7504 = vpack.c.b16 %v6000, %v5992
    %v7505 = vpack.c.b16 %v6001, %v5993
    %v7506 = vpack.c.b16 %v6002, %v5994
    %v7507 = vpack.c.b16 %v6003, %v5995
    %v7508 = vpack.c.b16 %v6004, %v5996
    %v7509 = vpack.c.b16 %v6005, %v5997
    %v7510 = vpack.c.b16 %v6006, %v5998
    %v7511 = vpack.c.b16 %v6015, %v6007
    %v7512 = vpack.c.b16 %v6016, %v6008
    %v7513 = vpack.c.b16 %v6017, %v6009
    %v7514 = vpack.c.b16 %v6018, %v6010
    %v7515 = vpack.c.b16 %v6019, %v6011
    %v7516 = vpack.c.b16 %v6020, %v6012
    %v7517 = vpack.c.b16 %v6021, %v6013
    %v7518 = vpack.c.b16 %v6022, %v6014
    %v7519 = vpack.c.b16 %v6031, %v6023
    %v7520 = vpack.c.b16 %v6032, %v6024
    %v7521 = vpack.c.b16 %v6033, %v6025
    %v7522 = vpack.c.b16 %v6034, %v6026
    %v7523 = vpack.c.b16 %v6035, %v6027
    %v7524 = vpack.c.b16 %v6036, %v6028
    %v7525 = vpack.c.b16 %v6037, %v6029
    %v7526 = vpack.c.b16 %v6038, %v6030
    %v7527 = vpack.c.b16 %v6047, %v6039
    %v7528 = vpack.c.b16 %v6048, %v6040
    %v7529 = vpack.c.b16 %v6049, %v6041
    %v7530 = vpack.c.b16 %v6050, %v6042
    %v7531 = vpack.c.b16 %v6051, %v6043
    %v7532 = vpack.c.b16 %v6052, %v6044
    %v7533 = vpack.c.b16 %v6053, %v6045
    %v7534 = vpack.c.b16 %v6054, %v6046
    %v7535 = vpack.c.b16 %v6063, %v6055
    %v7536 = vpack.c.b16 %v6064, %v6056
    %v7537 = vpack.c.b16 %v6065, %v6057
    %v7538 = vpack.c.b16 %v6066, %v6058
    %v7539 = vpack.c.b16 %v6067, %v6059
    %v7540 = vpack.c.b16 %v6068, %v6060
    %v7541 = vpack.c.b16 %v6069, %v6061
    %v7542 = vpack.c.b16 %v6070, %v6062
    %v7543 = vpack.c.b16 %v6079, %v6071
    %v7544 = vpack.c.b16 %v6080, %v6072
    %v7545 = vpack.c.b16 %v6081, %v6073
    %v7546 = vpack.c.b16 %v6082, %v6074
    %v7547 = vpack.c.b16 %v6083, %v6075
    %v7548 = vpack.c.b16 %v6084, %v6076
    %v7549 = vpack.c.b16 %v6085, %v6077
    %v7550 = vpack.c.b16 %v6086, %v6078
    %v7551 = vpack.c.b16 %v6095, %v6087
    %v7552 = vpack.c.b16 %v6096, %v6088
    %v7553 = vpack.c.b16 %v6097, %v6089
    %v7554 = vpack.c.b16 %v6098, %v6090
    %v7555 = vpack.c.b16 %v6099, %v6091
    %v7556 = vpack.c.b16 %v6100, %v6092
    %v7557 = vpack.c.b16 %v6101, %v6093
    %v7558 = vpack.c.b16 %v6102, %v6094
    %v7559 = vpack.c.b16 %v6111, %v6103
    %v7560 = vpack.c.b16 %v6112, %v6104
    %v7561 = vpack.c.b16 %v6113, %v6105
    %v7562 = vpack.c.b16 %v6114, %v6106
    %v7563 = vpack.c.b16 %v6115, %v6107
    %v7564 = vpack.c.b16 %v6116, %v6108
    %v7565 = vpack.c.b16 %v6117, %v6109
    %v7566 = vpack.c.b16 %v6118, %v6110
    %v7567 = vpack.c.b16 %v6127, %v6119
    %v7568 = vpack.c.b16 %v6128, %v6120
    %v7569 = vpack.c.b16 %v6129, %v6121
    %v7570 = vpack.c.b16 %v6130, %v6122
    %v7571 = vpack.c.b16 %v6131, %v6123
    %v7572 = vpack.c.b16 %v6132, %v6124
    %v7573 = vpack.c.b16 %v6133, %v6125
    %v7574 = vpack.c.b16 %v6134, %v6126
    %v7575 = vpack.c.b16 %v6143, %v6135
    %v7576 = vpack.c.b16 %v6144, %v6136
    %v7577 = vpack.c.b16 %v6145, %v6137
    %v7578 = vpack.c.b16 %v6146, %v6138
    %v7579 = vpack.c.b16 %v6147, %v6139
    %v7580 = vpack.c.b16 %v6148, %v6140
    %v7581 = vpack.c.b16 %v6149, %v6141
    %v7582 = vpack.c.b16 %v6150, %v6142
    %v7583 = vpack.c.b16 %v6159, %v6151
    %v7584 = vpack.c.b16 %v6160, %v6152
    %v7585 = vpack.c.b16 %v6161, %v6153
    %v7586 = vpack.c.b16 %v6162, %v6154
    %v7587 = vpack.c.b16 %v6163, %v6155
    %v7588 = vpack.c.b16 %v6164, %v6156
    %v7589 = vpack.c.b16 %v6165, %v6157
    %v7590 = vpack.c.b16 %v6166, %v6158
    %v7591 = vpack.c.b16 %v6175, %v6167
    %v7592 = vpack.c.b16 %v6176, %v6168
    %v7593 = vpack.c.b16 %v6177, %v6169
    %v7594 = vpack.c.b16 %v6178, %v6170
    %v7595 = vpack.c.b16 %v6179, %v6171
    %v7596 = vpack.c.b16 %v6180, %v6172
    %v7597 = vpack.c.b16 %v6181, %v6173
    %v7598 = vpack.c.b16 %v6182, %v6174
    %v7599 = vpack.c.b16 %v6191, %v6183
    %v7600 = vpack.c.b16 %v6192, %v6184
    %v7601 = vpack.c.b16 %v6193, %v6185
    %v7602 = vpack.c.b16 %v6194, %v6186
    %v7603 = vpack.c.b16 %v6195, %v6187
    %v7604 = vpack.c.b16 %v6196, %v6188
    %v7605 = vpack.c.b16 %v6197, %v6189
    %v7606 = vpack.c.b16 %v6198, %v6190
    %v7607 = vpack.c.b16 %v6207, %v6199
    %v7608 = vpack.c.b16 %v6208, %v6200
    %v7609 = vpack.c.b16 %v6209, %v6201
    %v7610 = vpack.c.b16 %v6210, %v6202
    %v7611 = vpack.c.b16 %v6211, %v6203
    %v7612 = vpack.c.b16 %v6212, %v6204
    %v7613 = vpack.c.b16 %v6213, %v6205
    %v7614 = vpack.c.b16 %v6214, %v6206
    %v7615 = vpack.c.b16 %v6223, %v6215
    %v7616 = vpack.c.b16 %v6224, %v6216
    %v7617 = vpack.c.b16 %v6225, %v6217
    %v7618 = vpack.c.b16 %v6226, %v6218
    %v7619 = vpack.c.b16 %v6227, %v6219
    %v7620 = vpack.c.b16 %v6228, %v6220
    %v7621 = vpack.c.b16 %v6229, %v6221
    %v7622 = vpack.c.b16 %v6230, %v6222
    %v7623 = vpack.c.b16 %v6239, %v6231
    %v7624 = vpack.c.b16 %v6240, %v6232
    %v7625 = vpack.c.b16 %v6241, %v6233
    %v7626 = vpack.c.b16 %v6242, %v6234
    %v7627 = vpack.c.b16 %v6243, %v6235
    %v7628 = vpack.c.b16 %v6244, %v6236
    %v7629 = vpack.c.b16 %v6245, %v6237
    %v7630 = vpack.c.b16 %v6246, %v6238
    %v7631 = vpack.c.b16 %v6255, %v6247
    %v7632 = vpack.c.b16 %v6256, %v6248
    %v7633 = vpack.c.b16 %v6257, %v6249
    %v7634 = vpack.c.b16 %v6258, %v6250
    %v7635 = vpack.c.b16 %v6259, %v6251
    %v7636 = vpack.c.b16 %v6260, %v6252
    %v7637 = vpack.c.b16 %v6261, %v6253
    %v7638 = vpack.c.b16 %v6262, %v6254
    %v7639 = vpack.c.b16 %v6271, %v6263
    %v7640 = vpack.c.b16 %v6272, %v6264
    %v7641 = vpack.c.b16 %v6273, %v6265
    %v7642 = vpack.c.b16 %v6274, %v6266
    %v7643 = vpack.c.b16 %v6275, %v6267
    %v7644 = vpack.c.b16 %v6276, %v6268
    %v7645 = vpack.c.b16 %v6277, %v6269
    %v7646 = vpack.c.b16 %v6278, %v6270
    %v7647 = vpack.c.b16 %v6287, %v6279
    %v7648 = vpack.c.b16 %v6288, %v6280
    %v7649 = vpack.c.b16 %v6289, %v6281
    %v7650 = vpack.c.b16 %v6290, %v6282
    %v7651 = vpack.c.b16 %v6291, %v6283
    %v7652 = vpack.c.b16 %v6292, %v6284
    %v7653 = vpack.c.b16 %v6293, %v6285
    %v7654 = vpack.c.b16 %v6294, %v6286
    %v7655 = vpack.c.b16 %v6303, %v6295
    %v7656 = vpack.c.b16 %v6304, %v6296
    %v7657 = vpack.c.b16 %v6305, %v6297
    %v7658 = vpack.c.b16 %v6306, %v6298
    %v7659 = vpack.c.b16 %v6307, %v6299
    %v7660 = vpack.c.b16 %v6308, %v6300
    %v7661 = vpack.c.b16 %v6309, %v6301
    %v7662 = vpack.c.b16 %v6310, %v6302
    %v7663 = vpack.c.b16 %v6319, %v6311
    %v7664 = vpack.c.b16 %v6320, %v6312
    %v7665 = vpack.c.b16 %v6321, %v6313
    %v7666 = vpack.c.b16 %v6322, %v6314
    %v7667 = vpack.c.b16 %v6323, %v6315
    %v7668 = vpack.c.b16 %v6324, %v6316
    %v7669 = vpack.c.b16 %v6325, %v6317
    %v7670 = vpack.c.b16 %v6326, %v6318
    %v7671 = vpack.c.b16 %v6335, %v6327
    %v7672 = vpack.c.b16 %v6336, %v6328
    %v7673 = vpack.c.b16 %v6337, %v6329
    %v7674 = vpack.c.b16 %v6338, %v6330
    %v7675 = vpack.c.b16 %v6339, %v6331
    %v7676 = vpack.c.b16 %v6340, %v6332
    %v7677 = vpack.c.b16 %v6341, %v6333
    %v7678 = vpack.c.b16 %v6342, %v6334
    %v7679 = vpack.c.b16 %v6351, %v6343
    %v7680 = vpack.c.b16 %v6352, %v6344
    %v7681 = vpack.c.b16 %v6353, %v6345
    %v7682 = vpack.c.b16 %v6354, %v6346
    %v7683 = vpack.c.b16 %v6355, %v6347
    %v7684 = vpack.c.b16 %v6356, %v6348
    %v7685 = vpack.c.b16 %v6357, %v6349
    %v7686 = vpack.c.b16 %v6358, %v6350
    %v7687 = vpack.c.b16 %v6367, %v6359
    %v7688 = vpack.c.b16 %v6368, %v6360
    %v7689 = vpack.c.b16 %v6369, %v6361
    %v7690 = vpack.c.b16 %v6370, %v6362
    %v7691 = vpack.c.b16 %v6371, %v6363
    %v7692 = vpack.c.b16 %v6372, %v6364
    %v7693 = vpack.c.b16 %v6373, %v6365
    %v7694 = vpack.c.b16 %v6374, %v6366
    %v7695 = vpack.c.b16 %v6383, %v6375
    %v7696 = vpack.c.b16 %v6384, %v6376
    %v7697 = vpack.c.b16 %v6385, %v6377
    %v7698 = vpack.c.b16 %v6386, %v6378
    %v7699 = vpack.c.b16 %v6387, %v6379
    %v7700 = vpack.c.b16 %v6388, %v6380
    %v7701 = vpack.c.b16 %v6389, %v6381
    %v7702 = vpack.c.b16 %v6390, %v6382
    %v7703 = vpack.c.b16 %v6399, %v6391
    %v7704 = vpack.c.b16 %v6400, %v6392
    %v7705 = vpack.c.b16 %v6401, %v6393
    %v7706 = vpack.c.b16 %v6402, %v6394
    %v7707 = vpack.c.b16 %v6403, %v6395
    %v7708 = vpack.c.b16 %v6404, %v6396
    %v7709 = vpack.c.b16 %v6405, %v6397
    %v7710 = vpack.c.b16 %v6406, %v6398
    %v7711 = vpack.c.b16 %v6415, %v6407
    %v7712 = vpack.c.b16 %v6416, %v6408
    %v7713 = vpack.c.b16 %v6417, %v6409
    %v7714 = vpack.c.b16 %v6418, %v6410
    %v7715 = vpack.c.b16 %v6419, %v6411
    %v7716 = vpack.c.b16 %v6420, %v6412
    %v7717 = vpack.c.b16 %v6421, %v6413
    %v7718 = vpack.c.b16 %v6422, %v6414
    %v7719 = vpack.c.b16 %v6431, %v6423
    %v7720 = vpack.c.b16 %v6432, %v6424
    %v7721 = vpack.c.b16 %v6433, %v6425
    %v7722 = vpack.c.b16 %v6434, %v6426
    %v7723 = vpack.c.b16 %v6435, %v6427
    %v7724 = vpack.c.b16 %v6436, %v6428
    %v7725 = vpack.c.b16 %v6437, %v6429
    %v7726 = vpack.c.b16 %v6438, %v6430
    %v7727 = vpack.c.b16 %v6447, %v6439
    %v7728 = vpack.c.b16 %v6448, %v6440
    %v7729 = vpack.c.b16 %v6449, %v6441
    %v7730 = vpack.c.b16 %v6450, %v6442
    %v7731 = vpack.c.b16 %v6451, %v6443
    %v7732 = vpack.c.b16 %v6452, %v6444
    %v7733 = vpack.c.b16 %v6453, %v6445
    %v7734 = vpack.c.b16 %v6454, %v6446
    %9015 = vmatprep.subr.bf16.mxu0 %v6512
    %9016 = vmatpush1.bf16.msra.mxu0 %v6511
    %9017 = vmatprep.subr.bf16.mxu0 %v6504
    %9018 = vmatpush1.bf16.msra.mxu0 %v6503
    %9019 = vmatprep.subr.bf16.mxu0 %v6496
    %9020 = vmatpush1.bf16.msra.mxu0 %v6495
    %9021 = vmatprep.subr.bf16.mxu0 %v6488
    %9022 = vmatpush1.bf16.msra.mxu0 %v6487
    %9023 = vmatprep.subr.bf16.mxu0 %v6480
    %9024 = vmatpush1.bf16.msra.mxu0 %v6479
    %9025 = vmatprep.subr.bf16.mxu0 %v6472
    %9026 = vmatpush1.bf16.msra.mxu0 %v6471
    %9027 = vmatprep.subr.bf16.mxu0 %v6464
    %9028 = vmatpush1.bf16.msra.mxu0 %v6463
    %9029 = vmatprep.subr.bf16.mxu0 %v6456
    %9030 = vmatpush1.bf16.msra.mxu0 %v6455
    %9031 = vmatprep.subr.bf16.mxu0 %v6576
    %9032 = vmatpush2.bf16.msra.mxu0 %v6575
    %9033 = vmatprep.subr.bf16.mxu0 %v6568
    %9034 = vmatpush2.bf16.msra.mxu0 %v6567
    %9035 = vmatprep.subr.bf16.mxu0 %v6560
    %9036 = vmatpush2.bf16.msra.mxu0 %v6559
    %9037 = vmatprep.subr.bf16.mxu0 %v6552
    %9038 = vmatpush2.bf16.msra.mxu0 %v6551
    %9039 = vmatprep.subr.bf16.mxu0 %v6544
    %9040 = vmatpush2.bf16.msra.mxu0 %v6543
    %9041 = vmatprep.subr.bf16.mxu0 %v6536
    %9042 = vmatpush2.bf16.msra.mxu0 %v6535
    %9043 = vmatprep.subr.bf16.mxu0 %v6528
    %9044 = vmatpush2.bf16.msra.mxu0 %v6527
    %9045 = vmatprep.subr.bf16.mxu0 %v6520
    %9046 = vmatpush2.bf16.msra.mxu0 %v6519
    %9047 = vmatprep.mubr.bf16.mxu0 %v1274
    %9048 = vmatmul.mubr.bf16.gmra.mxu0 %v1273
    %v9049 = vpop.f32.mrf.mxu0
    %v9050 = vadd.f32 %v2578, %v9049
    %v9051 = vpop.f32.mrf.mxu0
    %v9052 = vadd.f32 %v2582, %v9051
    %v9053 = vpop.f32.mrf.mxu0
    %v9054 = vpop.f32.mrf.mxu0
    %9055 = vdwg.mxu0
    %9056 = vmatprep.subr.bf16.mxu0 %v6640
    %9057 = vmatpush1.bf16.msra.mxu0 %v6639
    %9058 = vmatprep.subr.bf16.mxu0 %v6632
    %9059 = vmatpush1.bf16.msra.mxu0 %v6631
    %9060 = vmatprep.subr.bf16.mxu0 %v6624
    %9061 = vmatpush1.bf16.msra.mxu0 %v6623
    %9062 = vmatprep.subr.bf16.mxu0 %v6616
    %9063 = vmatpush1.bf16.msra.mxu0 %v6615
    %9064 = vmatprep.subr.bf16.mxu0 %v6608
    %9065 = vmatpush1.bf16.msra.mxu0 %v6607
    %9066 = vmatprep.subr.bf16.mxu0 %v6600
    %9067 = vmatpush1.bf16.msra.mxu0 %v6599
    %9068 = vmatprep.subr.bf16.mxu0 %v6592
    %9069 = vmatpush1.bf16.msra.mxu0 %v6591
    %9070 = vmatprep.subr.bf16.mxu0 %v6584
    %9071 = vmatpush1.bf16.msra.mxu0 %v6583
    %9072 = vmatprep.subr.bf16.mxu0 %v6704
    %9073 = vmatpush2.bf16.msra.mxu0 %v6703
    %9074 = vmatprep.subr.bf16.mxu0 %v6696
    %9075 = vmatpush2.bf16.msra.mxu0 %v6695
    %9076 = vmatprep.subr.bf16.mxu0 %v6688
    %9077 = vmatpush2.bf16.msra.mxu0 %v6687
    %9078 = vmatprep.subr.bf16.mxu0 %v6680
    %9079 = vmatpush2.bf16.msra.mxu0 %v6679
    %9080 = vmatprep.subr.bf16.mxu0 %v6672
    %9081 = vmatpush2.bf16.msra.mxu0 %v6671
    %9082 = vmatprep.subr.bf16.mxu0 %v6664
    %9083 = vmatpush2.bf16.msra.mxu0 %v6663
    %9084 = vmatprep.subr.bf16.mxu0 %v6656
    %9085 = vmatpush2.bf16.msra.mxu0 %v6655
    %9086 = vmatprep.subr.bf16.mxu0 %v6648
    %9087 = vmatpush2.bf16.msra.mxu0 %v6647
    %9088 = vmatprep.mubr.bf16.mxu0 %v1276
    %9089 = vmatmul.mubr.bf16.gmra.mxu0 %v1275
    %v9090 = vpop.f32.mrf.mxu0
    %v9091 = vadd.f32 %v9050, %v9090
    %v9092 = vpop.f32.mrf.mxu0
    %v9093 = vadd.f32 %v9052, %v9092
    %v9094 = vpop.f32.mrf.mxu0
    %v9095 = vpop.f32.mrf.mxu0
    %9096 = vdwg.mxu0
    %9097 = vmatprep.subr.bf16.mxu0 %v6768
    %9098 = vmatpush1.bf16.msra.mxu0 %v6767
    %9099 = vmatprep.subr.bf16.mxu0 %v6760
    %9100 = vmatpush1.bf16.msra.mxu0 %v6759
    %9101 = vmatprep.subr.bf16.mxu0 %v6752
    %9102 = vmatpush1.bf16.msra.mxu0 %v6751
    %9103 = vmatprep.subr.bf16.mxu0 %v6744
    %9104 = vmatpush1.bf16.msra.mxu0 %v6743
    %9105 = vmatprep.subr.bf16.mxu0 %v6736
    %9106 = vmatpush1.bf16.msra.mxu0 %v6735
    %9107 = vmatprep.subr.bf16.mxu0 %v6728
    %9108 = vmatpush1.bf16.msra.mxu0 %v6727
    %9109 = vmatprep.subr.bf16.mxu0 %v6720
    %9110 = vmatpush1.bf16.msra.mxu0 %v6719
    %9111 = vmatprep.subr.bf16.mxu0 %v6712
    %9112 = vmatpush1.bf16.msra.mxu0 %v6711
    %9113 = vmatprep.subr.bf16.mxu0 %v6832
    %9114 = vmatpush2.bf16.msra.mxu0 %v6831
    %9115 = vmatprep.subr.bf16.mxu0 %v6824
    %9116 = vmatpush2.bf16.msra.mxu0 %v6823
    %9117 = vmatprep.subr.bf16.mxu0 %v6816
    %9118 = vmatpush2.bf16.msra.mxu0 %v6815
    %9119 = vmatprep.subr.bf16.mxu0 %v6808
    %9120 = vmatpush2.bf16.msra.mxu0 %v6807
    %9121 = vmatprep.subr.bf16.mxu0 %v6800
    %9122 = vmatpush2.bf16.msra.mxu0 %v6799
    %9123 = vmatprep.subr.bf16.mxu0 %v6792
    %9124 = vmatpush2.bf16.msra.mxu0 %v6791
    %9125 = vmatprep.subr.bf16.mxu0 %v6784
    %9126 = vmatpush2.bf16.msra.mxu0 %v6783
    %9127 = vmatprep.subr.bf16.mxu0 %v6776
    %9128 = vmatpush2.bf16.msra.mxu0 %v6775
    %9129 = vmatprep.mubr.bf16.mxu0 %v1278
    %9130 = vmatmul.mubr.bf16.gmra.mxu0 %v1277
    %v9131 = vpop.f32.mrf.mxu0
    %v9132 = vadd.f32 %v9091, %v9131
    %v9133 = vpop.f32.mrf.mxu0
    %v9134 = vadd.f32 %v9093, %v9133
    %v9135 = vpop.f32.mrf.mxu0
    %v9136 = vpop.f32.mrf.mxu0
    %9137 = vdwg.mxu0
    %9138 = vmatprep.subr.bf16.mxu0 %v6896
    %9139 = vmatpush1.bf16.msra.mxu0 %v6895
    %9140 = vmatprep.subr.bf16.mxu0 %v6888
    %9141 = vmatpush1.bf16.msra.mxu0 %v6887
    %9142 = vmatprep.subr.bf16.mxu0 %v6880
    %9143 = vmatpush1.bf16.msra.mxu0 %v6879
    %9144 = vmatprep.subr.bf16.mxu0 %v6872
    %9145 = vmatpush1.bf16.msra.mxu0 %v6871
    %9146 = vmatprep.subr.bf16.mxu0 %v6864
    %9147 = vmatpush1.bf16.msra.mxu0 %v6863
    %9148 = vmatprep.subr.bf16.mxu0 %v6856
    %9149 = vmatpush1.bf16.msra.mxu0 %v6855
    %9150 = vmatprep.subr.bf16.mxu0 %v6848
    %9151 = vmatpush1.bf16.msra.mxu0 %v6847
    %9152 = vmatprep.subr.bf16.mxu0 %v6840
    %9153 = vmatpush1.bf16.msra.mxu0 %v6839
    %9154 = vmatprep.subr.bf16.mxu0 %v6960
    %9155 = vmatpush2.bf16.msra.mxu0 %v6959
    %9156 = vmatprep.subr.bf16.mxu0 %v6952
    %9157 = vmatpush2.bf16.msra.mxu0 %v6951
    %9158 = vmatprep.subr.bf16.mxu0 %v6944
    %9159 = vmatpush2.bf16.msra.mxu0 %v6943
    %9160 = vmatprep.subr.bf16.mxu0 %v6936
    %9161 = vmatpush2.bf16.msra.mxu0 %v6935
    %9162 = vmatprep.subr.bf16.mxu0 %v6928
    %9163 = vmatpush2.bf16.msra.mxu0 %v6927
    %9164 = vmatprep.subr.bf16.mxu0 %v6920
    %9165 = vmatpush2.bf16.msra.mxu0 %v6919
    %9166 = vmatprep.subr.bf16.mxu0 %v6912
    %9167 = vmatpush2.bf16.msra.mxu0 %v6911
    %9168 = vmatprep.subr.bf16.mxu0 %v6904
    %9169 = vmatpush2.bf16.msra.mxu0 %v6903
    %9170 = vmatprep.mubr.bf16.mxu0 %v1280
    %9171 = vmatmul.mubr.bf16.gmra.mxu0 %v1279
    %v9172 = vpop.f32.mrf.mxu0
    %v9173 = vadd.f32 %v9132, %v9172
    %v9174 = vpop.f32.mrf.mxu0
    %v9175 = vadd.f32 %v9134, %v9174
    %v9176 = vpop.f32.mrf.mxu0
    %v9177 = vpop.f32.mrf.mxu0
    %9178 = vdwg.mxu0
    %9179 = vmatprep.subr.bf16.mxu0 %v7024
    %9180 = vmatpush1.bf16.msra.mxu0 %v7023
    %9181 = vmatprep.subr.bf16.mxu0 %v7016
    %9182 = vmatpush1.bf16.msra.mxu0 %v7015
    %9183 = vmatprep.subr.bf16.mxu0 %v7008
    %9184 = vmatpush1.bf16.msra.mxu0 %v7007
    %9185 = vmatprep.subr.bf16.mxu0 %v7000
    %9186 = vmatpush1.bf16.msra.mxu0 %v6999
    %9187 = vmatprep.subr.bf16.mxu0 %v6992
    %9188 = vmatpush1.bf16.msra.mxu0 %v6991
    %9189 = vmatprep.subr.bf16.mxu0 %v6984
    %9190 = vmatpush1.bf16.msra.mxu0 %v6983
    %9191 = vmatprep.subr.bf16.mxu0 %v6976
    %9192 = vmatpush1.bf16.msra.mxu0 %v6975
    %9193 = vmatprep.subr.bf16.mxu0 %v6968
    %9194 = vmatpush1.bf16.msra.mxu0 %v6967
    %9195 = vmatprep.subr.bf16.mxu0 %v7088
    %9196 = vmatpush2.bf16.msra.mxu0 %v7087
    %9197 = vmatprep.subr.bf16.mxu0 %v7080
    %9198 = vmatpush2.bf16.msra.mxu0 %v7079
    %9199 = vmatprep.subr.bf16.mxu0 %v7072
    %9200 = vmatpush2.bf16.msra.mxu0 %v7071
    %9201 = vmatprep.subr.bf16.mxu0 %v7064
    %9202 = vmatpush2.bf16.msra.mxu0 %v7063
    %9203 = vmatprep.subr.bf16.mxu0 %v7056
    %9204 = vmatpush2.bf16.msra.mxu0 %v7055
    %9205 = vmatprep.subr.bf16.mxu0 %v7048
    %9206 = vmatpush2.bf16.msra.mxu0 %v7047
    %9207 = vmatprep.subr.bf16.mxu0 %v7040
    %9208 = vmatpush2.bf16.msra.mxu0 %v7039
    %9209 = vmatprep.subr.bf16.mxu0 %v7032
    %9210 = vmatpush2.bf16.msra.mxu0 %v7031
    %9211 = vmatprep.mubr.bf16.mxu0 %v1282
    %9212 = vmatmul.mubr.bf16.gmra.mxu0 %v1281
    %v9213 = vpop.f32.mrf.mxu0
    %v9214 = vadd.f32 %v9173, %v9213
    %v9215 = vpop.f32.mrf.mxu0
    %v9216 = vadd.f32 %v9175, %v9215
    %v9217 = vpop.f32.mrf.mxu0
    %v9218 = vpop.f32.mrf.mxu0
    %9219 = vdwg.mxu0
    %9220 = vmatprep.subr.bf16.mxu0 %v7152
    %9221 = vmatpush1.bf16.msra.mxu0 %v7151
    %9222 = vmatprep.subr.bf16.mxu0 %v7144
    %9223 = vmatpush1.bf16.msra.mxu0 %v7143
    %9224 = vmatprep.subr.bf16.mxu0 %v7136
    %9225 = vmatpush1.bf16.msra.mxu0 %v7135
    %9226 = vmatprep.subr.bf16.mxu0 %v7128
    %9227 = vmatpush1.bf16.msra.mxu0 %v7127
    %9228 = vmatprep.subr.bf16.mxu0 %v7120
    %9229 = vmatpush1.bf16.msra.mxu0 %v7119
    %9230 = vmatprep.subr.bf16.mxu0 %v7112
    %9231 = vmatpush1.bf16.msra.mxu0 %v7111
    %9232 = vmatprep.subr.bf16.mxu0 %v7104
    %9233 = vmatpush1.bf16.msra.mxu0 %v7103
    %9234 = vmatprep.subr.bf16.mxu0 %v7096
    %9235 = vmatpush1.bf16.msra.mxu0 %v7095
    %9236 = vmatprep.subr.bf16.mxu0 %v7216
    %9237 = vmatpush2.bf16.msra.mxu0 %v7215
    %9238 = vmatprep.subr.bf16.mxu0 %v7208
    %9239 = vmatpush2.bf16.msra.mxu0 %v7207
    %9240 = vmatprep.subr.bf16.mxu0 %v7200
    %9241 = vmatpush2.bf16.msra.mxu0 %v7199
    %9242 = vmatprep.subr.bf16.mxu0 %v7192
    %9243 = vmatpush2.bf16.msra.mxu0 %v7191
    %9244 = vmatprep.subr.bf16.mxu0 %v7184
    %9245 = vmatpush2.bf16.msra.mxu0 %v7183
    %9246 = vmatprep.subr.bf16.mxu0 %v7176
    %9247 = vmatpush2.bf16.msra.mxu0 %v7175
    %9248 = vmatprep.subr.bf16.mxu0 %v7168
    %9249 = vmatpush2.bf16.msra.mxu0 %v7167
    %9250 = vmatprep.subr.bf16.mxu0 %v7160
    %9251 = vmatpush2.bf16.msra.mxu0 %v7159
    %9252 = vmatprep.mubr.bf16.mxu0 %v1284
    %9253 = vmatmul.mubr.bf16.gmra.mxu0 %v1283
    %v9254 = vpop.f32.mrf.mxu0
    %v9255 = vadd.f32 %v9214, %v9254
    %v9256 = vpop.f32.mrf.mxu0
    %v9257 = vadd.f32 %v9216, %v9256
    %v9258 = vpop.f32.mrf.mxu0
    %v9259 = vpop.f32.mrf.mxu0
    %9260 = vdwg.mxu0
    %9261 = vmatprep.subr.bf16.mxu0 %v7280
    %9262 = vmatpush1.bf16.msra.mxu0 %v7279
    %9263 = vmatprep.subr.bf16.mxu0 %v7272
    %9264 = vmatpush1.bf16.msra.mxu0 %v7271
    %9265 = vmatprep.subr.bf16.mxu0 %v7264
    %9266 = vmatpush1.bf16.msra.mxu0 %v7263
    %9267 = vmatprep.subr.bf16.mxu0 %v7256
    %9268 = vmatpush1.bf16.msra.mxu0 %v7255
    %9269 = vmatprep.subr.bf16.mxu0 %v7248
    %9270 = vmatpush1.bf16.msra.mxu0 %v7247
    %9271 = vmatprep.subr.bf16.mxu0 %v7240
    %9272 = vmatpush1.bf16.msra.mxu0 %v7239
    %9273 = vmatprep.subr.bf16.mxu0 %v7232
    %9274 = vmatpush1.bf16.msra.mxu0 %v7231
    %9275 = vmatprep.subr.bf16.mxu0 %v7224
    %9276 = vmatpush1.bf16.msra.mxu0 %v7223
    %9277 = vmatprep.subr.bf16.mxu0 %v7344
    %9278 = vmatpush2.bf16.msra.mxu0 %v7343
    %9279 = vmatprep.subr.bf16.mxu0 %v7336
    %9280 = vmatpush2.bf16.msra.mxu0 %v7335
    %9281 = vmatprep.subr.bf16.mxu0 %v7328
    %9282 = vmatpush2.bf16.msra.mxu0 %v7327
    %9283 = vmatprep.subr.bf16.mxu0 %v7320
    %9284 = vmatpush2.bf16.msra.mxu0 %v7319
    %9285 = vmatprep.subr.bf16.mxu0 %v7312
    %9286 = vmatpush2.bf16.msra.mxu0 %v7311
    %9287 = vmatprep.subr.bf16.mxu0 %v7304
    %9288 = vmatpush2.bf16.msra.mxu0 %v7303
    %9289 = vmatprep.subr.bf16.mxu0 %v7296
    %9290 = vmatpush2.bf16.msra.mxu0 %v7295
    %9291 = vmatprep.subr.bf16.mxu0 %v7288
    %9292 = vmatpush2.bf16.msra.mxu0 %v7287
    %9293 = vmatprep.mubr.bf16.mxu0 %v1286
    %9294 = vmatmul.mubr.bf16.gmra.mxu0 %v1285
    %v9295 = vpop.f32.mrf.mxu0
    %v9296 = vadd.f32 %v9255, %v9295
    %v9297 = vpop.f32.mrf.mxu0
    %v9298 = vadd.f32 %v9257, %v9297
    %v9299 = vpop.f32.mrf.mxu0
    %v9300 = vpop.f32.mrf.mxu0
    %9301 = vdwg.mxu0
    %9302 = vmatprep.subr.bf16.mxu0 %v7408
    %9303 = vmatpush1.bf16.msra.mxu0 %v7407
    %9304 = vmatprep.subr.bf16.mxu0 %v7400
    %9305 = vmatpush1.bf16.msra.mxu0 %v7399
    %9306 = vmatprep.subr.bf16.mxu0 %v7392
    %9307 = vmatpush1.bf16.msra.mxu0 %v7391
    %9308 = vmatprep.subr.bf16.mxu0 %v7384
    %9309 = vmatpush1.bf16.msra.mxu0 %v7383
    %9310 = vmatprep.subr.bf16.mxu0 %v7376
    %9311 = vmatpush1.bf16.msra.mxu0 %v7375
    %9312 = vmatprep.subr.bf16.mxu0 %v7368
    %9313 = vmatpush1.bf16.msra.mxu0 %v7367
    %9314 = vmatprep.subr.bf16.mxu0 %v7360
    %9315 = vmatpush1.bf16.msra.mxu0 %v7359
    %9316 = vmatprep.subr.bf16.mxu0 %v7352
    %9317 = vmatpush1.bf16.msra.mxu0 %v7351
    %9318 = vmatprep.subr.bf16.mxu0 %v7472
    %9319 = vmatpush2.bf16.msra.mxu0 %v7471
    %9320 = vmatprep.subr.bf16.mxu0 %v7464
    %9321 = vmatpush2.bf16.msra.mxu0 %v7463
    %9322 = vmatprep.subr.bf16.mxu0 %v7456
    %9323 = vmatpush2.bf16.msra.mxu0 %v7455
    %9324 = vmatprep.subr.bf16.mxu0 %v7448
    %9325 = vmatpush2.bf16.msra.mxu0 %v7447
    %9326 = vmatprep.subr.bf16.mxu0 %v7440
    %9327 = vmatpush2.bf16.msra.mxu0 %v7439
    %9328 = vmatprep.subr.bf16.mxu0 %v7432
    %9329 = vmatpush2.bf16.msra.mxu0 %v7431
    %9330 = vmatprep.subr.bf16.mxu0 %v7424
    %9331 = vmatpush2.bf16.msra.mxu0 %v7423
    %9332 = vmatprep.subr.bf16.mxu0 %v7416
    %9333 = vmatpush2.bf16.msra.mxu0 %v7415
    %9334 = vmatprep.mubr.bf16.mxu0 %v1288
    %9335 = vmatmul.mubr.bf16.gmra.mxu0 %v1287
    %v9336 = vpop.f32.mrf.mxu0
    %v9337 = vadd.f32 %v9296, %v9336
    %v9338 = vpop.f32.mrf.mxu0
    %v9339 = vadd.f32 %v9298, %v9338
    %v9340 = vpop.f32.mrf.mxu0
    %v9341 = vpop.f32.mrf.mxu0
    %9342 = vdwg.mxu0
    %9343 = vmatprep.subr.bf16.mxu0 %v7536
    %9344 = vmatpush1.bf16.msra.mxu0 %v7535
    %9345 = vmatprep.subr.bf16.mxu0 %v7528
    %9346 = vmatpush1.bf16.msra.mxu0 %v7527
    %9347 = vmatprep.subr.bf16.mxu0 %v7520
    %9348 = vmatpush1.bf16.msra.mxu0 %v7519
    %9349 = vmatprep.subr.bf16.mxu0 %v7512
    %9350 = vmatpush1.bf16.msra.mxu0 %v7511
    %9351 = vmatprep.subr.bf16.mxu0 %v7504
    %9352 = vmatpush1.bf16.msra.mxu0 %v7503
    %9353 = vmatprep.subr.bf16.mxu0 %v7496
    %9354 = vmatpush1.bf16.msra.mxu0 %v7495
    %9355 = vmatprep.subr.bf16.mxu0 %v7488
    %9356 = vmatpush1.bf16.msra.mxu0 %v7487
    %9357 = vmatprep.subr.bf16.mxu0 %v7480
    %9358 = vmatpush1.bf16.msra.mxu0 %v7479
    %9359 = vmatprep.subr.bf16.mxu0 %v7600
    %9360 = vmatpush2.bf16.msra.mxu0 %v7599
    %9361 = vmatprep.subr.bf16.mxu0 %v7592
    %9362 = vmatpush2.bf16.msra.mxu0 %v7591
    %9363 = vmatprep.subr.bf16.mxu0 %v7584
    %9364 = vmatpush2.bf16.msra.mxu0 %v7583
    %9365 = vmatprep.subr.bf16.mxu0 %v7576
    %9366 = vmatpush2.bf16.msra.mxu0 %v7575
    %9367 = vmatprep.subr.bf16.mxu0 %v7568
    %9368 = vmatpush2.bf16.msra.mxu0 %v7567
    %9369 = vmatprep.subr.bf16.mxu0 %v7560
    %9370 = vmatpush2.bf16.msra.mxu0 %v7559
    %9371 = vmatprep.subr.bf16.mxu0 %v7552
    %9372 = vmatpush2.bf16.msra.mxu0 %v7551
    %9373 = vmatprep.subr.bf16.mxu0 %v7544
    %9374 = vmatpush2.bf16.msra.mxu0 %v7543
    %9375 = vmatprep.mubr.bf16.mxu0 %v1290
    %9376 = vmatmul.mubr.bf16.gmra.mxu0 %v1289
    %v9377 = vpop.f32.mrf.mxu0
    %v9378 = vadd.f32 %v9337, %v9377
    %v9379 = vpop.f32.mrf.mxu0
    %v9380 = vadd.f32 %v9339, %v9379
    %v9381 = vpop.f32.mrf.mxu0
    %v9382 = vpop.f32.mrf.mxu0
    %9383 = vdwg.mxu0
    %9384 = vmatprep.subr.bf16.mxu0 %v7664
    %9385 = vmatpush1.bf16.msra.mxu0 %v7663
    %9386 = vmatprep.subr.bf16.mxu0 %v7656
    %9387 = vmatpush1.bf16.msra.mxu0 %v7655
    %9388 = vmatprep.subr.bf16.mxu0 %v7648
    %9389 = vmatpush1.bf16.msra.mxu0 %v7647
    %9390 = vmatprep.subr.bf16.mxu0 %v7640
    %9391 = vmatpush1.bf16.msra.mxu0 %v7639
    %9392 = vmatprep.subr.bf16.mxu0 %v7632
    %9393 = vmatpush1.bf16.msra.mxu0 %v7631
    %9394 = vmatprep.subr.bf16.mxu0 %v7624
    %9395 = vmatpush1.bf16.msra.mxu0 %v7623
    %9396 = vmatprep.subr.bf16.mxu0 %v7616
    %9397 = vmatpush1.bf16.msra.mxu0 %v7615
    %9398 = vmatprep.subr.bf16.mxu0 %v7608
    %9399 = vmatpush1.bf16.msra.mxu0 %v7607
    %9400 = vmatprep.subr.bf16.mxu0 %v7728
    %9401 = vmatpush2.bf16.msra.mxu0 %v7727
    %9402 = vmatprep.subr.bf16.mxu0 %v7720
    %9403 = vmatpush2.bf16.msra.mxu0 %v7719
    %9404 = vmatprep.subr.bf16.mxu0 %v7712
    %9405 = vmatpush2.bf16.msra.mxu0 %v7711
    %9406 = vmatprep.subr.bf16.mxu0 %v7704
    %9407 = vmatpush2.bf16.msra.mxu0 %v7703
    %9408 = vmatprep.subr.bf16.mxu0 %v7696
    %9409 = vmatpush2.bf16.msra.mxu0 %v7695
    %9410 = vmatprep.subr.bf16.mxu0 %v7688
    %9411 = vmatpush2.bf16.msra.mxu0 %v7687
    %9412 = vmatprep.subr.bf16.mxu0 %v7680
    %9413 = vmatpush2.bf16.msra.mxu0 %v7679
    %9414 = vmatprep.subr.bf16.mxu0 %v7672
    %9415 = vmatpush2.bf16.msra.mxu0 %v7671
    %9416 = vmatprep.mubr.bf16.mxu0 %v1292
    %9417 = vmatmul.mubr.bf16.gmra.mxu0 %v1291
    %v9418 = vpop.f32.mrf.mxu0
    %v9419 = vadd.f32 %v9378, %v9418
    %v9420 = vpop.f32.mrf.mxu0
    %v9421 = vadd.f32 %v9380, %v9420
    %v9422 = vpop.f32.mrf.mxu0
    %v9423 = vpop.f32.mrf.mxu0
    %9424 = vdwg.mxu0
    %9425 = vmatprep.subr.bf16.mxu0 %v6514
    %9426 = vmatpush1.bf16.msra.mxu0 %v6513
    %9427 = vmatprep.subr.bf16.mxu0 %v6506
    %9428 = vmatpush1.bf16.msra.mxu0 %v6505
    %9429 = vmatprep.subr.bf16.mxu0 %v6498
    %9430 = vmatpush1.bf16.msra.mxu0 %v6497
    %9431 = vmatprep.subr.bf16.mxu0 %v6490
    %9432 = vmatpush1.bf16.msra.mxu0 %v6489
    %9433 = vmatprep.subr.bf16.mxu0 %v6482
    %9434 = vmatpush1.bf16.msra.mxu0 %v6481
    %9435 = vmatprep.subr.bf16.mxu0 %v6474
    %9436 = vmatpush1.bf16.msra.mxu0 %v6473
    %9437 = vmatprep.subr.bf16.mxu0 %v6466
    %9438 = vmatpush1.bf16.msra.mxu0 %v6465
    %9439 = vmatprep.subr.bf16.mxu0 %v6458
    %9440 = vmatpush1.bf16.msra.mxu0 %v6457
    %9441 = vmatprep.subr.bf16.mxu0 %v6578
    %9442 = vmatpush2.bf16.msra.mxu0 %v6577
    %9443 = vmatprep.subr.bf16.mxu0 %v6570
    %9444 = vmatpush2.bf16.msra.mxu0 %v6569
    %9445 = vmatprep.subr.bf16.mxu0 %v6562
    %9446 = vmatpush2.bf16.msra.mxu0 %v6561
    %9447 = vmatprep.subr.bf16.mxu0 %v6554
    %9448 = vmatpush2.bf16.msra.mxu0 %v6553
    %9449 = vmatprep.subr.bf16.mxu0 %v6546
    %9450 = vmatpush2.bf16.msra.mxu0 %v6545
    %9451 = vmatprep.subr.bf16.mxu0 %v6538
    %9452 = vmatpush2.bf16.msra.mxu0 %v6537
    %9453 = vmatprep.subr.bf16.mxu0 %v6530
    %9454 = vmatpush2.bf16.msra.mxu0 %v6529
    %9455 = vmatprep.subr.bf16.mxu0 %v6522
    %9456 = vmatpush2.bf16.msra.mxu0 %v6521
    %9457 = vmatprep.mubr.bf16.mxu0 %v1274
    %9458 = vmatmul.mubr.bf16.gmra.mxu0 %v1273
    %v9459 = vpop.f32.mrf.mxu0
    %v9460 = vadd.f32 %v2586, %v9459
    %v9461 = vpop.f32.mrf.mxu0
    %v9462 = vadd.f32 %v2590, %v9461
    %v9463 = vpop.f32.mrf.mxu0
    %v9464 = vpop.f32.mrf.mxu0
    %9465 = vdwg.mxu0
    %9466 = vmatprep.subr.bf16.mxu0 %v6642
    %9467 = vmatpush1.bf16.msra.mxu0 %v6641
    %9468 = vmatprep.subr.bf16.mxu0 %v6634
    %9469 = vmatpush1.bf16.msra.mxu0 %v6633
    %9470 = vmatprep.subr.bf16.mxu0 %v6626
    %9471 = vmatpush1.bf16.msra.mxu0 %v6625
    %9472 = vmatprep.subr.bf16.mxu0 %v6618
    %9473 = vmatpush1.bf16.msra.mxu0 %v6617
    %9474 = vmatprep.subr.bf16.mxu0 %v6610
    %9475 = vmatpush1.bf16.msra.mxu0 %v6609
    %9476 = vmatprep.subr.bf16.mxu0 %v6602
    %9477 = vmatpush1.bf16.msra.mxu0 %v6601
    %9478 = vmatprep.subr.bf16.mxu0 %v6594
    %9479 = vmatpush1.bf16.msra.mxu0 %v6593
    %9480 = vmatprep.subr.bf16.mxu0 %v6586
    %9481 = vmatpush1.bf16.msra.mxu0 %v6585
    %9482 = vmatprep.subr.bf16.mxu0 %v6706
    %9483 = vmatpush2.bf16.msra.mxu0 %v6705
    %9484 = vmatprep.subr.bf16.mxu0 %v6698
    %9485 = vmatpush2.bf16.msra.mxu0 %v6697
    %9486 = vmatprep.subr.bf16.mxu0 %v6690
    %9487 = vmatpush2.bf16.msra.mxu0 %v6689
    %9488 = vmatprep.subr.bf16.mxu0 %v6682
    %9489 = vmatpush2.bf16.msra.mxu0 %v6681
    %9490 = vmatprep.subr.bf16.mxu0 %v6674
    %9491 = vmatpush2.bf16.msra.mxu0 %v6673
    %9492 = vmatprep.subr.bf16.mxu0 %v6666
    %9493 = vmatpush2.bf16.msra.mxu0 %v6665
    %9494 = vmatprep.subr.bf16.mxu0 %v6658
    %9495 = vmatpush2.bf16.msra.mxu0 %v6657
    %9496 = vmatprep.subr.bf16.mxu0 %v6650
    %9497 = vmatpush2.bf16.msra.mxu0 %v6649
    %9498 = vmatprep.mubr.bf16.mxu0 %v1276
    %9499 = vmatmul.mubr.bf16.gmra.mxu0 %v1275
    %v9500 = vpop.f32.mrf.mxu0
    %v9501 = vadd.f32 %v9460, %v9500
    %v9502 = vpop.f32.mrf.mxu0
    %v9503 = vadd.f32 %v9462, %v9502
    %v9504 = vpop.f32.mrf.mxu0
    %v9505 = vpop.f32.mrf.mxu0
    %9506 = vdwg.mxu0
    %9507 = vmatprep.subr.bf16.mxu0 %v6770
    %9508 = vmatpush1.bf16.msra.mxu0 %v6769
    %9509 = vmatprep.subr.bf16.mxu0 %v6762
    %9510 = vmatpush1.bf16.msra.mxu0 %v6761
    %9511 = vmatprep.subr.bf16.mxu0 %v6754
    %9512 = vmatpush1.bf16.msra.mxu0 %v6753
    %9513 = vmatprep.subr.bf16.mxu0 %v6746
    %9514 = vmatpush1.bf16.msra.mxu0 %v6745
    %9515 = vmatprep.subr.bf16.mxu0 %v6738
    %9516 = vmatpush1.bf16.msra.mxu0 %v6737
    %9517 = vmatprep.subr.bf16.mxu0 %v6730
    %9518 = vmatpush1.bf16.msra.mxu0 %v6729
    %9519 = vmatprep.subr.bf16.mxu0 %v6722
    %9520 = vmatpush1.bf16.msra.mxu0 %v6721
    %9521 = vmatprep.subr.bf16.mxu0 %v6714
    %9522 = vmatpush1.bf16.msra.mxu0 %v6713
    %9523 = vmatprep.subr.bf16.mxu0 %v6834
    %9524 = vmatpush2.bf16.msra.mxu0 %v6833
    %9525 = vmatprep.subr.bf16.mxu0 %v6826
    %9526 = vmatpush2.bf16.msra.mxu0 %v6825
    %9527 = vmatprep.subr.bf16.mxu0 %v6818
    %9528 = vmatpush2.bf16.msra.mxu0 %v6817
    %9529 = vmatprep.subr.bf16.mxu0 %v6810
    %9530 = vmatpush2.bf16.msra.mxu0 %v6809
    %9531 = vmatprep.subr.bf16.mxu0 %v6802
    %9532 = vmatpush2.bf16.msra.mxu0 %v6801
    %9533 = vmatprep.subr.bf16.mxu0 %v6794
    %9534 = vmatpush2.bf16.msra.mxu0 %v6793
    %9535 = vmatprep.subr.bf16.mxu0 %v6786
    %9536 = vmatpush2.bf16.msra.mxu0 %v6785
    %9537 = vmatprep.subr.bf16.mxu0 %v6778
    %9538 = vmatpush2.bf16.msra.mxu0 %v6777
    %9539 = vmatprep.mubr.bf16.mxu0 %v1278
    %9540 = vmatmul.mubr.bf16.gmra.mxu0 %v1277
    %v9541 = vpop.f32.mrf.mxu0
    %v9542 = vadd.f32 %v9501, %v9541
    %v9543 = vpop.f32.mrf.mxu0
    %v9544 = vadd.f32 %v9503, %v9543
    %v9545 = vpop.f32.mrf.mxu0
    %v9546 = vpop.f32.mrf.mxu0
    %9547 = vdwg.mxu0
    %9548 = vmatprep.subr.bf16.mxu0 %v6898
    %9549 = vmatpush1.bf16.msra.mxu0 %v6897
    %9550 = vmatprep.subr.bf16.mxu0 %v6890
    %9551 = vmatpush1.bf16.msra.mxu0 %v6889
    %9552 = vmatprep.subr.bf16.mxu0 %v6882
    %9553 = vmatpush1.bf16.msra.mxu0 %v6881
    %9554 = vmatprep.subr.bf16.mxu0 %v6874
    %9555 = vmatpush1.bf16.msra.mxu0 %v6873
    %9556 = vmatprep.subr.bf16.mxu0 %v6866
    %9557 = vmatpush1.bf16.msra.mxu0 %v6865
    %9558 = vmatprep.subr.bf16.mxu0 %v6858
    %9559 = vmatpush1.bf16.msra.mxu0 %v6857
    %9560 = vmatprep.subr.bf16.mxu0 %v6850
    %9561 = vmatpush1.bf16.msra.mxu0 %v6849
    %9562 = vmatprep.subr.bf16.mxu0 %v6842
    %9563 = vmatpush1.bf16.msra.mxu0 %v6841
    %9564 = vmatprep.subr.bf16.mxu0 %v6962
    %9565 = vmatpush2.bf16.msra.mxu0 %v6961
    %9566 = vmatprep.subr.bf16.mxu0 %v6954
    %9567 = vmatpush2.bf16.msra.mxu0 %v6953
    %9568 = vmatprep.subr.bf16.mxu0 %v6946
    %9569 = vmatpush2.bf16.msra.mxu0 %v6945
    %9570 = vmatprep.subr.bf16.mxu0 %v6938
    %9571 = vmatpush2.bf16.msra.mxu0 %v6937
    %9572 = vmatprep.subr.bf16.mxu0 %v6930
    %9573 = vmatpush2.bf16.msra.mxu0 %v6929
    %9574 = vmatprep.subr.bf16.mxu0 %v6922
    %9575 = vmatpush2.bf16.msra.mxu0 %v6921
    %9576 = vmatprep.subr.bf16.mxu0 %v6914
    %9577 = vmatpush2.bf16.msra.mxu0 %v6913
    %9578 = vmatprep.subr.bf16.mxu0 %v6906
    %9579 = vmatpush2.bf16.msra.mxu0 %v6905
    %9580 = vmatprep.mubr.bf16.mxu0 %v1280
    %9581 = vmatmul.mubr.bf16.gmra.mxu0 %v1279
    %v9582 = vpop.f32.mrf.mxu0
    %v9583 = vadd.f32 %v9542, %v9582
    %v9584 = vpop.f32.mrf.mxu0
    %v9585 = vadd.f32 %v9544, %v9584
    %v9586 = vpop.f32.mrf.mxu0
    %v9587 = vpop.f32.mrf.mxu0
    %9588 = vdwg.mxu0
    %9589 = vmatprep.subr.bf16.mxu0 %v7026
    %9590 = vmatpush1.bf16.msra.mxu0 %v7025
    %9591 = vmatprep.subr.bf16.mxu0 %v7018
    %9592 = vmatpush1.bf16.msra.mxu0 %v7017
    %9593 = vmatprep.subr.bf16.mxu0 %v7010
    %9594 = vmatpush1.bf16.msra.mxu0 %v7009
    %9595 = vmatprep.subr.bf16.mxu0 %v7002
    %9596 = vmatpush1.bf16.msra.mxu0 %v7001
    %9597 = vmatprep.subr.bf16.mxu0 %v6994
    %9598 = vmatpush1.bf16.msra.mxu0 %v6993
    %9599 = vmatprep.subr.bf16.mxu0 %v6986
    %9600 = vmatpush1.bf16.msra.mxu0 %v6985
    %9601 = vmatprep.subr.bf16.mxu0 %v6978
    %9602 = vmatpush1.bf16.msra.mxu0 %v6977
    %9603 = vmatprep.subr.bf16.mxu0 %v6970
    %9604 = vmatpush1.bf16.msra.mxu0 %v6969
    %9605 = vmatprep.subr.bf16.mxu0 %v7090
    %9606 = vmatpush2.bf16.msra.mxu0 %v7089
    %9607 = vmatprep.subr.bf16.mxu0 %v7082
    %9608 = vmatpush2.bf16.msra.mxu0 %v7081
    %9609 = vmatprep.subr.bf16.mxu0 %v7074
    %9610 = vmatpush2.bf16.msra.mxu0 %v7073
    %9611 = vmatprep.subr.bf16.mxu0 %v7066
    %9612 = vmatpush2.bf16.msra.mxu0 %v7065
    %9613 = vmatprep.subr.bf16.mxu0 %v7058
    %9614 = vmatpush2.bf16.msra.mxu0 %v7057
    %9615 = vmatprep.subr.bf16.mxu0 %v7050
    %9616 = vmatpush2.bf16.msra.mxu0 %v7049
    %9617 = vmatprep.subr.bf16.mxu0 %v7042
    %9618 = vmatpush2.bf16.msra.mxu0 %v7041
    %9619 = vmatprep.subr.bf16.mxu0 %v7034
    %9620 = vmatpush2.bf16.msra.mxu0 %v7033
    %9621 = vmatprep.mubr.bf16.mxu0 %v1282
    %9622 = vmatmul.mubr.bf16.gmra.mxu0 %v1281
    %v9623 = vpop.f32.mrf.mxu0
    %v9624 = vadd.f32 %v9583, %v9623
    %v9625 = vpop.f32.mrf.mxu0
    %v9626 = vadd.f32 %v9585, %v9625
    %v9627 = vpop.f32.mrf.mxu0
    %v9628 = vpop.f32.mrf.mxu0
    %9629 = vdwg.mxu0
    %9630 = vmatprep.subr.bf16.mxu0 %v7154
    %9631 = vmatpush1.bf16.msra.mxu0 %v7153
    %9632 = vmatprep.subr.bf16.mxu0 %v7146
    %9633 = vmatpush1.bf16.msra.mxu0 %v7145
    %9634 = vmatprep.subr.bf16.mxu0 %v7138
    %9635 = vmatpush1.bf16.msra.mxu0 %v7137
    %9636 = vmatprep.subr.bf16.mxu0 %v7130
    %9637 = vmatpush1.bf16.msra.mxu0 %v7129
    %9638 = vmatprep.subr.bf16.mxu0 %v7122
    %9639 = vmatpush1.bf16.msra.mxu0 %v7121
    %9640 = vmatprep.subr.bf16.mxu0 %v7114
    %9641 = vmatpush1.bf16.msra.mxu0 %v7113
    %9642 = vmatprep.subr.bf16.mxu0 %v7106
    %9643 = vmatpush1.bf16.msra.mxu0 %v7105
    %9644 = vmatprep.subr.bf16.mxu0 %v7098
    %9645 = vmatpush1.bf16.msra.mxu0 %v7097
    %9646 = vmatprep.subr.bf16.mxu0 %v7218
    %9647 = vmatpush2.bf16.msra.mxu0 %v7217
    %9648 = vmatprep.subr.bf16.mxu0 %v7210
    %9649 = vmatpush2.bf16.msra.mxu0 %v7209
    %9650 = vmatprep.subr.bf16.mxu0 %v7202
    %9651 = vmatpush2.bf16.msra.mxu0 %v7201
    %9652 = vmatprep.subr.bf16.mxu0 %v7194
    %9653 = vmatpush2.bf16.msra.mxu0 %v7193
    %9654 = vmatprep.subr.bf16.mxu0 %v7186
    %9655 = vmatpush2.bf16.msra.mxu0 %v7185
    %9656 = vmatprep.subr.bf16.mxu0 %v7178
    %9657 = vmatpush2.bf16.msra.mxu0 %v7177
    %9658 = vmatprep.subr.bf16.mxu0 %v7170
    %9659 = vmatpush2.bf16.msra.mxu0 %v7169
    %9660 = vmatprep.subr.bf16.mxu0 %v7162
    %9661 = vmatpush2.bf16.msra.mxu0 %v7161
    %9662 = vmatprep.mubr.bf16.mxu0 %v1284
    %9663 = vmatmul.mubr.bf16.gmra.mxu0 %v1283
    %v9664 = vpop.f32.mrf.mxu0
    %v9665 = vadd.f32 %v9624, %v9664
    %v9666 = vpop.f32.mrf.mxu0
    %v9667 = vadd.f32 %v9626, %v9666
    %v9668 = vpop.f32.mrf.mxu0
    %v9669 = vpop.f32.mrf.mxu0
    %9670 = vdwg.mxu0
    %9671 = vmatprep.subr.bf16.mxu0 %v7282
    %9672 = vmatpush1.bf16.msra.mxu0 %v7281
    %9673 = vmatprep.subr.bf16.mxu0 %v7274
    %9674 = vmatpush1.bf16.msra.mxu0 %v7273
    %9675 = vmatprep.subr.bf16.mxu0 %v7266
    %9676 = vmatpush1.bf16.msra.mxu0 %v7265
    %9677 = vmatprep.subr.bf16.mxu0 %v7258
    %9678 = vmatpush1.bf16.msra.mxu0 %v7257
    %9679 = vmatprep.subr.bf16.mxu0 %v7250
    %9680 = vmatpush1.bf16.msra.mxu0 %v7249
    %9681 = vmatprep.subr.bf16.mxu0 %v7242
    %9682 = vmatpush1.bf16.msra.mxu0 %v7241
    %9683 = vmatprep.subr.bf16.mxu0 %v7234
    %9684 = vmatpush1.bf16.msra.mxu0 %v7233
    %9685 = vmatprep.subr.bf16.mxu0 %v7226
    %9686 = vmatpush1.bf16.msra.mxu0 %v7225
    %9687 = vmatprep.subr.bf16.mxu0 %v7346
    %9688 = vmatpush2.bf16.msra.mxu0 %v7345
    %9689 = vmatprep.subr.bf16.mxu0 %v7338
    %9690 = vmatpush2.bf16.msra.mxu0 %v7337
    %9691 = vmatprep.subr.bf16.mxu0 %v7330
    %9692 = vmatpush2.bf16.msra.mxu0 %v7329
    %9693 = vmatprep.subr.bf16.mxu0 %v7322
    %9694 = vmatpush2.bf16.msra.mxu0 %v7321
    %9695 = vmatprep.subr.bf16.mxu0 %v7314
    %9696 = vmatpush2.bf16.msra.mxu0 %v7313
    %9697 = vmatprep.subr.bf16.mxu0 %v7306
    %9698 = vmatpush2.bf16.msra.mxu0 %v7305
    %9699 = vmatprep.subr.bf16.mxu0 %v7298
    %9700 = vmatpush2.bf16.msra.mxu0 %v7297
    %9701 = vmatprep.subr.bf16.mxu0 %v7290
    %9702 = vmatpush2.bf16.msra.mxu0 %v7289
    %9703 = vmatprep.mubr.bf16.mxu0 %v1286
    %9704 = vmatmul.mubr.bf16.gmra.mxu0 %v1285
    %v9705 = vpop.f32.mrf.mxu0
    %v9706 = vadd.f32 %v9665, %v9705
    %v9707 = vpop.f32.mrf.mxu0
    %v9708 = vadd.f32 %v9667, %v9707
    %v9709 = vpop.f32.mrf.mxu0
    %v9710 = vpop.f32.mrf.mxu0
    %9711 = vdwg.mxu0
    %9712 = vmatprep.subr.bf16.mxu0 %v7410
    %9713 = vmatpush1.bf16.msra.mxu0 %v7409
    %9714 = vmatprep.subr.bf16.mxu0 %v7402
    %9715 = vmatpush1.bf16.msra.mxu0 %v7401
    %9716 = vmatprep.subr.bf16.mxu0 %v7394
    %9717 = vmatpush1.bf16.msra.mxu0 %v7393
    %9718 = vmatprep.subr.bf16.mxu0 %v7386
    %9719 = vmatpush1.bf16.msra.mxu0 %v7385
    %9720 = vmatprep.subr.bf16.mxu0 %v7378
    %9721 = vmatpush1.bf16.msra.mxu0 %v7377
    %9722 = vmatprep.subr.bf16.mxu0 %v7370
    %9723 = vmatpush1.bf16.msra.mxu0 %v7369
    %9724 = vmatprep.subr.bf16.mxu0 %v7362
    %9725 = vmatpush1.bf16.msra.mxu0 %v7361
    %9726 = vmatprep.subr.bf16.mxu0 %v7354
    %9727 = vmatpush1.bf16.msra.mxu0 %v7353
    %9728 = vmatprep.subr.bf16.mxu0 %v7474
    %9729 = vmatpush2.bf16.msra.mxu0 %v7473
    %9730 = vmatprep.subr.bf16.mxu0 %v7466
    %9731 = vmatpush2.bf16.msra.mxu0 %v7465
    %9732 = vmatprep.subr.bf16.mxu0 %v7458
    %9733 = vmatpush2.bf16.msra.mxu0 %v7457
    %9734 = vmatprep.subr.bf16.mxu0 %v7450
    %9735 = vmatpush2.bf16.msra.mxu0 %v7449
    %9736 = vmatprep.subr.bf16.mxu0 %v7442
    %9737 = vmatpush2.bf16.msra.mxu0 %v7441
    %9738 = vmatprep.subr.bf16.mxu0 %v7434
    %9739 = vmatpush2.bf16.msra.mxu0 %v7433
    %9740 = vmatprep.subr.bf16.mxu0 %v7426
    %9741 = vmatpush2.bf16.msra.mxu0 %v7425
    %9742 = vmatprep.subr.bf16.mxu0 %v7418
    %9743 = vmatpush2.bf16.msra.mxu0 %v7417
    %9744 = vmatprep.mubr.bf16.mxu0 %v1288
    %9745 = vmatmul.mubr.bf16.gmra.mxu0 %v1287
    %v9746 = vpop.f32.mrf.mxu0
    %v9747 = vadd.f32 %v9706, %v9746
    %v9748 = vpop.f32.mrf.mxu0
    %v9749 = vadd.f32 %v9708, %v9748
    %v9750 = vpop.f32.mrf.mxu0
    %v9751 = vpop.f32.mrf.mxu0
    %9752 = vdwg.mxu0
    %9753 = vmatprep.subr.bf16.mxu0 %v7538
    %9754 = vmatpush1.bf16.msra.mxu0 %v7537
    %9755 = vmatprep.subr.bf16.mxu0 %v7530
    %9756 = vmatpush1.bf16.msra.mxu0 %v7529
    %9757 = vmatprep.subr.bf16.mxu0 %v7522
    %9758 = vmatpush1.bf16.msra.mxu0 %v7521
    %9759 = vmatprep.subr.bf16.mxu0 %v7514
    %9760 = vmatpush1.bf16.msra.mxu0 %v7513
    %9761 = vmatprep.subr.bf16.mxu0 %v7506
    %9762 = vmatpush1.bf16.msra.mxu0 %v7505
    %9763 = vmatprep.subr.bf16.mxu0 %v7498
    %9764 = vmatpush1.bf16.msra.mxu0 %v7497
    %9765 = vmatprep.subr.bf16.mxu0 %v7490
    %9766 = vmatpush1.bf16.msra.mxu0 %v7489
    %9767 = vmatprep.subr.bf16.mxu0 %v7482
    %9768 = vmatpush1.bf16.msra.mxu0 %v7481
    %9769 = vmatprep.subr.bf16.mxu0 %v7602
    %9770 = vmatpush2.bf16.msra.mxu0 %v7601
    %9771 = vmatprep.subr.bf16.mxu0 %v7594
    %9772 = vmatpush2.bf16.msra.mxu0 %v7593
    %9773 = vmatprep.subr.bf16.mxu0 %v7586
    %9774 = vmatpush2.bf16.msra.mxu0 %v7585
    %9775 = vmatprep.subr.bf16.mxu0 %v7578
    %9776 = vmatpush2.bf16.msra.mxu0 %v7577
    %9777 = vmatprep.subr.bf16.mxu0 %v7570
    %9778 = vmatpush2.bf16.msra.mxu0 %v7569
    %9779 = vmatprep.subr.bf16.mxu0 %v7562
    %9780 = vmatpush2.bf16.msra.mxu0 %v7561
    %9781 = vmatprep.subr.bf16.mxu0 %v7554
    %9782 = vmatpush2.bf16.msra.mxu0 %v7553
    %9783 = vmatprep.subr.bf16.mxu0 %v7546
    %9784 = vmatpush2.bf16.msra.mxu0 %v7545
    %9785 = vmatprep.mubr.bf16.mxu0 %v1290
    %9786 = vmatmul.mubr.bf16.gmra.mxu0 %v1289
    %v9787 = vpop.f32.mrf.mxu0
    %v9788 = vadd.f32 %v9747, %v9787
    %v9789 = vpop.f32.mrf.mxu0
    %v9790 = vadd.f32 %v9749, %v9789
    %v9791 = vpop.f32.mrf.mxu0
    %v9792 = vpop.f32.mrf.mxu0
    %9793 = vdwg.mxu0
    %9794 = vmatprep.subr.bf16.mxu0 %v7666
    %9795 = vmatpush1.bf16.msra.mxu0 %v7665
    %9796 = vmatprep.subr.bf16.mxu0 %v7658
    %9797 = vmatpush1.bf16.msra.mxu0 %v7657
    %9798 = vmatprep.subr.bf16.mxu0 %v7650
    %9799 = vmatpush1.bf16.msra.mxu0 %v7649
    %9800 = vmatprep.subr.bf16.mxu0 %v7642
    %9801 = vmatpush1.bf16.msra.mxu0 %v7641
    %9802 = vmatprep.subr.bf16.mxu0 %v7634
    %9803 = vmatpush1.bf16.msra.mxu0 %v7633
    %9804 = vmatprep.subr.bf16.mxu0 %v7626
    %9805 = vmatpush1.bf16.msra.mxu0 %v7625
    %9806 = vmatprep.subr.bf16.mxu0 %v7618
    %9807 = vmatpush1.bf16.msra.mxu0 %v7617
    %9808 = vmatprep.subr.bf16.mxu0 %v7610
    %9809 = vmatpush1.bf16.msra.mxu0 %v7609
    %9810 = vmatprep.subr.bf16.mxu0 %v7730
    %9811 = vmatpush2.bf16.msra.mxu0 %v7729
    %9812 = vmatprep.subr.bf16.mxu0 %v7722
    %9813 = vmatpush2.bf16.msra.mxu0 %v7721
    %9814 = vmatprep.subr.bf16.mxu0 %v7714
    %9815 = vmatpush2.bf16.msra.mxu0 %v7713
    %9816 = vmatprep.subr.bf16.mxu0 %v7706
    %9817 = vmatpush2.bf16.msra.mxu0 %v7705
    %9818 = vmatprep.subr.bf16.mxu0 %v7698
    %9819 = vmatpush2.bf16.msra.mxu0 %v7697
    %9820 = vmatprep.subr.bf16.mxu0 %v7690
    %9821 = vmatpush2.bf16.msra.mxu0 %v7689
    %9822 = vmatprep.subr.bf16.mxu0 %v7682
    %9823 = vmatpush2.bf16.msra.mxu0 %v7681
    %9824 = vmatprep.subr.bf16.mxu0 %v7674
    %9825 = vmatpush2.bf16.msra.mxu0 %v7673
    %9826 = vmatprep.mubr.bf16.mxu0 %v1292
    %9827 = vmatmul.mubr.bf16.gmra.mxu0 %v1291
    %v9828 = vpop.f32.mrf.mxu0
    %v9829 = vadd.f32 %v9788, %v9828
    %v9830 = vpop.f32.mrf.mxu0
    %v9831 = vadd.f32 %v9790, %v9830
    %v9832 = vpop.f32.mrf.mxu0
    %v9833 = vpop.f32.mrf.mxu0
    %9834 = vdwg.mxu0
    %9835 = vmatprep.subr.bf16.mxu0 %v6516
    %9836 = vmatpush1.bf16.msra.mxu0 %v6515
    %9837 = vmatprep.subr.bf16.mxu0 %v6508
    %9838 = vmatpush1.bf16.msra.mxu0 %v6507
    %9839 = vmatprep.subr.bf16.mxu0 %v6500
    %9840 = vmatpush1.bf16.msra.mxu0 %v6499
    %9841 = vmatprep.subr.bf16.mxu0 %v6492
    %9842 = vmatpush1.bf16.msra.mxu0 %v6491
    %9843 = vmatprep.subr.bf16.mxu0 %v6484
    %9844 = vmatpush1.bf16.msra.mxu0 %v6483
    %9845 = vmatprep.subr.bf16.mxu0 %v6476
    %9846 = vmatpush1.bf16.msra.mxu0 %v6475
    %9847 = vmatprep.subr.bf16.mxu0 %v6468
    %9848 = vmatpush1.bf16.msra.mxu0 %v6467
    %9849 = vmatprep.subr.bf16.mxu0 %v6460
    %9850 = vmatpush1.bf16.msra.mxu0 %v6459
    %9851 = vmatprep.subr.bf16.mxu0 %v6580
    %9852 = vmatpush2.bf16.msra.mxu0 %v6579
    %9853 = vmatprep.subr.bf16.mxu0 %v6572
    %9854 = vmatpush2.bf16.msra.mxu0 %v6571
    %9855 = vmatprep.subr.bf16.mxu0 %v6564
    %9856 = vmatpush2.bf16.msra.mxu0 %v6563
    %9857 = vmatprep.subr.bf16.mxu0 %v6556
    %9858 = vmatpush2.bf16.msra.mxu0 %v6555
    %9859 = vmatprep.subr.bf16.mxu0 %v6548
    %9860 = vmatpush2.bf16.msra.mxu0 %v6547
    %9861 = vmatprep.subr.bf16.mxu0 %v6540
    %9862 = vmatpush2.bf16.msra.mxu0 %v6539
    %9863 = vmatprep.subr.bf16.mxu0 %v6532
    %9864 = vmatpush2.bf16.msra.mxu0 %v6531
    %9865 = vmatprep.subr.bf16.mxu0 %v6524
    %9866 = vmatpush2.bf16.msra.mxu0 %v6523
    %9867 = vmatprep.mubr.bf16.mxu0 %v1274
    %9868 = vmatmul.mubr.bf16.gmra.mxu0 %v1273
    %v9869 = vpop.f32.mrf.mxu0
    %v9870 = vadd.f32 %v2594, %v9869
    %v9871 = vpop.f32.mrf.mxu0
    %v9872 = vadd.f32 %v2598, %v9871
    %v9873 = vpop.f32.mrf.mxu0
    %v9874 = vpop.f32.mrf.mxu0
    %9875 = vdwg.mxu0
    %9876 = vmatprep.subr.bf16.mxu0 %v6644
    %9877 = vmatpush1.bf16.msra.mxu0 %v6643
    %9878 = vmatprep.subr.bf16.mxu0 %v6636
    %9879 = vmatpush1.bf16.msra.mxu0 %v6635
    %9880 = vmatprep.subr.bf16.mxu0 %v6628
    %9881 = vmatpush1.bf16.msra.mxu0 %v6627
    %9882 = vmatprep.subr.bf16.mxu0 %v6620
    %9883 = vmatpush1.bf16.msra.mxu0 %v6619
    %9884 = vmatprep.subr.bf16.mxu0 %v6612
    %9885 = vmatpush1.bf16.msra.mxu0 %v6611
    %9886 = vmatprep.subr.bf16.mxu0 %v6604
    %9887 = vmatpush1.bf16.msra.mxu0 %v6603
    %9888 = vmatprep.subr.bf16.mxu0 %v6596
    %9889 = vmatpush1.bf16.msra.mxu0 %v6595
    %9890 = vmatprep.subr.bf16.mxu0 %v6588
    %9891 = vmatpush1.bf16.msra.mxu0 %v6587
    %9892 = vmatprep.subr.bf16.mxu0 %v6708
    %9893 = vmatpush2.bf16.msra.mxu0 %v6707
    %9894 = vmatprep.subr.bf16.mxu0 %v6700
    %9895 = vmatpush2.bf16.msra.mxu0 %v6699
    %9896 = vmatprep.subr.bf16.mxu0 %v6692
    %9897 = vmatpush2.bf16.msra.mxu0 %v6691
    %9898 = vmatprep.subr.bf16.mxu0 %v6684
    %9899 = vmatpush2.bf16.msra.mxu0 %v6683
    %9900 = vmatprep.subr.bf16.mxu0 %v6676
    %9901 = vmatpush2.bf16.msra.mxu0 %v6675
    %9902 = vmatprep.subr.bf16.mxu0 %v6668
    %9903 = vmatpush2.bf16.msra.mxu0 %v6667
    %9904 = vmatprep.subr.bf16.mxu0 %v6660
    %9905 = vmatpush2.bf16.msra.mxu0 %v6659
    %9906 = vmatprep.subr.bf16.mxu0 %v6652
    %9907 = vmatpush2.bf16.msra.mxu0 %v6651
    %9908 = vmatprep.mubr.bf16.mxu0 %v1276
    %9909 = vmatmul.mubr.bf16.gmra.mxu0 %v1275
    %v9910 = vpop.f32.mrf.mxu0
    %v9911 = vadd.f32 %v9870, %v9910
    %v9912 = vpop.f32.mrf.mxu0
    %v9913 = vadd.f32 %v9872, %v9912
    %v9914 = vpop.f32.mrf.mxu0
    %v9915 = vpop.f32.mrf.mxu0
    %9916 = vdwg.mxu0
    %9917 = vmatprep.subr.bf16.mxu0 %v6772
    %9918 = vmatpush1.bf16.msra.mxu0 %v6771
    %9919 = vmatprep.subr.bf16.mxu0 %v6764
    %9920 = vmatpush1.bf16.msra.mxu0 %v6763
    %9921 = vmatprep.subr.bf16.mxu0 %v6756
    %9922 = vmatpush1.bf16.msra.mxu0 %v6755
    %9923 = vmatprep.subr.bf16.mxu0 %v6748
    %9924 = vmatpush1.bf16.msra.mxu0 %v6747
    %9925 = vmatprep.subr.bf16.mxu0 %v6740
    %9926 = vmatpush1.bf16.msra.mxu0 %v6739
    %9927 = vmatprep.subr.bf16.mxu0 %v6732
    %9928 = vmatpush1.bf16.msra.mxu0 %v6731
    %9929 = vmatprep.subr.bf16.mxu0 %v6724
    %9930 = vmatpush1.bf16.msra.mxu0 %v6723
    %9931 = vmatprep.subr.bf16.mxu0 %v6716
    %9932 = vmatpush1.bf16.msra.mxu0 %v6715
    %9933 = vmatprep.subr.bf16.mxu0 %v6836
    %9934 = vmatpush2.bf16.msra.mxu0 %v6835
    %9935 = vmatprep.subr.bf16.mxu0 %v6828
    %9936 = vmatpush2.bf16.msra.mxu0 %v6827
    %9937 = vmatprep.subr.bf16.mxu0 %v6820
    %9938 = vmatpush2.bf16.msra.mxu0 %v6819
    %9939 = vmatprep.subr.bf16.mxu0 %v6812
    %9940 = vmatpush2.bf16.msra.mxu0 %v6811
    %9941 = vmatprep.subr.bf16.mxu0 %v6804
    %9942 = vmatpush2.bf16.msra.mxu0 %v6803
    %9943 = vmatprep.subr.bf16.mxu0 %v6796
    %9944 = vmatpush2.bf16.msra.mxu0 %v6795
    %9945 = vmatprep.subr.bf16.mxu0 %v6788
    %9946 = vmatpush2.bf16.msra.mxu0 %v6787
    %9947 = vmatprep.subr.bf16.mxu0 %v6780
    %9948 = vmatpush2.bf16.msra.mxu0 %v6779
    %9949 = vmatprep.mubr.bf16.mxu0 %v1278
    %9950 = vmatmul.mubr.bf16.gmra.mxu0 %v1277
    %v9951 = vpop.f32.mrf.mxu0
    %v9952 = vadd.f32 %v9911, %v9951
    %v9953 = vpop.f32.mrf.mxu0
    %v9954 = vadd.f32 %v9913, %v9953
    %v9955 = vpop.f32.mrf.mxu0
    %v9956 = vpop.f32.mrf.mxu0
    %9957 = vdwg.mxu0
    %9958 = vmatprep.subr.bf16.mxu0 %v6900
    %9959 = vmatpush1.bf16.msra.mxu0 %v6899
    %9960 = vmatprep.subr.bf16.mxu0 %v6892
    %9961 = vmatpush1.bf16.msra.mxu0 %v6891
    %9962 = vmatprep.subr.bf16.mxu0 %v6884
    %9963 = vmatpush1.bf16.msra.mxu0 %v6883
    %9964 = vmatprep.subr.bf16.mxu0 %v6876
    %9965 = vmatpush1.bf16.msra.mxu0 %v6875
    %9966 = vmatprep.subr.bf16.mxu0 %v6868
    %9967 = vmatpush1.bf16.msra.mxu0 %v6867
    %9968 = vmatprep.subr.bf16.mxu0 %v6860
    %9969 = vmatpush1.bf16.msra.mxu0 %v6859
    %9970 = vmatprep.subr.bf16.mxu0 %v6852
    %9971 = vmatpush1.bf16.msra.mxu0 %v6851
    %9972 = vmatprep.subr.bf16.mxu0 %v6844
    %9973 = vmatpush1.bf16.msra.mxu0 %v6843
    %9974 = vmatprep.subr.bf16.mxu0 %v6964
    %9975 = vmatpush2.bf16.msra.mxu0 %v6963
    %9976 = vmatprep.subr.bf16.mxu0 %v6956
    %9977 = vmatpush2.bf16.msra.mxu0 %v6955
    %9978 = vmatprep.subr.bf16.mxu0 %v6948
    %9979 = vmatpush2.bf16.msra.mxu0 %v6947
    %9980 = vmatprep.subr.bf16.mxu0 %v6940
    %9981 = vmatpush2.bf16.msra.mxu0 %v6939
    %9982 = vmatprep.subr.bf16.mxu0 %v6932
    %9983 = vmatpush2.bf16.msra.mxu0 %v6931
    %9984 = vmatprep.subr.bf16.mxu0 %v6924
    %9985 = vmatpush2.bf16.msra.mxu0 %v6923
    %9986 = vmatprep.subr.bf16.mxu0 %v6916
    %9987 = vmatpush2.bf16.msra.mxu0 %v6915
    %9988 = vmatprep.subr.bf16.mxu0 %v6908
    %9989 = vmatpush2.bf16.msra.mxu0 %v6907
    %9990 = vmatprep.mubr.bf16.mxu0 %v1280
    %9991 = vmatmul.mubr.bf16.gmra.mxu0 %v1279
    %v9992 = vpop.f32.mrf.mxu0
    %v9993 = vadd.f32 %v9952, %v9992
    %v9994 = vpop.f32.mrf.mxu0
    %v9995 = vadd.f32 %v9954, %v9994
    %v9996 = vpop.f32.mrf.mxu0
    %v9997 = vpop.f32.mrf.mxu0
    %9998 = vdwg.mxu0
    %9999 = vmatprep.subr.bf16.mxu0 %v7028
    %10000 = vmatpush1.bf16.msra.mxu0 %v7027
    %10001 = vmatprep.subr.bf16.mxu0 %v7020
    %10002 = vmatpush1.bf16.msra.mxu0 %v7019
    %10003 = vmatprep.subr.bf16.mxu0 %v7012
    %10004 = vmatpush1.bf16.msra.mxu0 %v7011
    %10005 = vmatprep.subr.bf16.mxu0 %v7004
    %10006 = vmatpush1.bf16.msra.mxu0 %v7003
    %10007 = vmatprep.subr.bf16.mxu0 %v6996
    %10008 = vmatpush1.bf16.msra.mxu0 %v6995
    %10009 = vmatprep.subr.bf16.mxu0 %v6988
    %10010 = vmatpush1.bf16.msra.mxu0 %v6987
    %10011 = vmatprep.subr.bf16.mxu0 %v6980
    %10012 = vmatpush1.bf16.msra.mxu0 %v6979
    %10013 = vmatprep.subr.bf16.mxu0 %v6972
    %10014 = vmatpush1.bf16.msra.mxu0 %v6971
    %10015 = vmatprep.subr.bf16.mxu0 %v7092
    %10016 = vmatpush2.bf16.msra.mxu0 %v7091
    %10017 = vmatprep.subr.bf16.mxu0 %v7084
    %10018 = vmatpush2.bf16.msra.mxu0 %v7083
    %10019 = vmatprep.subr.bf16.mxu0 %v7076
    %10020 = vmatpush2.bf16.msra.mxu0 %v7075
    %10021 = vmatprep.subr.bf16.mxu0 %v7068
    %10022 = vmatpush2.bf16.msra.mxu0 %v7067
    %10023 = vmatprep.subr.bf16.mxu0 %v7060
    %10024 = vmatpush2.bf16.msra.mxu0 %v7059
    %10025 = vmatprep.subr.bf16.mxu0 %v7052
    %10026 = vmatpush2.bf16.msra.mxu0 %v7051
    %10027 = vmatprep.subr.bf16.mxu0 %v7044
    %10028 = vmatpush2.bf16.msra.mxu0 %v7043
    %10029 = vmatprep.subr.bf16.mxu0 %v7036
    %10030 = vmatpush2.bf16.msra.mxu0 %v7035
    %10031 = vmatprep.mubr.bf16.mxu0 %v1282
    %10032 = vmatmul.mubr.bf16.gmra.mxu0 %v1281
    %v10033 = vpop.f32.mrf.mxu0
    %v10034 = vadd.f32 %v9993, %v10033
    %v10035 = vpop.f32.mrf.mxu0
    %v10036 = vadd.f32 %v9995, %v10035
    %v10037 = vpop.f32.mrf.mxu0
    %v10038 = vpop.f32.mrf.mxu0
    %10039 = vdwg.mxu0
    %10040 = vmatprep.subr.bf16.mxu0 %v7156
    %10041 = vmatpush1.bf16.msra.mxu0 %v7155
    %10042 = vmatprep.subr.bf16.mxu0 %v7148
    %10043 = vmatpush1.bf16.msra.mxu0 %v7147
    %10044 = vmatprep.subr.bf16.mxu0 %v7140
    %10045 = vmatpush1.bf16.msra.mxu0 %v7139
    %10046 = vmatprep.subr.bf16.mxu0 %v7132
    %10047 = vmatpush1.bf16.msra.mxu0 %v7131
    %10048 = vmatprep.subr.bf16.mxu0 %v7124
    %10049 = vmatpush1.bf16.msra.mxu0 %v7123
    %10050 = vmatprep.subr.bf16.mxu0 %v7116
    %10051 = vmatpush1.bf16.msra.mxu0 %v7115
    %10052 = vmatprep.subr.bf16.mxu0 %v7108
    %10053 = vmatpush1.bf16.msra.mxu0 %v7107
    %10054 = vmatprep.subr.bf16.mxu0 %v7100
    %10055 = vmatpush1.bf16.msra.mxu0 %v7099
    %10056 = vmatprep.subr.bf16.mxu0 %v7220
    %10057 = vmatpush2.bf16.msra.mxu0 %v7219
    %10058 = vmatprep.subr.bf16.mxu0 %v7212
    %10059 = vmatpush2.bf16.msra.mxu0 %v7211
    %10060 = vmatprep.subr.bf16.mxu0 %v7204
    %10061 = vmatpush2.bf16.msra.mxu0 %v7203
    %10062 = vmatprep.subr.bf16.mxu0 %v7196
    %10063 = vmatpush2.bf16.msra.mxu0 %v7195
    %10064 = vmatprep.subr.bf16.mxu0 %v7188
    %10065 = vmatpush2.bf16.msra.mxu0 %v7187
    %10066 = vmatprep.subr.bf16.mxu0 %v7180
    %10067 = vmatpush2.bf16.msra.mxu0 %v7179
    %10068 = vmatprep.subr.bf16.mxu0 %v7172
    %10069 = vmatpush2.bf16.msra.mxu0 %v7171
    %10070 = vmatprep.subr.bf16.mxu0 %v7164
    %10071 = vmatpush2.bf16.msra.mxu0 %v7163
    %10072 = vmatprep.mubr.bf16.mxu0 %v1284
    %10073 = vmatmul.mubr.bf16.gmra.mxu0 %v1283
    %v10074 = vpop.f32.mrf.mxu0
    %v10075 = vadd.f32 %v10034, %v10074
    %v10076 = vpop.f32.mrf.mxu0
    %v10077 = vadd.f32 %v10036, %v10076
    %v10078 = vpop.f32.mrf.mxu0
    %v10079 = vpop.f32.mrf.mxu0
    %10080 = vdwg.mxu0
    %10081 = vmatprep.subr.bf16.mxu0 %v7284
    %10082 = vmatpush1.bf16.msra.mxu0 %v7283
    %10083 = vmatprep.subr.bf16.mxu0 %v7276
    %10084 = vmatpush1.bf16.msra.mxu0 %v7275
    %10085 = vmatprep.subr.bf16.mxu0 %v7268
    %10086 = vmatpush1.bf16.msra.mxu0 %v7267
    %10087 = vmatprep.subr.bf16.mxu0 %v7260
    %10088 = vmatpush1.bf16.msra.mxu0 %v7259
    %10089 = vmatprep.subr.bf16.mxu0 %v7252
    %10090 = vmatpush1.bf16.msra.mxu0 %v7251
    %10091 = vmatprep.subr.bf16.mxu0 %v7244
    %10092 = vmatpush1.bf16.msra.mxu0 %v7243
    %10093 = vmatprep.subr.bf16.mxu0 %v7236
    %10094 = vmatpush1.bf16.msra.mxu0 %v7235
    %10095 = vmatprep.subr.bf16.mxu0 %v7228
    %10096 = vmatpush1.bf16.msra.mxu0 %v7227
    %10097 = vmatprep.subr.bf16.mxu0 %v7348
    %10098 = vmatpush2.bf16.msra.mxu0 %v7347
    %10099 = vmatprep.subr.bf16.mxu0 %v7340
    %10100 = vmatpush2.bf16.msra.mxu0 %v7339
    %10101 = vmatprep.subr.bf16.mxu0 %v7332
    %10102 = vmatpush2.bf16.msra.mxu0 %v7331
    %10103 = vmatprep.subr.bf16.mxu0 %v7324
    %10104 = vmatpush2.bf16.msra.mxu0 %v7323
    %10105 = vmatprep.subr.bf16.mxu0 %v7316
    %10106 = vmatpush2.bf16.msra.mxu0 %v7315
    %10107 = vmatprep.subr.bf16.mxu0 %v7308
    %10108 = vmatpush2.bf16.msra.mxu0 %v7307
    %10109 = vmatprep.subr.bf16.mxu0 %v7300
    %10110 = vmatpush2.bf16.msra.mxu0 %v7299
    %10111 = vmatprep.subr.bf16.mxu0 %v7292
    %10112 = vmatpush2.bf16.msra.mxu0 %v7291
    %10113 = vmatprep.mubr.bf16.mxu0 %v1286
    %10114 = vmatmul.mubr.bf16.gmra.mxu0 %v1285
    %v10115 = vpop.f32.mrf.mxu0
    %v10116 = vadd.f32 %v10075, %v10115
    %v10117 = vpop.f32.mrf.mxu0
    %v10118 = vadd.f32 %v10077, %v10117
    %v10119 = vpop.f32.mrf.mxu0
    %v10120 = vpop.f32.mrf.mxu0
    %10121 = vdwg.mxu0
    %10122 = vmatprep.subr.bf16.mxu0 %v7412
    %10123 = vmatpush1.bf16.msra.mxu0 %v7411
    %10124 = vmatprep.subr.bf16.mxu0 %v7404
    %10125 = vmatpush1.bf16.msra.mxu0 %v7403
    %10126 = vmatprep.subr.bf16.mxu0 %v7396
    %10127 = vmatpush1.bf16.msra.mxu0 %v7395
    %10128 = vmatprep.subr.bf16.mxu0 %v7388
    %10129 = vmatpush1.bf16.msra.mxu0 %v7387
    %10130 = vmatprep.subr.bf16.mxu0 %v7380
    %10131 = vmatpush1.bf16.msra.mxu0 %v7379
    %10132 = vmatprep.subr.bf16.mxu0 %v7372
    %10133 = vmatpush1.bf16.msra.mxu0 %v7371
    %10134 = vmatprep.subr.bf16.mxu0 %v7364
    %10135 = vmatpush1.bf16.msra.mxu0 %v7363
    %10136 = vmatprep.subr.bf16.mxu0 %v7356
    %10137 = vmatpush1.bf16.msra.mxu0 %v7355
    %10138 = vmatprep.subr.bf16.mxu0 %v7476
    %10139 = vmatpush2.bf16.msra.mxu0 %v7475
    %10140 = vmatprep.subr.bf16.mxu0 %v7468
    %10141 = vmatpush2.bf16.msra.mxu0 %v7467
    %10142 = vmatprep.subr.bf16.mxu0 %v7460
    %10143 = vmatpush2.bf16.msra.mxu0 %v7459
    %10144 = vmatprep.subr.bf16.mxu0 %v7452
    %10145 = vmatpush2.bf16.msra.mxu0 %v7451
    %10146 = vmatprep.subr.bf16.mxu0 %v7444
    %10147 = vmatpush2.bf16.msra.mxu0 %v7443
    %10148 = vmatprep.subr.bf16.mxu0 %v7436
    %10149 = vmatpush2.bf16.msra.mxu0 %v7435
    %10150 = vmatprep.subr.bf16.mxu0 %v7428
    %10151 = vmatpush2.bf16.msra.mxu0 %v7427
    %10152 = vmatprep.subr.bf16.mxu0 %v7420
    %10153 = vmatpush2.bf16.msra.mxu0 %v7419
    %10154 = vmatprep.mubr.bf16.mxu0 %v1288
    %10155 = vmatmul.mubr.bf16.gmra.mxu0 %v1287
    %v10156 = vpop.f32.mrf.mxu0
    %v10157 = vadd.f32 %v10116, %v10156
    %v10158 = vpop.f32.mrf.mxu0
    %v10159 = vadd.f32 %v10118, %v10158
    %v10160 = vpop.f32.mrf.mxu0
    %v10161 = vpop.f32.mrf.mxu0
    %10162 = vdwg.mxu0
    %10163 = vmatprep.subr.bf16.mxu0 %v7540
    %10164 = vmatpush1.bf16.msra.mxu0 %v7539
    %10165 = vmatprep.subr.bf16.mxu0 %v7532
    %10166 = vmatpush1.bf16.msra.mxu0 %v7531
    %10167 = vmatprep.subr.bf16.mxu0 %v7524
    %10168 = vmatpush1.bf16.msra.mxu0 %v7523
    %10169 = vmatprep.subr.bf16.mxu0 %v7516
    %10170 = vmatpush1.bf16.msra.mxu0 %v7515
    %10171 = vmatprep.subr.bf16.mxu0 %v7508
    %10172 = vmatpush1.bf16.msra.mxu0 %v7507
    %10173 = vmatprep.subr.bf16.mxu0 %v7500
    %10174 = vmatpush1.bf16.msra.mxu0 %v7499
    %10175 = vmatprep.subr.bf16.mxu0 %v7492
    %10176 = vmatpush1.bf16.msra.mxu0 %v7491
    %10177 = vmatprep.subr.bf16.mxu0 %v7484
    %10178 = vmatpush1.bf16.msra.mxu0 %v7483
    %10179 = vmatprep.subr.bf16.mxu0 %v7604
    %10180 = vmatpush2.bf16.msra.mxu0 %v7603
    %10181 = vmatprep.subr.bf16.mxu0 %v7596
    %10182 = vmatpush2.bf16.msra.mxu0 %v7595
    %10183 = vmatprep.subr.bf16.mxu0 %v7588
    %10184 = vmatpush2.bf16.msra.mxu0 %v7587
    %10185 = vmatprep.subr.bf16.mxu0 %v7580
    %10186 = vmatpush2.bf16.msra.mxu0 %v7579
    %10187 = vmatprep.subr.bf16.mxu0 %v7572
    %10188 = vmatpush2.bf16.msra.mxu0 %v7571
    %10189 = vmatprep.subr.bf16.mxu0 %v7564
    %10190 = vmatpush2.bf16.msra.mxu0 %v7563
    %10191 = vmatprep.subr.bf16.mxu0 %v7556
    %10192 = vmatpush2.bf16.msra.mxu0 %v7555
    %10193 = vmatprep.subr.bf16.mxu0 %v7548
    %10194 = vmatpush2.bf16.msra.mxu0 %v7547
    %10195 = vmatprep.mubr.bf16.mxu0 %v1290
    %10196 = vmatmul.mubr.bf16.gmra.mxu0 %v1289
    %v10197 = vpop.f32.mrf.mxu0
    %v10198 = vadd.f32 %v10157, %v10197
    %v10199 = vpop.f32.mrf.mxu0
    %v10200 = vadd.f32 %v10159, %v10199
    %v10201 = vpop.f32.mrf.mxu0
    %v10202 = vpop.f32.mrf.mxu0
    %10203 = vdwg.mxu0
    %10204 = vmatprep.subr.bf16.mxu0 %v7668
    %10205 = vmatpush1.bf16.msra.mxu0 %v7667
    %10206 = vmatprep.subr.bf16.mxu0 %v7660
    %10207 = vmatpush1.bf16.msra.mxu0 %v7659
    %10208 = vmatprep.subr.bf16.mxu0 %v7652
    %10209 = vmatpush1.bf16.msra.mxu0 %v7651
    %10210 = vmatprep.subr.bf16.mxu0 %v7644
    %10211 = vmatpush1.bf16.msra.mxu0 %v7643
    %10212 = vmatprep.subr.bf16.mxu0 %v7636
    %10213 = vmatpush1.bf16.msra.mxu0 %v7635
    %10214 = vmatprep.subr.bf16.mxu0 %v7628
    %10215 = vmatpush1.bf16.msra.mxu0 %v7627
    %10216 = vmatprep.subr.bf16.mxu0 %v7620
    %10217 = vmatpush1.bf16.msra.mxu0 %v7619
    %10218 = vmatprep.subr.bf16.mxu0 %v7612
    %10219 = vmatpush1.bf16.msra.mxu0 %v7611
    %10220 = vmatprep.subr.bf16.mxu0 %v7732
    %10221 = vmatpush2.bf16.msra.mxu0 %v7731
    %10222 = vmatprep.subr.bf16.mxu0 %v7724
    %10223 = vmatpush2.bf16.msra.mxu0 %v7723
    %10224 = vmatprep.subr.bf16.mxu0 %v7716
    %10225 = vmatpush2.bf16.msra.mxu0 %v7715
    %10226 = vmatprep.subr.bf16.mxu0 %v7708
    %10227 = vmatpush2.bf16.msra.mxu0 %v7707
    %10228 = vmatprep.subr.bf16.mxu0 %v7700
    %10229 = vmatpush2.bf16.msra.mxu0 %v7699
    %10230 = vmatprep.subr.bf16.mxu0 %v7692
    %10231 = vmatpush2.bf16.msra.mxu0 %v7691
    %10232 = vmatprep.subr.bf16.mxu0 %v7684
    %10233 = vmatpush2.bf16.msra.mxu0 %v7683
    %10234 = vmatprep.subr.bf16.mxu0 %v7676
    %10235 = vmatpush2.bf16.msra.mxu0 %v7675
    %10236 = vmatprep.mubr.bf16.mxu0 %v1292
    %10237 = vmatmul.mubr.bf16.gmra.mxu0 %v1291
    %v10238 = vpop.f32.mrf.mxu0
    %v10239 = vadd.f32 %v10198, %v10238
    %v10240 = vpop.f32.mrf.mxu0
    %v10241 = vadd.f32 %v10200, %v10240
    %v10242 = vpop.f32.mrf.mxu0
    %v10243 = vpop.f32.mrf.mxu0
    %10244 = vdwg.mxu0
    %10245 = vmatprep.subr.bf16.mxu0 %v6518
    %10246 = vmatpush1.bf16.msra.mxu0 %v6517
    %10247 = vmatprep.subr.bf16.mxu0 %v6510
    %10248 = vmatpush1.bf16.msra.mxu0 %v6509
    %10249 = vmatprep.subr.bf16.mxu0 %v6502
    %10250 = vmatpush1.bf16.msra.mxu0 %v6501
    %10251 = vmatprep.subr.bf16.mxu0 %v6494
    %10252 = vmatpush1.bf16.msra.mxu0 %v6493
    %10253 = vmatprep.subr.bf16.mxu0 %v6486
    %10254 = vmatpush1.bf16.msra.mxu0 %v6485
    %10255 = vmatprep.subr.bf16.mxu0 %v6478
    %10256 = vmatpush1.bf16.msra.mxu0 %v6477
    %10257 = vmatprep.subr.bf16.mxu0 %v6470
    %10258 = vmatpush1.bf16.msra.mxu0 %v6469
    %10259 = vmatprep.subr.bf16.mxu0 %v6462
    %10260 = vmatpush1.bf16.msra.mxu0 %v6461
    %10261 = vmatprep.subr.bf16.mxu0 %v6582
    %10262 = vmatpush2.bf16.msra.mxu0 %v6581
    %10263 = vmatprep.subr.bf16.mxu0 %v6574
    %10264 = vmatpush2.bf16.msra.mxu0 %v6573
    %10265 = vmatprep.subr.bf16.mxu0 %v6566
    %10266 = vmatpush2.bf16.msra.mxu0 %v6565
    %10267 = vmatprep.subr.bf16.mxu0 %v6558
    %10268 = vmatpush2.bf16.msra.mxu0 %v6557
    %10269 = vmatprep.subr.bf16.mxu0 %v6550
    %10270 = vmatpush2.bf16.msra.mxu0 %v6549
    %10271 = vmatprep.subr.bf16.mxu0 %v6542
    %10272 = vmatpush2.bf16.msra.mxu0 %v6541
    %10273 = vmatprep.subr.bf16.mxu0 %v6534
    %10274 = vmatpush2.bf16.msra.mxu0 %v6533
    %10275 = vmatprep.subr.bf16.mxu0 %v6526
    %10276 = vmatpush2.bf16.msra.mxu0 %v6525
    %10277 = vmatprep.mubr.bf16.mxu0 %v1274
    %10278 = vmatmul.mubr.bf16.gmra.mxu0 %v1273
    %v10279 = vpop.f32.mrf.mxu0
    %v10280 = vadd.f32 %v2602, %v10279
    %v10281 = vpop.f32.mrf.mxu0
    %v10282 = vadd.f32 %v2606, %v10281
    %v10283 = vpop.f32.mrf.mxu0
    %v10284 = vpop.f32.mrf.mxu0
    %10285 = vdwg.mxu0
    %10286 = vmatprep.subr.bf16.mxu0 %v6646
    %10287 = vmatpush1.bf16.msra.mxu0 %v6645
    %10288 = vmatprep.subr.bf16.mxu0 %v6638
    %10289 = vmatpush1.bf16.msra.mxu0 %v6637
    %10290 = vmatprep.subr.bf16.mxu0 %v6630
    %10291 = vmatpush1.bf16.msra.mxu0 %v6629
    %10292 = vmatprep.subr.bf16.mxu0 %v6622
    %10293 = vmatpush1.bf16.msra.mxu0 %v6621
    %10294 = vmatprep.subr.bf16.mxu0 %v6614
    %10295 = vmatpush1.bf16.msra.mxu0 %v6613
    %10296 = vmatprep.subr.bf16.mxu0 %v6606
    %10297 = vmatpush1.bf16.msra.mxu0 %v6605
    %10298 = vmatprep.subr.bf16.mxu0 %v6598
    %10299 = vmatpush1.bf16.msra.mxu0 %v6597
    %10300 = vmatprep.subr.bf16.mxu0 %v6590
    %10301 = vmatpush1.bf16.msra.mxu0 %v6589
    %10302 = vmatprep.subr.bf16.mxu0 %v6710
    %10303 = vmatpush2.bf16.msra.mxu0 %v6709
    %10304 = vmatprep.subr.bf16.mxu0 %v6702
    %10305 = vmatpush2.bf16.msra.mxu0 %v6701
    %10306 = vmatprep.subr.bf16.mxu0 %v6694
    %10307 = vmatpush2.bf16.msra.mxu0 %v6693
    %10308 = vmatprep.subr.bf16.mxu0 %v6686
    %10309 = vmatpush2.bf16.msra.mxu0 %v6685
    %10310 = vmatprep.subr.bf16.mxu0 %v6678
    %10311 = vmatpush2.bf16.msra.mxu0 %v6677
    %10312 = vmatprep.subr.bf16.mxu0 %v6670
    %10313 = vmatpush2.bf16.msra.mxu0 %v6669
    %10314 = vmatprep.subr.bf16.mxu0 %v6662
    %10315 = vmatpush2.bf16.msra.mxu0 %v6661
    %10316 = vmatprep.subr.bf16.mxu0 %v6654
    %10317 = vmatpush2.bf16.msra.mxu0 %v6653
    %10318 = vmatprep.mubr.bf16.mxu0 %v1276
    %10319 = vmatmul.mubr.bf16.gmra.mxu0 %v1275
    %v10320 = vpop.f32.mrf.mxu0
    %v10321 = vadd.f32 %v10280, %v10320
    %v10322 = vpop.f32.mrf.mxu0
    %v10323 = vadd.f32 %v10282, %v10322
    %v10324 = vpop.f32.mrf.mxu0
    %v10325 = vpop.f32.mrf.mxu0
    %10326 = vdwg.mxu0
    %10327 = vmatprep.subr.bf16.mxu0 %v6774
    %10328 = vmatpush1.bf16.msra.mxu0 %v6773
    %10329 = vmatprep.subr.bf16.mxu0 %v6766
    %10330 = vmatpush1.bf16.msra.mxu0 %v6765
    %10331 = vmatprep.subr.bf16.mxu0 %v6758
    %10332 = vmatpush1.bf16.msra.mxu0 %v6757
    %10333 = vmatprep.subr.bf16.mxu0 %v6750
    %10334 = vmatpush1.bf16.msra.mxu0 %v6749
    %10335 = vmatprep.subr.bf16.mxu0 %v6742
    %10336 = vmatpush1.bf16.msra.mxu0 %v6741
    %10337 = vmatprep.subr.bf16.mxu0 %v6734
    %10338 = vmatpush1.bf16.msra.mxu0 %v6733
    %10339 = vmatprep.subr.bf16.mxu0 %v6726
    %10340 = vmatpush1.bf16.msra.mxu0 %v6725
    %10341 = vmatprep.subr.bf16.mxu0 %v6718
    %10342 = vmatpush1.bf16.msra.mxu0 %v6717
    %10343 = vmatprep.subr.bf16.mxu0 %v6838
    %10344 = vmatpush2.bf16.msra.mxu0 %v6837
    %10345 = vmatprep.subr.bf16.mxu0 %v6830
    %10346 = vmatpush2.bf16.msra.mxu0 %v6829
    %10347 = vmatprep.subr.bf16.mxu0 %v6822
    %10348 = vmatpush2.bf16.msra.mxu0 %v6821
    %10349 = vmatprep.subr.bf16.mxu0 %v6814
    %10350 = vmatpush2.bf16.msra.mxu0 %v6813
    %10351 = vmatprep.subr.bf16.mxu0 %v6806
    %10352 = vmatpush2.bf16.msra.mxu0 %v6805
    %10353 = vmatprep.subr.bf16.mxu0 %v6798
    %10354 = vmatpush2.bf16.msra.mxu0 %v6797
    %10355 = vmatprep.subr.bf16.mxu0 %v6790
    %10356 = vmatpush2.bf16.msra.mxu0 %v6789
    %10357 = vmatprep.subr.bf16.mxu0 %v6782
    %10358 = vmatpush2.bf16.msra.mxu0 %v6781
    %10359 = vmatprep.mubr.bf16.mxu0 %v1278
    %10360 = vmatmul.mubr.bf16.gmra.mxu0 %v1277
    %v10361 = vpop.f32.mrf.mxu0
    %v10362 = vadd.f32 %v10321, %v10361
    %v10363 = vpop.f32.mrf.mxu0
    %v10364 = vadd.f32 %v10323, %v10363
    %v10365 = vpop.f32.mrf.mxu0
    %v10366 = vpop.f32.mrf.mxu0
    %10367 = vdwg.mxu0
    %10368 = vmatprep.subr.bf16.mxu0 %v6902
    %10369 = vmatpush1.bf16.msra.mxu0 %v6901
    %10370 = vmatprep.subr.bf16.mxu0 %v6894
    %10371 = vmatpush1.bf16.msra.mxu0 %v6893
    %10372 = vmatprep.subr.bf16.mxu0 %v6886
    %10373 = vmatpush1.bf16.msra.mxu0 %v6885
    %10374 = vmatprep.subr.bf16.mxu0 %v6878
    %10375 = vmatpush1.bf16.msra.mxu0 %v6877
    %10376 = vmatprep.subr.bf16.mxu0 %v6870
    %10377 = vmatpush1.bf16.msra.mxu0 %v6869
    %10378 = vmatprep.subr.bf16.mxu0 %v6862
    %10379 = vmatpush1.bf16.msra.mxu0 %v6861
    %10380 = vmatprep.subr.bf16.mxu0 %v6854
    %10381 = vmatpush1.bf16.msra.mxu0 %v6853
    %10382 = vmatprep.subr.bf16.mxu0 %v6846
    %10383 = vmatpush1.bf16.msra.mxu0 %v6845
    %10384 = vmatprep.subr.bf16.mxu0 %v6966
    %10385 = vmatpush2.bf16.msra.mxu0 %v6965
    %10386 = vmatprep.subr.bf16.mxu0 %v6958
    %10387 = vmatpush2.bf16.msra.mxu0 %v6957
    %10388 = vmatprep.subr.bf16.mxu0 %v6950
    %10389 = vmatpush2.bf16.msra.mxu0 %v6949
    %10390 = vmatprep.subr.bf16.mxu0 %v6942
    %10391 = vmatpush2.bf16.msra.mxu0 %v6941
    %10392 = vmatprep.subr.bf16.mxu0 %v6934
    %10393 = vmatpush2.bf16.msra.mxu0 %v6933
    %10394 = vmatprep.subr.bf16.mxu0 %v6926
    %10395 = vmatpush2.bf16.msra.mxu0 %v6925
    %10396 = vmatprep.subr.bf16.mxu0 %v6918
    %10397 = vmatpush2.bf16.msra.mxu0 %v6917
    %10398 = vmatprep.subr.bf16.mxu0 %v6910
    %10399 = vmatpush2.bf16.msra.mxu0 %v6909
    %10400 = vmatprep.mubr.bf16.mxu0 %v1280
    %10401 = vmatmul.mubr.bf16.gmra.mxu0 %v1279
    %v10402 = vpop.f32.mrf.mxu0
    %v10403 = vadd.f32 %v10362, %v10402
    %v10404 = vpop.f32.mrf.mxu0
    %v10405 = vadd.f32 %v10364, %v10404
    %v10406 = vpop.f32.mrf.mxu0
    %v10407 = vpop.f32.mrf.mxu0
    %10408 = vdwg.mxu0
    %10409 = vmatprep.subr.bf16.mxu0 %v7030
    %10410 = vmatpush1.bf16.msra.mxu0 %v7029
    %10411 = vmatprep.subr.bf16.mxu0 %v7022
    %10412 = vmatpush1.bf16.msra.mxu0 %v7021
    %10413 = vmatprep.subr.bf16.mxu0 %v7014
    %10414 = vmatpush1.bf16.msra.mxu0 %v7013
    %10415 = vmatprep.subr.bf16.mxu0 %v7006
    %10416 = vmatpush1.bf16.msra.mxu0 %v7005
    %10417 = vmatprep.subr.bf16.mxu0 %v6998
    %10418 = vmatpush1.bf16.msra.mxu0 %v6997
    %10419 = vmatprep.subr.bf16.mxu0 %v6990
    %10420 = vmatpush1.bf16.msra.mxu0 %v6989
    %10421 = vmatprep.subr.bf16.mxu0 %v6982
    %10422 = vmatpush1.bf16.msra.mxu0 %v6981
    %10423 = vmatprep.subr.bf16.mxu0 %v6974
    %10424 = vmatpush1.bf16.msra.mxu0 %v6973
    %10425 = vmatprep.subr.bf16.mxu0 %v7094
    %10426 = vmatpush2.bf16.msra.mxu0 %v7093
    %10427 = vmatprep.subr.bf16.mxu0 %v7086
    %10428 = vmatpush2.bf16.msra.mxu0 %v7085
    %10429 = vmatprep.subr.bf16.mxu0 %v7078
    %10430 = vmatpush2.bf16.msra.mxu0 %v7077
    %10431 = vmatprep.subr.bf16.mxu0 %v7070
    %10432 = vmatpush2.bf16.msra.mxu0 %v7069
    %10433 = vmatprep.subr.bf16.mxu0 %v7062
    %10434 = vmatpush2.bf16.msra.mxu0 %v7061
    %10435 = vmatprep.subr.bf16.mxu0 %v7054
    %10436 = vmatpush2.bf16.msra.mxu0 %v7053
    %10437 = vmatprep.subr.bf16.mxu0 %v7046
    %10438 = vmatpush2.bf16.msra.mxu0 %v7045
    %10439 = vmatprep.subr.bf16.mxu0 %v7038
    %10440 = vmatpush2.bf16.msra.mxu0 %v7037
    %10441 = vmatprep.mubr.bf16.mxu0 %v1282
    %10442 = vmatmul.mubr.bf16.gmra.mxu0 %v1281
    %v10443 = vpop.f32.mrf.mxu0
    %v10444 = vadd.f32 %v10403, %v10443
    %v10445 = vpop.f32.mrf.mxu0
    %v10446 = vadd.f32 %v10405, %v10445
    %v10447 = vpop.f32.mrf.mxu0
    %v10448 = vpop.f32.mrf.mxu0
    %10449 = vdwg.mxu0
    %10450 = vmatprep.subr.bf16.mxu0 %v7158
    %10451 = vmatpush1.bf16.msra.mxu0 %v7157
    %10452 = vmatprep.subr.bf16.mxu0 %v7150
    %10453 = vmatpush1.bf16.msra.mxu0 %v7149
    %10454 = vmatprep.subr.bf16.mxu0 %v7142
    %10455 = vmatpush1.bf16.msra.mxu0 %v7141
    %10456 = vmatprep.subr.bf16.mxu0 %v7134
    %10457 = vmatpush1.bf16.msra.mxu0 %v7133
    %10458 = vmatprep.subr.bf16.mxu0 %v7126
    %10459 = vmatpush1.bf16.msra.mxu0 %v7125
    %10460 = vmatprep.subr.bf16.mxu0 %v7118
    %10461 = vmatpush1.bf16.msra.mxu0 %v7117
    %10462 = vmatprep.subr.bf16.mxu0 %v7110
    %10463 = vmatpush1.bf16.msra.mxu0 %v7109
    %10464 = vmatprep.subr.bf16.mxu0 %v7102
    %10465 = vmatpush1.bf16.msra.mxu0 %v7101
    %10466 = vmatprep.subr.bf16.mxu0 %v7222
    %10467 = vmatpush2.bf16.msra.mxu0 %v7221
    %10468 = vmatprep.subr.bf16.mxu0 %v7214
    %10469 = vmatpush2.bf16.msra.mxu0 %v7213
    %10470 = vmatprep.subr.bf16.mxu0 %v7206
    %10471 = vmatpush2.bf16.msra.mxu0 %v7205
    %10472 = vmatprep.subr.bf16.mxu0 %v7198
    %10473 = vmatpush2.bf16.msra.mxu0 %v7197
    %10474 = vmatprep.subr.bf16.mxu0 %v7190
    %10475 = vmatpush2.bf16.msra.mxu0 %v7189
    %10476 = vmatprep.subr.bf16.mxu0 %v7182
    %10477 = vmatpush2.bf16.msra.mxu0 %v7181
    %10478 = vmatprep.subr.bf16.mxu0 %v7174
    %10479 = vmatpush2.bf16.msra.mxu0 %v7173
    %10480 = vmatprep.subr.bf16.mxu0 %v7166
    %10481 = vmatpush2.bf16.msra.mxu0 %v7165
    %10482 = vmatprep.mubr.bf16.mxu0 %v1284
    %10483 = vmatmul.mubr.bf16.gmra.mxu0 %v1283
    %v10484 = vpop.f32.mrf.mxu0
    %v10485 = vadd.f32 %v10444, %v10484
    %v10486 = vpop.f32.mrf.mxu0
    %v10487 = vadd.f32 %v10446, %v10486
    %v10488 = vpop.f32.mrf.mxu0
    %v10489 = vpop.f32.mrf.mxu0
    %10490 = vdwg.mxu0
    %10491 = vmatprep.subr.bf16.mxu0 %v7286
    %10492 = vmatpush1.bf16.msra.mxu0 %v7285
    %10493 = vmatprep.subr.bf16.mxu0 %v7278
    %10494 = vmatpush1.bf16.msra.mxu0 %v7277
    %10495 = vmatprep.subr.bf16.mxu0 %v7270
    %10496 = vmatpush1.bf16.msra.mxu0 %v7269
    %10497 = vmatprep.subr.bf16.mxu0 %v7262
    %10498 = vmatpush1.bf16.msra.mxu0 %v7261
    %10499 = vmatprep.subr.bf16.mxu0 %v7254
    %10500 = vmatpush1.bf16.msra.mxu0 %v7253
    %10501 = vmatprep.subr.bf16.mxu0 %v7246
    %10502 = vmatpush1.bf16.msra.mxu0 %v7245
    %10503 = vmatprep.subr.bf16.mxu0 %v7238
    %10504 = vmatpush1.bf16.msra.mxu0 %v7237
    %10505 = vmatprep.subr.bf16.mxu0 %v7230
    %10506 = vmatpush1.bf16.msra.mxu0 %v7229
    %10507 = vmatprep.subr.bf16.mxu0 %v7350
    %10508 = vmatpush2.bf16.msra.mxu0 %v7349
    %10509 = vmatprep.subr.bf16.mxu0 %v7342
    %10510 = vmatpush2.bf16.msra.mxu0 %v7341
    %10511 = vmatprep.subr.bf16.mxu0 %v7334
    %10512 = vmatpush2.bf16.msra.mxu0 %v7333
    %10513 = vmatprep.subr.bf16.mxu0 %v7326
    %10514 = vmatpush2.bf16.msra.mxu0 %v7325
    %10515 = vmatprep.subr.bf16.mxu0 %v7318
    %10516 = vmatpush2.bf16.msra.mxu0 %v7317
    %10517 = vmatprep.subr.bf16.mxu0 %v7310
    %10518 = vmatpush2.bf16.msra.mxu0 %v7309
    %10519 = vmatprep.subr.bf16.mxu0 %v7302
    %10520 = vmatpush2.bf16.msra.mxu0 %v7301
    %10521 = vmatprep.subr.bf16.mxu0 %v7294
    %10522 = vmatpush2.bf16.msra.mxu0 %v7293
    %10523 = vmatprep.mubr.bf16.mxu0 %v1286
    %10524 = vmatmul.mubr.bf16.gmra.mxu0 %v1285
    %v10525 = vpop.f32.mrf.mxu0
    %v10526 = vadd.f32 %v10485, %v10525
    %v10527 = vpop.f32.mrf.mxu0
    %v10528 = vadd.f32 %v10487, %v10527
    %v10529 = vpop.f32.mrf.mxu0
    %v10530 = vpop.f32.mrf.mxu0
    %10531 = vdwg.mxu0
    %10532 = vmatprep.subr.bf16.mxu0 %v7414
    %10533 = vmatpush1.bf16.msra.mxu0 %v7413
    %10534 = vmatprep.subr.bf16.mxu0 %v7406
    %10535 = vmatpush1.bf16.msra.mxu0 %v7405
    %10536 = vmatprep.subr.bf16.mxu0 %v7398
    %10537 = vmatpush1.bf16.msra.mxu0 %v7397
    %10538 = vmatprep.subr.bf16.mxu0 %v7390
    %10539 = vmatpush1.bf16.msra.mxu0 %v7389
    %10540 = vmatprep.subr.bf16.mxu0 %v7382
    %10541 = vmatpush1.bf16.msra.mxu0 %v7381
    %10542 = vmatprep.subr.bf16.mxu0 %v7374
    %10543 = vmatpush1.bf16.msra.mxu0 %v7373
    %10544 = vmatprep.subr.bf16.mxu0 %v7366
    %10545 = vmatpush1.bf16.msra.mxu0 %v7365
    %10546 = vmatprep.subr.bf16.mxu0 %v7358
    %10547 = vmatpush1.bf16.msra.mxu0 %v7357
    %10548 = vmatprep.subr.bf16.mxu0 %v7478
    %10549 = vmatpush2.bf16.msra.mxu0 %v7477
    %10550 = vmatprep.subr.bf16.mxu0 %v7470
    %10551 = vmatpush2.bf16.msra.mxu0 %v7469
    %10552 = vmatprep.subr.bf16.mxu0 %v7462
    %10553 = vmatpush2.bf16.msra.mxu0 %v7461
    %10554 = vmatprep.subr.bf16.mxu0 %v7454
    %10555 = vmatpush2.bf16.msra.mxu0 %v7453
    %10556 = vmatprep.subr.bf16.mxu0 %v7446
    %10557 = vmatpush2.bf16.msra.mxu0 %v7445
    %10558 = vmatprep.subr.bf16.mxu0 %v7438
    %10559 = vmatpush2.bf16.msra.mxu0 %v7437
    %10560 = vmatprep.subr.bf16.mxu0 %v7430
    %10561 = vmatpush2.bf16.msra.mxu0 %v7429
    %10562 = vmatprep.subr.bf16.mxu0 %v7422
    %10563 = vmatpush2.bf16.msra.mxu0 %v7421
    %10564 = vmatprep.mubr.bf16.mxu0 %v1288
    %10565 = vmatmul.mubr.bf16.gmra.mxu0 %v1287
    %v10566 = vpop.f32.mrf.mxu0
    %v10567 = vadd.f32 %v10526, %v10566
    %v10568 = vpop.f32.mrf.mxu0
    %v10569 = vadd.f32 %v10528, %v10568
    %v10570 = vpop.f32.mrf.mxu0
    %v10571 = vpop.f32.mrf.mxu0
    %10572 = vdwg.mxu0
    %10573 = vmatprep.subr.bf16.mxu0 %v7542
    %10574 = vmatpush1.bf16.msra.mxu0 %v7541
    %10575 = vmatprep.subr.bf16.mxu0 %v7534
    %10576 = vmatpush1.bf16.msra.mxu0 %v7533
    %10577 = vmatprep.subr.bf16.mxu0 %v7526
    %10578 = vmatpush1.bf16.msra.mxu0 %v7525
    %10579 = vmatprep.subr.bf16.mxu0 %v7518
    %10580 = vmatpush1.bf16.msra.mxu0 %v7517
    %10581 = vmatprep.subr.bf16.mxu0 %v7510
    %10582 = vmatpush1.bf16.msra.mxu0 %v7509
    %10583 = vmatprep.subr.bf16.mxu0 %v7502
    %10584 = vmatpush1.bf16.msra.mxu0 %v7501
    %10585 = vmatprep.subr.bf16.mxu0 %v7494
    %10586 = vmatpush1.bf16.msra.mxu0 %v7493
    %10587 = vmatprep.subr.bf16.mxu0 %v7486
    %10588 = vmatpush1.bf16.msra.mxu0 %v7485
    %10589 = vmatprep.subr.bf16.mxu0 %v7606
    %10590 = vmatpush2.bf16.msra.mxu0 %v7605
    %10591 = vmatprep.subr.bf16.mxu0 %v7598
    %10592 = vmatpush2.bf16.msra.mxu0 %v7597
    %10593 = vmatprep.subr.bf16.mxu0 %v7590
    %10594 = vmatpush2.bf16.msra.mxu0 %v7589
    %10595 = vmatprep.subr.bf16.mxu0 %v7582
    %10596 = vmatpush2.bf16.msra.mxu0 %v7581
    %10597 = vmatprep.subr.bf16.mxu0 %v7574
    %10598 = vmatpush2.bf16.msra.mxu0 %v7573
    %10599 = vmatprep.subr.bf16.mxu0 %v7566
    %10600 = vmatpush2.bf16.msra.mxu0 %v7565
    %10601 = vmatprep.subr.bf16.mxu0 %v7558
    %10602 = vmatpush2.bf16.msra.mxu0 %v7557
    %10603 = vmatprep.subr.bf16.mxu0 %v7550
    %10604 = vmatpush2.bf16.msra.mxu0 %v7549
    %10605 = vmatprep.mubr.bf16.mxu0 %v1290
    %10606 = vmatmul.mubr.bf16.gmra.mxu0 %v1289
    %v10607 = vpop.f32.mrf.mxu0
    %v10608 = vadd.f32 %v10567, %v10607
    %v10609 = vpop.f32.mrf.mxu0
    %v10610 = vadd.f32 %v10569, %v10609
    %v10611 = vpop.f32.mrf.mxu0
    %v10612 = vpop.f32.mrf.mxu0
    %10613 = vdwg.mxu0
    %10614 = vmatprep.subr.bf16.mxu0 %v7670
    %10615 = vmatpush1.bf16.msra.mxu0 %v7669
    %10616 = vmatprep.subr.bf16.mxu0 %v7662
    %10617 = vmatpush1.bf16.msra.mxu0 %v7661
    %10618 = vmatprep.subr.bf16.mxu0 %v7654
    %10619 = vmatpush1.bf16.msra.mxu0 %v7653
    %10620 = vmatprep.subr.bf16.mxu0 %v7646
    %10621 = vmatpush1.bf16.msra.mxu0 %v7645
    %10622 = vmatprep.subr.bf16.mxu0 %v7638
    %10623 = vmatpush1.bf16.msra.mxu0 %v7637
    %10624 = vmatprep.subr.bf16.mxu0 %v7630
    %10625 = vmatpush1.bf16.msra.mxu0 %v7629
    %10626 = vmatprep.subr.bf16.mxu0 %v7622
    %10627 = vmatpush1.bf16.msra.mxu0 %v7621
    %10628 = vmatprep.subr.bf16.mxu0 %v7614
    %10629 = vmatpush1.bf16.msra.mxu0 %v7613
    %10630 = vmatprep.subr.bf16.mxu0 %v7734
    %10631 = vmatpush2.bf16.msra.mxu0 %v7733
    %10632 = vmatprep.subr.bf16.mxu0 %v7726
    %10633 = vmatpush2.bf16.msra.mxu0 %v7725
    %10634 = vmatprep.subr.bf16.mxu0 %v7718
    %10635 = vmatpush2.bf16.msra.mxu0 %v7717
    %10636 = vmatprep.subr.bf16.mxu0 %v7710
    %10637 = vmatpush2.bf16.msra.mxu0 %v7709
    %10638 = vmatprep.subr.bf16.mxu0 %v7702
    %10639 = vmatpush2.bf16.msra.mxu0 %v7701
    %10640 = vmatprep.subr.bf16.mxu0 %v7694
    %10641 = vmatpush2.bf16.msra.mxu0 %v7693
    %10642 = vmatprep.subr.bf16.mxu0 %v7686
    %10643 = vmatpush2.bf16.msra.mxu0 %v7685
    %10644 = vmatprep.subr.bf16.mxu0 %v7678
    %10645 = vmatpush2.bf16.msra.mxu0 %v7677
    %10646 = vmatprep.mubr.bf16.mxu0 %v1292
    %10647 = vmatmul.mubr.bf16.gmra.mxu0 %v1291
    %v10648 = vpop.f32.mrf.mxu0
    %v10649 = vadd.f32 %v10608, %v10648
    %v10650 = vpop.f32.mrf.mxu0
    %v10651 = vadd.f32 %v10610, %v10650
    %v10652 = vpop.f32.mrf.mxu0
    %v10653 = vpop.f32.mrf.mxu0
    %10654 = vdwg.mxu0
    %s10655 = sld [smem:[#allocation23 + $0x1]]
    %vm10656 = vcmp.ge.f32.partialorder %v9419, 0.0
    %vm10657 = vcmp.ge.f32.partialorder %v9421, 0.0
    %vm10658 = vcmp.ge.f32.partialorder %v9829, 0.0
    %vm10659 = vcmp.ge.f32.partialorder %v9831, 0.0
    %vm10660 = vcmp.ge.f32.partialorder %v10239, 0.0
    %vm10661 = vcmp.ge.f32.partialorder %v10241, 0.0
    %vm10662 = vcmp.ge.f32.partialorder %v10649, 0.0
    %vm10663 = vcmp.ge.f32.partialorder %v10651, 0.0
    %v10664 = vstv %s10655
    %v10665 = vmul.f32 %v10664, %v9419
    %v10666 = vmul.f32 %v10664, %v9421
    %v10667 = vmul.f32 %v10664, %v9829
    %v10668 = vmul.f32 %v10664, %v9831
    %v10669 = vmul.f32 %v10664, %v10239
    %v10670 = vmul.f32 %v10664, %v10241
    %v10671 = vmul.f32 %v10664, %v10649
    %v10672 = vmul.f32 %v10664, %v10651
    %v10673 = vsel %vm10656, %v9419, %v10665
    %v10674 = vsel %vm10657, %v9421, %v10666
    %v10675 = vsel %vm10658, %v9829, %v10667
    %v10676 = vsel %vm10659, %v9831, %v10668
    %v10677 = vsel %vm10660, %v10239, %v10669
    %v10678 = vsel %vm10661, %v10241, %v10670
    %v10679 = vsel %vm10662, %v10649, %v10671
    %v10680 = vsel %vm10663, %v10651, %v10672
    %v10681 = vpack.c.bf16 %v10673, %v10673
    %v10682 = vpack.c.bf16 %v10674, %v10674
    %v10683 = vpack.c.bf16 %v10675, %v10675
    %v10684 = vpack.c.bf16 %v10676, %v10676
    %v10685 = vpack.c.bf16 %v10677, %v10677
    %v10686 = vpack.c.bf16 %v10678, %v10678
    %v10687 = vpack.c.bf16 %v10679, %v10679
    %v10688 = vpack.c.bf16 %v10680, %v10680
    %v10689 = vld [vmem:[#allocation12] sm:$0xff]
    %v10690 = vld [vmem:[#allocation12 + $0x8] sm:$0xff]
    %v10691 = vld [vmem:[#allocation12 + $0x10] sm:$0xff]
    %v10692 = vld [vmem:[#allocation12 + $0x18] sm:$0xff]
    %v10693 = vld [vmem:[#allocation12 + $0x20] sm:$0xff]
    %v10694 = vld [vmem:[#allocation12 + $0x28] sm:$0xff]
    %v10695 = vld [vmem:[#allocation12 + $0x30] sm:$0xff]
    %v10696 = vld [vmem:[#allocation12 + $0x38] sm:$0xff]
    %v10697 = vld [vmem:[#allocation12 + $0x40] sm:$0xff]
    %v10698 = vld [vmem:[#allocation12 + $0x48] sm:$0xff]
    %v10699 = vld [vmem:[#allocation12 + $0x50] sm:$0xff]
    %v10700 = vld [vmem:[#allocation12 + $0x58] sm:$0xff]
    %v10701 = vld [vmem:[#allocation12 + $0x60] sm:$0xff]
    %v10702 = vld [vmem:[#allocation12 + $0x68] sm:$0xff]
    %v10703 = vld [vmem:[#allocation12 + $0x70] sm:$0xff]
    %v10704 = vld [vmem:[#allocation12 + $0x78] sm:$0xff]
    %v10705 = vld [vmem:[#allocation12 + $0x80] sm:$0xff]
    %v10706 = vld [vmem:[#allocation12 + $0x88] sm:$0xff]
    %v10707 = vld [vmem:[#allocation12 + $0x90] sm:$0xff]
    %v10708 = vld [vmem:[#allocation12 + $0x98] sm:$0xff]
    %v10709 = vld [vmem:[#allocation12 + $0xa0] sm:$0xff]
    %v10710 = vld [vmem:[#allocation12 + $0xa8] sm:$0xff]
    %v10711 = vld [vmem:[#allocation12 + $0xb0] sm:$0xff]
    %v10712 = vld [vmem:[#allocation12 + $0xb8] sm:$0xff]
    %v10713 = vld [vmem:[#allocation12 + $0xc0] sm:$0xff]
    %v10714 = vld [vmem:[#allocation12 + $0xc8] sm:$0xff]
    %v10715 = vld [vmem:[#allocation12 + $0xd0] sm:$0xff]
    %v10716 = vld [vmem:[#allocation12 + $0xd8] sm:$0xff]
    %v10717 = vld [vmem:[#allocation12 + $0xe0] sm:$0xff]
    %v10718 = vld [vmem:[#allocation12 + $0xe8] sm:$0xff]
    %v10719 = vld [vmem:[#allocation12 + $0xf0] sm:$0xff]
    %v10720 = vld [vmem:[#allocation12 + $0xf8] sm:$0xff]
    %v10721 = vld [vmem:[#allocation12 + $0x100] sm:$0xff]
    %v10722 = vld [vmem:[#allocation12 + $0x108] sm:$0xff]
    %v10723 = vld [vmem:[#allocation12 + $0x110] sm:$0xff]
    %v10724 = vld [vmem:[#allocation12 + $0x118] sm:$0xff]
    %v10725 = vld [vmem:[#allocation12 + $0x120] sm:$0xff]
    %v10726 = vld [vmem:[#allocation12 + $0x128] sm:$0xff]
    %v10727 = vld [vmem:[#allocation12 + $0x130] sm:$0xff]
    %v10728 = vld [vmem:[#allocation12 + $0x138] sm:$0xff]
    %v10729 = vld [vmem:[#allocation12 + $0x140] sm:$0xff]
    %v10730 = vld [vmem:[#allocation12 + $0x148] sm:$0xff]
    %v10731 = vld [vmem:[#allocation12 + $0x150] sm:$0xff]
    %v10732 = vld [vmem:[#allocation12 + $0x158] sm:$0xff]
    %v10733 = vld [vmem:[#allocation12 + $0x160] sm:$0xff]
    %v10734 = vld [vmem:[#allocation12 + $0x168] sm:$0xff]
    %v10735 = vld [vmem:[#allocation12 + $0x170] sm:$0xff]
    %v10736 = vld [vmem:[#allocation12 + $0x178] sm:$0xff]
    %v10737 = vld [vmem:[#allocation12 + $0x180] sm:$0xff]
    %v10738 = vld [vmem:[#allocation12 + $0x188] sm:$0xff]
    %v10739 = vld [vmem:[#allocation12 + $0x190] sm:$0xff]
    %v10740 = vld [vmem:[#allocation12 + $0x198] sm:$0xff]
    %v10741 = vld [vmem:[#allocation12 + $0x1a0] sm:$0xff]
    %v10742 = vld [vmem:[#allocation12 + $0x1a8] sm:$0xff]
    %v10743 = vld [vmem:[#allocation12 + $0x1b0] sm:$0xff]
    %v10744 = vld [vmem:[#allocation12 + $0x1b8] sm:$0xff]
    %v10745 = vld [vmem:[#allocation12 + $0x1c0] sm:$0xff]
    %v10746 = vld [vmem:[#allocation12 + $0x1c8] sm:$0xff]
    %v10747 = vld [vmem:[#allocation12 + $0x1d0] sm:$0xff]
    %v10748 = vld [vmem:[#allocation12 + $0x1d8] sm:$0xff]
    %v10749 = vld [vmem:[#allocation12 + $0x1e0] sm:$0xff]
    %v10750 = vld [vmem:[#allocation12 + $0x1e8] sm:$0xff]
    %v10751 = vld [vmem:[#allocation12 + $0x1f0] sm:$0xff]
    %v10752 = vld [vmem:[#allocation12 + $0x1f8] sm:$0xff]
    %v10753 = vld [vmem:[#allocation12 + $0x200] sm:$0xff]
    %v10754 = vld [vmem:[#allocation12 + $0x208] sm:$0xff]
    %v10755 = vld [vmem:[#allocation12 + $0x210] sm:$0xff]
    %v10756 = vld [vmem:[#allocation12 + $0x218] sm:$0xff]
    %v10757 = vld [vmem:[#allocation12 + $0x220] sm:$0xff]
    %v10758 = vld [vmem:[#allocation12 + $0x228] sm:$0xff]
    %v10759 = vld [vmem:[#allocation12 + $0x230] sm:$0xff]
    %v10760 = vld [vmem:[#allocation12 + $0x238] sm:$0xff]
    %v10761 = vld [vmem:[#allocation12 + $0x240] sm:$0xff]
    %v10762 = vld [vmem:[#allocation12 + $0x248] sm:$0xff]
    %v10763 = vld [vmem:[#allocation12 + $0x250] sm:$0xff]
    %v10764 = vld [vmem:[#allocation12 + $0x258] sm:$0xff]
    %v10765 = vld [vmem:[#allocation12 + $0x260] sm:$0xff]
    %v10766 = vld [vmem:[#allocation12 + $0x268] sm:$0xff]
    %v10767 = vld [vmem:[#allocation12 + $0x270] sm:$0xff]
    %v10768 = vld [vmem:[#allocation12 + $0x278] sm:$0xff]
    %v10769 = vld [vmem:[#allocation12 + $0x280] sm:$0xff]
    %v10770 = vld [vmem:[#allocation12 + $0x288] sm:$0xff]
    %v10771 = vld [vmem:[#allocation12 + $0x290] sm:$0xff]
    %v10772 = vld [vmem:[#allocation12 + $0x298] sm:$0xff]
    %v10773 = vld [vmem:[#allocation12 + $0x2a0] sm:$0xff]
    %v10774 = vld [vmem:[#allocation12 + $0x2a8] sm:$0xff]
    %v10775 = vld [vmem:[#allocation12 + $0x2b0] sm:$0xff]
    %v10776 = vld [vmem:[#allocation12 + $0x2b8] sm:$0xff]
    %v10777 = vld [vmem:[#allocation12 + $0x2c0] sm:$0xff]
    %v10778 = vld [vmem:[#allocation12 + $0x2c8] sm:$0xff]
    %v10779 = vld [vmem:[#allocation12 + $0x2d0] sm:$0xff]
    %v10780 = vld [vmem:[#allocation12 + $0x2d8] sm:$0xff]
    %v10781 = vld [vmem:[#allocation12 + $0x2e0] sm:$0xff]
    %v10782 = vld [vmem:[#allocation12 + $0x2e8] sm:$0xff]
    %v10783 = vld [vmem:[#allocation12 + $0x2f0] sm:$0xff]
    %v10784 = vld [vmem:[#allocation12 + $0x2f8] sm:$0xff]
    %v10785 = vld [vmem:[#allocation12 + $0x300] sm:$0xff]
    %v10786 = vld [vmem:[#allocation12 + $0x308] sm:$0xff]
    %v10787 = vld [vmem:[#allocation12 + $0x310] sm:$0xff]
    %v10788 = vld [vmem:[#allocation12 + $0x318] sm:$0xff]
    %v10789 = vld [vmem:[#allocation12 + $0x320] sm:$0xff]
    %v10790 = vld [vmem:[#allocation12 + $0x328] sm:$0xff]
    %v10791 = vld [vmem:[#allocation12 + $0x330] sm:$0xff]
    %v10792 = vld [vmem:[#allocation12 + $0x338] sm:$0xff]
    %v10793 = vld [vmem:[#allocation12 + $0x340] sm:$0xff]
    %v10794 = vld [vmem:[#allocation12 + $0x348] sm:$0xff]
    %v10795 = vld [vmem:[#allocation12 + $0x350] sm:$0xff]
    %v10796 = vld [vmem:[#allocation12 + $0x358] sm:$0xff]
    %v10797 = vld [vmem:[#allocation12 + $0x360] sm:$0xff]
    %v10798 = vld [vmem:[#allocation12 + $0x368] sm:$0xff]
    %v10799 = vld [vmem:[#allocation12 + $0x370] sm:$0xff]
    %v10800 = vld [vmem:[#allocation12 + $0x378] sm:$0xff]
    %v10801 = vld [vmem:[#allocation12 + $0x380] sm:$0xff]
    %v10802 = vld [vmem:[#allocation12 + $0x388] sm:$0xff]
    %v10803 = vld [vmem:[#allocation12 + $0x390] sm:$0xff]
    %v10804 = vld [vmem:[#allocation12 + $0x398] sm:$0xff]
    %v10805 = vld [vmem:[#allocation12 + $0x3a0] sm:$0xff]
    %v10806 = vld [vmem:[#allocation12 + $0x3a8] sm:$0xff]
    %v10807 = vld [vmem:[#allocation12 + $0x3b0] sm:$0xff]
    %v10808 = vld [vmem:[#allocation12 + $0x3b8] sm:$0xff]
    %v10809 = vld [vmem:[#allocation12 + $0x3c0] sm:$0xff]
    %v10810 = vld [vmem:[#allocation12 + $0x3c8] sm:$0xff]
    %v10811 = vld [vmem:[#allocation12 + $0x3d0] sm:$0xff]
    %v10812 = vld [vmem:[#allocation12 + $0x3d8] sm:$0xff]
    %v10813 = vld [vmem:[#allocation12 + $0x3e0] sm:$0xff]
    %v10814 = vld [vmem:[#allocation12 + $0x3e8] sm:$0xff]
    %v10815 = vld [vmem:[#allocation12 + $0x3f0] sm:$0xff]
    %v10816 = vld [vmem:[#allocation12 + $0x3f8] sm:$0xff]
    %v10817 = vld [vmem:[#allocation12 + $0x400] sm:$0xff]
    %v10818 = vld [vmem:[#allocation12 + $0x408] sm:$0xff]
    %v10819 = vld [vmem:[#allocation12 + $0x410] sm:$0xff]
    %v10820 = vld [vmem:[#allocation12 + $0x418] sm:$0xff]
    %v10821 = vld [vmem:[#allocation12 + $0x420] sm:$0xff]
    %v10822 = vld [vmem:[#allocation12 + $0x428] sm:$0xff]
    %v10823 = vld [vmem:[#allocation12 + $0x430] sm:$0xff]
    %v10824 = vld [vmem:[#allocation12 + $0x438] sm:$0xff]
    %v10825 = vld [vmem:[#allocation12 + $0x440] sm:$0xff]
    %v10826 = vld [vmem:[#allocation12 + $0x448] sm:$0xff]
    %v10827 = vld [vmem:[#allocation12 + $0x450] sm:$0xff]
    %v10828 = vld [vmem:[#allocation12 + $0x458] sm:$0xff]
    %v10829 = vld [vmem:[#allocation12 + $0x460] sm:$0xff]
    %v10830 = vld [vmem:[#allocation12 + $0x468] sm:$0xff]
    %v10831 = vld [vmem:[#allocation12 + $0x470] sm:$0xff]
    %v10832 = vld [vmem:[#allocation12 + $0x478] sm:$0xff]
    %v10833 = vld [vmem:[#allocation12 + $0x480] sm:$0xff]
    %v10834 = vld [vmem:[#allocation12 + $0x488] sm:$0xff]
    %v10835 = vld [vmem:[#allocation12 + $0x490] sm:$0xff]
    %v10836 = vld [vmem:[#allocation12 + $0x498] sm:$0xff]
    %v10837 = vld [vmem:[#allocation12 + $0x4a0] sm:$0xff]
    %v10838 = vld [vmem:[#allocation12 + $0x4a8] sm:$0xff]
    %v10839 = vld [vmem:[#allocation12 + $0x4b0] sm:$0xff]
    %v10840 = vld [vmem:[#allocation12 + $0x4b8] sm:$0xff]
    %v10841 = vld [vmem:[#allocation12 + $0x4c0] sm:$0xff]
    %v10842 = vld [vmem:[#allocation12 + $0x4c8] sm:$0xff]
    %v10843 = vld [vmem:[#allocation12 + $0x4d0] sm:$0xff]
    %v10844 = vld [vmem:[#allocation12 + $0x4d8] sm:$0xff]
    %v10845 = vld [vmem:[#allocation12 + $0x4e0] sm:$0xff]
    %v10846 = vld [vmem:[#allocation12 + $0x4e8] sm:$0xff]
    %v10847 = vld [vmem:[#allocation12 + $0x4f0] sm:$0xff]
    %v10848 = vld [vmem:[#allocation12 + $0x4f8] sm:$0xff]
    %v10849 = vld [vmem:[#allocation12 + $0x500] sm:$0xff]
    %v10850 = vld [vmem:[#allocation12 + $0x508] sm:$0xff]
    %v10851 = vld [vmem:[#allocation12 + $0x510] sm:$0xff]
    %v10852 = vld [vmem:[#allocation12 + $0x518] sm:$0xff]
    %v10853 = vld [vmem:[#allocation12 + $0x520] sm:$0xff]
    %v10854 = vld [vmem:[#allocation12 + $0x528] sm:$0xff]
    %v10855 = vld [vmem:[#allocation12 + $0x530] sm:$0xff]
    %v10856 = vld [vmem:[#allocation12 + $0x538] sm:$0xff]
    %v10857 = vld [vmem:[#allocation12 + $0x540] sm:$0xff]
    %v10858 = vld [vmem:[#allocation12 + $0x548] sm:$0xff]
    %v10859 = vld [vmem:[#allocation12 + $0x550] sm:$0xff]
    %v10860 = vld [vmem:[#allocation12 + $0x558] sm:$0xff]
    %v10861 = vld [vmem:[#allocation12 + $0x560] sm:$0xff]
    %v10862 = vld [vmem:[#allocation12 + $0x568] sm:$0xff]
    %v10863 = vld [vmem:[#allocation12 + $0x570] sm:$0xff]
    %v10864 = vld [vmem:[#allocation12 + $0x578] sm:$0xff]
    %v10865 = vld [vmem:[#allocation12 + $0x580] sm:$0xff]
    %v10866 = vld [vmem:[#allocation12 + $0x588] sm:$0xff]
    %v10867 = vld [vmem:[#allocation12 + $0x590] sm:$0xff]
    %v10868 = vld [vmem:[#allocation12 + $0x598] sm:$0xff]
    %v10869 = vld [vmem:[#allocation12 + $0x5a0] sm:$0xff]
    %v10870 = vld [vmem:[#allocation12 + $0x5a8] sm:$0xff]
    %v10871 = vld [vmem:[#allocation12 + $0x5b0] sm:$0xff]
    %v10872 = vld [vmem:[#allocation12 + $0x5b8] sm:$0xff]
    %v10873 = vld [vmem:[#allocation12 + $0x5c0] sm:$0xff]
    %v10874 = vld [vmem:[#allocation12 + $0x5c8] sm:$0xff]
    %v10875 = vld [vmem:[#allocation12 + $0x5d0] sm:$0xff]
    %v10876 = vld [vmem:[#allocation12 + $0x5d8] sm:$0xff]
    %v10877 = vld [vmem:[#allocation12 + $0x5e0] sm:$0xff]
    %v10878 = vld [vmem:[#allocation12 + $0x5e8] sm:$0xff]
    %v10879 = vld [vmem:[#allocation12 + $0x5f0] sm:$0xff]
    %v10880 = vld [vmem:[#allocation12 + $0x5f8] sm:$0xff]
    %v10881 = vld [vmem:[#allocation12 + $0x600] sm:$0xff]
    %v10882 = vld [vmem:[#allocation12 + $0x608] sm:$0xff]
    %v10883 = vld [vmem:[#allocation12 + $0x610] sm:$0xff]
    %v10884 = vld [vmem:[#allocation12 + $0x618] sm:$0xff]
    %v10885 = vld [vmem:[#allocation12 + $0x620] sm:$0xff]
    %v10886 = vld [vmem:[#allocation12 + $0x628] sm:$0xff]
    %v10887 = vld [vmem:[#allocation12 + $0x630] sm:$0xff]
    %v10888 = vld [vmem:[#allocation12 + $0x638] sm:$0xff]
    %v10889 = vld [vmem:[#allocation12 + $0x640] sm:$0xff]
    %v10890 = vld [vmem:[#allocation12 + $0x648] sm:$0xff]
    %v10891 = vld [vmem:[#allocation12 + $0x650] sm:$0xff]
    %v10892 = vld [vmem:[#allocation12 + $0x658] sm:$0xff]
    %v10893 = vld [vmem:[#allocation12 + $0x660] sm:$0xff]
    %v10894 = vld [vmem:[#allocation12 + $0x668] sm:$0xff]
    %v10895 = vld [vmem:[#allocation12 + $0x670] sm:$0xff]
    %v10896 = vld [vmem:[#allocation12 + $0x678] sm:$0xff]
    %v10897 = vld [vmem:[#allocation12 + $0x680] sm:$0xff]
    %v10898 = vld [vmem:[#allocation12 + $0x688] sm:$0xff]
    %v10899 = vld [vmem:[#allocation12 + $0x690] sm:$0xff]
    %v10900 = vld [vmem:[#allocation12 + $0x698] sm:$0xff]
    %v10901 = vld [vmem:[#allocation12 + $0x6a0] sm:$0xff]
    %v10902 = vld [vmem:[#allocation12 + $0x6a8] sm:$0xff]
    %v10903 = vld [vmem:[#allocation12 + $0x6b0] sm:$0xff]
    %v10904 = vld [vmem:[#allocation12 + $0x6b8] sm:$0xff]
    %v10905 = vld [vmem:[#allocation12 + $0x6c0] sm:$0xff]
    %v10906 = vld [vmem:[#allocation12 + $0x6c8] sm:$0xff]
    %v10907 = vld [vmem:[#allocation12 + $0x6d0] sm:$0xff]
    %v10908 = vld [vmem:[#allocation12 + $0x6d8] sm:$0xff]
    %v10909 = vld [vmem:[#allocation12 + $0x6e0] sm:$0xff]
    %v10910 = vld [vmem:[#allocation12 + $0x6e8] sm:$0xff]
    %v10911 = vld [vmem:[#allocation12 + $0x6f0] sm:$0xff]
    %v10912 = vld [vmem:[#allocation12 + $0x6f8] sm:$0xff]
    %v10913 = vld [vmem:[#allocation12 + $0x700] sm:$0xff]
    %v10914 = vld [vmem:[#allocation12 + $0x708] sm:$0xff]
    %v10915 = vld [vmem:[#allocation12 + $0x710] sm:$0xff]
    %v10916 = vld [vmem:[#allocation12 + $0x718] sm:$0xff]
    %v10917 = vld [vmem:[#allocation12 + $0x720] sm:$0xff]
    %v10918 = vld [vmem:[#allocation12 + $0x728] sm:$0xff]
    %v10919 = vld [vmem:[#allocation12 + $0x730] sm:$0xff]
    %v10920 = vld [vmem:[#allocation12 + $0x738] sm:$0xff]
    %v10921 = vld [vmem:[#allocation12 + $0x740] sm:$0xff]
    %v10922 = vld [vmem:[#allocation12 + $0x748] sm:$0xff]
    %v10923 = vld [vmem:[#allocation12 + $0x750] sm:$0xff]
    %v10924 = vld [vmem:[#allocation12 + $0x758] sm:$0xff]
    %v10925 = vld [vmem:[#allocation12 + $0x760] sm:$0xff]
    %v10926 = vld [vmem:[#allocation12 + $0x768] sm:$0xff]
    %v10927 = vld [vmem:[#allocation12 + $0x770] sm:$0xff]
    %v10928 = vld [vmem:[#allocation12 + $0x778] sm:$0xff]
    %v10929 = vld [vmem:[#allocation12 + $0x780] sm:$0xff]
    %v10930 = vld [vmem:[#allocation12 + $0x788] sm:$0xff]
    %v10931 = vld [vmem:[#allocation12 + $0x790] sm:$0xff]
    %v10932 = vld [vmem:[#allocation12 + $0x798] sm:$0xff]
    %v10933 = vld [vmem:[#allocation12 + $0x7a0] sm:$0xff]
    %v10934 = vld [vmem:[#allocation12 + $0x7a8] sm:$0xff]
    %v10935 = vld [vmem:[#allocation12 + $0x7b0] sm:$0xff]
    %v10936 = vld [vmem:[#allocation12 + $0x7b8] sm:$0xff]
    %v10937 = vld [vmem:[#allocation12 + $0x7c0] sm:$0xff]
    %v10938 = vld [vmem:[#allocation12 + $0x7c8] sm:$0xff]
    %v10939 = vld [vmem:[#allocation12 + $0x7d0] sm:$0xff]
    %v10940 = vld [vmem:[#allocation12 + $0x7d8] sm:$0xff]
    %v10941 = vld [vmem:[#allocation12 + $0x7e0] sm:$0xff]
    %v10942 = vld [vmem:[#allocation12 + $0x7e8] sm:$0xff]
    %v10943 = vld [vmem:[#allocation12 + $0x7f0] sm:$0xff]
    %v10944 = vld [vmem:[#allocation12 + $0x7f8] sm:$0xff]
    %v10945 = vld [vmem:[#allocation14] sm:$0xf]
    %v10947 = vlaneseq
    %v10948 = vshrl.u32 %v10947, 7
    %v10949 = vsub.s32 0, %v10948
    %v10950 = vrot.slane %v10945, %v10949
    %v10951 = vlaneseq
    %v10952 = vshrl.u32 %v10951, 7
    %v10953 = vsub.s32 1, %v10952
    %v10954 = vrot.slane %v10945, %v10953
    %v10955 = vlaneseq
    %v10956 = vshrl.u32 %v10955, 7
    %v10957 = vsub.s32 2, %v10956
    %v10958 = vrot.slane %v10945, %v10957
    %v10959 = vlaneseq
    %v10960 = vshrl.u32 %v10959, 7
    %v10961 = vsub.s32 3, %v10960
    %v10962 = vrot.slane %v10945, %v10961
    %v11223 = vunpack.c.l.b16 %v10689
    %v11224 = vunpack.c.h.b16 %v10689
    %v11225 = vunpack.c.l.b16 %v10690
    %v11226 = vunpack.c.h.b16 %v10690
    %v11227 = vunpack.c.l.b16 %v10691
    %v11228 = vunpack.c.h.b16 %v10691
    %v11229 = vunpack.c.l.b16 %v10692
    %v11230 = vunpack.c.h.b16 %v10692
    %v11231 = vunpack.c.l.b16 %v10693
    %v11232 = vunpack.c.h.b16 %v10693
    %v11233 = vunpack.c.l.b16 %v10694
    %v11234 = vunpack.c.h.b16 %v10694
    %v11235 = vunpack.c.l.b16 %v10695
    %v11236 = vunpack.c.h.b16 %v10695
    %v11237 = vunpack.c.l.b16 %v10696
    %v11238 = vunpack.c.h.b16 %v10696
    %v11239 = vunpack.c.l.b16 %v10697
    %v11240 = vunpack.c.h.b16 %v10697
    %v11241 = vunpack.c.l.b16 %v10698
    %v11242 = vunpack.c.h.b16 %v10698
    %v11243 = vunpack.c.l.b16 %v10699
    %v11244 = vunpack.c.h.b16 %v10699
    %v11245 = vunpack.c.l.b16 %v10700
    %v11246 = vunpack.c.h.b16 %v10700
    %v11247 = vunpack.c.l.b16 %v10701
    %v11248 = vunpack.c.h.b16 %v10701
    %v11249 = vunpack.c.l.b16 %v10702
    %v11250 = vunpack.c.h.b16 %v10702
    %v11251 = vunpack.c.l.b16 %v10703
    %v11252 = vunpack.c.h.b16 %v10703
    %v11253 = vunpack.c.l.b16 %v10704
    %v11254 = vunpack.c.h.b16 %v10704
    %v11255 = vunpack.c.l.b16 %v10705
    %v11256 = vunpack.c.h.b16 %v10705
    %v11257 = vunpack.c.l.b16 %v10706
    %v11258 = vunpack.c.h.b16 %v10706
    %v11259 = vunpack.c.l.b16 %v10707
    %v11260 = vunpack.c.h.b16 %v10707
    %v11261 = vunpack.c.l.b16 %v10708
    %v11262 = vunpack.c.h.b16 %v10708
    %v11263 = vunpack.c.l.b16 %v10709
    %v11264 = vunpack.c.h.b16 %v10709
    %v11265 = vunpack.c.l.b16 %v10710
    %v11266 = vunpack.c.h.b16 %v10710
    %v11267 = vunpack.c.l.b16 %v10711
    %v11268 = vunpack.c.h.b16 %v10711
    %v11269 = vunpack.c.l.b16 %v10712
    %v11270 = vunpack.c.h.b16 %v10712
    %v11271 = vunpack.c.l.b16 %v10713
    %v11272 = vunpack.c.h.b16 %v10713
    %v11273 = vunpack.c.l.b16 %v10714
    %v11274 = vunpack.c.h.b16 %v10714
    %v11275 = vunpack.c.l.b16 %v10715
    %v11276 = vunpack.c.h.b16 %v10715
    %v11277 = vunpack.c.l.b16 %v10716
    %v11278 = vunpack.c.h.b16 %v10716
    %v11279 = vunpack.c.l.b16 %v10717
    %v11280 = vunpack.c.h.b16 %v10717
    %v11281 = vunpack.c.l.b16 %v10718
    %v11282 = vunpack.c.h.b16 %v10718
    %v11283 = vunpack.c.l.b16 %v10719
    %v11284 = vunpack.c.h.b16 %v10719
    %v11285 = vunpack.c.l.b16 %v10720
    %v11286 = vunpack.c.h.b16 %v10720
    %v11287 = vunpack.c.l.b16 %v10721
    %v11288 = vunpack.c.h.b16 %v10721
    %v11289 = vunpack.c.l.b16 %v10722
    %v11290 = vunpack.c.h.b16 %v10722
    %v11291 = vunpack.c.l.b16 %v10723
    %v11292 = vunpack.c.h.b16 %v10723
    %v11293 = vunpack.c.l.b16 %v10724
    %v11294 = vunpack.c.h.b16 %v10724
    %v11295 = vunpack.c.l.b16 %v10725
    %v11296 = vunpack.c.h.b16 %v10725
    %v11297 = vunpack.c.l.b16 %v10726
    %v11298 = vunpack.c.h.b16 %v10726
    %v11299 = vunpack.c.l.b16 %v10727
    %v11300 = vunpack.c.h.b16 %v10727
    %v11301 = vunpack.c.l.b16 %v10728
    %v11302 = vunpack.c.h.b16 %v10728
    %v11303 = vunpack.c.l.b16 %v10729
    %v11304 = vunpack.c.h.b16 %v10729
    %v11305 = vunpack.c.l.b16 %v10730
    %v11306 = vunpack.c.h.b16 %v10730
    %v11307 = vunpack.c.l.b16 %v10731
    %v11308 = vunpack.c.h.b16 %v10731
    %v11309 = vunpack.c.l.b16 %v10732
    %v11310 = vunpack.c.h.b16 %v10732
    %v11311 = vunpack.c.l.b16 %v10733
    %v11312 = vunpack.c.h.b16 %v10733
    %v11313 = vunpack.c.l.b16 %v10734
    %v11314 = vunpack.c.h.b16 %v10734
    %v11315 = vunpack.c.l.b16 %v10735
    %v11316 = vunpack.c.h.b16 %v10735
    %v11317 = vunpack.c.l.b16 %v10736
    %v11318 = vunpack.c.h.b16 %v10736
    %v11319 = vunpack.c.l.b16 %v10737
    %v11320 = vunpack.c.h.b16 %v10737
    %v11321 = vunpack.c.l.b16 %v10738
    %v11322 = vunpack.c.h.b16 %v10738
    %v11323 = vunpack.c.l.b16 %v10739
    %v11324 = vunpack.c.h.b16 %v10739
    %v11325 = vunpack.c.l.b16 %v10740
    %v11326 = vunpack.c.h.b16 %v10740
    %v11327 = vunpack.c.l.b16 %v10741
    %v11328 = vunpack.c.h.b16 %v10741
    %v11329 = vunpack.c.l.b16 %v10742
    %v11330 = vunpack.c.h.b16 %v10742
    %v11331 = vunpack.c.l.b16 %v10743
    %v11332 = vunpack.c.h.b16 %v10743
    %v11333 = vunpack.c.l.b16 %v10744
    %v11334 = vunpack.c.h.b16 %v10744
    %v11335 = vunpack.c.l.b16 %v10745
    %v11336 = vunpack.c.h.b16 %v10745
    %v11337 = vunpack.c.l.b16 %v10746
    %v11338 = vunpack.c.h.b16 %v10746
    %v11339 = vunpack.c.l.b16 %v10747
    %v11340 = vunpack.c.h.b16 %v10747
    %v11341 = vunpack.c.l.b16 %v10748
    %v11342 = vunpack.c.h.b16 %v10748
    %v11343 = vunpack.c.l.b16 %v10749
    %v11344 = vunpack.c.h.b16 %v10749
    %v11345 = vunpack.c.l.b16 %v10750
    %v11346 = vunpack.c.h.b16 %v10750
    %v11347 = vunpack.c.l.b16 %v10751
    %v11348 = vunpack.c.h.b16 %v10751
    %v11349 = vunpack.c.l.b16 %v10752
    %v11350 = vunpack.c.h.b16 %v10752
    %v11351 = vunpack.c.l.b16 %v10753
    %v11352 = vunpack.c.h.b16 %v10753
    %v11353 = vunpack.c.l.b16 %v10754
    %v11354 = vunpack.c.h.b16 %v10754
    %v11355 = vunpack.c.l.b16 %v10755
    %v11356 = vunpack.c.h.b16 %v10755
    %v11357 = vunpack.c.l.b16 %v10756
    %v11358 = vunpack.c.h.b16 %v10756
    %v11359 = vunpack.c.l.b16 %v10757
    %v11360 = vunpack.c.h.b16 %v10757
    %v11361 = vunpack.c.l.b16 %v10758
    %v11362 = vunpack.c.h.b16 %v10758
    %v11363 = vunpack.c.l.b16 %v10759
    %v11364 = vunpack.c.h.b16 %v10759
    %v11365 = vunpack.c.l.b16 %v10760
    %v11366 = vunpack.c.h.b16 %v10760
    %v11367 = vunpack.c.l.b16 %v10761
    %v11368 = vunpack.c.h.b16 %v10761
    %v11369 = vunpack.c.l.b16 %v10762
    %v11370 = vunpack.c.h.b16 %v10762
    %v11371 = vunpack.c.l.b16 %v10763
    %v11372 = vunpack.c.h.b16 %v10763
    %v11373 = vunpack.c.l.b16 %v10764
    %v11374 = vunpack.c.h.b16 %v10764
    %v11375 = vunpack.c.l.b16 %v10765
    %v11376 = vunpack.c.h.b16 %v10765
    %v11377 = vunpack.c.l.b16 %v10766
    %v11378 = vunpack.c.h.b16 %v10766
    %v11379 = vunpack.c.l.b16 %v10767
    %v11380 = vunpack.c.h.b16 %v10767
    %v11381 = vunpack.c.l.b16 %v10768
    %v11382 = vunpack.c.h.b16 %v10768
    %v11383 = vunpack.c.l.b16 %v10769
    %v11384 = vunpack.c.h.b16 %v10769
    %v11385 = vunpack.c.l.b16 %v10770
    %v11386 = vunpack.c.h.b16 %v10770
    %v11387 = vunpack.c.l.b16 %v10771
    %v11388 = vunpack.c.h.b16 %v10771
    %v11389 = vunpack.c.l.b16 %v10772
    %v11390 = vunpack.c.h.b16 %v10772
    %v11391 = vunpack.c.l.b16 %v10773
    %v11392 = vunpack.c.h.b16 %v10773
    %v11393 = vunpack.c.l.b16 %v10774
    %v11394 = vunpack.c.h.b16 %v10774
    %v11395 = vunpack.c.l.b16 %v10775
    %v11396 = vunpack.c.h.b16 %v10775
    %v11397 = vunpack.c.l.b16 %v10776
    %v11398 = vunpack.c.h.b16 %v10776
    %v11399 = vunpack.c.l.b16 %v10777
    %v11400 = vunpack.c.h.b16 %v10777
    %v11401 = vunpack.c.l.b16 %v10778
    %v11402 = vunpack.c.h.b16 %v10778
    %v11403 = vunpack.c.l.b16 %v10779
    %v11404 = vunpack.c.h.b16 %v10779
    %v11405 = vunpack.c.l.b16 %v10780
    %v11406 = vunpack.c.h.b16 %v10780
    %v11407 = vunpack.c.l.b16 %v10781
    %v11408 = vunpack.c.h.b16 %v10781
    %v11409 = vunpack.c.l.b16 %v10782
    %v11410 = vunpack.c.h.b16 %v10782
    %v11411 = vunpack.c.l.b16 %v10783
    %v11412 = vunpack.c.h.b16 %v10783
    %v11413 = vunpack.c.l.b16 %v10784
    %v11414 = vunpack.c.h.b16 %v10784
    %v11415 = vunpack.c.l.b16 %v10785
    %v11416 = vunpack.c.h.b16 %v10785
    %v11417 = vunpack.c.l.b16 %v10786
    %v11418 = vunpack.c.h.b16 %v10786
    %v11419 = vunpack.c.l.b16 %v10787
    %v11420 = vunpack.c.h.b16 %v10787
    %v11421 = vunpack.c.l.b16 %v10788
    %v11422 = vunpack.c.h.b16 %v10788
    %v11423 = vunpack.c.l.b16 %v10789
    %v11424 = vunpack.c.h.b16 %v10789
    %v11425 = vunpack.c.l.b16 %v10790
    %v11426 = vunpack.c.h.b16 %v10790
    %v11427 = vunpack.c.l.b16 %v10791
    %v11428 = vunpack.c.h.b16 %v10791
    %v11429 = vunpack.c.l.b16 %v10792
    %v11430 = vunpack.c.h.b16 %v10792
    %v11431 = vunpack.c.l.b16 %v10793
    %v11432 = vunpack.c.h.b16 %v10793
    %v11433 = vunpack.c.l.b16 %v10794
    %v11434 = vunpack.c.h.b16 %v10794
    %v11435 = vunpack.c.l.b16 %v10795
    %v11436 = vunpack.c.h.b16 %v10795
    %v11437 = vunpack.c.l.b16 %v10796
    %v11438 = vunpack.c.h.b16 %v10796
    %v11439 = vunpack.c.l.b16 %v10797
    %v11440 = vunpack.c.h.b16 %v10797
    %v11441 = vunpack.c.l.b16 %v10798
    %v11442 = vunpack.c.h.b16 %v10798
    %v11443 = vunpack.c.l.b16 %v10799
    %v11444 = vunpack.c.h.b16 %v10799
    %v11445 = vunpack.c.l.b16 %v10800
    %v11446 = vunpack.c.h.b16 %v10800
    %v11447 = vunpack.c.l.b16 %v10801
    %v11448 = vunpack.c.h.b16 %v10801
    %v11449 = vunpack.c.l.b16 %v10802
    %v11450 = vunpack.c.h.b16 %v10802
    %v11451 = vunpack.c.l.b16 %v10803
    %v11452 = vunpack.c.h.b16 %v10803
    %v11453 = vunpack.c.l.b16 %v10804
    %v11454 = vunpack.c.h.b16 %v10804
    %v11455 = vunpack.c.l.b16 %v10805
    %v11456 = vunpack.c.h.b16 %v10805
    %v11457 = vunpack.c.l.b16 %v10806
    %v11458 = vunpack.c.h.b16 %v10806
    %v11459 = vunpack.c.l.b16 %v10807
    %v11460 = vunpack.c.h.b16 %v10807
    %v11461 = vunpack.c.l.b16 %v10808
    %v11462 = vunpack.c.h.b16 %v10808
    %v11463 = vunpack.c.l.b16 %v10809
    %v11464 = vunpack.c.h.b16 %v10809
    %v11465 = vunpack.c.l.b16 %v10810
    %v11466 = vunpack.c.h.b16 %v10810
    %v11467 = vunpack.c.l.b16 %v10811
    %v11468 = vunpack.c.h.b16 %v10811
    %v11469 = vunpack.c.l.b16 %v10812
    %v11470 = vunpack.c.h.b16 %v10812
    %v11471 = vunpack.c.l.b16 %v10813
    %v11472 = vunpack.c.h.b16 %v10813
    %v11473 = vunpack.c.l.b16 %v10814
    %v11474 = vunpack.c.h.b16 %v10814
    %v11475 = vunpack.c.l.b16 %v10815
    %v11476 = vunpack.c.h.b16 %v10815
    %v11477 = vunpack.c.l.b16 %v10816
    %v11478 = vunpack.c.h.b16 %v10816
    %v11479 = vunpack.c.l.b16 %v10817
    %v11480 = vunpack.c.h.b16 %v10817
    %v11481 = vunpack.c.l.b16 %v10818
    %v11482 = vunpack.c.h.b16 %v10818
    %v11483 = vunpack.c.l.b16 %v10819
    %v11484 = vunpack.c.h.b16 %v10819
    %v11485 = vunpack.c.l.b16 %v10820
    %v11486 = vunpack.c.h.b16 %v10820
    %v11487 = vunpack.c.l.b16 %v10821
    %v11488 = vunpack.c.h.b16 %v10821
    %v11489 = vunpack.c.l.b16 %v10822
    %v11490 = vunpack.c.h.b16 %v10822
    %v11491 = vunpack.c.l.b16 %v10823
    %v11492 = vunpack.c.h.b16 %v10823
    %v11493 = vunpack.c.l.b16 %v10824
    %v11494 = vunpack.c.h.b16 %v10824
    %v11495 = vunpack.c.l.b16 %v10825
    %v11496 = vunpack.c.h.b16 %v10825
    %v11497 = vunpack.c.l.b16 %v10826
    %v11498 = vunpack.c.h.b16 %v10826
    %v11499 = vunpack.c.l.b16 %v10827
    %v11500 = vunpack.c.h.b16 %v10827
    %v11501 = vunpack.c.l.b16 %v10828
    %v11502 = vunpack.c.h.b16 %v10828
    %v11503 = vunpack.c.l.b16 %v10829
    %v11504 = vunpack.c.h.b16 %v10829
    %v11505 = vunpack.c.l.b16 %v10830
    %v11506 = vunpack.c.h.b16 %v10830
    %v11507 = vunpack.c.l.b16 %v10831
    %v11508 = vunpack.c.h.b16 %v10831
    %v11509 = vunpack.c.l.b16 %v10832
    %v11510 = vunpack.c.h.b16 %v10832
    %v11511 = vunpack.c.l.b16 %v10833
    %v11512 = vunpack.c.h.b16 %v10833
    %v11513 = vunpack.c.l.b16 %v10834
    %v11514 = vunpack.c.h.b16 %v10834
    %v11515 = vunpack.c.l.b16 %v10835
    %v11516 = vunpack.c.h.b16 %v10835
    %v11517 = vunpack.c.l.b16 %v10836
    %v11518 = vunpack.c.h.b16 %v10836
    %v11519 = vunpack.c.l.b16 %v10837
    %v11520 = vunpack.c.h.b16 %v10837
    %v11521 = vunpack.c.l.b16 %v10838
    %v11522 = vunpack.c.h.b16 %v10838
    %v11523 = vunpack.c.l.b16 %v10839
    %v11524 = vunpack.c.h.b16 %v10839
    %v11525 = vunpack.c.l.b16 %v10840
    %v11526 = vunpack.c.h.b16 %v10840
    %v11527 = vunpack.c.l.b16 %v10841
    %v11528 = vunpack.c.h.b16 %v10841
    %v11529 = vunpack.c.l.b16 %v10842
    %v11530 = vunpack.c.h.b16 %v10842
    %v11531 = vunpack.c.l.b16 %v10843
    %v11532 = vunpack.c.h.b16 %v10843
    %v11533 = vunpack.c.l.b16 %v10844
    %v11534 = vunpack.c.h.b16 %v10844
    %v11535 = vunpack.c.l.b16 %v10845
    %v11536 = vunpack.c.h.b16 %v10845
    %v11537 = vunpack.c.l.b16 %v10846
    %v11538 = vunpack.c.h.b16 %v10846
    %v11539 = vunpack.c.l.b16 %v10847
    %v11540 = vunpack.c.h.b16 %v10847
    %v11541 = vunpack.c.l.b16 %v10848
    %v11542 = vunpack.c.h.b16 %v10848
    %v11543 = vunpack.c.l.b16 %v10849
    %v11544 = vunpack.c.h.b16 %v10849
    %v11545 = vunpack.c.l.b16 %v10850
    %v11546 = vunpack.c.h.b16 %v10850
    %v11547 = vunpack.c.l.b16 %v10851
    %v11548 = vunpack.c.h.b16 %v10851
    %v11549 = vunpack.c.l.b16 %v10852
    %v11550 = vunpack.c.h.b16 %v10852
    %v11551 = vunpack.c.l.b16 %v10853
    %v11552 = vunpack.c.h.b16 %v10853
    %v11553 = vunpack.c.l.b16 %v10854
    %v11554 = vunpack.c.h.b16 %v10854
    %v11555 = vunpack.c.l.b16 %v10855
    %v11556 = vunpack.c.h.b16 %v10855
    %v11557 = vunpack.c.l.b16 %v10856
    %v11558 = vunpack.c.h.b16 %v10856
    %v11559 = vunpack.c.l.b16 %v10857
    %v11560 = vunpack.c.h.b16 %v10857
    %v11561 = vunpack.c.l.b16 %v10858
    %v11562 = vunpack.c.h.b16 %v10858
    %v11563 = vunpack.c.l.b16 %v10859
    %v11564 = vunpack.c.h.b16 %v10859
    %v11565 = vunpack.c.l.b16 %v10860
    %v11566 = vunpack.c.h.b16 %v10860
    %v11567 = vunpack.c.l.b16 %v10861
    %v11568 = vunpack.c.h.b16 %v10861
    %v11569 = vunpack.c.l.b16 %v10862
    %v11570 = vunpack.c.h.b16 %v10862
    %v11571 = vunpack.c.l.b16 %v10863
    %v11572 = vunpack.c.h.b16 %v10863
    %v11573 = vunpack.c.l.b16 %v10864
    %v11574 = vunpack.c.h.b16 %v10864
    %v11575 = vunpack.c.l.b16 %v10865
    %v11576 = vunpack.c.h.b16 %v10865
    %v11577 = vunpack.c.l.b16 %v10866
    %v11578 = vunpack.c.h.b16 %v10866
    %v11579 = vunpack.c.l.b16 %v10867
    %v11580 = vunpack.c.h.b16 %v10867
    %v11581 = vunpack.c.l.b16 %v10868
    %v11582 = vunpack.c.h.b16 %v10868
    %v11583 = vunpack.c.l.b16 %v10869
    %v11584 = vunpack.c.h.b16 %v10869
    %v11585 = vunpack.c.l.b16 %v10870
    %v11586 = vunpack.c.h.b16 %v10870
    %v11587 = vunpack.c.l.b16 %v10871
    %v11588 = vunpack.c.h.b16 %v10871
    %v11589 = vunpack.c.l.b16 %v10872
    %v11590 = vunpack.c.h.b16 %v10872
    %v11591 = vunpack.c.l.b16 %v10873
    %v11592 = vunpack.c.h.b16 %v10873
    %v11593 = vunpack.c.l.b16 %v10874
    %v11594 = vunpack.c.h.b16 %v10874
    %v11595 = vunpack.c.l.b16 %v10875
    %v11596 = vunpack.c.h.b16 %v10875
    %v11597 = vunpack.c.l.b16 %v10876
    %v11598 = vunpack.c.h.b16 %v10876
    %v11599 = vunpack.c.l.b16 %v10877
    %v11600 = vunpack.c.h.b16 %v10877
    %v11601 = vunpack.c.l.b16 %v10878
    %v11602 = vunpack.c.h.b16 %v10878
    %v11603 = vunpack.c.l.b16 %v10879
    %v11604 = vunpack.c.h.b16 %v10879
    %v11605 = vunpack.c.l.b16 %v10880
    %v11606 = vunpack.c.h.b16 %v10880
    %v11607 = vunpack.c.l.b16 %v10881
    %v11608 = vunpack.c.h.b16 %v10881
    %v11609 = vunpack.c.l.b16 %v10882
    %v11610 = vunpack.c.h.b16 %v10882
    %v11611 = vunpack.c.l.b16 %v10883
    %v11612 = vunpack.c.h.b16 %v10883
    %v11613 = vunpack.c.l.b16 %v10884
    %v11614 = vunpack.c.h.b16 %v10884
    %v11615 = vunpack.c.l.b16 %v10885
    %v11616 = vunpack.c.h.b16 %v10885
    %v11617 = vunpack.c.l.b16 %v10886
    %v11618 = vunpack.c.h.b16 %v10886
    %v11619 = vunpack.c.l.b16 %v10887
    %v11620 = vunpack.c.h.b16 %v10887
    %v11621 = vunpack.c.l.b16 %v10888
    %v11622 = vunpack.c.h.b16 %v10888
    %v11623 = vunpack.c.l.b16 %v10889
    %v11624 = vunpack.c.h.b16 %v10889
    %v11625 = vunpack.c.l.b16 %v10890
    %v11626 = vunpack.c.h.b16 %v10890
    %v11627 = vunpack.c.l.b16 %v10891
    %v11628 = vunpack.c.h.b16 %v10891
    %v11629 = vunpack.c.l.b16 %v10892
    %v11630 = vunpack.c.h.b16 %v10892
    %v11631 = vunpack.c.l.b16 %v10893
    %v11632 = vunpack.c.h.b16 %v10893
    %v11633 = vunpack.c.l.b16 %v10894
    %v11634 = vunpack.c.h.b16 %v10894
    %v11635 = vunpack.c.l.b16 %v10895
    %v11636 = vunpack.c.h.b16 %v10895
    %v11637 = vunpack.c.l.b16 %v10896
    %v11638 = vunpack.c.h.b16 %v10896
    %v11639 = vunpack.c.l.b16 %v10897
    %v11640 = vunpack.c.h.b16 %v10897
    %v11641 = vunpack.c.l.b16 %v10898
    %v11642 = vunpack.c.h.b16 %v10898
    %v11643 = vunpack.c.l.b16 %v10899
    %v11644 = vunpack.c.h.b16 %v10899
    %v11645 = vunpack.c.l.b16 %v10900
    %v11646 = vunpack.c.h.b16 %v10900
    %v11647 = vunpack.c.l.b16 %v10901
    %v11648 = vunpack.c.h.b16 %v10901
    %v11649 = vunpack.c.l.b16 %v10902
    %v11650 = vunpack.c.h.b16 %v10902
    %v11651 = vunpack.c.l.b16 %v10903
    %v11652 = vunpack.c.h.b16 %v10903
    %v11653 = vunpack.c.l.b16 %v10904
    %v11654 = vunpack.c.h.b16 %v10904
    %v11655 = vunpack.c.l.b16 %v10905
    %v11656 = vunpack.c.h.b16 %v10905
    %v11657 = vunpack.c.l.b16 %v10906
    %v11658 = vunpack.c.h.b16 %v10906
    %v11659 = vunpack.c.l.b16 %v10907
    %v11660 = vunpack.c.h.b16 %v10907
    %v11661 = vunpack.c.l.b16 %v10908
    %v11662 = vunpack.c.h.b16 %v10908
    %v11663 = vunpack.c.l.b16 %v10909
    %v11664 = vunpack.c.h.b16 %v10909
    %v11665 = vunpack.c.l.b16 %v10910
    %v11666 = vunpack.c.h.b16 %v10910
    %v11667 = vunpack.c.l.b16 %v10911
    %v11668 = vunpack.c.h.b16 %v10911
    %v11669 = vunpack.c.l.b16 %v10912
    %v11670 = vunpack.c.h.b16 %v10912
    %v11671 = vunpack.c.l.b16 %v10913
    %v11672 = vunpack.c.h.b16 %v10913
    %v11673 = vunpack.c.l.b16 %v10914
    %v11674 = vunpack.c.h.b16 %v10914
    %v11675 = vunpack.c.l.b16 %v10915
    %v11676 = vunpack.c.h.b16 %v10915
    %v11677 = vunpack.c.l.b16 %v10916
    %v11678 = vunpack.c.h.b16 %v10916
    %v11679 = vunpack.c.l.b16 %v10917
    %v11680 = vunpack.c.h.b16 %v10917
    %v11681 = vunpack.c.l.b16 %v10918
    %v11682 = vunpack.c.h.b16 %v10918
    %v11683 = vunpack.c.l.b16 %v10919
    %v11684 = vunpack.c.h.b16 %v10919
    %v11685 = vunpack.c.l.b16 %v10920
    %v11686 = vunpack.c.h.b16 %v10920
    %v11687 = vunpack.c.l.b16 %v10921
    %v11688 = vunpack.c.h.b16 %v10921
    %v11689 = vunpack.c.l.b16 %v10922
    %v11690 = vunpack.c.h.b16 %v10922
    %v11691 = vunpack.c.l.b16 %v10923
    %v11692 = vunpack.c.h.b16 %v10923
    %v11693 = vunpack.c.l.b16 %v10924
    %v11694 = vunpack.c.h.b16 %v10924
    %v11695 = vunpack.c.l.b16 %v10925
    %v11696 = vunpack.c.h.b16 %v10925
    %v11697 = vunpack.c.l.b16 %v10926
    %v11698 = vunpack.c.h.b16 %v10926
    %v11699 = vunpack.c.l.b16 %v10927
    %v11700 = vunpack.c.h.b16 %v10927
    %v11701 = vunpack.c.l.b16 %v10928
    %v11702 = vunpack.c.h.b16 %v10928
    %v11703 = vunpack.c.l.b16 %v10929
    %v11704 = vunpack.c.h.b16 %v10929
    %v11705 = vunpack.c.l.b16 %v10930
    %v11706 = vunpack.c.h.b16 %v10930
    %v11707 = vunpack.c.l.b16 %v10931
    %v11708 = vunpack.c.h.b16 %v10931
    %v11709 = vunpack.c.l.b16 %v10932
    %v11710 = vunpack.c.h.b16 %v10932
    %v11711 = vunpack.c.l.b16 %v10933
    %v11712 = vunpack.c.h.b16 %v10933
    %v11713 = vunpack.c.l.b16 %v10934
    %v11714 = vunpack.c.h.b16 %v10934
    %v11715 = vunpack.c.l.b16 %v10935
    %v11716 = vunpack.c.h.b16 %v10935
    %v11717 = vunpack.c.l.b16 %v10936
    %v11718 = vunpack.c.h.b16 %v10936
    %v11719 = vunpack.c.l.b16 %v10937
    %v11720 = vunpack.c.h.b16 %v10937
    %v11721 = vunpack.c.l.b16 %v10938
    %v11722 = vunpack.c.h.b16 %v10938
    %v11723 = vunpack.c.l.b16 %v10939
    %v11724 = vunpack.c.h.b16 %v10939
    %v11725 = vunpack.c.l.b16 %v10940
    %v11726 = vunpack.c.h.b16 %v10940
    %v11727 = vunpack.c.l.b16 %v10941
    %v11728 = vunpack.c.h.b16 %v10941
    %v11729 = vunpack.c.l.b16 %v10942
    %v11730 = vunpack.c.h.b16 %v10942
    %v11731 = vunpack.c.l.b16 %v10943
    %v11732 = vunpack.c.h.b16 %v10943
    %v11733 = vunpack.c.l.b16 %v10944
    %v11734 = vunpack.c.h.b16 %v10944
    %v11735 = vpack.c.b16 %v11227, %v11223
    %v11736 = vpack.c.b16 %v11228, %v11224
    %v11737 = vpack.c.b16 %v11229, %v11225
    %v11738 = vpack.c.b16 %v11230, %v11226
    %v11739 = vpack.c.b16 %v11235, %v11231
    %v11740 = vpack.c.b16 %v11236, %v11232
    %v11741 = vpack.c.b16 %v11237, %v11233
    %v11742 = vpack.c.b16 %v11238, %v11234
    %v11743 = vpack.c.b16 %v11243, %v11239
    %v11744 = vpack.c.b16 %v11244, %v11240
    %v11745 = vpack.c.b16 %v11245, %v11241
    %v11746 = vpack.c.b16 %v11246, %v11242
    %v11747 = vpack.c.b16 %v11251, %v11247
    %v11748 = vpack.c.b16 %v11252, %v11248
    %v11749 = vpack.c.b16 %v11253, %v11249
    %v11750 = vpack.c.b16 %v11254, %v11250
    %v11751 = vpack.c.b16 %v11259, %v11255
    %v11752 = vpack.c.b16 %v11260, %v11256
    %v11753 = vpack.c.b16 %v11261, %v11257
    %v11754 = vpack.c.b16 %v11262, %v11258
    %v11755 = vpack.c.b16 %v11267, %v11263
    %v11756 = vpack.c.b16 %v11268, %v11264
    %v11757 = vpack.c.b16 %v11269, %v11265
    %v11758 = vpack.c.b16 %v11270, %v11266
    %v11759 = vpack.c.b16 %v11275, %v11271
    %v11760 = vpack.c.b16 %v11276, %v11272
    %v11761 = vpack.c.b16 %v11277, %v11273
    %v11762 = vpack.c.b16 %v11278, %v11274
    %v11763 = vpack.c.b16 %v11283, %v11279
    %v11764 = vpack.c.b16 %v11284, %v11280
    %v11765 = vpack.c.b16 %v11285, %v11281
    %v11766 = vpack.c.b16 %v11286, %v11282
    %v11767 = vpack.c.b16 %v11291, %v11287
    %v11768 = vpack.c.b16 %v11292, %v11288
    %v11769 = vpack.c.b16 %v11293, %v11289
    %v11770 = vpack.c.b16 %v11294, %v11290
    %v11771 = vpack.c.b16 %v11299, %v11295
    %v11772 = vpack.c.b16 %v11300, %v11296
    %v11773 = vpack.c.b16 %v11301, %v11297
    %v11774 = vpack.c.b16 %v11302, %v11298
    %v11775 = vpack.c.b16 %v11307, %v11303
    %v11776 = vpack.c.b16 %v11308, %v11304
    %v11777 = vpack.c.b16 %v11309, %v11305
    %v11778 = vpack.c.b16 %v11310, %v11306
    %v11779 = vpack.c.b16 %v11315, %v11311
    %v11780 = vpack.c.b16 %v11316, %v11312
    %v11781 = vpack.c.b16 %v11317, %v11313
    %v11782 = vpack.c.b16 %v11318, %v11314
    %v11783 = vpack.c.b16 %v11323, %v11319
    %v11784 = vpack.c.b16 %v11324, %v11320
    %v11785 = vpack.c.b16 %v11325, %v11321
    %v11786 = vpack.c.b16 %v11326, %v11322
    %v11787 = vpack.c.b16 %v11331, %v11327
    %v11788 = vpack.c.b16 %v11332, %v11328
    %v11789 = vpack.c.b16 %v11333, %v11329
    %v11790 = vpack.c.b16 %v11334, %v11330
    %v11791 = vpack.c.b16 %v11339, %v11335
    %v11792 = vpack.c.b16 %v11340, %v11336
    %v11793 = vpack.c.b16 %v11341, %v11337
    %v11794 = vpack.c.b16 %v11342, %v11338
    %v11795 = vpack.c.b16 %v11347, %v11343
    %v11796 = vpack.c.b16 %v11348, %v11344
    %v11797 = vpack.c.b16 %v11349, %v11345
    %v11798 = vpack.c.b16 %v11350, %v11346
    %v11799 = vpack.c.b16 %v11355, %v11351
    %v11800 = vpack.c.b16 %v11356, %v11352
    %v11801 = vpack.c.b16 %v11357, %v11353
    %v11802 = vpack.c.b16 %v11358, %v11354
    %v11803 = vpack.c.b16 %v11363, %v11359
    %v11804 = vpack.c.b16 %v11364, %v11360
    %v11805 = vpack.c.b16 %v11365, %v11361
    %v11806 = vpack.c.b16 %v11366, %v11362
    %v11807 = vpack.c.b16 %v11371, %v11367
    %v11808 = vpack.c.b16 %v11372, %v11368
    %v11809 = vpack.c.b16 %v11373, %v11369
    %v11810 = vpack.c.b16 %v11374, %v11370
    %v11811 = vpack.c.b16 %v11379, %v11375
    %v11812 = vpack.c.b16 %v11380, %v11376
    %v11813 = vpack.c.b16 %v11381, %v11377
    %v11814 = vpack.c.b16 %v11382, %v11378
    %v11815 = vpack.c.b16 %v11387, %v11383
    %v11816 = vpack.c.b16 %v11388, %v11384
    %v11817 = vpack.c.b16 %v11389, %v11385
    %v11818 = vpack.c.b16 %v11390, %v11386
    %v11819 = vpack.c.b16 %v11395, %v11391
    %v11820 = vpack.c.b16 %v11396, %v11392
    %v11821 = vpack.c.b16 %v11397, %v11393
    %v11822 = vpack.c.b16 %v11398, %v11394
    %v11823 = vpack.c.b16 %v11403, %v11399
    %v11824 = vpack.c.b16 %v11404, %v11400
    %v11825 = vpack.c.b16 %v11405, %v11401
    %v11826 = vpack.c.b16 %v11406, %v11402
    %v11827 = vpack.c.b16 %v11411, %v11407
    %v11828 = vpack.c.b16 %v11412, %v11408
    %v11829 = vpack.c.b16 %v11413, %v11409
    %v11830 = vpack.c.b16 %v11414, %v11410
    %v11831 = vpack.c.b16 %v11419, %v11415
    %v11832 = vpack.c.b16 %v11420, %v11416
    %v11833 = vpack.c.b16 %v11421, %v11417
    %v11834 = vpack.c.b16 %v11422, %v11418
    %v11835 = vpack.c.b16 %v11427, %v11423
    %v11836 = vpack.c.b16 %v11428, %v11424
    %v11837 = vpack.c.b16 %v11429, %v11425
    %v11838 = vpack.c.b16 %v11430, %v11426
    %v11839 = vpack.c.b16 %v11435, %v11431
    %v11840 = vpack.c.b16 %v11436, %v11432
    %v11841 = vpack.c.b16 %v11437, %v11433
    %v11842 = vpack.c.b16 %v11438, %v11434
    %v11843 = vpack.c.b16 %v11443, %v11439
    %v11844 = vpack.c.b16 %v11444, %v11440
    %v11845 = vpack.c.b16 %v11445, %v11441
    %v11846 = vpack.c.b16 %v11446, %v11442
    %v11847 = vpack.c.b16 %v11451, %v11447
    %v11848 = vpack.c.b16 %v11452, %v11448
    %v11849 = vpack.c.b16 %v11453, %v11449
    %v11850 = vpack.c.b16 %v11454, %v11450
    %v11851 = vpack.c.b16 %v11459, %v11455
    %v11852 = vpack.c.b16 %v11460, %v11456
    %v11853 = vpack.c.b16 %v11461, %v11457
    %v11854 = vpack.c.b16 %v11462, %v11458
    %v11855 = vpack.c.b16 %v11467, %v11463
    %v11856 = vpack.c.b16 %v11468, %v11464
    %v11857 = vpack.c.b16 %v11469, %v11465
    %v11858 = vpack.c.b16 %v11470, %v11466
    %v11859 = vpack.c.b16 %v11475, %v11471
    %v11860 = vpack.c.b16 %v11476, %v11472
    %v11861 = vpack.c.b16 %v11477, %v11473
    %v11862 = vpack.c.b16 %v11478, %v11474
    %v11863 = vpack.c.b16 %v11483, %v11479
    %v11864 = vpack.c.b16 %v11484, %v11480
    %v11865 = vpack.c.b16 %v11485, %v11481
    %v11866 = vpack.c.b16 %v11486, %v11482
    %v11867 = vpack.c.b16 %v11491, %v11487
    %v11868 = vpack.c.b16 %v11492, %v11488
    %v11869 = vpack.c.b16 %v11493, %v11489
    %v11870 = vpack.c.b16 %v11494, %v11490
    %v11871 = vpack.c.b16 %v11499, %v11495
    %v11872 = vpack.c.b16 %v11500, %v11496
    %v11873 = vpack.c.b16 %v11501, %v11497
    %v11874 = vpack.c.b16 %v11502, %v11498
    %v11875 = vpack.c.b16 %v11507, %v11503
    %v11876 = vpack.c.b16 %v11508, %v11504
    %v11877 = vpack.c.b16 %v11509, %v11505
    %v11878 = vpack.c.b16 %v11510, %v11506
    %v11879 = vpack.c.b16 %v11515, %v11511
    %v11880 = vpack.c.b16 %v11516, %v11512
    %v11881 = vpack.c.b16 %v11517, %v11513
    %v11882 = vpack.c.b16 %v11518, %v11514
    %v11883 = vpack.c.b16 %v11523, %v11519
    %v11884 = vpack.c.b16 %v11524, %v11520
    %v11885 = vpack.c.b16 %v11525, %v11521
    %v11886 = vpack.c.b16 %v11526, %v11522
    %v11887 = vpack.c.b16 %v11531, %v11527
    %v11888 = vpack.c.b16 %v11532, %v11528
    %v11889 = vpack.c.b16 %v11533, %v11529
    %v11890 = vpack.c.b16 %v11534, %v11530
    %v11891 = vpack.c.b16 %v11539, %v11535
    %v11892 = vpack.c.b16 %v11540, %v11536
    %v11893 = vpack.c.b16 %v11541, %v11537
    %v11894 = vpack.c.b16 %v11542, %v11538
    %v11895 = vpack.c.b16 %v11547, %v11543
    %v11896 = vpack.c.b16 %v11548, %v11544
    %v11897 = vpack.c.b16 %v11549, %v11545
    %v11898 = vpack.c.b16 %v11550, %v11546
    %v11899 = vpack.c.b16 %v11555, %v11551
    %v11900 = vpack.c.b16 %v11556, %v11552
    %v11901 = vpack.c.b16 %v11557, %v11553
    %v11902 = vpack.c.b16 %v11558, %v11554
    %v11903 = vpack.c.b16 %v11563, %v11559
    %v11904 = vpack.c.b16 %v11564, %v11560
    %v11905 = vpack.c.b16 %v11565, %v11561
    %v11906 = vpack.c.b16 %v11566, %v11562
    %v11907 = vpack.c.b16 %v11571, %v11567
    %v11908 = vpack.c.b16 %v11572, %v11568
    %v11909 = vpack.c.b16 %v11573, %v11569
    %v11910 = vpack.c.b16 %v11574, %v11570
    %v11911 = vpack.c.b16 %v11579, %v11575
    %v11912 = vpack.c.b16 %v11580, %v11576
    %v11913 = vpack.c.b16 %v11581, %v11577
    %v11914 = vpack.c.b16 %v11582, %v11578
    %v11915 = vpack.c.b16 %v11587, %v11583
    %v11916 = vpack.c.b16 %v11588, %v11584
    %v11917 = vpack.c.b16 %v11589, %v11585
    %v11918 = vpack.c.b16 %v11590, %v11586
    %v11919 = vpack.c.b16 %v11595, %v11591
    %v11920 = vpack.c.b16 %v11596, %v11592
    %v11921 = vpack.c.b16 %v11597, %v11593
    %v11922 = vpack.c.b16 %v11598, %v11594
    %v11923 = vpack.c.b16 %v11603, %v11599
    %v11924 = vpack.c.b16 %v11604, %v11600
    %v11925 = vpack.c.b16 %v11605, %v11601
    %v11926 = vpack.c.b16 %v11606, %v11602
    %v11927 = vpack.c.b16 %v11611, %v11607
    %v11928 = vpack.c.b16 %v11612, %v11608
    %v11929 = vpack.c.b16 %v11613, %v11609
    %v11930 = vpack.c.b16 %v11614, %v11610
    %v11931 = vpack.c.b16 %v11619, %v11615
    %v11932 = vpack.c.b16 %v11620, %v11616
    %v11933 = vpack.c.b16 %v11621, %v11617
    %v11934 = vpack.c.b16 %v11622, %v11618
    %v11935 = vpack.c.b16 %v11627, %v11623
    %v11936 = vpack.c.b16 %v11628, %v11624
    %v11937 = vpack.c.b16 %v11629, %v11625
    %v11938 = vpack.c.b16 %v11630, %v11626
    %v11939 = vpack.c.b16 %v11635, %v11631
    %v11940 = vpack.c.b16 %v11636, %v11632
    %v11941 = vpack.c.b16 %v11637, %v11633
    %v11942 = vpack.c.b16 %v11638, %v11634
    %v11943 = vpack.c.b16 %v11643, %v11639
    %v11944 = vpack.c.b16 %v11644, %v11640
    %v11945 = vpack.c.b16 %v11645, %v11641
    %v11946 = vpack.c.b16 %v11646, %v11642
    %v11947 = vpack.c.b16 %v11651, %v11647
    %v11948 = vpack.c.b16 %v11652, %v11648
    %v11949 = vpack.c.b16 %v11653, %v11649
    %v11950 = vpack.c.b16 %v11654, %v11650
    %v11951 = vpack.c.b16 %v11659, %v11655
    %v11952 = vpack.c.b16 %v11660, %v11656
    %v11953 = vpack.c.b16 %v11661, %v11657
    %v11954 = vpack.c.b16 %v11662, %v11658
    %v11955 = vpack.c.b16 %v11667, %v11663
    %v11956 = vpack.c.b16 %v11668, %v11664
    %v11957 = vpack.c.b16 %v11669, %v11665
    %v11958 = vpack.c.b16 %v11670, %v11666
    %v11959 = vpack.c.b16 %v11675, %v11671
    %v11960 = vpack.c.b16 %v11676, %v11672
    %v11961 = vpack.c.b16 %v11677, %v11673
    %v11962 = vpack.c.b16 %v11678, %v11674
    %v11963 = vpack.c.b16 %v11683, %v11679
    %v11964 = vpack.c.b16 %v11684, %v11680
    %v11965 = vpack.c.b16 %v11685, %v11681
    %v11966 = vpack.c.b16 %v11686, %v11682
    %v11967 = vpack.c.b16 %v11691, %v11687
    %v11968 = vpack.c.b16 %v11692, %v11688
    %v11969 = vpack.c.b16 %v11693, %v11689
    %v11970 = vpack.c.b16 %v11694, %v11690
    %v11971 = vpack.c.b16 %v11699, %v11695
    %v11972 = vpack.c.b16 %v11700, %v11696
    %v11973 = vpack.c.b16 %v11701, %v11697
    %v11974 = vpack.c.b16 %v11702, %v11698
    %v11975 = vpack.c.b16 %v11707, %v11703
    %v11976 = vpack.c.b16 %v11708, %v11704
    %v11977 = vpack.c.b16 %v11709, %v11705
    %v11978 = vpack.c.b16 %v11710, %v11706
    %v11979 = vpack.c.b16 %v11715, %v11711
    %v11980 = vpack.c.b16 %v11716, %v11712
    %v11981 = vpack.c.b16 %v11717, %v11713
    %v11982 = vpack.c.b16 %v11718, %v11714
    %v11983 = vpack.c.b16 %v11723, %v11719
    %v11984 = vpack.c.b16 %v11724, %v11720
    %v11985 = vpack.c.b16 %v11725, %v11721
    %v11986 = vpack.c.b16 %v11726, %v11722
    %v11987 = vpack.c.b16 %v11731, %v11727
    %v11988 = vpack.c.b16 %v11732, %v11728
    %v11989 = vpack.c.b16 %v11733, %v11729
    %v11990 = vpack.c.b16 %v11734, %v11730
    %12247 = vmatprep.subr.bf16.mxu0 %v11764
    %12248 = vmatpush1.bf16.msra.mxu0 %v11763
    %12249 = vmatprep.subr.bf16.mxu0 %v11760
    %12250 = vmatpush1.bf16.msra.mxu0 %v11759
    %12251 = vmatprep.subr.bf16.mxu0 %v11756
    %12252 = vmatpush1.bf16.msra.mxu0 %v11755
    %12253 = vmatprep.subr.bf16.mxu0 %v11752
    %12254 = vmatpush1.bf16.msra.mxu0 %v11751
    %12255 = vmatprep.subr.bf16.mxu0 %v11748
    %12256 = vmatpush1.bf16.msra.mxu0 %v11747
    %12257 = vmatprep.subr.bf16.mxu0 %v11744
    %12258 = vmatpush1.bf16.msra.mxu0 %v11743
    %12259 = vmatprep.subr.bf16.mxu0 %v11740
    %12260 = vmatpush1.bf16.msra.mxu0 %v11739
    %12261 = vmatprep.subr.bf16.mxu0 %v11736
    %12262 = vmatpush1.bf16.msra.mxu0 %v11735
    %12263 = vmatprep.subr.bf16.mxu0 %v11796
    %12264 = vmatpush2.bf16.msra.mxu0 %v11795
    %12265 = vmatprep.subr.bf16.mxu0 %v11792
    %12266 = vmatpush2.bf16.msra.mxu0 %v11791
    %12267 = vmatprep.subr.bf16.mxu0 %v11788
    %12268 = vmatpush2.bf16.msra.mxu0 %v11787
    %12269 = vmatprep.subr.bf16.mxu0 %v11784
    %12270 = vmatpush2.bf16.msra.mxu0 %v11783
    %12271 = vmatprep.subr.bf16.mxu0 %v11780
    %12272 = vmatpush2.bf16.msra.mxu0 %v11779
    %12273 = vmatprep.subr.bf16.mxu0 %v11776
    %12274 = vmatpush2.bf16.msra.mxu0 %v11775
    %12275 = vmatprep.subr.bf16.mxu0 %v11772
    %12276 = vmatpush2.bf16.msra.mxu0 %v11771
    %12277 = vmatprep.subr.bf16.mxu0 %v11768
    %12278 = vmatpush2.bf16.msra.mxu0 %v11767
    %12279 = vmatprep.mubr.bf16.mxu0 %v10682
    %12280 = vmatmul.mubr.bf16.gmra.mxu0 %v10681
    %v12281 = vpop.f32.mrf.mxu0
    %v12282 = vadd.f32 %v10950, %v12281
    %v12283 = vpop.f32.mrf.mxu0
    %v12284 = vadd.f32 %v10954, %v12283
    %v12285 = vpop.f32.mrf.mxu0
    %v12286 = vpop.f32.mrf.mxu0
    %12287 = vdwg.mxu0
    %12288 = vmatprep.subr.bf16.mxu0 %v11828
    %12289 = vmatpush1.bf16.msra.mxu0 %v11827
    %12290 = vmatprep.subr.bf16.mxu0 %v11824
    %12291 = vmatpush1.bf16.msra.mxu0 %v11823
    %12292 = vmatprep.subr.bf16.mxu0 %v11820
    %12293 = vmatpush1.bf16.msra.mxu0 %v11819
    %12294 = vmatprep.subr.bf16.mxu0 %v11816
    %12295 = vmatpush1.bf16.msra.mxu0 %v11815
    %12296 = vmatprep.subr.bf16.mxu0 %v11812
    %12297 = vmatpush1.bf16.msra.mxu0 %v11811
    %12298 = vmatprep.subr.bf16.mxu0 %v11808
    %12299 = vmatpush1.bf16.msra.mxu0 %v11807
    %12300 = vmatprep.subr.bf16.mxu0 %v11804
    %12301 = vmatpush1.bf16.msra.mxu0 %v11803
    %12302 = vmatprep.subr.bf16.mxu0 %v11800
    %12303 = vmatpush1.bf16.msra.mxu0 %v11799
    %12304 = vmatprep.subr.bf16.mxu0 %v11860
    %12305 = vmatpush2.bf16.msra.mxu0 %v11859
    %12306 = vmatprep.subr.bf16.mxu0 %v11856
    %12307 = vmatpush2.bf16.msra.mxu0 %v11855
    %12308 = vmatprep.subr.bf16.mxu0 %v11852
    %12309 = vmatpush2.bf16.msra.mxu0 %v11851
    %12310 = vmatprep.subr.bf16.mxu0 %v11848
    %12311 = vmatpush2.bf16.msra.mxu0 %v11847
    %12312 = vmatprep.subr.bf16.mxu0 %v11844
    %12313 = vmatpush2.bf16.msra.mxu0 %v11843
    %12314 = vmatprep.subr.bf16.mxu0 %v11840
    %12315 = vmatpush2.bf16.msra.mxu0 %v11839
    %12316 = vmatprep.subr.bf16.mxu0 %v11836
    %12317 = vmatpush2.bf16.msra.mxu0 %v11835
    %12318 = vmatprep.subr.bf16.mxu0 %v11832
    %12319 = vmatpush2.bf16.msra.mxu0 %v11831
    %12320 = vmatprep.mubr.bf16.mxu0 %v10684
    %12321 = vmatmul.mubr.bf16.gmra.mxu0 %v10683
    %v12322 = vpop.f32.mrf.mxu0
    %v12323 = vadd.f32 %v12282, %v12322
    %v12324 = vpop.f32.mrf.mxu0
    %v12325 = vadd.f32 %v12284, %v12324
    %v12326 = vpop.f32.mrf.mxu0
    %v12327 = vpop.f32.mrf.mxu0
    %12328 = vdwg.mxu0
    %12329 = vmatprep.subr.bf16.mxu0 %v11892
    %12330 = vmatpush1.bf16.msra.mxu0 %v11891
    %12331 = vmatprep.subr.bf16.mxu0 %v11888
    %12332 = vmatpush1.bf16.msra.mxu0 %v11887
    %12333 = vmatprep.subr.bf16.mxu0 %v11884
    %12334 = vmatpush1.bf16.msra.mxu0 %v11883
    %12335 = vmatprep.subr.bf16.mxu0 %v11880
    %12336 = vmatpush1.bf16.msra.mxu0 %v11879
    %12337 = vmatprep.subr.bf16.mxu0 %v11876
    %12338 = vmatpush1.bf16.msra.mxu0 %v11875
    %12339 = vmatprep.subr.bf16.mxu0 %v11872
    %12340 = vmatpush1.bf16.msra.mxu0 %v11871
    %12341 = vmatprep.subr.bf16.mxu0 %v11868
    %12342 = vmatpush1.bf16.msra.mxu0 %v11867
    %12343 = vmatprep.subr.bf16.mxu0 %v11864
    %12344 = vmatpush1.bf16.msra.mxu0 %v11863
    %12345 = vmatprep.subr.bf16.mxu0 %v11924
    %12346 = vmatpush2.bf16.msra.mxu0 %v11923
    %12347 = vmatprep.subr.bf16.mxu0 %v11920
    %12348 = vmatpush2.bf16.msra.mxu0 %v11919
    %12349 = vmatprep.subr.bf16.mxu0 %v11916
    %12350 = vmatpush2.bf16.msra.mxu0 %v11915
    %12351 = vmatprep.subr.bf16.mxu0 %v11912
    %12352 = vmatpush2.bf16.msra.mxu0 %v11911
    %12353 = vmatprep.subr.bf16.mxu0 %v11908
    %12354 = vmatpush2.bf16.msra.mxu0 %v11907
    %12355 = vmatprep.subr.bf16.mxu0 %v11904
    %12356 = vmatpush2.bf16.msra.mxu0 %v11903
    %12357 = vmatprep.subr.bf16.mxu0 %v11900
    %12358 = vmatpush2.bf16.msra.mxu0 %v11899
    %12359 = vmatprep.subr.bf16.mxu0 %v11896
    %12360 = vmatpush2.bf16.msra.mxu0 %v11895
    %12361 = vmatprep.mubr.bf16.mxu0 %v10686
    %12362 = vmatmul.mubr.bf16.gmra.mxu0 %v10685
    %v12363 = vpop.f32.mrf.mxu0
    %v12364 = vadd.f32 %v12323, %v12363
    %v12365 = vpop.f32.mrf.mxu0
    %v12366 = vadd.f32 %v12325, %v12365
    %v12367 = vpop.f32.mrf.mxu0
    %v12368 = vpop.f32.mrf.mxu0
    %12369 = vdwg.mxu0
    %12370 = vmatprep.subr.bf16.mxu0 %v11956
    %12371 = vmatpush1.bf16.msra.mxu0 %v11955
    %12372 = vmatprep.subr.bf16.mxu0 %v11952
    %12373 = vmatpush1.bf16.msra.mxu0 %v11951
    %12374 = vmatprep.subr.bf16.mxu0 %v11948
    %12375 = vmatpush1.bf16.msra.mxu0 %v11947
    %12376 = vmatprep.subr.bf16.mxu0 %v11944
    %12377 = vmatpush1.bf16.msra.mxu0 %v11943
    %12378 = vmatprep.subr.bf16.mxu0 %v11940
    %12379 = vmatpush1.bf16.msra.mxu0 %v11939
    %12380 = vmatprep.subr.bf16.mxu0 %v11936
    %12381 = vmatpush1.bf16.msra.mxu0 %v11935
    %12382 = vmatprep.subr.bf16.mxu0 %v11932
    %12383 = vmatpush1.bf16.msra.mxu0 %v11931
    %12384 = vmatprep.subr.bf16.mxu0 %v11928
    %12385 = vmatpush1.bf16.msra.mxu0 %v11927
    %12386 = vmatprep.subr.bf16.mxu0 %v11988
    %12387 = vmatpush2.bf16.msra.mxu0 %v11987
    %12388 = vmatprep.subr.bf16.mxu0 %v11984
    %12389 = vmatpush2.bf16.msra.mxu0 %v11983
    %12390 = vmatprep.subr.bf16.mxu0 %v11980
    %12391 = vmatpush2.bf16.msra.mxu0 %v11979
    %12392 = vmatprep.subr.bf16.mxu0 %v11976
    %12393 = vmatpush2.bf16.msra.mxu0 %v11975
    %12394 = vmatprep.subr.bf16.mxu0 %v11972
    %12395 = vmatpush2.bf16.msra.mxu0 %v11971
    %12396 = vmatprep.subr.bf16.mxu0 %v11968
    %12397 = vmatpush2.bf16.msra.mxu0 %v11967
    %12398 = vmatprep.subr.bf16.mxu0 %v11964
    %12399 = vmatpush2.bf16.msra.mxu0 %v11963
    %12400 = vmatprep.subr.bf16.mxu0 %v11960
    %12401 = vmatpush2.bf16.msra.mxu0 %v11959
    %12402 = vmatprep.mubr.bf16.mxu0 %v10688
    %12403 = vmatmul.mubr.bf16.gmra.mxu0 %v10687
    %v12404 = vpop.f32.mrf.mxu0
    %v12405 = vadd.f32 %v12364, %v12404
    %v12406 = vpop.f32.mrf.mxu0
    %v12407 = vadd.f32 %v12366, %v12406
    %v12408 = vpop.f32.mrf.mxu0
    %v12409 = vpop.f32.mrf.mxu0
    %12410 = vdwg.mxu0
    %12411 = vmatprep.subr.bf16.mxu0 %v11766
    %12412 = vmatpush1.bf16.msra.mxu0 %v11765
    %12413 = vmatprep.subr.bf16.mxu0 %v11762
    %12414 = vmatpush1.bf16.msra.mxu0 %v11761
    %12415 = vmatprep.subr.bf16.mxu0 %v11758
    %12416 = vmatpush1.bf16.msra.mxu0 %v11757
    %12417 = vmatprep.subr.bf16.mxu0 %v11754
    %12418 = vmatpush1.bf16.msra.mxu0 %v11753
    %12419 = vmatprep.subr.bf16.mxu0 %v11750
    %12420 = vmatpush1.bf16.msra.mxu0 %v11749
    %12421 = vmatprep.subr.bf16.mxu0 %v11746
    %12422 = vmatpush1.bf16.msra.mxu0 %v11745
    %12423 = vmatprep.subr.bf16.mxu0 %v11742
    %12424 = vmatpush1.bf16.msra.mxu0 %v11741
    %12425 = vmatprep.subr.bf16.mxu0 %v11738
    %12426 = vmatpush1.bf16.msra.mxu0 %v11737
    %12427 = vmatprep.subr.bf16.mxu0 %v11798
    %12428 = vmatpush2.bf16.msra.mxu0 %v11797
    %12429 = vmatprep.subr.bf16.mxu0 %v11794
    %12430 = vmatpush2.bf16.msra.mxu0 %v11793
    %12431 = vmatprep.subr.bf16.mxu0 %v11790
    %12432 = vmatpush2.bf16.msra.mxu0 %v11789
    %12433 = vmatprep.subr.bf16.mxu0 %v11786
    %12434 = vmatpush2.bf16.msra.mxu0 %v11785
    %12435 = vmatprep.subr.bf16.mxu0 %v11782
    %12436 = vmatpush2.bf16.msra.mxu0 %v11781
    %12437 = vmatprep.subr.bf16.mxu0 %v11778
    %12438 = vmatpush2.bf16.msra.mxu0 %v11777
    %12439 = vmatprep.subr.bf16.mxu0 %v11774
    %12440 = vmatpush2.bf16.msra.mxu0 %v11773
    %12441 = vmatprep.subr.bf16.mxu0 %v11770
    %12442 = vmatpush2.bf16.msra.mxu0 %v11769
    %12443 = vmatprep.mubr.bf16.mxu0 %v10682
    %12444 = vmatmul.mubr.bf16.gmra.mxu0 %v10681
    %v12445 = vpop.f32.mrf.mxu0
    %v12446 = vadd.f32 %v10958, %v12445
    %v12447 = vpop.f32.mrf.mxu0
    %v12448 = vadd.f32 %v10962, %v12447
    %v12449 = vpop.f32.mrf.mxu0
    %v12450 = vpop.f32.mrf.mxu0
    %12451 = vdwg.mxu0
    %12452 = vmatprep.subr.bf16.mxu0 %v11830
    %12453 = vmatpush1.bf16.msra.mxu0 %v11829
    %12454 = vmatprep.subr.bf16.mxu0 %v11826
    %12455 = vmatpush1.bf16.msra.mxu0 %v11825
    %12456 = vmatprep.subr.bf16.mxu0 %v11822
    %12457 = vmatpush1.bf16.msra.mxu0 %v11821
    %12458 = vmatprep.subr.bf16.mxu0 %v11818
    %12459 = vmatpush1.bf16.msra.mxu0 %v11817
    %12460 = vmatprep.subr.bf16.mxu0 %v11814
    %12461 = vmatpush1.bf16.msra.mxu0 %v11813
    %12462 = vmatprep.subr.bf16.mxu0 %v11810
    %12463 = vmatpush1.bf16.msra.mxu0 %v11809
    %12464 = vmatprep.subr.bf16.mxu0 %v11806
    %12465 = vmatpush1.bf16.msra.mxu0 %v11805
    %12466 = vmatprep.subr.bf16.mxu0 %v11802
    %12467 = vmatpush1.bf16.msra.mxu0 %v11801
    %12468 = vmatprep.subr.bf16.mxu0 %v11862
    %12469 = vmatpush2.bf16.msra.mxu0 %v11861
    %12470 = vmatprep.subr.bf16.mxu0 %v11858
    %12471 = vmatpush2.bf16.msra.mxu0 %v11857
    %12472 = vmatprep.subr.bf16.mxu0 %v11854
    %12473 = vmatpush2.bf16.msra.mxu0 %v11853
    %12474 = vmatprep.subr.bf16.mxu0 %v11850
    %12475 = vmatpush2.bf16.msra.mxu0 %v11849
    %12476 = vmatprep.subr.bf16.mxu0 %v11846
    %12477 = vmatpush2.bf16.msra.mxu0 %v11845
    %12478 = vmatprep.subr.bf16.mxu0 %v11842
    %12479 = vmatpush2.bf16.msra.mxu0 %v11841
    %12480 = vmatprep.subr.bf16.mxu0 %v11838
    %12481 = vmatpush2.bf16.msra.mxu0 %v11837
    %12482 = vmatprep.subr.bf16.mxu0 %v11834
    %12483 = vmatpush2.bf16.msra.mxu0 %v11833
    %12484 = vmatprep.mubr.bf16.mxu0 %v10684
    %12485 = vmatmul.mubr.bf16.gmra.mxu0 %v10683
    %v12486 = vpop.f32.mrf.mxu0
    %v12487 = vadd.f32 %v12446, %v12486
    %v12488 = vpop.f32.mrf.mxu0
    %v12489 = vadd.f32 %v12448, %v12488
    %v12490 = vpop.f32.mrf.mxu0
    %v12491 = vpop.f32.mrf.mxu0
    %12492 = vdwg.mxu0
    %12493 = vmatprep.subr.bf16.mxu0 %v11894
    %12494 = vmatpush1.bf16.msra.mxu0 %v11893
    %12495 = vmatprep.subr.bf16.mxu0 %v11890
    %12496 = vmatpush1.bf16.msra.mxu0 %v11889
    %12497 = vmatprep.subr.bf16.mxu0 %v11886
    %12498 = vmatpush1.bf16.msra.mxu0 %v11885
    %12499 = vmatprep.subr.bf16.mxu0 %v11882
    %12500 = vmatpush1.bf16.msra.mxu0 %v11881
    %12501 = vmatprep.subr.bf16.mxu0 %v11878
    %12502 = vmatpush1.bf16.msra.mxu0 %v11877
    %12503 = vmatprep.subr.bf16.mxu0 %v11874
    %12504 = vmatpush1.bf16.msra.mxu0 %v11873
    %12505 = vmatprep.subr.bf16.mxu0 %v11870
    %12506 = vmatpush1.bf16.msra.mxu0 %v11869
    %12507 = vmatprep.subr.bf16.mxu0 %v11866
    %12508 = vmatpush1.bf16.msra.mxu0 %v11865
    %12509 = vmatprep.subr.bf16.mxu0 %v11926
    %12510 = vmatpush2.bf16.msra.mxu0 %v11925
    %12511 = vmatprep.subr.bf16.mxu0 %v11922
    %12512 = vmatpush2.bf16.msra.mxu0 %v11921
    %12513 = vmatprep.subr.bf16.mxu0 %v11918
    %12514 = vmatpush2.bf16.msra.mxu0 %v11917
    %12515 = vmatprep.subr.bf16.mxu0 %v11914
    %12516 = vmatpush2.bf16.msra.mxu0 %v11913
    %12517 = vmatprep.subr.bf16.mxu0 %v11910
    %12518 = vmatpush2.bf16.msra.mxu0 %v11909
    %12519 = vmatprep.subr.bf16.mxu0 %v11906
    %12520 = vmatpush2.bf16.msra.mxu0 %v11905
    %12521 = vmatprep.subr.bf16.mxu0 %v11902
    %12522 = vmatpush2.bf16.msra.mxu0 %v11901
    %12523 = vmatprep.subr.bf16.mxu0 %v11898
    %12524 = vmatpush2.bf16.msra.mxu0 %v11897
    %12525 = vmatprep.mubr.bf16.mxu0 %v10686
    %12526 = vmatmul.mubr.bf16.gmra.mxu0 %v10685
    %v12527 = vpop.f32.mrf.mxu0
    %v12528 = vadd.f32 %v12487, %v12527
    %v12529 = vpop.f32.mrf.mxu0
    %v12530 = vadd.f32 %v12489, %v12529
    %v12531 = vpop.f32.mrf.mxu0
    %v12532 = vpop.f32.mrf.mxu0
    %12533 = vdwg.mxu0
    %12534 = vmatprep.subr.bf16.mxu0 %v11958
    %12535 = vmatpush1.bf16.msra.mxu0 %v11957
    %12536 = vmatprep.subr.bf16.mxu0 %v11954
    %12537 = vmatpush1.bf16.msra.mxu0 %v11953
    %12538 = vmatprep.subr.bf16.mxu0 %v11950
    %12539 = vmatpush1.bf16.msra.mxu0 %v11949
    %12540 = vmatprep.subr.bf16.mxu0 %v11946
    %12541 = vmatpush1.bf16.msra.mxu0 %v11945
    %12542 = vmatprep.subr.bf16.mxu0 %v11942
    %12543 = vmatpush1.bf16.msra.mxu0 %v11941
    %12544 = vmatprep.subr.bf16.mxu0 %v11938
    %12545 = vmatpush1.bf16.msra.mxu0 %v11937
    %12546 = vmatprep.subr.bf16.mxu0 %v11934
    %12547 = vmatpush1.bf16.msra.mxu0 %v11933
    %12548 = vmatprep.subr.bf16.mxu0 %v11930
    %12549 = vmatpush1.bf16.msra.mxu0 %v11929
    %12550 = vmatprep.subr.bf16.mxu0 %v11990
    %12551 = vmatpush2.bf16.msra.mxu0 %v11989
    %12552 = vmatprep.subr.bf16.mxu0 %v11986
    %12553 = vmatpush2.bf16.msra.mxu0 %v11985
    %12554 = vmatprep.subr.bf16.mxu0 %v11982
    %12555 = vmatpush2.bf16.msra.mxu0 %v11981
    %12556 = vmatprep.subr.bf16.mxu0 %v11978
    %12557 = vmatpush2.bf16.msra.mxu0 %v11977
    %12558 = vmatprep.subr.bf16.mxu0 %v11974
    %12559 = vmatpush2.bf16.msra.mxu0 %v11973
    %12560 = vmatprep.subr.bf16.mxu0 %v11970
    %12561 = vmatpush2.bf16.msra.mxu0 %v11969
    %12562 = vmatprep.subr.bf16.mxu0 %v11966
    %12563 = vmatpush2.bf16.msra.mxu0 %v11965
    %12564 = vmatprep.subr.bf16.mxu0 %v11962
    %12565 = vmatpush2.bf16.msra.mxu0 %v11961
    %12566 = vmatprep.mubr.bf16.mxu0 %v10688
    %12567 = vmatmul.mubr.bf16.gmra.mxu0 %v10687
    %v12568 = vpop.f32.mrf.mxu0
    %v12569 = vadd.f32 %v12528, %v12568
    %v12570 = vpop.f32.mrf.mxu0
    %v12571 = vadd.f32 %v12530, %v12570
    %v12572 = vpop.f32.mrf.mxu0
    %v12573 = vpop.f32.mrf.mxu0
    %12574 = vdwg.mxu0
    %s12575 = sld [smem:[#allocation23 + $0x2]]
    %vm12576 = vcmp.ge.f32.partialorder %v12405, 0.0
    %vm12577 = vcmp.ge.f32.partialorder %v12407, 0.0
    %vm12578 = vcmp.ge.f32.partialorder %v12569, 0.0
    %vm12579 = vcmp.ge.f32.partialorder %v12571, 0.0
    %v12580 = vstv %s12575
    %v12581 = vmul.f32 %v12580, %v12405
    %v12582 = vmul.f32 %v12580, %v12407
    %v12583 = vmul.f32 %v12580, %v12569
    %v12584 = vmul.f32 %v12580, %v12571
    %v12585 = vsel %vm12576, %v12405, %v12581
    %v12586 = vsel %vm12577, %v12407, %v12582
    %v12587 = vsel %vm12578, %v12569, %v12583
    %v12588 = vsel %vm12579, %v12571, %v12584
    %v12589 = vpack.c.bf16 %v12585, %v12585
    %v12590 = vpack.c.bf16 %v12586, %v12586
    %v12591 = vpack.c.bf16 %v12587, %v12587
    %v12592 = vpack.c.bf16 %v12588, %v12588
    %v12593 = vld [vmem:[#allocation15] sm:$0xf]
    %v12594 = vld [vmem:[#allocation15 + $0x4] sm:$0xf]
    %v12595 = vld [vmem:[#allocation15 + $0x8] sm:$0xf]
    %v12596 = vld [vmem:[#allocation15 + $0xc] sm:$0xf]
    %v12597 = vld [vmem:[#allocation15 + $0x10] sm:$0xf]
    %v12598 = vld [vmem:[#allocation15 + $0x14] sm:$0xf]
    %v12599 = vld [vmem:[#allocation15 + $0x18] sm:$0xf]
    %v12600 = vld [vmem:[#allocation15 + $0x1c] sm:$0xf]
    %v12601 = vld [vmem:[#allocation15 + $0x20] sm:$0xf]
    %v12602 = vld [vmem:[#allocation15 + $0x24] sm:$0xf]
    %v12603 = vld [vmem:[#allocation15 + $0x28] sm:$0xf]
    %v12604 = vld [vmem:[#allocation15 + $0x2c] sm:$0xf]
    %v12605 = vld [vmem:[#allocation15 + $0x30] sm:$0xf]
    %v12606 = vld [vmem:[#allocation15 + $0x34] sm:$0xf]
    %v12607 = vld [vmem:[#allocation15 + $0x38] sm:$0xf]
    %v12608 = vld [vmem:[#allocation15 + $0x3c] sm:$0xf]
    %v12609 = vld [vmem:[#allocation15 + $0x40] sm:$0xf]
    %v12610 = vld [vmem:[#allocation15 + $0x44] sm:$0xf]
    %v12611 = vld [vmem:[#allocation15 + $0x48] sm:$0xf]
    %v12612 = vld [vmem:[#allocation15 + $0x4c] sm:$0xf]
    %v12613 = vld [vmem:[#allocation15 + $0x50] sm:$0xf]
    %v12614 = vld [vmem:[#allocation15 + $0x54] sm:$0xf]
    %v12615 = vld [vmem:[#allocation15 + $0x58] sm:$0xf]
    %v12616 = vld [vmem:[#allocation15 + $0x5c] sm:$0xf]
    %v12617 = vld [vmem:[#allocation15 + $0x60] sm:$0xf]
    %v12618 = vld [vmem:[#allocation15 + $0x64] sm:$0xf]
    %v12619 = vld [vmem:[#allocation15 + $0x68] sm:$0xf]
    %v12620 = vld [vmem:[#allocation15 + $0x6c] sm:$0xf]
    %v12621 = vld [vmem:[#allocation15 + $0x70] sm:$0xf]
    %v12622 = vld [vmem:[#allocation15 + $0x74] sm:$0xf]
    %v12623 = vld [vmem:[#allocation15 + $0x78] sm:$0xf]
    %v12624 = vld [vmem:[#allocation15 + $0x7c] sm:$0xf]
    %v12625 = vld [vmem:[#allocation15 + $0x80] sm:$0xf]
    %v12626 = vld [vmem:[#allocation15 + $0x84] sm:$0xf]
    %v12627 = vld [vmem:[#allocation15 + $0x88] sm:$0xf]
    %v12628 = vld [vmem:[#allocation15 + $0x8c] sm:$0xf]
    %v12629 = vld [vmem:[#allocation15 + $0x90] sm:$0xf]
    %v12630 = vld [vmem:[#allocation15 + $0x94] sm:$0xf]
    %v12631 = vld [vmem:[#allocation15 + $0x98] sm:$0xf]
    %v12632 = vld [vmem:[#allocation15 + $0x9c] sm:$0xf]
    %v12633 = vld [vmem:[#allocation15 + $0xa0] sm:$0xf]
    %v12634 = vld [vmem:[#allocation15 + $0xa4] sm:$0xf]
    %v12635 = vld [vmem:[#allocation15 + $0xa8] sm:$0xf]
    %v12636 = vld [vmem:[#allocation15 + $0xac] sm:$0xf]
    %v12637 = vld [vmem:[#allocation15 + $0xb0] sm:$0xf]
    %v12638 = vld [vmem:[#allocation15 + $0xb4] sm:$0xf]
    %v12639 = vld [vmem:[#allocation15 + $0xb8] sm:$0xf]
    %v12640 = vld [vmem:[#allocation15 + $0xbc] sm:$0xf]
    %v12641 = vld [vmem:[#allocation15 + $0xc0] sm:$0xf]
    %v12642 = vld [vmem:[#allocation15 + $0xc4] sm:$0xf]
    %v12643 = vld [vmem:[#allocation15 + $0xc8] sm:$0xf]
    %v12644 = vld [vmem:[#allocation15 + $0xcc] sm:$0xf]
    %v12645 = vld [vmem:[#allocation15 + $0xd0] sm:$0xf]
    %v12646 = vld [vmem:[#allocation15 + $0xd4] sm:$0xf]
    %v12647 = vld [vmem:[#allocation15 + $0xd8] sm:$0xf]
    %v12648 = vld [vmem:[#allocation15 + $0xdc] sm:$0xf]
    %v12649 = vld [vmem:[#allocation15 + $0xe0] sm:$0xf]
    %v12650 = vld [vmem:[#allocation15 + $0xe4] sm:$0xf]
    %v12651 = vld [vmem:[#allocation15 + $0xe8] sm:$0xf]
    %v12652 = vld [vmem:[#allocation15 + $0xec] sm:$0xf]
    %v12653 = vld [vmem:[#allocation15 + $0xf0] sm:$0xf]
    %v12654 = vld [vmem:[#allocation15 + $0xf4] sm:$0xf]
    %v12655 = vld [vmem:[#allocation15 + $0xf8] sm:$0xf]
    %v12656 = vld [vmem:[#allocation15 + $0xfc] sm:$0xf]
    %v12657 = vld [vmem:[#allocation17] sm:$0x1]
    %v12659 = vlaneseq
    %v12660 = vshrl.u32 %v12659, 7
    %v12661 = vsub.s32 0, %v12660
    %v12662 = vrot.slane %v12657, %v12661
    %v12728 = vunpack.c.l.b16 %v12593
    %v12729 = vunpack.c.l.b16 %v12594
    %v12730 = vunpack.c.l.b16 %v12595
    %v12731 = vunpack.c.l.b16 %v12596
    %v12732 = vunpack.c.l.b16 %v12597
    %v12733 = vunpack.c.l.b16 %v12598
    %v12734 = vunpack.c.l.b16 %v12599
    %v12735 = vunpack.c.l.b16 %v12600
    %v12736 = vunpack.c.l.b16 %v12601
    %v12737 = vunpack.c.l.b16 %v12602
    %v12738 = vunpack.c.l.b16 %v12603
    %v12739 = vunpack.c.l.b16 %v12604
    %v12740 = vunpack.c.l.b16 %v12605
    %v12741 = vunpack.c.l.b16 %v12606
    %v12742 = vunpack.c.l.b16 %v12607
    %v12743 = vunpack.c.l.b16 %v12608
    %v12744 = vunpack.c.l.b16 %v12609
    %v12745 = vunpack.c.l.b16 %v12610
    %v12746 = vunpack.c.l.b16 %v12611
    %v12747 = vunpack.c.l.b16 %v12612
    %v12748 = vunpack.c.l.b16 %v12613
    %v12749 = vunpack.c.l.b16 %v12614
    %v12750 = vunpack.c.l.b16 %v12615
    %v12751 = vunpack.c.l.b16 %v12616
    %v12752 = vunpack.c.l.b16 %v12617
    %v12753 = vunpack.c.l.b16 %v12618
    %v12754 = vunpack.c.l.b16 %v12619
    %v12755 = vunpack.c.l.b16 %v12620
    %v12756 = vunpack.c.l.b16 %v12621
    %v12757 = vunpack.c.l.b16 %v12622
    %v12758 = vunpack.c.l.b16 %v12623
    %v12759 = vunpack.c.l.b16 %v12624
    %v12760 = vunpack.c.l.b16 %v12625
    %v12761 = vunpack.c.l.b16 %v12626
    %v12762 = vunpack.c.l.b16 %v12627
    %v12763 = vunpack.c.l.b16 %v12628
    %v12764 = vunpack.c.l.b16 %v12629
    %v12765 = vunpack.c.l.b16 %v12630
    %v12766 = vunpack.c.l.b16 %v12631
    %v12767 = vunpack.c.l.b16 %v12632
    %v12768 = vunpack.c.l.b16 %v12633
    %v12769 = vunpack.c.l.b16 %v12634
    %v12770 = vunpack.c.l.b16 %v12635
    %v12771 = vunpack.c.l.b16 %v12636
    %v12772 = vunpack.c.l.b16 %v12637
    %v12773 = vunpack.c.l.b16 %v12638
    %v12774 = vunpack.c.l.b16 %v12639
    %v12775 = vunpack.c.l.b16 %v12640
    %v12776 = vunpack.c.l.b16 %v12641
    %v12777 = vunpack.c.l.b16 %v12642
    %v12778 = vunpack.c.l.b16 %v12643
    %v12779 = vunpack.c.l.b16 %v12644
    %v12780 = vunpack.c.l.b16 %v12645
    %v12781 = vunpack.c.l.b16 %v12646
    %v12782 = vunpack.c.l.b16 %v12647
    %v12783 = vunpack.c.l.b16 %v12648
    %v12784 = vunpack.c.l.b16 %v12649
    %v12785 = vunpack.c.l.b16 %v12650
    %v12786 = vunpack.c.l.b16 %v12651
    %v12787 = vunpack.c.l.b16 %v12652
    %v12788 = vunpack.c.l.b16 %v12653
    %v12789 = vunpack.c.l.b16 %v12654
    %v12790 = vunpack.c.l.b16 %v12655
    %v12791 = vunpack.c.l.b16 %v12656
    %v12792 = vpack.c.b16 %v12729, %v12728
    %v12793 = vpack.c.b16 %v12731, %v12730
    %v12794 = vpack.c.b16 %v12733, %v12732
    %v12795 = vpack.c.b16 %v12735, %v12734
    %v12796 = vpack.c.b16 %v12737, %v12736
    %v12797 = vpack.c.b16 %v12739, %v12738
    %v12798 = vpack.c.b16 %v12741, %v12740
    %v12799 = vpack.c.b16 %v12743, %v12742
    %v12800 = vpack.c.b16 %v12745, %v12744
    %v12801 = vpack.c.b16 %v12747, %v12746
    %v12802 = vpack.c.b16 %v12749, %v12748
    %v12803 = vpack.c.b16 %v12751, %v12750
    %v12804 = vpack.c.b16 %v12753, %v12752
    %v12805 = vpack.c.b16 %v12755, %v12754
    %v12806 = vpack.c.b16 %v12757, %v12756
    %v12807 = vpack.c.b16 %v12759, %v12758
    %v12808 = vpack.c.b16 %v12761, %v12760
    %v12809 = vpack.c.b16 %v12763, %v12762
    %v12810 = vpack.c.b16 %v12765, %v12764
    %v12811 = vpack.c.b16 %v12767, %v12766
    %v12812 = vpack.c.b16 %v12769, %v12768
    %v12813 = vpack.c.b16 %v12771, %v12770
    %v12814 = vpack.c.b16 %v12773, %v12772
    %v12815 = vpack.c.b16 %v12775, %v12774
    %v12816 = vpack.c.b16 %v12777, %v12776
    %v12817 = vpack.c.b16 %v12779, %v12778
    %v12818 = vpack.c.b16 %v12781, %v12780
    %v12819 = vpack.c.b16 %v12783, %v12782
    %v12820 = vpack.c.b16 %v12785, %v12784
    %v12821 = vpack.c.b16 %v12787, %v12786
    %v12822 = vpack.c.b16 %v12789, %v12788
    %v12823 = vpack.c.b16 %v12791, %v12790
    %12856 = vmatprep.subr.bf16.mxu0 0
    %12857 = vmatpush1.bf16.msra.mxu0 %v12799
    %12858 = vmatprep.subr.bf16.mxu0 0
    %12859 = vmatpush1.bf16.msra.mxu0 %v12798
    %12860 = vmatprep.subr.bf16.mxu0 0
    %12861 = vmatpush1.bf16.msra.mxu0 %v12797
    %12862 = vmatprep.subr.bf16.mxu0 0
    %12863 = vmatpush1.bf16.msra.mxu0 %v12796
    %12864 = vmatprep.subr.bf16.mxu0 0
    %12865 = vmatpush1.bf16.msra.mxu0 %v12795
    %12866 = vmatprep.subr.bf16.mxu0 0
    %12867 = vmatpush1.bf16.msra.mxu0 %v12794
    %12868 = vmatprep.subr.bf16.mxu0 0
    %12869 = vmatpush1.bf16.msra.mxu0 %v12793
    %12870 = vmatprep.subr.bf16.mxu0 0
    %12871 = vmatpush1.bf16.msra.mxu0 %v12792
    %12872 = vmatprep.subr.bf16.mxu0 0
    %12873 = vmatpush2.bf16.msra.mxu0 %v12807
    %12874 = vmatprep.subr.bf16.mxu0 0
    %12875 = vmatpush2.bf16.msra.mxu0 %v12806
    %12876 = vmatprep.subr.bf16.mxu0 0
    %12877 = vmatpush2.bf16.msra.mxu0 %v12805
    %12878 = vmatprep.subr.bf16.mxu0 0
    %12879 = vmatpush2.bf16.msra.mxu0 %v12804
    %12880 = vmatprep.subr.bf16.mxu0 0
    %12881 = vmatpush2.bf16.msra.mxu0 %v12803
    %12882 = vmatprep.subr.bf16.mxu0 0
    %12883 = vmatpush2.bf16.msra.mxu0 %v12802
    %12884 = vmatprep.subr.bf16.mxu0 0
    %12885 = vmatpush2.bf16.msra.mxu0 %v12801
    %12886 = vmatprep.subr.bf16.mxu0 0
    %12887 = vmatpush2.bf16.msra.mxu0 %v12800
    %12888 = vmatprep.mubr.bf16.mxu0 %v12590
    %12889 = vmatmul.mubr.bf16.gmra.mxu0 %v12589
    %v12890 = vpop.f32.mrf.mxu0
    %v12891 = vadd.f32 %v12662, %v12890
    %v12892 = vpop.f32.mrf.mxu0
    %v12893 = vpop.f32.mrf.mxu0
    %v12894 = vpop.f32.mrf.mxu0
    %12895 = vdwg.mxu0
    %12896 = vmatprep.subr.bf16.mxu0 0
    %12897 = vmatpush1.bf16.msra.mxu0 %v12815
    %12898 = vmatprep.subr.bf16.mxu0 0
    %12899 = vmatpush1.bf16.msra.mxu0 %v12814
    %12900 = vmatprep.subr.bf16.mxu0 0
    %12901 = vmatpush1.bf16.msra.mxu0 %v12813
    %12902 = vmatprep.subr.bf16.mxu0 0
    %12903 = vmatpush1.bf16.msra.mxu0 %v12812
    %12904 = vmatprep.subr.bf16.mxu0 0
    %12905 = vmatpush1.bf16.msra.mxu0 %v12811
    %12906 = vmatprep.subr.bf16.mxu0 0
    %12907 = vmatpush1.bf16.msra.mxu0 %v12810
    %12908 = vmatprep.subr.bf16.mxu0 0
    %12909 = vmatpush1.bf16.msra.mxu0 %v12809
    %12910 = vmatprep.subr.bf16.mxu0 0
    %12911 = vmatpush1.bf16.msra.mxu0 %v12808
    %12912 = vmatprep.subr.bf16.mxu0 0
    %12913 = vmatpush2.bf16.msra.mxu0 %v12823
    %12914 = vmatprep.subr.bf16.mxu0 0
    %12915 = vmatpush2.bf16.msra.mxu0 %v12822
    %12916 = vmatprep.subr.bf16.mxu0 0
    %12917 = vmatpush2.bf16.msra.mxu0 %v12821
    %12918 = vmatprep.subr.bf16.mxu0 0
    %12919 = vmatpush2.bf16.msra.mxu0 %v12820
    %12920 = vmatprep.subr.bf16.mxu0 0
    %12921 = vmatpush2.bf16.msra.mxu0 %v12819
    %12922 = vmatprep.subr.bf16.mxu0 0
    %12923 = vmatpush2.bf16.msra.mxu0 %v12818
    %12924 = vmatprep.subr.bf16.mxu0 0
    %12925 = vmatpush2.bf16.msra.mxu0 %v12817
    %12926 = vmatprep.subr.bf16.mxu0 0
    %12927 = vmatpush2.bf16.msra.mxu0 %v12816
    %12928 = vmatprep.mubr.bf16.mxu0 %v12592
    %12929 = vmatmul.mubr.bf16.gmra.mxu0 %v12591
    %v12930 = vpop.f32.mrf.mxu0
    %v12931 = vadd.f32 %v12891, %v12930
    %v12932 = vpop.f32.mrf.mxu0
    %v12933 = vpop.f32.mrf.mxu0
    %v12934 = vpop.f32.mrf.mxu0
    %12935 = vdwg.mxu0
    %s12936 = sld [smem:[#allocation23 + $0x3]]
    %vm12937 = vcmp.ge.f32.partialorder %v12931, 0.0
    %v12938 = vstv %s12936
    %v12939 = vmul.f32 %v12938, %v12931
    %v12940 = vsel %vm12937, %v12931, %v12939
    %v12941 = vpack.c.bf16 %v12940, %v12940
    %v12942 = vld [vmem:[%s9] sm:$0xf]
    %v12943 = vld [vmem:[%s9 + $0x4] sm:$0xf]
    %v12944 = vld [vmem:[%s9 + $0x8] sm:$0xf]
    %v12945 = vld [vmem:[%s9 + $0xc] sm:$0xf]
    %v12946 = vld [vmem:[%s9 + $0x10] sm:$0xf]
    %v12947 = vld [vmem:[%s9 + $0x14] sm:$0xf]
    %v12948 = vld [vmem:[%s9 + $0x18] sm:$0xf]
    %v12949 = vld [vmem:[%s9 + $0x1c] sm:$0xf]
    %v12950 = vld [vmem:[%s9 + $0x20] sm:$0xf]
    %v12951 = vld [vmem:[%s9 + $0x24] sm:$0xf]
    %v12952 = vld [vmem:[%s9 + $0x28] sm:$0xf]
    %v12953 = vld [vmem:[%s9 + $0x2c] sm:$0xf]
    %v12954 = vld [vmem:[%s9 + $0x30] sm:$0xf]
    %v12955 = vld [vmem:[%s9 + $0x34] sm:$0xf]
    %v12956 = vld [vmem:[%s9 + $0x38] sm:$0xf]
    %v12957 = vld [vmem:[%s9 + $0x3c] sm:$0xf]
    %v12958 = vld [vmem:[#allocation18] sm:$0x1]
    %v12960 = vlaneseq
    %v12961 = vshrl.u32 %v12960, 7
    %v12962 = vsub.s32 0, %v12961
    %v12963 = vrot.slane %v12958, %v12962
    %v12981 = vunpack.c.l.b16 %v12942
    %v12982 = vunpack.c.l.b16 %v12943
    %v12983 = vunpack.c.l.b16 %v12944
    %v12984 = vunpack.c.l.b16 %v12945
    %v12985 = vunpack.c.l.b16 %v12946
    %v12986 = vunpack.c.l.b16 %v12947
    %v12987 = vunpack.c.l.b16 %v12948
    %v12988 = vunpack.c.l.b16 %v12949
    %v12989 = vunpack.c.l.b16 %v12950
    %v12990 = vunpack.c.l.b16 %v12951
    %v12991 = vunpack.c.l.b16 %v12952
    %v12992 = vunpack.c.l.b16 %v12953
    %v12993 = vunpack.c.l.b16 %v12954
    %v12994 = vunpack.c.l.b16 %v12955
    %v12995 = vunpack.c.l.b16 %v12956
    %v12996 = vunpack.c.l.b16 %v12957
    %v12997 = vpack.c.b16 %v12982, %v12981
    %v12998 = vpack.c.b16 %v12984, %v12983
    %v12999 = vpack.c.b16 %v12986, %v12985
    %v13000 = vpack.c.b16 %v12988, %v12987
    %v13001 = vpack.c.b16 %v12990, %v12989
    %v13002 = vpack.c.b16 %v12992, %v12991
    %v13003 = vpack.c.b16 %v12994, %v12993
    %v13004 = vpack.c.b16 %v12996, %v12995
    %13013 = vmatprep.subr.bf16.mxu0 0
    %13014 = vmatpush1.bf16.msra.mxu0 %v13004
    %13015 = vmatprep.subr.bf16.mxu0 0
    %13016 = vmatpush1.bf16.msra.mxu0 %v13003
    %13017 = vmatprep.subr.bf16.mxu0 0
    %13018 = vmatpush1.bf16.msra.mxu0 %v13002
    %13019 = vmatprep.subr.bf16.mxu0 0
    %13020 = vmatpush1.bf16.msra.mxu0 %v13001
    %13021 = vmatprep.subr.bf16.mxu0 0
    %13022 = vmatpush1.bf16.msra.mxu0 %v13000
    %13023 = vmatprep.subr.bf16.mxu0 0
    %13024 = vmatpush1.bf16.msra.mxu0 %v12999
    %13025 = vmatprep.subr.bf16.mxu0 0
    %13026 = vmatpush1.bf16.msra.mxu0 %v12998
    %13027 = vmatprep.subr.bf16.mxu0 0
    %13028 = vmatpush1.bf16.msra.mxu0 %v12997
    %13029 = vmatprep.subr.bf16.mxu0 0
    %13030 = vmatpush2.bf16.msra.mxu0 0
    %13031 = vmatprep.subr.bf16.mxu0 0
    %13032 = vmatpush2.bf16.msra.mxu0 0
    %13033 = vmatprep.subr.bf16.mxu0 0
    %13034 = vmatpush2.bf16.msra.mxu0 0
    %13035 = vmatprep.subr.bf16.mxu0 0
    %13036 = vmatpush2.bf16.msra.mxu0 0
    %13037 = vmatprep.subr.bf16.mxu0 0
    %13038 = vmatpush2.bf16.msra.mxu0 0
    %13039 = vmatprep.subr.bf16.mxu0 0
    %13040 = vmatpush2.bf16.msra.mxu0 0
    %13041 = vmatprep.subr.bf16.mxu0 0
    %13042 = vmatpush2.bf16.msra.mxu0 0
    %13043 = vmatprep.subr.bf16.mxu0 0
    %13044 = vmatpush2.bf16.msra.mxu0 0
    %13045 = vmatprep.mubr.bf16.mxu0 0
    %13046 = vmatmul.mubr.bf16.gmra.mxu0 %v12941
    %v13047 = vpop.f32.mrf.mxu0
    %v13048 = vadd.f32 %v12963, %v13047
    %v13049 = vpop.f32.mrf.mxu0
    %v13050 = vpop.f32.mrf.mxu0
    %v13051 = vpop.f32.mrf.mxu0
    %13052 = vdwg.mxu0
    %s13053 = sld [smem:[#allocation23 + $0x4]]
    %vm13054 = vcmp.ge.f32.partialorder %v13048, 0.0
    %v13055 = vstv %s13053
    %v13056 = vmul.f32 %v13055, %v13048
    %v13057 = vsel %vm13054, %v13048, %v13056
    %v13058 = vpack.c.bf16 %v13057, %v13057
    %v13059 = vld [vmem:[#allocation20] sm:$0xf]
    %v13060 = vld [vmem:[#allocation20 + $0x4] sm:$0xf]
    %v13061 = vld [vmem:[#allocation20 + $0x8] sm:$0xf]
    %v13062 = vld [vmem:[#allocation20 + $0xc] sm:$0xf]
    %v13063 = vld [vmem:[#allocation20 + $0x10] sm:$0xf]
    %v13064 = vld [vmem:[#allocation20 + $0x14] sm:$0xf]
    %v13065 = vld [vmem:[#allocation20 + $0x18] sm:$0xf]
    %v13066 = vld [vmem:[#allocation20 + $0x1c] sm:$0xf]
    %v13067 = vld [vmem:[#allocation21] sm:$0x1]
    %v13069 = vlaneseq
    %v13070 = vshrl.u32 %v13069, 7
    %v13071 = vsub.s32 0, %v13070
    %v13072 = vrot.slane %v13067, %v13071
    %v13082 = vunpack.c.l.b16 %v13059
    %v13083 = vunpack.c.l.b16 %v13060
    %v13084 = vunpack.c.l.b16 %v13061
    %v13085 = vunpack.c.l.b16 %v13062
    %v13086 = vunpack.c.l.b16 %v13063
    %v13087 = vunpack.c.l.b16 %v13064
    %v13088 = vunpack.c.l.b16 %v13065
    %v13089 = vunpack.c.l.b16 %v13066
    %v13090 = vpack.c.b16 %v13083, %v13082
    %v13091 = vpack.c.b16 %v13085, %v13084
    %v13092 = vpack.c.b16 %v13087, %v13086
    %v13093 = vpack.c.b16 %v13089, %v13088
    %v13099 = vsel %vm797, %v13058, 0
    %13101 = vmatprep.subr.bf16.mxu0 0
    %13102 = vmatpush1.bf16.msra.mxu0 0
    %13103 = vmatprep.subr.bf16.mxu0 0
    %13104 = vmatpush1.bf16.msra.mxu0 0
    %13105 = vmatprep.subr.bf16.mxu0 0
    %13106 = vmatpush1.bf16.msra.mxu0 0
    %13107 = vmatprep.subr.bf16.mxu0 0
    %13108 = vmatpush1.bf16.msra.mxu0 0
    %13109 = vmatprep.subr.bf16.mxu0 0
    %13110 = vmatpush1.bf16.msra.mxu0 %v13093
    %13111 = vmatprep.subr.bf16.mxu0 0
    %13112 = vmatpush1.bf16.msra.mxu0 %v13092
    %13113 = vmatprep.subr.bf16.mxu0 0
    %13114 = vmatpush1.bf16.msra.mxu0 %v13091
    %13115 = vmatprep.subr.bf16.mxu0 0
    %13116 = vmatpush1.bf16.msra.mxu0 %v13090
    %13117 = vmatprep.subr.bf16.mxu0 0
    %13118 = vmatpush2.bf16.msra.mxu0 0
    %13119 = vmatprep.subr.bf16.mxu0 0
    %13120 = vmatpush2.bf16.msra.mxu0 0
    %13121 = vmatprep.subr.bf16.mxu0 0
    %13122 = vmatpush2.bf16.msra.mxu0 0
    %13123 = vmatprep.subr.bf16.mxu0 0
    %13124 = vmatpush2.bf16.msra.mxu0 0
    %13125 = vmatprep.subr.bf16.mxu0 0
    %13126 = vmatpush2.bf16.msra.mxu0 0
    %13127 = vmatprep.subr.bf16.mxu0 0
    %13128 = vmatpush2.bf16.msra.mxu0 0
    %13129 = vmatprep.subr.bf16.mxu0 0
    %13130 = vmatpush2.bf16.msra.mxu0 0
    %13131 = vmatprep.subr.bf16.mxu0 0
    %13132 = vmatpush2.bf16.msra.mxu0 0
    %13133 = vmatprep.mubr.bf16.mxu0 0
    %13134 = vmatmul.mubr.bf16.gmra.mxu0 %v13099
    %v13135 = vpop.f32.mrf.mxu0
    %v13136 = vadd.f32 %v13072, %v13135
    %v13137 = vpop.f32.mrf.mxu0
    %v13138 = vpop.f32.mrf.mxu0
    %v13139 = vpop.f32.mrf.mxu0
    %13140 = vdwg.mxu0
    %13141 = vst [vmem:[#allocation24] sm:$0xff] %v13136
    // Predicated region
    $region110: #{tpu_custom_call.1} parent=1 // pred_check
      _
    $region111: #{tpu_custom_call.1} parent=1 // pred_check_branch
      %13143 = sbr.rel (0) target = $region113
    $region112: #{tpu_custom_call.1} parent=1 // pred_region
      %s13145 = ssub.s32 128, 128
      %13146 = vsyncadd [#allocation4], %s13145
      %s13148 = sshll.u32 [#allocation24], 4
      %s13149 = int_to_ptr.vmem [resolvable:$true] %s13148
      %13151 = dma.vmem_to_hbm [thread:$0]  %s13149, 128, %s14, [#allocation4]
    $region113: #{tpu_custom_call.1} parent=1 // pred_fallthru
      _
    // Predicated region
    $region114: #{tpu_custom_call.1} parent=1 // pred_check
      _
    $region115: #{tpu_custom_call.1} parent=1 // pred_check_branch
      %13153 = sbr.rel (0) target = $region117
    $region116: #{tpu_custom_call.1} parent=1 // pred_region
      %13154 = dma.done [#allocation4], 128
    $region117: #{tpu_custom_call.1} parent=1 // pred_fallthru
      _
    %13155 = vsyncpa [#allocation3], 1
    %13156 = vsyncpa [#allocation7], 1
    %13157 = vsyncpa [#allocation10], 1
    %13158 = vsyncpa [#allocation13], 1
    %13159 = vsyncpa [#allocation16], 1
    %13160 = vsyncpa [#allocation19], 1
    %13161 = vsyncpa [#allocation22], 1
    %13162 = vsyncpa [#allocation4], 1
    %13163 = vsyncpa [#allocation5], 1

</llo_original>
